<compile_context>
chip_gen: v5e
topology: v5e:2x2
jax: 0.10.0
libtpu: 0.0.40
codegen_flags: <defaults>
</compile_context>

<pallas_src>
import functools
import math

import numpy as np
import jax
import jax.numpy as jnp
from jax.experimental import pallas as pl
from jax.experimental.pallas import tpu as pltpu

# ----------------------------- hyperparameters -----------------------------
EMBED = 32          # hp.embedding_size
NUM_BLOCK = 2       # hp.num_block
HEADS = 4
OUTPUT_SIZE = 16    # hp.output_size
VOCAB = 40          # len(vocab)
MAX_POS = 64        # (1024 in the original; a small table is enough here)
MASK_FILL = float(-2 ** 32 + 1)
LN_EPS = 1e-5


# ------------------------------ in-kernel helpers ------------------------------

def _layernorm(y, g, b):
    mean = jnp.mean(y, axis=-1, keepdims=True)
    var = jnp.mean(jnp.square(y - mean), axis=-1, keepdims=True)
    return (y - mean) * jax.lax.rsqrt(var + LN_EPS) * g + b


def _attention_core(q, k, v, *, H, dh, causal_bias):
    """Multi-head scaled-dot attention for ONE batch element.

    q: [Lq, H*dh], k/v: [Lk, H*dh] (heads packed along lanes)
    causal_bias: None or head-stacked additive mask [H*Lq, Lk]
    returns (ctx [Lq, H*dh], attn [Lq, H*Lk])   (attn packed lane-dense per head)
    """
    Lq = q.shape[0]
    scale = 1.0 / math.sqrt(dh)

    s_tiles = []
    for h in range(H):
        q_h = q[:, h * dh:(h + 1) * dh]
        k_h = k[:, h * dh:(h + 1) * dh]
        # q . k^T without materializing a transpose
        s_tiles.append(jax.lax.dot_general(
            q_h, k_h, (((1,), (1,)), ((), ())),
            preferred_element_type=jnp.float32))
    s = jnp.concatenate(s_tiles, axis=0) * scale            # [H*Lq, Lk]
    if causal_bias is not None:
        s = s + causal_bias

    # single softmax pass over all heads; reciprocal on the EUP slot
    m = jnp.max(s, axis=-1, keepdims=True)
    e = jnp.exp(s - m)
    denom = jnp.sum(e, axis=-1, keepdims=True)
    a = e * pl.reciprocal(denom, approx=True)               # [H*Lq, Lk]

    attn_tiles, ctx_tiles = [], []
    for h in range(H):
        a_h = a[h * Lq:(h + 1) * Lq, :]                     # [Lq, Lk]
        attn_tiles.append(a_h)
        ctx_tiles.append(jnp.dot(a_h, v[:, h * dh:(h + 1) * dh],
                                 preferred_element_type=jnp.float32))
    ctx = jnp.concatenate(ctx_tiles, axis=1)                # [Lq, H*dh]
    attn = jnp.concatenate(attn_tiles, axis=1)              # [Lq, H*Lk] lane-dense
    return ctx, attn


def _attn_sublayer(x, mem, w_first, w_kv, wo, bo, g, b, *, H, dh, causal_bias):
    """Attention sublayer: projections + MHA + concat-output-proj + residual + LN.

    Self-attention : mem is None, w_first is the fused [E, 3E] QKV weight.
    Cross-attention: mem is the encoder memory, w_first = Wq [E,E], w_kv = Wkv [E,2E].
    """
    E = H * dh
    if mem is None:
        qkv = jnp.dot(x, w_first, preferred_element_type=jnp.float32)   # [Lq, 3E]
        q, k, v = qkv[:, :E], qkv[:, E:2 * E], qkv[:, 2 * E:]
    else:
        q = jnp.dot(x, w_first, preferred_element_type=jnp.float32)     # [Lq, E]
        kv = jnp.dot(mem, w_kv, preferred_element_type=jnp.float32)     # [Lk, 2E]
        k, v = kv[:, :E], kv[:, E:]

    ctx, attn = _attention_core(q, k, v, H=H, dh=dh, causal_bias=causal_bias)
    # final_linear(cat([query_input, context], -1)) + residual + LN  (as in PyTorch)
    cat = jnp.concatenate([x, ctx], axis=1)                              # [Lq, 2E]
    proj = jnp.dot(cat, wo, preferred_element_type=jnp.float32) + bo
    return _layernorm(proj + x, g, b), attn


def _ffn_ln(x, w1, b1, w2, b2, g, b):
    h = jnp.maximum(jnp.dot(x, w1, preferred_element_type=jnp.float32) + b1, 0.0)
    y = jnp.dot(h, w2, preferred_element_type=jnp.float32) + b2 + x
    return _layernorm(y, g, b)


# ------------------------------ fused forward kernel ------------------------------

def _forward_kernel(
        src_ref, tgt_emb_ref, tgt_pos_ref,
        e_wqkv, e_wo, e_bo, e_ag, e_ab, e_w1, e_b1, e_w2, e_b2, e_fg, e_fb,
        nrm_w, nrm_b,
        s_wqkv, s_wo, s_bo, s_ag, s_ab,
        c_wq, c_wkv, c_wo, c_bo, c_ag, c_ab,
        d_w1, d_b1, d_w2, d_b2, d_fg, d_fb,
        o_w, o_b,
        out_ref, attn_enc_ref, attn_dec_ref, attn_dot_ref,
        *, S, L, H, dh):
    # Each grid step processes ONE batch element end-to-end.

    # -------- encoder --------
    x = src_ref[0]                                               # [S, E]
    for blk in range(NUM_BLOCK):
        x, a = _attn_sublayer(x, None, e_wqkv[blk], None, e_wo[blk], e_bo[blk],
                              e_ag[blk], e_ab[blk], H=H, dh=dh, causal_bias=None)
        attn_enc_ref[blk, 0] = a                                 # [S, H*S] lane-dense
        x = _ffn_ln(x, e_w1[blk], e_b1[blk], e_w2[blk], e_b2[blk],
                    e_fg[blk], e_fb[blk])
    memory = x                                                   # [S, E]

    # -------- decoder prolog: norm linear + positional add (dropout == identity) ----
    d = (jnp.dot(tgt_emb_ref[0], nrm_w[...], preferred_element_type=jnp.float32)
         + nrm_b[...] + tgt_pos_ref[0])                          # [L, E]

    # precomputed additive causal mask, stacked per head, reused across blocks
    row = jax.lax.broadcasted_iota(jnp.int32, (L, L), 0)
    col = jax.lax.broadcasted_iota(jnp.int32, (L, L), 1)
    causal = jnp.where(col > row, jnp.float32(MASK_FILL), jnp.float32(0.0))
    causal = jnp.tile(causal, (H, 1))                            # [H*L, L]

    # -------- decoder blocks --------
    for blk in range(NUM_BLOCK):
        d, a_dec = _attn_sublayer(d, None, s_wqkv[blk], None, s_wo[blk], s_bo[blk],
                                  s_ag[blk], s_ab[blk], H=H, dh=dh,
                                  causal_bias=causal)
        attn_dec_ref[blk, 0] = a_dec                             # [L, H*L]
        d, a_dot = _attn_sublayer(d, memory, c_wq[blk], c_wkv[blk], c_wo[blk],
                                  c_bo[blk], c_ag[blk], c_ab[blk], H=H, dh=dh,
                                  causal_bias=None)
        attn_dot_ref[blk, 0] = a_dot                             # [L, H*S]
        d = _ffn_ln(d, d_w1[blk], d_b1[blk], d_w2[blk], d_b2[blk],
                    d_fg[blk], d_fb[blk])

    # -------- output linear --------
    out_ref[0] = (jnp.dot(d, o_w[...], preferred_element_type=jnp.float32)
                  + o_b[...])


# ------------------------------ pallas_call wrapper ------------------------------

def _const_spec(shape):
    zeros = (0,) * len(shape)
    return pl.BlockSpec(tuple(shape), lambda i: zeros)


@jax.jit
def transformer_apply(params, source_seq, target_seq_input, source_pos, target_pos):
    enc, dec = params["encoder"], params["decoder"]
    B, S = source_seq.shape
    L = target_seq_input.shape[1]
    E, H = EMBED, HEADS
    dh = E // H

    # Embedding / positional gathers stay in XLA (tiny); pos_dropout == identity.
    src_x = enc["embed"][source_seq] + enc["pos_table"][source_pos]   # [B, S, E]
    tgt_emb = dec["embed"][target_seq_input]                           # [B, L, E]
    tgt_pos = dec["pos_table"][target_pos]                             # [B, L, E]

    ea, ef = enc["attn"], enc["ffn"]
    sa, ca, df = dec["selfattn"], dec["dotattn"], dec["ffn"]

    args = (src_x, tgt_emb, tgt_pos,
            ea["wqkv"], ea["wo"], ea["bo"], ea["ln_g"], ea["ln_b"],
            ef["w1"], ef["b1"], ef["w2"], ef["b2"], ef["ln_g"], ef["ln_b"],
            dec["norm_w"], dec["norm_b"],
            sa["wqkv"], sa["wo"], sa["bo"], sa["ln_g"], sa["ln_b"],
            ca["wq"], ca["wkv"], ca["wo"], ca["bo"], ca["ln_g"], ca["ln_b"],
            df["w1"], df["b1"], df["w2"], df["b2"], df["ln_g"], df["ln_b"],
            dec["out_w"], dec["out_b"])

    in_specs = ([pl.BlockSpec((1, S, E), lambda i: (i, 0, 0)),
                 pl.BlockSpec((1, L, E), lambda i: (i, 0, 0)),
                 pl.BlockSpec((1, L, E), lambda i: (i, 0, 0))]
                + [_const_spec(a.shape) for a in args[3:]])

    out_shape = (jax.ShapeDtypeStruct((B, L, OUTPUT_SIZE), jnp.float32),
                 jax.ShapeDtypeStruct((NUM_BLOCK, B, S, H * S), jnp.float32),
                 jax.ShapeDtypeStruct((NUM_BLOCK, B, L, H * L), jnp.float32),
                 jax.ShapeDtypeStruct((NUM_BLOCK, B, L, H * S), jnp.float32))
    out_specs = (pl.BlockSpec((1, L, OUTPUT_SIZE), lambda i: (i, 0, 0)),
                 pl.BlockSpec((NUM_BLOCK, 1, S, H * S), lambda i: (0, i, 0, 0)),
                 pl.BlockSpec((NUM_BLOCK, 1, L, H * L), lambda i: (0, i, 0, 0)),
                 pl.BlockSpec((NUM_BLOCK, 1, L, H * S), lambda i: (0, i, 0, 0)))

    out, attn_enc_p, attn_dec_p, attn_dot_p = pl.pallas_call(
        functools.partial(_forward_kernel, S=S, L=L, H=H, dh=dh),
        out_shape=out_shape,
        grid=(B,),
        in_specs=in_specs,
        out_specs=out_specs,
        compiler_params=pltpu.CompilerParams(
            dimension_semantics=("parallel",),
            vmem_limit_bytes=32 * 1024 * 1024),
    )(*args)

    # Re-pack lane-dense kernel attn outputs [NB, B, Lq, H*Lk] into PyTorch's
    # head-major [H*B, Lq, Lk] per block (pure layout plumbing outside the kernel).
    def unpack(p, Lq, Lk):
        x = p.reshape(NUM_BLOCK, B, Lq, H, Lk)
        x = jnp.transpose(x, (0, 3, 1, 2, 4)).reshape(NUM_BLOCK, H * B, Lq, Lk)
        return [x[i] for i in range(NUM_BLOCK)]

    attns_enc = unpack(attn_enc_p, S, S)
    attns_dec = unpack(attn_dec_p, L, L)
    attn_probs = unpack(attn_dot_p, L, S)
    return out, attn_probs, attns_enc, attns_dec


# ------------------------------ parameter init ------------------------------

def sinusoid_table(n_position, d_hid, padding_idx=0):
    pos = np.arange(n_position)[:, None].astype(np.float64)
    idx = np.arange(d_hid)[None, :]
    angle = pos / np.power(10000.0, 2.0 * (idx // 2) / d_hid)
    table = np.zeros((n_position, d_hid), np.float64)
    table[:, 0::2] = np.sin(angle[:, 0::2])
    table[:, 1::2] = np.cos(angle[:, 1::2])
    table[padding_idx] = 0.0
    return jnp.asarray(table, jnp.float32)


class KeyGen:
    def __init__(self, seed):
        self.key = jax.random.PRNGKey(seed)

    def __call__(self):
        self.key, sub = jax.random.split(self.key)
        return sub


def init_params(seed=0):
    kg = KeyGen(seed)
    E, NB = EMBED, NUM_BLOCK
    s = 0.1
    pos_table = sinusoid_table(MAX_POS, E, padding_idx=0)

    def embed_table():
        emb = jax.random.normal(kg(), (VOCAB, E), jnp.float32) * s
        return emb.at[0].set(0.0)                  # padding_idx=0

    def attn_weights(fused_qkv):
        w = {
            # final_linear over concat([query_input, context], -1): [2E, E]
            "wo": jax.random.normal(kg(), (NB, 2 * E, E), jnp.float32) * s,
            "bo": jnp.zeros((NB, 1, E), jnp.float32),
            "ln_g": jnp.ones((NB, 1, E), jnp.float32),
            "ln_b": jnp.zeros((NB, 1, E), jnp.float32),
        }
        if fused_qkv:
            w["wqkv"] = jax.random.normal(kg(), (NB, E, 3 * E), jnp.float32) * s
        else:   # cross-attention: query from decoder, key/value from memory
            w["wq"] = jax.random.normal(kg(), (NB, E, E), jnp.float32) * s
            w["wkv"] = jax.random.normal(kg(), (NB, E, 2 * E), jnp.float32) * s
        return w

    def ffn_weights():
        return {
            "w1": jax.random.normal(kg(), (NB, E, 4 * E), jnp.float32) * s,
            "b1": jnp.zeros((NB, 1, 4 * E), jnp.float32),
            "w2": jax.random.normal(kg(), (NB, 4 * E, E), jnp.float32) * s,
            "b2": jnp.zeros((NB, 1, E), jnp.float32),
            "ln_g": jnp.ones((NB, 1, E), jnp.float32),
            "ln_b": jnp.zeros((NB, 1, E), jnp.float32),
        }

    encoder = {
        "embed": embed_table(),
        "pos_table": pos_table,
        "attn": attn_weights(True),
        "ffn": ffn_weights(),
    }
    decoder = {
        "embed": embed_table(),
        "pos_table": pos_table,
        "norm_w": jax.random.normal(kg(), (E, E), jnp.float32) * s,
        "norm_b": jnp.zeros((1, E), jnp.float32),
        "selfattn": attn_weights(True),
        "dotattn": attn_weights(False),
        "ffn": ffn_weights(),
        "out_w": jax.random.normal(kg(), (E, OUTPUT_SIZE), jnp.float32) * s,
        "out_b": jnp.zeros((1, OUTPUT_SIZE), jnp.float32),
    }
    return {"encoder": encoder, "decoder": decoder}


# ----------------------------------- main -----------------------------------

if __name__ == "__main__":
    B, S, L = 2, 8, 8
    params = init_params(seed=0)

    key = jax.random.PRNGKey(0)
    k1, k2 = jax.random.split(key)
    source_seq = jax.random.randint(k1, (B, S), 2, VOCAB, dtype=jnp.int32)
    target_raw = jax.random.randint(k2, (B, L), 2, VOCAB, dtype=jnp.int32)
    # right-shifted target input (first token = 0)
    target_seq_input = jnp.concatenate(
        [jnp.zeros((B, 1), jnp.int32), target_raw[:, :-1]], axis=1)
    source_pos = jnp.tile(jnp.arange(1, S + 1, dtype=jnp.int32)[None, :], (B, 1))
    target_pos = jnp.tile(jnp.arange(1, L + 1, dtype=jnp.int32)[None, :], (B, 1))

    output, attn_probs, attns_enc, attns_dec = transformer_apply(
        params, source_seq, target_seq_input, source_pos, target_pos)
    jax.block_until_ready(output)
    for a in attn_probs + attns_enc + attns_dec:
        jax.block_until_ready(a)

    assert output.shape == (B, L, OUTPUT_SIZE)
    assert len(attn_probs) == NUM_BLOCK and attn_probs[0].shape == (HEADS * B, L, S)
    assert len(attns_enc) == NUM_BLOCK and attns_enc[0].shape == (HEADS * B, S, S)
    assert len(attns_dec) == NUM_BLOCK and attns_dec[0].shape == (HEADS * B, L, L)
    assert bool(jnp.all(jnp.isfinite(output)))
    # attention rows should sum to ~1 (approx reciprocal -> loose tolerance)
    assert bool(jnp.allclose(jnp.sum(attns_enc[0], axis=-1), 1.0, atol=2e-2))
    assert bool(jnp.allclose(jnp.sum(attns_dec[0], axis=-1), 1.0, atol=2e-2))
    print("KERNEL_OK")
</pallas_src>

<mosaic_0001>
module attributes {stable_mosaic.version = 11 : i64} {
  func.func @_forward_kernel(%arg0: i32, %arg1: memref<1x8x32xf32, #tpu.memory_space<vmem>>, %arg2: memref<1x8x32xf32, #tpu.memory_space<vmem>>, %arg3: memref<1x8x32xf32, #tpu.memory_space<vmem>>, %arg4: memref<2x32x96xf32, #tpu.memory_space<vmem>>, %arg5: memref<2x64x32xf32, #tpu.memory_space<vmem>>, %arg6: memref<2x1x32xf32, #tpu.memory_space<vmem>>, %arg7: memref<2x1x32xf32, #tpu.memory_space<vmem>>, %arg8: memref<2x1x32xf32, #tpu.memory_space<vmem>>, %arg9: memref<2x32x128xf32, #tpu.memory_space<vmem>>, %arg10: memref<2x1x128xf32, #tpu.memory_space<vmem>>, %arg11: memref<2x128x32xf32, #tpu.memory_space<vmem>>, %arg12: memref<2x1x32xf32, #tpu.memory_space<vmem>>, %arg13: memref<2x1x32xf32, #tpu.memory_space<vmem>>, %arg14: memref<2x1x32xf32, #tpu.memory_space<vmem>>, %arg15: memref<32x32xf32, #tpu.memory_space<vmem>>, %arg16: memref<1x32xf32, #tpu.memory_space<vmem>>, %arg17: memref<2x32x96xf32, #tpu.memory_space<vmem>>, %arg18: memref<2x64x32xf32, #tpu.memory_space<vmem>>, %arg19: memref<2x1x32xf32, #tpu.memory_space<vmem>>, %arg20: memref<2x1x32xf32, #tpu.memory_space<vmem>>, %arg21: memref<2x1x32xf32, #tpu.memory_space<vmem>>, %arg22: memref<2x32x32xf32, #tpu.memory_space<vmem>>, %arg23: memref<2x32x64xf32, #tpu.memory_space<vmem>>, %arg24: memref<2x64x32xf32, #tpu.memory_space<vmem>>, %arg25: memref<2x1x32xf32, #tpu.memory_space<vmem>>, %arg26: memref<2x1x32xf32, #tpu.memory_space<vmem>>, %arg27: memref<2x1x32xf32, #tpu.memory_space<vmem>>, %arg28: memref<2x32x128xf32, #tpu.memory_space<vmem>>, %arg29: memref<2x1x128xf32, #tpu.memory_space<vmem>>, %arg30: memref<2x128x32xf32, #tpu.memory_space<vmem>>, %arg31: memref<2x1x32xf32, #tpu.memory_space<vmem>>, %arg32: memref<2x1x32xf32, #tpu.memory_space<vmem>>, %arg33: memref<2x1x32xf32, #tpu.memory_space<vmem>>, %arg34: memref<32x16xf32, #tpu.memory_space<vmem>>, %arg35: memref<1x16xf32, #tpu.memory_space<vmem>>, %arg36: memref<1x8x16xf32, #tpu.memory_space<vmem>>, %arg37: memref<2x1x8x32xf32, #tpu.memory_space<vmem>>, %arg38: memref<2x1x8x32xf32, #tpu.memory_space<vmem>>, %arg39: memref<2x1x8x32xf32, #tpu.memory_space<vmem>>) attributes {dimension_semantics = [#tpu.dimension_semantics<parallel>], iteration_bounds = array<i64: 2>, scalar_prefetch = 0 : i64, scratch_operands = 0 : i64, tpu.core_type = #tpu.core_type<tc>, window_params = [{transform_indices = @transform_0, window_bounds = array<i64: 1, 8, 32>}, {transform_indices = @transform_1, window_bounds = array<i64: 1, 8, 32>}, {transform_indices = @transform_2, window_bounds = array<i64: 1, 8, 32>}, {pipeline_mode = #tpu.pipeline_mode<synchronous>, transform_indices = @transform_3, window_bounds = array<i64: 2, 32, 96>}, {pipeline_mode = #tpu.pipeline_mode<synchronous>, transform_indices = @transform_4, window_bounds = array<i64: 2, 64, 32>}, {pipeline_mode = #tpu.pipeline_mode<synchronous>, transform_indices = @transform_5, window_bounds = array<i64: 2, 1, 32>}, {pipeline_mode = #tpu.pipeline_mode<synchronous>, transform_indices = @transform_6, window_bounds = array<i64: 2, 1, 32>}, {pipeline_mode = #tpu.pipeline_mode<synchronous>, transform_indices = @transform_7, window_bounds = array<i64: 2, 1, 32>}, {pipeline_mode = #tpu.pipeline_mode<synchronous>, transform_indices = @transform_8, window_bounds = array<i64: 2, 32, 128>}, {pipeline_mode = #tpu.pipeline_mode<synchronous>, transform_indices = @transform_9, window_bounds = array<i64: 2, 1, 128>}, {pipeline_mode = #tpu.pipeline_mode<synchronous>, transform_indices = @transform_10, window_bounds = array<i64: 2, 128, 32>}, {pipeline_mode = #tpu.pipeline_mode<synchronous>, transform_indices = @transform_11, window_bounds = array<i64: 2, 1, 32>}, {pipeline_mode = #tpu.pipeline_mode<synchronous>, transform_indices = @transform_12, window_bounds = array<i64: 2, 1, 32>}, {pipeline_mode = #tpu.pipeline_mode<synchronous>, transform_indices = @transform_13, window_bounds = array<i64: 2, 1, 32>}, {pipeline_mode = #tpu.pipeline_mode<synchronous>, transform_indices = @transform_14, window_bounds = array<i64: 32, 32>}, {pipeline_mode = #tpu.pipeline_mode<synchronous>, transform_indices = @transform_15, window_bounds = array<i64: 1, 32>}, {pipeline_mode = #tpu.pipeline_mode<synchronous>, transform_indices = @transform_16, window_bounds = array<i64: 2, 32, 96>}, {pipeline_mode = #tpu.pipeline_mode<synchronous>, transform_indices = @transform_17, window_bounds = array<i64: 2, 64, 32>}, {pipeline_mode = #tpu.pipeline_mode<synchronous>, transform_indices = @transform_18, window_bounds = array<i64: 2, 1, 32>}, {pipeline_mode = #tpu.pipeline_mode<synchronous>, transform_indices = @transform_19, window_bounds = array<i64: 2, 1, 32>}, {pipeline_mode = #tpu.pipeline_mode<synchronous>, transform_indices = @transform_20, window_bounds = array<i64: 2, 1, 32>}, {pipeline_mode = #tpu.pipeline_mode<synchronous>, transform_indices = @transform_21, window_bounds = array<i64: 2, 32, 32>}, {pipeline_mode = #tpu.pipeline_mode<synchronous>, transform_indices = @transform_22, window_bounds = array<i64: 2, 32, 64>}, {pipeline_mode = #tpu.pipeline_mode<synchronous>, transform_indices = @transform_23, window_bounds = array<i64: 2, 64, 32>}, {pipeline_mode = #tpu.pipeline_mode<synchronous>, transform_indices = @transform_24, window_bounds = array<i64: 2, 1, 32>}, {pipeline_mode = #tpu.pipeline_mode<synchronous>, transform_indices = @transform_25, window_bounds = array<i64: 2, 1, 32>}, {pipeline_mode = #tpu.pipeline_mode<synchronous>, transform_indices = @transform_26, window_bounds = array<i64: 2, 1, 32>}, {pipeline_mode = #tpu.pipeline_mode<synchronous>, transform_indices = @transform_27, window_bounds = array<i64: 2, 32, 128>}, {pipeline_mode = #tpu.pipeline_mode<synchronous>, transform_indices = @transform_28, window_bounds = array<i64: 2, 1, 128>}, {pipeline_mode = #tpu.pipeline_mode<synchronous>, transform_indices = @transform_29, window_bounds = array<i64: 2, 128, 32>}, {pipeline_mode = #tpu.pipeline_mode<synchronous>, transform_indices = @transform_30, window_bounds = array<i64: 2, 1, 32>}, {pipeline_mode = #tpu.pipeline_mode<synchronous>, transform_indices = @transform_31, window_bounds = array<i64: 2, 1, 32>}, {pipeline_mode = #tpu.pipeline_mode<synchronous>, transform_indices = @transform_32, window_bounds = array<i64: 2, 1, 32>}, {pipeline_mode = #tpu.pipeline_mode<synchronous>, transform_indices = @transform_33, window_bounds = array<i64: 32, 16>}, {pipeline_mode = #tpu.pipeline_mode<synchronous>, transform_indices = @transform_34, window_bounds = array<i64: 1, 16>}, {transform_indices = @transform_35, window_bounds = array<i64: 1, 8, 16>}, {transform_indices = @transform_36, window_bounds = array<i64: 2, 1, 8, 32>}, {transform_indices = @transform_37, window_bounds = array<i64: 2, 1, 8, 32>}, {transform_indices = @transform_38, window_bounds = array<i64: 2, 1, 8, 32>}]} {
    %c0 = arith.constant 0 : index
    %c0_0 = arith.constant 0 : index
    %c0_1 = arith.constant 0 : index
    %0 = vector.load %arg1[%c0, %c0_0, %c0_1] : memref<1x8x32xf32, #tpu.memory_space<vmem>>, vector<1x8x32xf32>
    %1 = vector.shape_cast %0 : vector<1x8x32xf32> to vector<8x32xf32>
    %c0_2 = arith.constant 0 : index
    %c0_3 = arith.constant 0 : index
    %c0_4 = arith.constant 0 : index
    %2 = vector.load %arg4[%c0_2, %c0_3, %c0_4] : memref<2x32x96xf32, #tpu.memory_space<vmem>>, vector<1x32x96xf32>
    %3 = vector.shape_cast %2 : vector<1x32x96xf32> to vector<32x96xf32>
    %c0_5 = arith.constant 0 : index
    %c0_6 = arith.constant 0 : index
    %c0_7 = arith.constant 0 : index
    %4 = vector.load %arg5[%c0_5, %c0_6, %c0_7] : memref<2x64x32xf32, #tpu.memory_space<vmem>>, vector<1x64x32xf32>
    %5 = vector.shape_cast %4 : vector<1x64x32xf32> to vector<64x32xf32>
    %c0_8 = arith.constant 0 : index
    %c0_9 = arith.constant 0 : index
    %c0_10 = arith.constant 0 : index
    %6 = vector.load %arg6[%c0_8, %c0_9, %c0_10] : memref<2x1x32xf32, #tpu.memory_space<vmem>>, vector<1x1x32xf32>
    %7 = vector.shape_cast %6 : vector<1x1x32xf32> to vector<1x32xf32>
    %c0_11 = arith.constant 0 : index
    %c0_12 = arith.constant 0 : index
    %c0_13 = arith.constant 0 : index
    %8 = vector.load %arg7[%c0_11, %c0_12, %c0_13] : memref<2x1x32xf32, #tpu.memory_space<vmem>>, vector<1x1x32xf32>
    %9 = vector.shape_cast %8 : vector<1x1x32xf32> to vector<1x32xf32>
    %c0_14 = arith.constant 0 : index
    %c0_15 = arith.constant 0 : index
    %c0_16 = arith.constant 0 : index
    %10 = vector.load %arg8[%c0_14, %c0_15, %c0_16] : memref<2x1x32xf32, #tpu.memory_space<vmem>>, vector<1x1x32xf32>
    %11 = vector.shape_cast %10 : vector<1x1x32xf32> to vector<1x32xf32>
    %cst = arith.constant dense<0.000000e+00> : vector<8x96xf32>
    %12 = tpu.matmul %1, %3, %cst {dimension_numbers = #tpu.dot_dimension_numbers<[1], [0], [0], [1], [0, 0, 1, 1], [], []>} : vector<8x32xf32>, vector<32x96xf32>, vector<8x96xf32> -> vector<8x96xf32>
    %13 = vector.extract_strided_slice %12 {offsets = [0, 0], sizes = [8, 32], strides = [1, 1]} : vector<8x96xf32> to vector<8x32xf32>
    %14 = vector.extract_strided_slice %12 {offsets = [0, 32], sizes = [8, 32], strides = [1, 1]} : vector<8x96xf32> to vector<8x32xf32>
    %15 = vector.extract_strided_slice %12 {offsets = [0, 64], sizes = [8, 32], strides = [1, 1]} : vector<8x96xf32> to vector<8x32xf32>
    %16 = vector.extract_strided_slice %13 {offsets = [0, 0], sizes = [8, 8], strides = [1, 1]} : vector<8x32xf32> to vector<8x8xf32>
    %17 = vector.extract_strided_slice %14 {offsets = [0, 0], sizes = [8, 8], strides = [1, 1]} : vector<8x32xf32> to vector<8x8xf32>
    %cst_17 = arith.constant dense<0.000000e+00> : vector<8x8xf32>
    %18 = tpu.matmul %16, %17, %cst_17 {dimension_numbers = #tpu.dot_dimension_numbers<[1], [1], [0], [0], [0, 0, 1, 0], [], []>} : vector<8x8xf32>, vector<8x8xf32>, vector<8x8xf32> -> vector<8x8xf32>
    %19 = vector.extract_strided_slice %13 {offsets = [0, 8], sizes = [8, 8], strides = [1, 1]} : vector<8x32xf32> to vector<8x8xf32>
    %20 = vector.extract_strided_slice %14 {offsets = [0, 8], sizes = [8, 8], strides = [1, 1]} : vector<8x32xf32> to vector<8x8xf32>
    %cst_18 = arith.constant dense<0.000000e+00> : vector<8x8xf32>
    %21 = tpu.matmul %19, %20, %cst_18 {dimension_numbers = #tpu.dot_dimension_numbers<[1], [1], [0], [0], [0, 0, 1, 0], [], []>} : vector<8x8xf32>, vector<8x8xf32>, vector<8x8xf32> -> vector<8x8xf32>
    %22 = vector.extract_strided_slice %13 {offsets = [0, 16], sizes = [8, 8], strides = [1, 1]} : vector<8x32xf32> to vector<8x8xf32>
    %23 = vector.extract_strided_slice %14 {offsets = [0, 16], sizes = [8, 8], strides = [1, 1]} : vector<8x32xf32> to vector<8x8xf32>
    %cst_19 = arith.constant dense<0.000000e+00> : vector<8x8xf32>
    %24 = tpu.matmul %22, %23, %cst_19 {dimension_numbers = #tpu.dot_dimension_numbers<[1], [1], [0], [0], [0, 0, 1, 0], [], []>} : vector<8x8xf32>, vector<8x8xf32>, vector<8x8xf32> -> vector<8x8xf32>
    %25 = vector.extract_strided_slice %13 {offsets = [0, 24], sizes = [8, 8], strides = [1, 1]} : vector<8x32xf32> to vector<8x8xf32>
    %26 = vector.extract_strided_slice %14 {offsets = [0, 24], sizes = [8, 8], strides = [1, 1]} : vector<8x32xf32> to vector<8x8xf32>
    %cst_20 = arith.constant dense<0.000000e+00> : vector<8x8xf32>
    %27 = tpu.matmul %25, %26, %cst_20 {dimension_numbers = #tpu.dot_dimension_numbers<[1], [1], [0], [0], [0, 0, 1, 0], [], []>} : vector<8x8xf32>, vector<8x8xf32>, vector<8x8xf32> -> vector<8x8xf32>
    %28 = tpu.concatenate %18, %21, %24, %27 in 0 : vector<8x8xf32>, vector<8x8xf32>, vector<8x8xf32>, vector<8x8xf32> -> vector<32x8xf32>
    %cst_21 = arith.constant 0.353553385 : f32
    %29 = vector.broadcast %cst_21 : f32 to vector<32x8xf32>
    %30 = arith.mulf %28, %29 : vector<32x8xf32>
    %cst_22 = arith.constant dense<0xFF800000> : vector<32xf32>
    %31 = vector.multi_reduction <maximumf>, %30, %cst_22 [1] : vector<32x8xf32> to vector<32xf32>
    %32 = vector.shape_cast %31 : vector<32xf32> to vector<32x1xf32>
    %33 = vector.broadcast %32 : vector<32x1xf32> to vector<32x8xf32>
    %34 = arith.subf %30, %33 : vector<32x8xf32>
    %35 = math.exp %34 : vector<32x8xf32>
    %cst_23 = arith.constant dense<0.000000e+00> : vector<32xf32>
    %36 = vector.multi_reduction <add>, %35, %cst_23 [1] : vector<32x8xf32> to vector<32xf32>
    %37 = vector.shape_cast %36 : vector<32xf32> to vector<32x1xf32>
    %38 = tpu.reciprocal %37 {approx = true} : vector<32x1xf32> -> vector<32x1xf32>
    %39 = vector.broadcast %38 : vector<32x1xf32> to vector<32x8xf32>
    %40 = arith.mulf %35, %39 : vector<32x8xf32>
    %41 = vector.extract_strided_slice %40 {offsets = [0, 0], sizes = [8, 8], strides = [1, 1]} : vector<32x8xf32> to vector<8x8xf32>
    %42 = vector.extract_strided_slice %15 {offsets = [0, 0], sizes = [8, 8], strides = [1, 1]} : vector<8x32xf32> to vector<8x8xf32>
    %cst_24 = arith.constant dense<0.000000e+00> : vector<8x8xf32>
    %43 = tpu.matmul %41, %42, %cst_24 {dimension_numbers = #tpu.dot_dimension_numbers<[1], [0], [0], [1], [0, 0, 1, 1], [], []>} : vector<8x8xf32>, vector<8x8xf32>, vector<8x8xf32> -> vector<8x8xf32>
    %44 = vector.extract_strided_slice %40 {offsets = [8, 0], sizes = [8, 8], strides = [1, 1]} : vector<32x8xf32> to vector<8x8xf32>
    %45 = vector.extract_strided_slice %15 {offsets = [0, 8], sizes = [8, 8], strides = [1, 1]} : vector<8x32xf32> to vector<8x8xf32>
    %cst_25 = arith.constant dense<0.000000e+00> : vector<8x8xf32>
    %46 = tpu.matmul %44, %45, %cst_25 {dimension_numbers = #tpu.dot_dimension_numbers<[1], [0], [0], [1], [0, 0, 1, 1], [], []>} : vector<8x8xf32>, vector<8x8xf32>, vector<8x8xf32> -> vector<8x8xf32>
    %47 = vector.extract_strided_slice %40 {offsets = [16, 0], sizes = [8, 8], strides = [1, 1]} : vector<32x8xf32> to vector<8x8xf32>
    %48 = vector.extract_strided_slice %15 {offsets = [0, 16], sizes = [8, 8], strides = [1, 1]} : vector<8x32xf32> to vector<8x8xf32>
    %cst_26 = arith.constant dense<0.000000e+00> : vector<8x8xf32>
    %49 = tpu.matmul %47, %48, %cst_26 {dimension_numbers = #tpu.dot_dimension_numbers<[1], [0], [0], [1], [0, 0, 1, 1], [], []>} : vector<8x8xf32>, vector<8x8xf32>, vector<8x8xf32> -> vector<8x8xf32>
    %50 = vector.extract_strided_slice %40 {offsets = [24, 0], sizes = [8, 8], strides = [1, 1]} : vector<32x8xf32> to vector<8x8xf32>
    %51 = vector.extract_strided_slice %15 {offsets = [0, 24], sizes = [8, 8], strides = [1, 1]} : vector<8x32xf32> to vector<8x8xf32>
    %cst_27 = arith.constant dense<0.000000e+00> : vector<8x8xf32>
    %52 = tpu.matmul %50, %51, %cst_27 {dimension_numbers = #tpu.dot_dimension_numbers<[1], [0], [0], [1], [0, 0, 1, 1], [], []>} : vector<8x8xf32>, vector<8x8xf32>, vector<8x8xf32> -> vector<8x8xf32>
    %53 = tpu.concatenate %43, %46, %49, %52 in 1 : vector<8x8xf32>, vector<8x8xf32>, vector<8x8xf32>, vector<8x8xf32> -> vector<8x32xf32>
    %54 = tpu.concatenate %41, %44, %47, %50 in 1 : vector<8x8xf32>, vector<8x8xf32>, vector<8x8xf32>, vector<8x8xf32> -> vector<8x32xf32>
    %55 = tpu.concatenate %1, %53 in 1 : vector<8x32xf32>, vector<8x32xf32> -> vector<8x64xf32>
    %cst_28 = arith.constant dense<0.000000e+00> : vector<8x32xf32>
    %56 = tpu.matmul %55, %5, %cst_28 {dimension_numbers = #tpu.dot_dimension_numbers<[1], [0], [0], [1], [0, 0, 1, 1], [], []>} : vector<8x64xf32>, vector<64x32xf32>, vector<8x32xf32> -> vector<8x32xf32>
    %57 = vector.broadcast %7 : vector<1x32xf32> to vector<8x32xf32>
    %58 = arith.addf %56, %57 : vector<8x32xf32>
    %59 = arith.addf %58, %1 : vector<8x32xf32>
    %cst_29 = arith.constant dense<0.000000e+00> : vector<8xf32>
    %60 = vector.multi_reduction <add>, %59, %cst_29 [1] : vector<8x32xf32> to vector<8xf32>
    %61 = vector.shape_cast %60 : vector<8xf32> to vector<8x1xf32>
    %cst_30 = arith.constant 3.200000e+01 : f32
    %62 = vector.broadcast %cst_30 : f32 to vector<8x1xf32>
    %63 = arith.divf %61, %62 : vector<8x1xf32>
    %64 = vector.broadcast %63 : vector<8x1xf32> to vector<8x32xf32>
    %65 = arith.subf %59, %64 : vector<8x32xf32>
    %66 = arith.mulf %65, %65 : vector<8x32xf32>
    %cst_31 = arith.constant dense<0.000000e+00> : vector<8xf32>
    %67 = vector.multi_reduction <add>, %66, %cst_31 [1] : vector<8x32xf32> to vector<8xf32>
    %68 = vector.shape_cast %67 : vector<8xf32> to vector<8x1xf32>
    %cst_32 = arith.constant 3.200000e+01 : f32
    %69 = vector.broadcast %cst_32 : f32 to vector<8x1xf32>
    %70 = arith.divf %68, %69 : vector<8x1xf32>
    %71 = vector.broadcast %63 : vector<8x1xf32> to vector<8x32xf32>
    %72 = arith.subf %59, %71 : vector<8x32xf32>
    %cst_33 = arith.constant 9.99999974E-6 : f32
    %73 = vector.broadcast %cst_33 : f32 to vector<8x1xf32>
    %74 = arith.addf %70, %73 : vector<8x1xf32>
    %75 = math.rsqrt %74 : vector<8x1xf32>
    %76 = vector.broadcast %75 : vector<8x1xf32> to vector<8x32xf32>
    %77 = arith.mulf %72, %76 : vector<8x32xf32>
    %78 = vector.broadcast %9 : vector<1x32xf32> to vector<8x32xf32>
    %79 = arith.mulf %77, %78 : vector<8x32xf32>
    %80 = vector.broadcast %11 : vector<1x32xf32> to vector<8x32xf32>
    %81 = arith.addf %79, %80 : vector<8x32xf32>
    %c0_34 = arith.constant 0 : index
    %c0_35 = arith.constant 0 : index
    %c0_36 = arith.constant 0 : index
    %c0_37 = arith.constant 0 : index
    %82 = vector.load %arg37[%c0_34, %c0_35, %c0_36, %c0_37] : memref<2x1x8x32xf32, #tpu.memory_space<vmem>>, vector<1x1x8x32xf32>
    %83 = vector.shape_cast %82 : vector<1x1x8x32xf32> to vector<8x32xf32>
    %84 = vector.shape_cast %54 : vector<8x32xf32> to vector<1x1x8x32xf32>
    tpu.vector_store %arg37[%c0_34, %c0_35, %c0_36, %c0_37], %84 {strides = array<i32>} : memref<2x1x8x32xf32, #tpu.memory_space<vmem>>, vector<1x1x8x32xf32>,
    %c0_38 = arith.constant 0 : index
    %c0_39 = arith.constant 0 : index
    %c0_40 = arith.constant 0 : index
    %85 = vector.load %arg9[%c0_38, %c0_39, %c0_40] : memref<2x32x128xf32, #tpu.memory_space<vmem>>, vector<1x32x128xf32>
    %86 = vector.shape_cast %85 : vector<1x32x128xf32> to vector<32x128xf32>
    %c0_41 = arith.constant 0 : index
    %c0_42 = arith.constant 0 : index
    %c0_43 = arith.constant 0 : index
    %87 = vector.load %arg10[%c0_41, %c0_42, %c0_43] : memref<2x1x128xf32, #tpu.memory_space<vmem>>, vector<1x1x128xf32>
    %88 = vector.shape_cast %87 : vector<1x1x128xf32> to vector<1x128xf32>
    %c0_44 = arith.constant 0 : index
    %c0_45 = arith.constant 0 : index
    %c0_46 = arith.constant 0 : index
    %89 = vector.load %arg11[%c0_44, %c0_45, %c0_46] : memref<2x128x32xf32, #tpu.memory_space<vmem>>, vector<1x128x32xf32>
    %90 = vector.shape_cast %89 : vector<1x128x32xf32> to vector<128x32xf32>
    %c0_47 = arith.constant 0 : index
    %c0_48 = arith.constant 0 : index
    %c0_49 = arith.constant 0 : index
    %91 = vector.load %arg12[%c0_47, %c0_48, %c0_49] : memref<2x1x32xf32, #tpu.memory_space<vmem>>, vector<1x1x32xf32>
    %92 = vector.shape_cast %91 : vector<1x1x32xf32> to vector<1x32xf32>
    %c0_50 = arith.constant 0 : index
    %c0_51 = arith.constant 0 : index
    %c0_52 = arith.constant 0 : index
    %93 = vector.load %arg13[%c0_50, %c0_51, %c0_52] : memref<2x1x32xf32, #tpu.memory_space<vmem>>, vector<1x1x32xf32>
    %94 = vector.shape_cast %93 : vector<1x1x32xf32> to vector<1x32xf32>
    %c0_53 = arith.constant 0 : index
    %c0_54 = arith.constant 0 : index
    %c0_55 = arith.constant 0 : index
    %95 = vector.load %arg14[%c0_53, %c0_54, %c0_55] : memref<2x1x32xf32, #tpu.memory_space<vmem>>, vector<1x1x32xf32>
    %96 = vector.shape_cast %95 : vector<1x1x32xf32> to vector<1x32xf32>
    %cst_56 = arith.constant dense<0.000000e+00> : vector<8x128xf32>
    %97 = tpu.matmul %81, %86, %cst_56 {dimension_numbers = #tpu.dot_dimension_numbers<[1], [0], [0], [1], [0, 0, 1, 1], [], []>} : vector<8x32xf32>, vector<32x128xf32>, vector<8x128xf32> -> vector<8x128xf32>
    %98 = vector.broadcast %88 : vector<1x128xf32> to vector<8x128xf32>
    %99 = arith.addf %97, %98 : vector<8x128xf32>
    %cst_57 = arith.constant 0.000000e+00 : f32
    %100 = vector.broadcast %cst_57 : f32 to vector<8x128xf32>
    %101 = arith.maximumf %99, %100 : vector<8x128xf32>
    %cst_58 = arith.constant dense<0.000000e+00> : vector<8x32xf32>
    %102 = tpu.matmul %101, %90, %cst_58 {dimension_numbers = #tpu.dot_dimension_numbers<[1], [0], [0], [1], [0, 0, 1, 1], [], []>} : vector<8x128xf32>, vector<128x32xf32>, vector<8x32xf32> -> vector<8x32xf32>
    %103 = vector.broadcast %92 : vector<1x32xf32> to vector<8x32xf32>
    %104 = arith.addf %102, %103 : vector<8x32xf32>
    %105 = arith.addf %104, %81 : vector<8x32xf32>
    %cst_59 = arith.constant dense<0.000000e+00> : vector<8xf32>
    %106 = vector.multi_reduction <add>, %105, %cst_59 [1] : vector<8x32xf32> to vector<8xf32>
    %107 = vector.shape_cast %106 : vector<8xf32> to vector<8x1xf32>
    %cst_60 = arith.constant 3.200000e+01 : f32
    %108 = vector.broadcast %cst_60 : f32 to vector<8x1xf32>
    %109 = arith.divf %107, %108 : vector<8x1xf32>
    %110 = vector.broadcast %109 : vector<8x1xf32> to vector<8x32xf32>
    %111 = arith.subf %105, %110 : vector<8x32xf32>
    %112 = arith.mulf %111, %111 : vector<8x32xf32>
    %cst_61 = arith.constant dense<0.000000e+00> : vector<8xf32>
    %113 = vector.multi_reduction <add>, %112, %cst_61 [1] : vector<8x32xf32> to vector<8xf32>
    %114 = vector.shape_cast %113 : vector<8xf32> to vector<8x1xf32>
    %cst_62 = arith.constant 3.200000e+01 : f32
    %115 = vector.broadcast %cst_62 : f32 to vector<8x1xf32>
    %116 = arith.divf %114, %115 : vector<8x1xf32>
    %117 = vector.broadcast %109 : vector<8x1xf32> to vector<8x32xf32>
    %118 = arith.subf %105, %117 : vector<8x32xf32>
    %cst_63 = arith.constant 9.99999974E-6 : f32
    %119 = vector.broadcast %cst_63 : f32 to vector<8x1xf32>
    %120 = arith.addf %116, %119 : vector<8x1xf32>
    %121 = math.rsqrt %120 : vector<8x1xf32>
    %122 = vector.broadcast %121 : vector<8x1xf32> to vector<8x32xf32>
    %123 = arith.mulf %118, %122 : vector<8x32xf32>
    %124 = vector.broadcast %94 : vector<1x32xf32> to vector<8x32xf32>
    %125 = arith.mulf %123, %124 : vector<8x32xf32>
    %126 = vector.broadcast %96 : vector<1x32xf32> to vector<8x32xf32>
    %127 = arith.addf %125, %126 : vector<8x32xf32>
    %c1 = arith.constant 1 : index
    %c0_64 = arith.constant 0 : index
    %c0_65 = arith.constant 0 : index
    %128 = vector.load %arg4[%c1, %c0_64, %c0_65] : memref<2x32x96xf32, #tpu.memory_space<vmem>>, vector<1x32x96xf32>
    %129 = vector.shape_cast %128 : vector<1x32x96xf32> to vector<32x96xf32>
    %c1_66 = arith.constant 1 : index
    %c0_67 = arith.constant 0 : index
    %c0_68 = arith.constant 0 : index
    %130 = vector.load %arg5[%c1_66, %c0_67, %c0_68] : memref<2x64x32xf32, #tpu.memory_space<vmem>>, vector<1x64x32xf32>
    %131 = vector.shape_cast %130 : vector<1x64x32xf32> to vector<64x32xf32>
    %c1_69 = arith.constant 1 : index
    %c0_70 = arith.constant 0 : index
    %c0_71 = arith.constant 0 : index
    %132 = vector.load %arg6[%c1_69, %c0_70, %c0_71] : memref<2x1x32xf32, #tpu.memory_space<vmem>>, vector<1x1x32xf32>
    %133 = vector.shape_cast %132 : vector<1x1x32xf32> to vector<1x32xf32>
    %c1_72 = arith.constant 1 : index
    %c0_73 = arith.constant 0 : index
    %c0_74 = arith.constant 0 : index
    %134 = vector.load %arg7[%c1_72, %c0_73, %c0_74] : memref<2x1x32xf32, #tpu.memory_space<vmem>>, vector<1x1x32xf32>
    %135 = vector.shape_cast %134 : vector<1x1x32xf32> to vector<1x32xf32>
    %c1_75 = arith.constant 1 : index
    %c0_76 = arith.constant 0 : index
    %c0_77 = arith.constant 0 : index
    %136 = vector.load %arg8[%c1_75, %c0_76, %c0_77] : memref<2x1x32xf32, #tpu.memory_space<vmem>>, vector<1x1x32xf32>
    %137 = vector.shape_cast %136 : vector<1x1x32xf32> to vector<1x32xf32>
    %cst_78 = arith.constant dense<0.000000e+00> : vector<8x96xf32>
    %138 = tpu.matmul %127, %129, %cst_78 {dimension_numbers = #tpu.dot_dimension_numbers<[1], [0], [0], [1], [0, 0, 1, 1], [], []>} : vector<8x32xf32>, vector<32x96xf32>, vector<8x96xf32> -> vector<8x96xf32>
    %139 = vector.extract_strided_slice %138 {offsets = [0, 0], sizes = [8, 32], strides = [1, 1]} : vector<8x96xf32> to vector<8x32xf32>
    %140 = vector.extract_strided_slice %138 {offsets = [0, 32], sizes = [8, 32], strides = [1, 1]} : vector<8x96xf32> to vector<8x32xf32>
    %141 = vector.extract_strided_slice %138 {offsets = [0, 64], sizes = [8, 32], strides = [1, 1]} : vector<8x96xf32> to vector<8x32xf32>
    %142 = vector.extract_strided_slice %139 {offsets = [0, 0], sizes = [8, 8], strides = [1, 1]} : vector<8x32xf32> to vector<8x8xf32>
    %143 = vector.extract_strided_slice %140 {offsets = [0, 0], sizes = [8, 8], strides = [1, 1]} : vector<8x32xf32> to vector<8x8xf32>
    %cst_79 = arith.constant dense<0.000000e+00> : vector<8x8xf32>
    %144 = tpu.matmul %142, %143, %cst_79 {dimension_numbers = #tpu.dot_dimension_numbers<[1], [1], [0], [0], [0, 0, 1, 0], [], []>} : vector<8x8xf32>, vector<8x8xf32>, vector<8x8xf32> -> vector<8x8xf32>
    %145 = vector.extract_strided_slice %139 {offsets = [0, 8], sizes = [8, 8], strides = [1, 1]} : vector<8x32xf32> to vector<8x8xf32>
    %146 = vector.extract_strided_slice %140 {offsets = [0, 8], sizes = [8, 8], strides = [1, 1]} : vector<8x32xf32> to vector<8x8xf32>
    %cst_80 = arith.constant dense<0.000000e+00> : vector<8x8xf32>
    %147 = tpu.matmul %145, %146, %cst_80 {dimension_numbers = #tpu.dot_dimension_numbers<[1], [1], [0], [0], [0, 0, 1, 0], [], []>} : vector<8x8xf32>, vector<8x8xf32>, vector<8x8xf32> -> vector<8x8xf32>
    %148 = vector.extract_strided_slice %139 {offsets = [0, 16], sizes = [8, 8], strides = [1, 1]} : vector<8x32xf32> to vector<8x8xf32>
    %149 = vector.extract_strided_slice %140 {offsets = [0, 16], sizes = [8, 8], strides = [1, 1]} : vector<8x32xf32> to vector<8x8xf32>
    %cst_81 = arith.constant dense<0.000000e+00> : vector<8x8xf32>
    %150 = tpu.matmul %148, %149, %cst_81 {dimension_numbers = #tpu.dot_dimension_numbers<[1], [1], [0], [0], [0, 0, 1, 0], [], []>} : vector<8x8xf32>, vector<8x8xf32>, vector<8x8xf32> -> vector<8x8xf32>
    %151 = vector.extract_strided_slice %139 {offsets = [0, 24], sizes = [8, 8], strides = [1, 1]} : vector<8x32xf32> to vector<8x8xf32>
    %152 = vector.extract_strided_slice %140 {offsets = [0, 24], sizes = [8, 8], strides = [1, 1]} : vector<8x32xf32> to vector<8x8xf32>
    %cst_82 = arith.constant dense<0.000000e+00> : vector<8x8xf32>
    %153 = tpu.matmul %151, %152, %cst_82 {dimension_numbers = #tpu.dot_dimension_numbers<[1], [1], [0], [0], [0, 0, 1, 0], [], []>} : vector<8x8xf32>, vector<8x8xf32>, vector<8x8xf32> -> vector<8x8xf32>
    %154 = tpu.concatenate %144, %147, %150, %153 in 0 : vector<8x8xf32>, vector<8x8xf32>, vector<8x8xf32>, vector<8x8xf32> -> vector<32x8xf32>
    %cst_83 = arith.constant 0.353553385 : f32
    %155 = vector.broadcast %cst_83 : f32 to vector<32x8xf32>
    %156 = arith.mulf %154, %155 : vector<32x8xf32>
    %cst_84 = arith.constant dense<0xFF800000> : vector<32xf32>
    %157 = vector.multi_reduction <maximumf>, %156, %cst_84 [1] : vector<32x8xf32> to vector<32xf32>
    %158 = vector.shape_cast %157 : vector<32xf32> to vector<32x1xf32>
    %159 = vector.broadcast %158 : vector<32x1xf32> to vector<32x8xf32>
    %160 = arith.subf %156, %159 : vector<32x8xf32>
    %161 = math.exp %160 : vector<32x8xf32>
    %cst_85 = arith.constant dense<0.000000e+00> : vector<32xf32>
    %162 = vector.multi_reduction <add>, %161, %cst_85 [1] : vector<32x8xf32> to vector<32xf32>
    %163 = vector.shape_cast %162 : vector<32xf32> to vector<32x1xf32>
    %164 = tpu.reciprocal %163 {approx = true} : vector<32x1xf32> -> vector<32x1xf32>
    %165 = vector.broadcast %164 : vector<32x1xf32> to vector<32x8xf32>
    %166 = arith.mulf %161, %165 : vector<32x8xf32>
    %167 = vector.extract_strided_slice %166 {offsets = [0, 0], sizes = [8, 8], strides = [1, 1]} : vector<32x8xf32> to vector<8x8xf32>
    %168 = vector.extract_strided_slice %141 {offsets = [0, 0], sizes = [8, 8], strides = [1, 1]} : vector<8x32xf32> to vector<8x8xf32>
    %cst_86 = arith.constant dense<0.000000e+00> : vector<8x8xf32>
    %169 = tpu.matmul %167, %168, %cst_86 {dimension_numbers = #tpu.dot_dimension_numbers<[1], [0], [0], [1], [0, 0, 1, 1], [], []>} : vector<8x8xf32>, vector<8x8xf32>, vector<8x8xf32> -> vector<8x8xf32>
    %170 = vector.extract_strided_slice %166 {offsets = [8, 0], sizes = [8, 8], strides = [1, 1]} : vector<32x8xf32> to vector<8x8xf32>
    %171 = vector.extract_strided_slice %141 {offsets = [0, 8], sizes = [8, 8], strides = [1, 1]} : vector<8x32xf32> to vector<8x8xf32>
    %cst_87 = arith.constant dense<0.000000e+00> : vector<8x8xf32>
    %172 = tpu.matmul %170, %171, %cst_87 {dimension_numbers = #tpu.dot_dimension_numbers<[1], [0], [0], [1], [0, 0, 1, 1], [], []>} : vector<8x8xf32>, vector<8x8xf32>, vector<8x8xf32> -> vector<8x8xf32>
    %173 = vector.extract_strided_slice %166 {offsets = [16, 0], sizes = [8, 8], strides = [1, 1]} : vector<32x8xf32> to vector<8x8xf32>
    %174 = vector.extract_strided_slice %141 {offsets = [0, 16], sizes = [8, 8], strides = [1, 1]} : vector<8x32xf32> to vector<8x8xf32>
    %cst_88 = arith.constant dense<0.000000e+00> : vector<8x8xf32>
    %175 = tpu.matmul %173, %174, %cst_88 {dimension_numbers = #tpu.dot_dimension_numbers<[1], [0], [0], [1], [0, 0, 1, 1], [], []>} : vector<8x8xf32>, vector<8x8xf32>, vector<8x8xf32> -> vector<8x8xf32>
    %176 = vector.extract_strided_slice %166 {offsets = [24, 0], sizes = [8, 8], strides = [1, 1]} : vector<32x8xf32> to vector<8x8xf32>
    %177 = vector.extract_strided_slice %141 {offsets = [0, 24], sizes = [8, 8], strides = [1, 1]} : vector<8x32xf32> to vector<8x8xf32>
    %cst_89 = arith.constant dense<0.000000e+00> : vector<8x8xf32>
    %178 = tpu.matmul %176, %177, %cst_89 {dimension_numbers = #tpu.dot_dimension_numbers<[1], [0], [0], [1], [0, 0, 1, 1], [], []>} : vector<8x8xf32>, vector<8x8xf32>, vector<8x8xf32> -> vector<8x8xf32>
    %179 = tpu.concatenate %169, %172, %175, %178 in 1 : vector<8x8xf32>, vector<8x8xf32>, vector<8x8xf32>, vector<8x8xf32> -> vector<8x32xf32>
    %180 = tpu.concatenate %167, %170, %173, %176 in 1 : vector<8x8xf32>, vector<8x8xf32>, vector<8x8xf32>, vector<8x8xf32> -> vector<8x32xf32>
    %181 = tpu.concatenate %127, %179 in 1 : vector<8x32xf32>, vector<8x32xf32> -> vector<8x64xf32>
    %cst_90 = arith.constant dense<0.000000e+00> : vector<8x32xf32>
    %182 = tpu.matmul %181, %131, %cst_90 {dimension_numbers = #tpu.dot_dimension_numbers<[1], [0], [0], [1], [0, 0, 1, 1], [], []>} : vector<8x64xf32>, vector<64x32xf32>, vector<8x32xf32> -> vector<8x32xf32>
    %183 = vector.broadcast %133 : vector<1x32xf32> to vector<8x32xf32>
    %184 = arith.addf %182, %183 : vector<8x32xf32>
    %185 = arith.addf %184, %127 : vector<8x32xf32>
    %cst_91 = arith.constant dense<0.000000e+00> : vector<8xf32>
    %186 = vector.multi_reduction <add>, %185, %cst_91 [1] : vector<8x32xf32> to vector<8xf32>
    %187 = vector.shape_cast %186 : vector<8xf32> to vector<8x1xf32>
    %cst_92 = arith.constant 3.200000e+01 : f32
    %188 = vector.broadcast %cst_92 : f32 to vector<8x1xf32>
    %189 = arith.divf %187, %188 : vector<8x1xf32>
    %190 = vector.broadcast %189 : vector<8x1xf32> to vector<8x32xf32>
    %191 = arith.subf %185, %190 : vector<8x32xf32>
    %192 = arith.mulf %191, %191 : vector<8x32xf32>
    %cst_93 = arith.constant dense<0.000000e+00> : vector<8xf32>
    %193 = vector.multi_reduction <add>, %192, %cst_93 [1] : vector<8x32xf32> to vector<8xf32>
    %194 = vector.shape_cast %193 : vector<8xf32> to vector<8x1xf32>
    %cst_94 = arith.constant 3.200000e+01 : f32
    %195 = vector.broadcast %cst_94 : f32 to vector<8x1xf32>
    %196 = arith.divf %194, %195 : vector<8x1xf32>
    %197 = vector.broadcast %189 : vector<8x1xf32> to vector<8x32xf32>
    %198 = arith.subf %185, %197 : vector<8x32xf32>
    %cst_95 = arith.constant 9.99999974E-6 : f32
    %199 = vector.broadcast %cst_95 : f32 to vector<8x1xf32>
    %200 = arith.addf %196, %199 : vector<8x1xf32>
    %201 = math.rsqrt %200 : vector<8x1xf32>
    %202 = vector.broadcast %201 : vector<8x1xf32> to vector<8x32xf32>
    %203 = arith.mulf %198, %202 : vector<8x32xf32>
    %204 = vector.broadcast %135 : vector<1x32xf32> to vector<8x32xf32>
    %205 = arith.mulf %203, %204 : vector<8x32xf32>
    %206 = vector.broadcast %137 : vector<1x32xf32> to vector<8x32xf32>
    %207 = arith.addf %205, %206 : vector<8x32xf32>
    %c1_96 = arith.constant 1 : index
    %c0_97 = arith.constant 0 : index
    %c0_98 = arith.constant 0 : index
    %c0_99 = arith.constant 0 : index
    %208 = vector.load %arg37[%c1_96, %c0_97, %c0_98, %c0_99] : memref<2x1x8x32xf32, #tpu.memory_space<vmem>>, vector<1x1x8x32xf32>
    %209 = vector.shape_cast %208 : vector<1x1x8x32xf32> to vector<8x32xf32>
    %210 = vector.shape_cast %180 : vector<8x32xf32> to vector<1x1x8x32xf32>
    tpu.vector_store %arg37[%c1_96, %c0_97, %c0_98, %c0_99], %210 {strides = array<i32>} : memref<2x1x8x32xf32, #tpu.memory_space<vmem>>, vector<1x1x8x32xf32>,
    %c1_100 = arith.constant 1 : index
    %c0_101 = arith.constant 0 : index
    %c0_102 = arith.constant 0 : index
    %211 = vector.load %arg9[%c1_100, %c0_101, %c0_102] : memref<2x32x128xf32, #tpu.memory_space<vmem>>, vector<1x32x128xf32>
    %212 = vector.shape_cast %211 : vector<1x32x128xf32> to vector<32x128xf32>
    %c1_103 = arith.constant 1 : index
    %c0_104 = arith.constant 0 : index
    %c0_105 = arith.constant 0 : index
    %213 = vector.load %arg10[%c1_103, %c0_104, %c0_105] : memref<2x1x128xf32, #tpu.memory_space<vmem>>, vector<1x1x128xf32>
    %214 = vector.shape_cast %213 : vector<1x1x128xf32> to vector<1x128xf32>
    %c1_106 = arith.constant 1 : index
    %c0_107 = arith.constant 0 : index
    %c0_108 = arith.constant 0 : index
    %215 = vector.load %arg11[%c1_106, %c0_107, %c0_108] : memref<2x128x32xf32, #tpu.memory_space<vmem>>, vector<1x128x32xf32>
    %216 = vector.shape_cast %215 : vector<1x128x32xf32> to vector<128x32xf32>
    %c1_109 = arith.constant 1 : index
    %c0_110 = arith.constant 0 : index
    %c0_111 = arith.constant 0 : index
    %217 = vector.load %arg12[%c1_109, %c0_110, %c0_111] : memref<2x1x32xf32, #tpu.memory_space<vmem>>, vector<1x1x32xf32>
    %218 = vector.shape_cast %217 : vector<1x1x32xf32> to vector<1x32xf32>
    %c1_112 = arith.constant 1 : index
    %c0_113 = arith.constant 0 : index
    %c0_114 = arith.constant 0 : index
    %219 = vector.load %arg13[%c1_112, %c0_113, %c0_114] : memref<2x1x32xf32, #tpu.memory_space<vmem>>, vector<1x1x32xf32>
    %220 = vector.shape_cast %219 : vector<1x1x32xf32> to vector<1x32xf32>
    %c1_115 = arith.constant 1 : index
    %c0_116 = arith.constant 0 : index
    %c0_117 = arith.constant 0 : index
    %221 = vector.load %arg14[%c1_115, %c0_116, %c0_117] : memref<2x1x32xf32, #tpu.memory_space<vmem>>, vector<1x1x32xf32>
    %222 = vector.shape_cast %221 : vector<1x1x32xf32> to vector<1x32xf32>
    %cst_118 = arith.constant dense<0.000000e+00> : vector<8x128xf32>
    %223 = tpu.matmul %207, %212, %cst_118 {dimension_numbers = #tpu.dot_dimension_numbers<[1], [0], [0], [1], [0, 0, 1, 1], [], []>} : vector<8x32xf32>, vector<32x128xf32>, vector<8x128xf32> -> vector<8x128xf32>
    %224 = vector.broadcast %214 : vector<1x128xf32> to vector<8x128xf32>
    %225 = arith.addf %223, %224 : vector<8x128xf32>
    %cst_119 = arith.constant 0.000000e+00 : f32
    %226 = vector.broadcast %cst_119 : f32 to vector<8x128xf32>
    %227 = arith.maximumf %225, %226 : vector<8x128xf32>
    %cst_120 = arith.constant dense<0.000000e+00> : vector<8x32xf32>
    %228 = tpu.matmul %227, %216, %cst_120 {dimension_numbers = #tpu.dot_dimension_numbers<[1], [0], [0], [1], [0, 0, 1, 1], [], []>} : vector<8x128xf32>, vector<128x32xf32>, vector<8x32xf32> -> vector<8x32xf32>
    %229 = vector.broadcast %218 : vector<1x32xf32> to vector<8x32xf32>
    %230 = arith.addf %228, %229 : vector<8x32xf32>
    %231 = arith.addf %230, %207 : vector<8x32xf32>
    %cst_121 = arith.constant dense<0.000000e+00> : vector<8xf32>
    %232 = vector.multi_reduction <add>, %231, %cst_121 [1] : vector<8x32xf32> to vector<8xf32>
    %233 = vector.shape_cast %232 : vector<8xf32> to vector<8x1xf32>
    %cst_122 = arith.constant 3.200000e+01 : f32
    %234 = vector.broadcast %cst_122 : f32 to vector<8x1xf32>
    %235 = arith.divf %233, %234 : vector<8x1xf32>
    %236 = vector.broadcast %235 : vector<8x1xf32> to vector<8x32xf32>
    %237 = arith.subf %231, %236 : vector<8x32xf32>
    %238 = arith.mulf %237, %237 : vector<8x32xf32>
    %cst_123 = arith.constant dense<0.000000e+00> : vector<8xf32>
    %239 = vector.multi_reduction <add>, %238, %cst_123 [1] : vector<8x32xf32> to vector<8xf32>
    %240 = vector.shape_cast %239 : vector<8xf32> to vector<8x1xf32>
    %cst_124 = arith.constant 3.200000e+01 : f32
    %241 = vector.broadcast %cst_124 : f32 to vector<8x1xf32>
    %242 = arith.divf %240, %241 : vector<8x1xf32>
    %243 = vector.broadcast %235 : vector<8x1xf32> to vector<8x32xf32>
    %244 = arith.subf %231, %243 : vector<8x32xf32>
    %cst_125 = arith.constant 9.99999974E-6 : f32
    %245 = vector.broadcast %cst_125 : f32 to vector<8x1xf32>
    %246 = arith.addf %242, %245 : vector<8x1xf32>
    %247 = math.rsqrt %246 : vector<8x1xf32>
    %248 = vector.broadcast %247 : vector<8x1xf32> to vector<8x32xf32>
    %249 = arith.mulf %244, %248 : vector<8x32xf32>
    %250 = vector.broadcast %220 : vector<1x32xf32> to vector<8x32xf32>
    %251 = arith.mulf %249, %250 : vector<8x32xf32>
    %252 = vector.broadcast %222 : vector<1x32xf32> to vector<8x32xf32>
    %253 = arith.addf %251, %252 : vector<8x32xf32>
    %c0_126 = arith.constant 0 : index
    %c0_127 = arith.constant 0 : index
    %c0_128 = arith.constant 0 : index
    %254 = vector.load %arg2[%c0_126, %c0_127, %c0_128] : memref<1x8x32xf32, #tpu.memory_space<vmem>>, vector<1x8x32xf32>
    %255 = vector.shape_cast %254 : vector<1x8x32xf32> to vector<8x32xf32>
    %c0_129 = arith.constant 0 : index
    %c0_130 = arith.constant 0 : index
    %256 = vector.load %arg15[%c0_129, %c0_130] : memref<32x32xf32, #tpu.memory_space<vmem>>, vector<32x32xf32>
    %cst_131 = arith.constant dense<0.000000e+00> : vector<8x32xf32>
    %257 = tpu.matmul %255, %256, %cst_131 {dimension_numbers = #tpu.dot_dimension_numbers<[1], [0], [0], [1], [0, 0, 1, 1], [], []>} : vector<8x32xf32>, vector<32x32xf32>, vector<8x32xf32> -> vector<8x32xf32>
    %c0_132 = arith.constant 0 : index
    %c0_133 = arith.constant 0 : index
    %258 = vector.load %arg16[%c0_132, %c0_133] : memref<1x32xf32, #tpu.memory_space<vmem>>, vector<1x32xf32>
    %259 = vector.broadcast %258 : vector<1x32xf32> to vector<8x32xf32>
    %260 = arith.addf %257, %259 : vector<8x32xf32>
    %c0_134 = arith.constant 0 : index
    %c0_135 = arith.constant 0 : index
    %c0_136 = arith.constant 0 : index
    %261 = vector.load %arg3[%c0_134, %c0_135, %c0_136] : memref<1x8x32xf32, #tpu.memory_space<vmem>>, vector<1x8x32xf32>
    %262 = vector.shape_cast %261 : vector<1x8x32xf32> to vector<8x32xf32>
    %263 = arith.addf %260, %262 : vector<8x32xf32>
    %264 = tpu.iota {dimensions = array<i32: 0>} : vector<8x8xi32>
    %265 = tpu.iota {dimensions = array<i32: 1>} : vector<8x8xi32>
    %266 = arith.cmpi sgt, %265, %264 : vector<8x8xi32>
    %cst_137 = arith.constant -4.2949673E+9 : f32
    %cst_138 = arith.constant 0.000000e+00 : f32
    %267 = vector.broadcast %cst_137 : f32 to vector<8x8xf32>
    %268 = vector.broadcast %cst_138 : f32 to vector<8x8xf32>
    %269 = arith.select %266, %267, %268 : vector<8x8xi1>, vector<8x8xf32>
    %270 = tpu.concatenate %269, %269, %269, %269 in 0 : vector<8x8xf32>, vector<8x8xf32>, vector<8x8xf32>, vector<8x8xf32> -> vector<32x8xf32>
    %c0_139 = arith.constant 0 : index
    %c0_140 = arith.constant 0 : index
    %c0_141 = arith.constant 0 : index
    %271 = vector.load %arg17[%c0_139, %c0_140, %c0_141] : memref<2x32x96xf32, #tpu.memory_space<vmem>>, vector<1x32x96xf32>
    %272 = vector.shape_cast %271 : vector<1x32x96xf32> to vector<32x96xf32>
    %c0_142 = arith.constant 0 : index
    %c0_143 = arith.constant 0 : index
    %c0_144 = arith.constant 0 : index
    %273 = vector.load %arg18[%c0_142, %c0_143, %c0_144] : memref<2x64x32xf32, #tpu.memory_space<vmem>>, vector<1x64x32xf32>
    %274 = vector.shape_cast %273 : vector<1x64x32xf32> to vector<64x32xf32>
    %c0_145 = arith.constant 0 : index
    %c0_146 = arith.constant 0 : index
    %c0_147 = arith.constant 0 : index
    %275 = vector.load %arg19[%c0_145, %c0_146, %c0_147] : memref<2x1x32xf32, #tpu.memory_space<vmem>>, vector<1x1x32xf32>
    %276 = vector.shape_cast %275 : vector<1x1x32xf32> to vector<1x32xf32>
    %c0_148 = arith.constant 0 : index
    %c0_149 = arith.constant 0 : index
    %c0_150 = arith.constant 0 : index
    %277 = vector.load %arg20[%c0_148, %c0_149, %c0_150] : memref<2x1x32xf32, #tpu.memory_space<vmem>>, vector<1x1x32xf32>
    %278 = vector.shape_cast %277 : vector<1x1x32xf32> to vector<1x32xf32>
    %c0_151 = arith.constant 0 : index
    %c0_152 = arith.constant 0 : index
    %c0_153 = arith.constant 0 : index
    %279 = vector.load %arg21[%c0_151, %c0_152, %c0_153] : memref<2x1x32xf32, #tpu.memory_space<vmem>>, vector<1x1x32xf32>
    %280 = vector.shape_cast %279 : vector<1x1x32xf32> to vector<1x32xf32>
    %cst_154 = arith.constant dense<0.000000e+00> : vector<8x96xf32>
    %281 = tpu.matmul %263, %272, %cst_154 {dimension_numbers = #tpu.dot_dimension_numbers<[1], [0], [0], [1], [0, 0, 1, 1], [], []>} : vector<8x32xf32>, vector<32x96xf32>, vector<8x96xf32> -> vector<8x96xf32>
    %282 = vector.extract_strided_slice %281 {offsets = [0, 0], sizes = [8, 32], strides = [1, 1]} : vector<8x96xf32> to vector<8x32xf32>
    %283 = vector.extract_strided_slice %281 {offsets = [0, 32], sizes = [8, 32], strides = [1, 1]} : vector<8x96xf32> to vector<8x32xf32>
    %284 = vector.extract_strided_slice %281 {offsets = [0, 64], sizes = [8, 32], strides = [1, 1]} : vector<8x96xf32> to vector<8x32xf32>
    %285 = vector.extract_strided_slice %282 {offsets = [0, 0], sizes = [8, 8], strides = [1, 1]} : vector<8x32xf32> to vector<8x8xf32>
    %286 = vector.extract_strided_slice %283 {offsets = [0, 0], sizes = [8, 8], strides = [1, 1]} : vector<8x32xf32> to vector<8x8xf32>
    %cst_155 = arith.constant dense<0.000000e+00> : vector<8x8xf32>
    %287 = tpu.matmul %285, %286, %cst_155 {dimension_numbers = #tpu.dot_dimension_numbers<[1], [1], [0], [0], [0, 0, 1, 0], [], []>} : vector<8x8xf32>, vector<8x8xf32>, vector<8x8xf32> -> vector<8x8xf32>
    %288 = vector.extract_strided_slice %282 {offsets = [0, 8], sizes = [8, 8], strides = [1, 1]} : vector<8x32xf32> to vector<8x8xf32>
    %289 = vector.extract_strided_slice %283 {offsets = [0, 8], sizes = [8, 8], strides = [1, 1]} : vector<8x32xf32> to vector<8x8xf32>
    %cst_156 = arith.constant dense<0.000000e+00> : vector<8x8xf32>
    %290 = tpu.matmul %288, %289, %cst_156 {dimension_numbers = #tpu.dot_dimension_numbers<[1], [1], [0], [0], [0, 0, 1, 0], [], []>} : vector<8x8xf32>, vector<8x8xf32>, vector<8x8xf32> -> vector<8x8xf32>
    %291 = vector.extract_strided_slice %282 {offsets = [0, 16], sizes = [8, 8], strides = [1, 1]} : vector<8x32xf32> to vector<8x8xf32>
    %292 = vector.extract_strided_slice %283 {offsets = [0, 16], sizes = [8, 8], strides = [1, 1]} : vector<8x32xf32> to vector<8x8xf32>
    %cst_157 = arith.constant dense<0.000000e+00> : vector<8x8xf32>
    %293 = tpu.matmul %291, %292, %cst_157 {dimension_numbers = #tpu.dot_dimension_numbers<[1], [1], [0], [0], [0, 0, 1, 0], [], []>} : vector<8x8xf32>, vector<8x8xf32>, vector<8x8xf32> -> vector<8x8xf32>
    %294 = vector.extract_strided_slice %282 {offsets = [0, 24], sizes = [8, 8], strides = [1, 1]} : vector<8x32xf32> to vector<8x8xf32>
    %295 = vector.extract_strided_slice %283 {offsets = [0, 24], sizes = [8, 8], strides = [1, 1]} : vector<8x32xf32> to vector<8x8xf32>
    %cst_158 = arith.constant dense<0.000000e+00> : vector<8x8xf32>
    %296 = tpu.matmul %294, %295, %cst_158 {dimension_numbers = #tpu.dot_dimension_numbers<[1], [1], [0], [0], [0, 0, 1, 0], [], []>} : vector<8x8xf32>, vector<8x8xf32>, vector<8x8xf32> -> vector<8x8xf32>
    %297 = tpu.concatenate %287, %290, %293, %296 in 0 : vector<8x8xf32>, vector<8x8xf32>, vector<8x8xf32>, vector<8x8xf32> -> vector<32x8xf32>
    %cst_159 = arith.constant 0.353553385 : f32
    %298 = vector.broadcast %cst_159 : f32 to vector<32x8xf32>
    %299 = arith.mulf %297, %298 : vector<32x8xf32>
    %300 = arith.addf %299, %270 : vector<32x8xf32>
    %cst_160 = arith.constant dense<0xFF800000> : vector<32xf32>
    %301 = vector.multi_reduction <maximumf>, %300, %cst_160 [1] : vector<32x8xf32> to vector<32xf32>
    %302 = vector.shape_cast %301 : vector<32xf32> to vector<32x1xf32>
    %303 = vector.broadcast %302 : vector<32x1xf32> to vector<32x8xf32>
    %304 = arith.subf %300, %303 : vector<32x8xf32>
    %305 = math.exp %304 : vector<32x8xf32>
    %cst_161 = arith.constant dense<0.000000e+00> : vector<32xf32>
    %306 = vector.multi_reduction <add>, %305, %cst_161 [1] : vector<32x8xf32> to vector<32xf32>
    %307 = vector.shape_cast %306 : vector<32xf32> to vector<32x1xf32>
    %308 = tpu.reciprocal %307 {approx = true} : vector<32x1xf32> -> vector<32x1xf32>
    %309 = vector.broadcast %308 : vector<32x1xf32> to vector<32x8xf32>
    %310 = arith.mulf %305, %309 : vector<32x8xf32>
    %311 = vector.extract_strided_slice %310 {offsets = [0, 0], sizes = [8, 8], strides = [1, 1]} : vector<32x8xf32> to vector<8x8xf32>
    %312 = vector.extract_strided_slice %284 {offsets = [0, 0], sizes = [8, 8], strides = [1, 1]} : vector<8x32xf32> to vector<8x8xf32>
    %cst_162 = arith.constant dense<0.000000e+00> : vector<8x8xf32>
    %313 = tpu.matmul %311, %312, %cst_162 {dimension_numbers = #tpu.dot_dimension_numbers<[1], [0], [0], [1], [0, 0, 1, 1], [], []>} : vector<8x8xf32>, vector<8x8xf32>, vector<8x8xf32> -> vector<8x8xf32>
    %314 = vector.extract_strided_slice %310 {offsets = [8, 0], sizes = [8, 8], strides = [1, 1]} : vector<32x8xf32> to vector<8x8xf32>
    %315 = vector.extract_strided_slice %284 {offsets = [0, 8], sizes = [8, 8], strides = [1, 1]} : vector<8x32xf32> to vector<8x8xf32>
    %cst_163 = arith.constant dense<0.000000e+00> : vector<8x8xf32>
    %316 = tpu.matmul %314, %315, %cst_163 {dimension_numbers = #tpu.dot_dimension_numbers<[1], [0], [0], [1], [0, 0, 1, 1], [], []>} : vector<8x8xf32>, vector<8x8xf32>, vector<8x8xf32> -> vector<8x8xf32>
    %317 = vector.extract_strided_slice %310 {offsets = [16, 0], sizes = [8, 8], strides = [1, 1]} : vector<32x8xf32> to vector<8x8xf32>
    %318 = vector.extract_strided_slice %284 {offsets = [0, 16], sizes = [8, 8], strides = [1, 1]} : vector<8x32xf32> to vector<8x8xf32>
    %cst_164 = arith.constant dense<0.000000e+00> : vector<8x8xf32>
    %319 = tpu.matmul %317, %318, %cst_164 {dimension_numbers = #tpu.dot_dimension_numbers<[1], [0], [0], [1], [0, 0, 1, 1], [], []>} : vector<8x8xf32>, vector<8x8xf32>, vector<8x8xf32> -> vector<8x8xf32>
    %320 = vector.extract_strided_slice %310 {offsets = [24, 0], sizes = [8, 8], strides = [1, 1]} : vector<32x8xf32> to vector<8x8xf32>
    %321 = vector.extract_strided_slice %284 {offsets = [0, 24], sizes = [8, 8], strides = [1, 1]} : vector<8x32xf32> to vector<8x8xf32>
    %cst_165 = arith.constant dense<0.000000e+00> : vector<8x8xf32>
    %322 = tpu.matmul %320, %321, %cst_165 {dimension_numbers = #tpu.dot_dimension_numbers<[1], [0], [0], [1], [0, 0, 1, 1], [], []>} : vector<8x8xf32>, vector<8x8xf32>, vector<8x8xf32> -> vector<8x8xf32>
    %323 = tpu.concatenate %313, %316, %319, %322 in 1 : vector<8x8xf32>, vector<8x8xf32>, vector<8x8xf32>, vector<8x8xf32> -> vector<8x32xf32>
    %324 = tpu.concatenate %311, %314, %317, %320 in 1 : vector<8x8xf32>, vector<8x8xf32>, vector<8x8xf32>, vector<8x8xf32> -> vector<8x32xf32>
    %325 = tpu.concatenate %263, %323 in 1 : vector<8x32xf32>, vector<8x32xf32> -> vector<8x64xf32>
    %cst_166 = arith.constant dense<0.000000e+00> : vector<8x32xf32>
    %326 = tpu.matmul %325, %274, %cst_166 {dimension_numbers = #tpu.dot_dimension_numbers<[1], [0], [0], [1], [0, 0, 1, 1], [], []>} : vector<8x64xf32>, vector<64x32xf32>, vector<8x32xf32> -> vector<8x32xf32>
    %327 = vector.broadcast %276 : vector<1x32xf32> to vector<8x32xf32>
    %328 = arith.addf %326, %327 : vector<8x32xf32>
    %329 = arith.addf %328, %263 : vector<8x32xf32>
    %cst_167 = arith.constant dense<0.000000e+00> : vector<8xf32>
    %330 = vector.multi_reduction <add>, %329, %cst_167 [1] : vector<8x32xf32> to vector<8xf32>
    %331 = vector.shape_cast %330 : vector<8xf32> to vector<8x1xf32>
    %cst_168 = arith.constant 3.200000e+01 : f32
    %332 = vector.broadcast %cst_168 : f32 to vector<8x1xf32>
    %333 = arith.divf %331, %332 : vector<8x1xf32>
    %334 = vector.broadcast %333 : vector<8x1xf32> to vector<8x32xf32>
    %335 = arith.subf %329, %334 : vector<8x32xf32>
    %336 = arith.mulf %335, %335 : vector<8x32xf32>
    %cst_169 = arith.constant dense<0.000000e+00> : vector<8xf32>
    %337 = vector.multi_reduction <add>, %336, %cst_169 [1] : vector<8x32xf32> to vector<8xf32>
    %338 = vector.shape_cast %337 : vector<8xf32> to vector<8x1xf32>
    %cst_170 = arith.constant 3.200000e+01 : f32
    %339 = vector.broadcast %cst_170 : f32 to vector<8x1xf32>
    %340 = arith.divf %338, %339 : vector<8x1xf32>
    %341 = vector.broadcast %333 : vector<8x1xf32> to vector<8x32xf32>
    %342 = arith.subf %329, %341 : vector<8x32xf32>
    %cst_171 = arith.constant 9.99999974E-6 : f32
    %343 = vector.broadcast %cst_171 : f32 to vector<8x1xf32>
    %344 = arith.addf %340, %343 : vector<8x1xf32>
    %345 = math.rsqrt %344 : vector<8x1xf32>
    %346 = vector.broadcast %345 : vector<8x1xf32> to vector<8x32xf32>
    %347 = arith.mulf %342, %346 : vector<8x32xf32>
    %348 = vector.broadcast %278 : vector<1x32xf32> to vector<8x32xf32>
    %349 = arith.mulf %347, %348 : vector<8x32xf32>
    %350 = vector.broadcast %280 : vector<1x32xf32> to vector<8x32xf32>
    %351 = arith.addf %349, %350 : vector<8x32xf32>
    %c0_172 = arith.constant 0 : index
    %c0_173 = arith.constant 0 : index
    %c0_174 = arith.constant 0 : index
    %c0_175 = arith.constant 0 : index
    %352 = vector.load %arg38[%c0_172, %c0_173, %c0_174, %c0_175] : memref<2x1x8x32xf32, #tpu.memory_space<vmem>>, vector<1x1x8x32xf32>
    %353 = vector.shape_cast %352 : vector<1x1x8x32xf32> to vector<8x32xf32>
    %354 = vector.shape_cast %324 : vector<8x32xf32> to vector<1x1x8x32xf32>
    tpu.vector_store %arg38[%c0_172, %c0_173, %c0_174, %c0_175], %354 {strides = array<i32>} : memref<2x1x8x32xf32, #tpu.memory_space<vmem>>, vector<1x1x8x32xf32>,
    %c0_176 = arith.constant 0 : index
    %c0_177 = arith.constant 0 : index
    %c0_178 = arith.constant 0 : index
    %355 = vector.load %arg22[%c0_176, %c0_177, %c0_178] : memref<2x32x32xf32, #tpu.memory_space<vmem>>, vector<1x32x32xf32>
    %356 = vector.shape_cast %355 : vector<1x32x32xf32> to vector<32x32xf32>
    %c0_179 = arith.constant 0 : index
    %c0_180 = arith.constant 0 : index
    %c0_181 = arith.constant 0 : index
    %357 = vector.load %arg23[%c0_179, %c0_180, %c0_181] : memref<2x32x64xf32, #tpu.memory_space<vmem>>, vector<1x32x64xf32>
    %358 = vector.shape_cast %357 : vector<1x32x64xf32> to vector<32x64xf32>
    %c0_182 = arith.constant 0 : index
    %c0_183 = arith.constant 0 : index
    %c0_184 = arith.constant 0 : index
    %359 = vector.load %arg24[%c0_182, %c0_183, %c0_184] : memref<2x64x32xf32, #tpu.memory_space<vmem>>, vector<1x64x32xf32>
    %360 = vector.shape_cast %359 : vector<1x64x32xf32> to vector<64x32xf32>
    %c0_185 = arith.constant 0 : index
    %c0_186 = arith.constant 0 : index
    %c0_187 = arith.constant 0 : index
    %361 = vector.load %arg25[%c0_185, %c0_186, %c0_187] : memref<2x1x32xf32, #tpu.memory_space<vmem>>, vector<1x1x32xf32>
    %362 = vector.shape_cast %361 : vector<1x1x32xf32> to vector<1x32xf32>
    %c0_188 = arith.constant 0 : index
    %c0_189 = arith.constant 0 : index
    %c0_190 = arith.constant 0 : index
    %363 = vector.load %arg26[%c0_188, %c0_189, %c0_190] : memref<2x1x32xf32, #tpu.memory_space<vmem>>, vector<1x1x32xf32>
    %364 = vector.shape_cast %363 : vector<1x1x32xf32> to vector<1x32xf32>
    %c0_191 = arith.constant 0 : index
    %c0_192 = arith.constant 0 : index
    %c0_193 = arith.constant 0 : index
    %365 = vector.load %arg27[%c0_191, %c0_192, %c0_193] : memref<2x1x32xf32, #tpu.memory_space<vmem>>, vector<1x1x32xf32>
    %366 = vector.shape_cast %365 : vector<1x1x32xf32> to vector<1x32xf32>
    %cst_194 = arith.constant dense<0.000000e+00> : vector<8x32xf32>
    %367 = tpu.matmul %351, %356, %cst_194 {dimension_numbers = #tpu.dot_dimension_numbers<[1], [0], [0], [1], [0, 0, 1, 1], [], []>} : vector<8x32xf32>, vector<32x32xf32>, vector<8x32xf32> -> vector<8x32xf32>
    %cst_195 = arith.constant dense<0.000000e+00> : vector<8x64xf32>
    %368 = tpu.matmul %253, %358, %cst_195 {dimension_numbers = #tpu.dot_dimension_numbers<[1], [0], [0], [1], [0, 0, 1, 1], [], []>} : vector<8x32xf32>, vector<32x64xf32>, vector<8x64xf32> -> vector<8x64xf32>
    %369 = vector.extract_strided_slice %368 {offsets = [0, 0], sizes = [8, 32], strides = [1, 1]} : vector<8x64xf32> to vector<8x32xf32>
    %370 = vector.extract_strided_slice %368 {offsets = [0, 32], sizes = [8, 32], strides = [1, 1]} : vector<8x64xf32> to vector<8x32xf32>
    %371 = vector.extract_strided_slice %367 {offsets = [0, 0], sizes = [8, 8], strides = [1, 1]} : vector<8x32xf32> to vector<8x8xf32>
    %372 = vector.extract_strided_slice %369 {offsets = [0, 0], sizes = [8, 8], strides = [1, 1]} : vector<8x32xf32> to vector<8x8xf32>
    %cst_196 = arith.constant dense<0.000000e+00> : vector<8x8xf32>
    %373 = tpu.matmul %371, %372, %cst_196 {dimension_numbers = #tpu.dot_dimension_numbers<[1], [1], [0], [0], [0, 0, 1, 0], [], []>} : vector<8x8xf32>, vector<8x8xf32>, vector<8x8xf32> -> vector<8x8xf32>
    %374 = vector.extract_strided_slice %367 {offsets = [0, 8], sizes = [8, 8], strides = [1, 1]} : vector<8x32xf32> to vector<8x8xf32>
    %375 = vector.extract_strided_slice %369 {offsets = [0, 8], sizes = [8, 8], strides = [1, 1]} : vector<8x32xf32> to vector<8x8xf32>
    %cst_197 = arith.constant dense<0.000000e+00> : vector<8x8xf32>
    %376 = tpu.matmul %374, %375, %cst_197 {dimension_numbers = #tpu.dot_dimension_numbers<[1], [1], [0], [0], [0, 0, 1, 0], [], []>} : vector<8x8xf32>, vector<8x8xf32>, vector<8x8xf32> -> vector<8x8xf32>
    %377 = vector.extract_strided_slice %367 {offsets = [0, 16], sizes = [8, 8], strides = [1, 1]} : vector<8x32xf32> to vector<8x8xf32>
    %378 = vector.extract_strided_slice %369 {offsets = [0, 16], sizes = [8, 8], strides = [1, 1]} : vector<8x32xf32> to vector<8x8xf32>
    %cst_198 = arith.constant dense<0.000000e+00> : vector<8x8xf32>
    %379 = tpu.matmul %377, %378, %cst_198 {dimension_numbers = #tpu.dot_dimension_numbers<[1], [1], [0], [0], [0, 0, 1, 0], [], []>} : vector<8x8xf32>, vector<8x8xf32>, vector<8x8xf32> -> vector<8x8xf32>
    %380 = vector.extract_strided_slice %367 {offsets = [0, 24], sizes = [8, 8], strides = [1, 1]} : vector<8x32xf32> to vector<8x8xf32>
    %381 = vector.extract_strided_slice %369 {offsets = [0, 24], sizes = [8, 8], strides = [1, 1]} : vector<8x32xf32> to vector<8x8xf32>
    %cst_199 = arith.constant dense<0.000000e+00> : vector<8x8xf32>
    %382 = tpu.matmul %380, %381, %cst_199 {dimension_numbers = #tpu.dot_dimension_numbers<[1], [1], [0], [0], [0, 0, 1, 0], [], []>} : vector<8x8xf32>, vector<8x8xf32>, vector<8x8xf32> -> vector<8x8xf32>
    %383 = tpu.concatenate %373, %376, %379, %382 in 0 : vector<8x8xf32>, vector<8x8xf32>, vector<8x8xf32>, vector<8x8xf32> -> vector<32x8xf32>
    %cst_200 = arith.constant 0.353553385 : f32
    %384 = vector.broadcast %cst_200 : f32 to vector<32x8xf32>
    %385 = arith.mulf %383, %384 : vector<32x8xf32>
    %cst_201 = arith.constant dense<0xFF800000> : vector<32xf32>
    %386 = vector.multi_reduction <maximumf>, %385, %cst_201 [1] : vector<32x8xf32> to vector<32xf32>
    %387 = vector.shape_cast %386 : vector<32xf32> to vector<32x1xf32>
    %388 = vector.broadcast %387 : vector<32x1xf32> to vector<32x8xf32>
    %389 = arith.subf %385, %388 : vector<32x8xf32>
    %390 = math.exp %389 : vector<32x8xf32>
    %cst_202 = arith.constant dense<0.000000e+00> : vector<32xf32>
    %391 = vector.multi_reduction <add>, %390, %cst_202 [1] : vector<32x8xf32> to vector<32xf32>
    %392 = vector.shape_cast %391 : vector<32xf32> to vector<32x1xf32>
    %393 = tpu.reciprocal %392 {approx = true} : vector<32x1xf32> -> vector<32x1xf32>
    %394 = vector.broadcast %393 : vector<32x1xf32> to vector<32x8xf32>
    %395 = arith.mulf %390, %394 : vector<32x8xf32>
    %396 = vector.extract_strided_slice %395 {offsets = [0, 0], sizes = [8, 8], strides = [1, 1]} : vector<32x8xf32> to vector<8x8xf32>
    %397 = vector.extract_strided_slice %370 {offsets = [0, 0], sizes = [8, 8], strides = [1, 1]} : vector<8x32xf32> to vector<8x8xf32>
    %cst_203 = arith.constant dense<0.000000e+00> : vector<8x8xf32>
    %398 = tpu.matmul %396, %397, %cst_203 {dimension_numbers = #tpu.dot_dimension_numbers<[1], [0], [0], [1], [0, 0, 1, 1], [], []>} : vector<8x8xf32>, vector<8x8xf32>, vector<8x8xf32> -> vector<8x8xf32>
    %399 = vector.extract_strided_slice %395 {offsets = [8, 0], sizes = [8, 8], strides = [1, 1]} : vector<32x8xf32> to vector<8x8xf32>
    %400 = vector.extract_strided_slice %370 {offsets = [0, 8], sizes = [8, 8], strides = [1, 1]} : vector<8x32xf32> to vector<8x8xf32>
    %cst_204 = arith.constant dense<0.000000e+00> : vector<8x8xf32>
    %401 = tpu.matmul %399, %400, %cst_204 {dimension_numbers = #tpu.dot_dimension_numbers<[1], [0], [0], [1], [0, 0, 1, 1], [], []>} : vector<8x8xf32>, vector<8x8xf32>, vector<8x8xf32> -> vector<8x8xf32>
    %402 = vector.extract_strided_slice %395 {offsets = [16, 0], sizes = [8, 8], strides = [1, 1]} : vector<32x8xf32> to vector<8x8xf32>
    %403 = vector.extract_strided_slice %370 {offsets = [0, 16], sizes = [8, 8], strides = [1, 1]} : vector<8x32xf32> to vector<8x8xf32>
    %cst_205 = arith.constant dense<0.000000e+00> : vector<8x8xf32>
    %404 = tpu.matmul %402, %403, %cst_205 {dimension_numbers = #tpu.dot_dimension_numbers<[1], [0], [0], [1], [0, 0, 1, 1], [], []>} : vector<8x8xf32>, vector<8x8xf32>, vector<8x8xf32> -> vector<8x8xf32>
    %405 = vector.extract_strided_slice %395 {offsets = [24, 0], sizes = [8, 8], strides = [1, 1]} : vector<32x8xf32> to vector<8x8xf32>
    %406 = vector.extract_strided_slice %370 {offsets = [0, 24], sizes = [8, 8], strides = [1, 1]} : vector<8x32xf32> to vector<8x8xf32>
    %cst_206 = arith.constant dense<0.000000e+00> : vector<8x8xf32>
    %407 = tpu.matmul %405, %406, %cst_206 {dimension_numbers = #tpu.dot_dimension_numbers<[1], [0], [0], [1], [0, 0, 1, 1], [], []>} : vector<8x8xf32>, vector<8x8xf32>, vector<8x8xf32> -> vector<8x8xf32>
    %408 = tpu.concatenate %398, %401, %404, %407 in 1 : vector<8x8xf32>, vector<8x8xf32>, vector<8x8xf32>, vector<8x8xf32> -> vector<8x32xf32>
    %409 = tpu.concatenate %396, %399, %402, %405 in 1 : vector<8x8xf32>, vector<8x8xf32>, vector<8x8xf32>, vector<8x8xf32> -> vector<8x32xf32>
    %410 = tpu.concatenate %351, %408 in 1 : vector<8x32xf32>, vector<8x32xf32> -> vector<8x64xf32>
    %cst_207 = arith.constant dense<0.000000e+00> : vector<8x32xf32>
    %411 = tpu.matmul %410, %360, %cst_207 {dimension_numbers = #tpu.dot_dimension_numbers<[1], [0], [0], [1], [0, 0, 1, 1], [], []>} : vector<8x64xf32>, vector<64x32xf32>, vector<8x32xf32> -> vector<8x32xf32>
    %412 = vector.broadcast %362 : vector<1x32xf32> to vector<8x32xf32>
    %413 = arith.addf %411, %412 : vector<8x32xf32>
    %414 = arith.addf %413, %351 : vector<8x32xf32>
    %cst_208 = arith.constant dense<0.000000e+00> : vector<8xf32>
    %415 = vector.multi_reduction <add>, %414, %cst_208 [1] : vector<8x32xf32> to vector<8xf32>
    %416 = vector.shape_cast %415 : vector<8xf32> to vector<8x1xf32>
    %cst_209 = arith.constant 3.200000e+01 : f32
    %417 = vector.broadcast %cst_209 : f32 to vector<8x1xf32>
    %418 = arith.divf %416, %417 : vector<8x1xf32>
    %419 = vector.broadcast %418 : vector<8x1xf32> to vector<8x32xf32>
    %420 = arith.subf %414, %419 : vector<8x32xf32>
    %421 = arith.mulf %420, %420 : vector<8x32xf32>
    %cst_210 = arith.constant dense<0.000000e+00> : vector<8xf32>
    %422 = vector.multi_reduction <add>, %421, %cst_210 [1] : vector<8x32xf32> to vector<8xf32>
    %423 = vector.shape_cast %422 : vector<8xf32> to vector<8x1xf32>
    %cst_211 = arith.constant 3.200000e+01 : f32
    %424 = vector.broadcast %cst_211 : f32 to vector<8x1xf32>
    %425 = arith.divf %423, %424 : vector<8x1xf32>
    %426 = vector.broadcast %418 : vector<8x1xf32> to vector<8x32xf32>
    %427 = arith.subf %414, %426 : vector<8x32xf32>
    %cst_212 = arith.constant 9.99999974E-6 : f32
    %428 = vector.broadcast %cst_212 : f32 to vector<8x1xf32>
    %429 = arith.addf %425, %428 : vector<8x1xf32>
    %430 = math.rsqrt %429 : vector<8x1xf32>
    %431 = vector.broadcast %430 : vector<8x1xf32> to vector<8x32xf32>
    %432 = arith.mulf %427, %431 : vector<8x32xf32>
    %433 = vector.broadcast %364 : vector<1x32xf32> to vector<8x32xf32>
    %434 = arith.mulf %432, %433 : vector<8x32xf32>
    %435 = vector.broadcast %366 : vector<1x32xf32> to vector<8x32xf32>
    %436 = arith.addf %434, %435 : vector<8x32xf32>
    %c0_213 = arith.constant 0 : index
    %c0_214 = arith.constant 0 : index
    %c0_215 = arith.constant 0 : index
    %c0_216 = arith.constant 0 : index
    %437 = vector.load %arg39[%c0_213, %c0_214, %c0_215, %c0_216] : memref<2x1x8x32xf32, #tpu.memory_space<vmem>>, vector<1x1x8x32xf32>
    %438 = vector.shape_cast %437 : vector<1x1x8x32xf32> to vector<8x32xf32>
    %439 = vector.shape_cast %409 : vector<8x32xf32> to vector<1x1x8x32xf32>
    tpu.vector_store %arg39[%c0_213, %c0_214, %c0_215, %c0_216], %439 {strides = array<i32>} : memref<2x1x8x32xf32, #tpu.memory_space<vmem>>, vector<1x1x8x32xf32>,
    %c0_217 = arith.constant 0 : index
    %c0_218 = arith.constant 0 : index
    %c0_219 = arith.constant 0 : index
    %440 = vector.load %arg28[%c0_217, %c0_218, %c0_219] : memref<2x32x128xf32, #tpu.memory_space<vmem>>, vector<1x32x128xf32>
    %441 = vector.shape_cast %440 : vector<1x32x128xf32> to vector<32x128xf32>
    %c0_220 = arith.constant 0 : index
    %c0_221 = arith.constant 0 : index
    %c0_222 = arith.constant 0 : index
    %442 = vector.load %arg29[%c0_220, %c0_221, %c0_222] : memref<2x1x128xf32, #tpu.memory_space<vmem>>, vector<1x1x128xf32>
    %443 = vector.shape_cast %442 : vector<1x1x128xf32> to vector<1x128xf32>
    %c0_223 = arith.constant 0 : index
    %c0_224 = arith.constant 0 : index
    %c0_225 = arith.constant 0 : index
    %444 = vector.load %arg30[%c0_223, %c0_224, %c0_225] : memref<2x128x32xf32, #tpu.memory_space<vmem>>, vector<1x128x32xf32>
    %445 = vector.shape_cast %444 : vector<1x128x32xf32> to vector<128x32xf32>
    %c0_226 = arith.constant 0 : index
    %c0_227 = arith.constant 0 : index
    %c0_228 = arith.constant 0 : index
    %446 = vector.load %arg31[%c0_226, %c0_227, %c0_228] : memref<2x1x32xf32, #tpu.memory_space<vmem>>, vector<1x1x32xf32>
    %447 = vector.shape_cast %446 : vector<1x1x32xf32> to vector<1x32xf32>
    %c0_229 = arith.constant 0 : index
    %c0_230 = arith.constant 0 : index
    %c0_231 = arith.constant 0 : index
    %448 = vector.load %arg32[%c0_229, %c0_230, %c0_231] : memref<2x1x32xf32, #tpu.memory_space<vmem>>, vector<1x1x32xf32>
    %449 = vector.shape_cast %448 : vector<1x1x32xf32> to vector<1x32xf32>
    %c0_232 = arith.constant 0 : index
    %c0_233 = arith.constant 0 : index
    %c0_234 = arith.constant 0 : index
    %450 = vector.load %arg33[%c0_232, %c0_233, %c0_234] : memref<2x1x32xf32, #tpu.memory_space<vmem>>, vector<1x1x32xf32>
    %451 = vector.shape_cast %450 : vector<1x1x32xf32> to vector<1x32xf32>
    %cst_235 = arith.constant dense<0.000000e+00> : vector<8x128xf32>
    %452 = tpu.matmul %436, %441, %cst_235 {dimension_numbers = #tpu.dot_dimension_numbers<[1], [0], [0], [1], [0, 0, 1, 1], [], []>} : vector<8x32xf32>, vector<32x128xf32>, vector<8x128xf32> -> vector<8x128xf32>
    %453 = vector.broadcast %443 : vector<1x128xf32> to vector<8x128xf32>
    %454 = arith.addf %452, %453 : vector<8x128xf32>
    %cst_236 = arith.constant 0.000000e+00 : f32
    %455 = vector.broadcast %cst_236 : f32 to vector<8x128xf32>
    %456 = arith.maximumf %454, %455 : vector<8x128xf32>
    %cst_237 = arith.constant dense<0.000000e+00> : vector<8x32xf32>
    %457 = tpu.matmul %456, %445, %cst_237 {dimension_numbers = #tpu.dot_dimension_numbers<[1], [0], [0], [1], [0, 0, 1, 1], [], []>} : vector<8x128xf32>, vector<128x32xf32>, vector<8x32xf32> -> vector<8x32xf32>
    %458 = vector.broadcast %447 : vector<1x32xf32> to vector<8x32xf32>
    %459 = arith.addf %457, %458 : vector<8x32xf32>
    %460 = arith.addf %459, %436 : vector<8x32xf32>
    %cst_238 = arith.constant dense<0.000000e+00> : vector<8xf32>
    %461 = vector.multi_reduction <add>, %460, %cst_238 [1] : vector<8x32xf32> to vector<8xf32>
    %462 = vector.shape_cast %461 : vector<8xf32> to vector<8x1xf32>
    %cst_239 = arith.constant 3.200000e+01 : f32
    %463 = vector.broadcast %cst_239 : f32 to vector<8x1xf32>
    %464 = arith.divf %462, %463 : vector<8x1xf32>
    %465 = vector.broadcast %464 : vector<8x1xf32> to vector<8x32xf32>
    %466 = arith.subf %460, %465 : vector<8x32xf32>
    %467 = arith.mulf %466, %466 : vector<8x32xf32>
    %cst_240 = arith.constant dense<0.000000e+00> : vector<8xf32>
    %468 = vector.multi_reduction <add>, %467, %cst_240 [1] : vector<8x32xf32> to vector<8xf32>
    %469 = vector.shape_cast %468 : vector<8xf32> to vector<8x1xf32>
    %cst_241 = arith.constant 3.200000e+01 : f32
    %470 = vector.broadcast %cst_241 : f32 to vector<8x1xf32>
    %471 = arith.divf %469, %470 : vector<8x1xf32>
    %472 = vector.broadcast %464 : vector<8x1xf32> to vector<8x32xf32>
    %473 = arith.subf %460, %472 : vector<8x32xf32>
    %cst_242 = arith.constant 9.99999974E-6 : f32
    %474 = vector.broadcast %cst_242 : f32 to vector<8x1xf32>
    %475 = arith.addf %471, %474 : vector<8x1xf32>
    %476 = math.rsqrt %475 : vector<8x1xf32>
    %477 = vector.broadcast %476 : vector<8x1xf32> to vector<8x32xf32>
    %478 = arith.mulf %473, %477 : vector<8x32xf32>
    %479 = vector.broadcast %449 : vector<1x32xf32> to vector<8x32xf32>
    %480 = arith.mulf %478, %479 : vector<8x32xf32>
    %481 = vector.broadcast %451 : vector<1x32xf32> to vector<8x32xf32>
    %482 = arith.addf %480, %481 : vector<8x32xf32>
    %c1_243 = arith.constant 1 : index
    %c0_244 = arith.constant 0 : index
    %c0_245 = arith.constant 0 : index
    %483 = vector.load %arg17[%c1_243, %c0_244, %c0_245] : memref<2x32x96xf32, #tpu.memory_space<vmem>>, vector<1x32x96xf32>
    %484 = vector.shape_cast %483 : vector<1x32x96xf32> to vector<32x96xf32>
    %c1_246 = arith.constant 1 : index
    %c0_247 = arith.constant 0 : index
    %c0_248 = arith.constant 0 : index
    %485 = vector.load %arg18[%c1_246, %c0_247, %c0_248] : memref<2x64x32xf32, #tpu.memory_space<vmem>>, vector<1x64x32xf32>
    %486 = vector.shape_cast %485 : vector<1x64x32xf32> to vector<64x32xf32>
    %c1_249 = arith.constant 1 : index
    %c0_250 = arith.constant 0 : index
    %c0_251 = arith.constant 0 : index
    %487 = vector.load %arg19[%c1_249, %c0_250, %c0_251] : memref<2x1x32xf32, #tpu.memory_space<vmem>>, vector<1x1x32xf32>
    %488 = vector.shape_cast %487 : vector<1x1x32xf32> to vector<1x32xf32>
    %c1_252 = arith.constant 1 : index
    %c0_253 = arith.constant 0 : index
    %c0_254 = arith.constant 0 : index
    %489 = vector.load %arg20[%c1_252, %c0_253, %c0_254] : memref<2x1x32xf32, #tpu.memory_space<vmem>>, vector<1x1x32xf32>
    %490 = vector.shape_cast %489 : vector<1x1x32xf32> to vector<1x32xf32>
    %c1_255 = arith.constant 1 : index
    %c0_256 = arith.constant 0 : index
    %c0_257 = arith.constant 0 : index
    %491 = vector.load %arg21[%c1_255, %c0_256, %c0_257] : memref<2x1x32xf32, #tpu.memory_space<vmem>>, vector<1x1x32xf32>
    %492 = vector.shape_cast %491 : vector<1x1x32xf32> to vector<1x32xf32>
    %cst_258 = arith.constant dense<0.000000e+00> : vector<8x96xf32>
    %493 = tpu.matmul %482, %484, %cst_258 {dimension_numbers = #tpu.dot_dimension_numbers<[1], [0], [0], [1], [0, 0, 1, 1], [], []>} : vector<8x32xf32>, vector<32x96xf32>, vector<8x96xf32> -> vector<8x96xf32>
    %494 = vector.extract_strided_slice %493 {offsets = [0, 0], sizes = [8, 32], strides = [1, 1]} : vector<8x96xf32> to vector<8x32xf32>
    %495 = vector.extract_strided_slice %493 {offsets = [0, 32], sizes = [8, 32], strides = [1, 1]} : vector<8x96xf32> to vector<8x32xf32>
    %496 = vector.extract_strided_slice %493 {offsets = [0, 64], sizes = [8, 32], strides = [1, 1]} : vector<8x96xf32> to vector<8x32xf32>
    %497 = vector.extract_strided_slice %494 {offsets = [0, 0], sizes = [8, 8], strides = [1, 1]} : vector<8x32xf32> to vector<8x8xf32>
    %498 = vector.extract_strided_slice %495 {offsets = [0, 0], sizes = [8, 8], strides = [1, 1]} : vector<8x32xf32> to vector<8x8xf32>
    %cst_259 = arith.constant dense<0.000000e+00> : vector<8x8xf32>
    %499 = tpu.matmul %497, %498, %cst_259 {dimension_numbers = #tpu.dot_dimension_numbers<[1], [1], [0], [0], [0, 0, 1, 0], [], []>} : vector<8x8xf32>, vector<8x8xf32>, vector<8x8xf32> -> vector<8x8xf32>
    %500 = vector.extract_strided_slice %494 {offsets = [0, 8], sizes = [8, 8], strides = [1, 1]} : vector<8x32xf32> to vector<8x8xf32>
    %501 = vector.extract_strided_slice %495 {offsets = [0, 8], sizes = [8, 8], strides = [1, 1]} : vector<8x32xf32> to vector<8x8xf32>
    %cst_260 = arith.constant dense<0.000000e+00> : vector<8x8xf32>
    %502 = tpu.matmul %500, %501, %cst_260 {dimension_numbers = #tpu.dot_dimension_numbers<[1], [1], [0], [0], [0, 0, 1, 0], [], []>} : vector<8x8xf32>, vector<8x8xf32>, vector<8x8xf32> -> vector<8x8xf32>
    %503 = vector.extract_strided_slice %494 {offsets = [0, 16], sizes = [8, 8], strides = [1, 1]} : vector<8x32xf32> to vector<8x8xf32>
    %504 = vector.extract_strided_slice %495 {offsets = [0, 16], sizes = [8, 8], strides = [1, 1]} : vector<8x32xf32> to vector<8x8xf32>
    %cst_261 = arith.constant dense<0.000000e+00> : vector<8x8xf32>
    %505 = tpu.matmul %503, %504, %cst_261 {dimension_numbers = #tpu.dot_dimension_numbers<[1], [1], [0], [0], [0, 0, 1, 0], [], []>} : vector<8x8xf32>, vector<8x8xf32>, vector<8x8xf32> -> vector<8x8xf32>
    %506 = vector.extract_strided_slice %494 {offsets = [0, 24], sizes = [8, 8], strides = [1, 1]} : vector<8x32xf32> to vector<8x8xf32>
    %507 = vector.extract_strided_slice %495 {offsets = [0, 24], sizes = [8, 8], strides = [1, 1]} : vector<8x32xf32> to vector<8x8xf32>
    %cst_262 = arith.constant dense<0.000000e+00> : vector<8x8xf32>
    %508 = tpu.matmul %506, %507, %cst_262 {dimension_numbers = #tpu.dot_dimension_numbers<[1], [1], [0], [0], [0, 0, 1, 0], [], []>} : vector<8x8xf32>, vector<8x8xf32>, vector<8x8xf32> -> vector<8x8xf32>
    %509 = tpu.concatenate %499, %502, %505, %508 in 0 : vector<8x8xf32>, vector<8x8xf32>, vector<8x8xf32>, vector<8x8xf32> -> vector<32x8xf32>
    %cst_263 = arith.constant 0.353553385 : f32
    %510 = vector.broadcast %cst_263 : f32 to vector<32x8xf32>
    %511 = arith.mulf %509, %510 : vector<32x8xf32>
    %512 = arith.addf %511, %270 : vector<32x8xf32>
    %cst_264 = arith.constant dense<0xFF800000> : vector<32xf32>
    %513 = vector.multi_reduction <maximumf>, %512, %cst_264 [1] : vector<32x8xf32> to vector<32xf32>
    %514 = vector.shape_cast %513 : vector<32xf32> to vector<32x1xf32>
    %515 = vector.broadcast %514 : vector<32x1xf32> to vector<32x8xf32>
    %516 = arith.subf %512, %515 : vector<32x8xf32>
    %517 = math.exp %516 : vector<32x8xf32>
    %cst_265 = arith.constant dense<0.000000e+00> : vector<32xf32>
    %518 = vector.multi_reduction <add>, %517, %cst_265 [1] : vector<32x8xf32> to vector<32xf32>
    %519 = vector.shape_cast %518 : vector<32xf32> to vector<32x1xf32>
    %520 = tpu.reciprocal %519 {approx = true} : vector<32x1xf32> -> vector<32x1xf32>
    %521 = vector.broadcast %520 : vector<32x1xf32> to vector<32x8xf32>
    %522 = arith.mulf %517, %521 : vector<32x8xf32>
    %523 = vector.extract_strided_slice %522 {offsets = [0, 0], sizes = [8, 8], strides = [1, 1]} : vector<32x8xf32> to vector<8x8xf32>
    %524 = vector.extract_strided_slice %496 {offsets = [0, 0], sizes = [8, 8], strides = [1, 1]} : vector<8x32xf32> to vector<8x8xf32>
    %cst_266 = arith.constant dense<0.000000e+00> : vector<8x8xf32>
    %525 = tpu.matmul %523, %524, %cst_266 {dimension_numbers = #tpu.dot_dimension_numbers<[1], [0], [0], [1], [0, 0, 1, 1], [], []>} : vector<8x8xf32>, vector<8x8xf32>, vector<8x8xf32> -> vector<8x8xf32>
    %526 = vector.extract_strided_slice %522 {offsets = [8, 0], sizes = [8, 8], strides = [1, 1]} : vector<32x8xf32> to vector<8x8xf32>
    %527 = vector.extract_strided_slice %496 {offsets = [0, 8], sizes = [8, 8], strides = [1, 1]} : vector<8x32xf32> to vector<8x8xf32>
    %cst_267 = arith.constant dense<0.000000e+00> : vector<8x8xf32>
    %528 = tpu.matmul %526, %527, %cst_267 {dimension_numbers = #tpu.dot_dimension_numbers<[1], [0], [0], [1], [0, 0, 1, 1], [], []>} : vector<8x8xf32>, vector<8x8xf32>, vector<8x8xf32> -> vector<8x8xf32>
    %529 = vector.extract_strided_slice %522 {offsets = [16, 0], sizes = [8, 8], strides = [1, 1]} : vector<32x8xf32> to vector<8x8xf32>
    %530 = vector.extract_strided_slice %496 {offsets = [0, 16], sizes = [8, 8], strides = [1, 1]} : vector<8x32xf32> to vector<8x8xf32>
    %cst_268 = arith.constant dense<0.000000e+00> : vector<8x8xf32>
    %531 = tpu.matmul %529, %530, %cst_268 {dimension_numbers = #tpu.dot_dimension_numbers<[1], [0], [0], [1], [0, 0, 1, 1], [], []>} : vector<8x8xf32>, vector<8x8xf32>, vector<8x8xf32> -> vector<8x8xf32>
    %532 = vector.extract_strided_slice %522 {offsets = [24, 0], sizes = [8, 8], strides = [1, 1]} : vector<32x8xf32> to vector<8x8xf32>
    %533 = vector.extract_strided_slice %496 {offsets = [0, 24], sizes = [8, 8], strides = [1, 1]} : vector<8x32xf32> to vector<8x8xf32>
    %cst_269 = arith.constant dense<0.000000e+00> : vector<8x8xf32>
    %534 = tpu.matmul %532, %533, %cst_269 {dimension_numbers = #tpu.dot_dimension_numbers<[1], [0], [0], [1], [0, 0, 1, 1], [], []>} : vector<8x8xf32>, vector<8x8xf32>, vector<8x8xf32> -> vector<8x8xf32>
    %535 = tpu.concatenate %525, %528, %531, %534 in 1 : vector<8x8xf32>, vector<8x8xf32>, vector<8x8xf32>, vector<8x8xf32> -> vector<8x32xf32>
    %536 = tpu.concatenate %523, %526, %529, %532 in 1 : vector<8x8xf32>, vector<8x8xf32>, vector<8x8xf32>, vector<8x8xf32> -> vector<8x32xf32>
    %537 = tpu.concatenate %482, %535 in 1 : vector<8x32xf32>, vector<8x32xf32> -> vector<8x64xf32>
    %cst_270 = arith.constant dense<0.000000e+00> : vector<8x32xf32>
    %538 = tpu.matmul %537, %486, %cst_270 {dimension_numbers = #tpu.dot_dimension_numbers<[1], [0], [0], [1], [0, 0, 1, 1], [], []>} : vector<8x64xf32>, vector<64x32xf32>, vector<8x32xf32> -> vector<8x32xf32>
    %539 = vector.broadcast %488 : vector<1x32xf32> to vector<8x32xf32>
    %540 = arith.addf %538, %539 : vector<8x32xf32>
    %541 = arith.addf %540, %482 : vector<8x32xf32>
    %cst_271 = arith.constant dense<0.000000e+00> : vector<8xf32>
    %542 = vector.multi_reduction <add>, %541, %cst_271 [1] : vector<8x32xf32> to vector<8xf32>
    %543 = vector.shape_cast %542 : vector<8xf32> to vector<8x1xf32>
    %cst_272 = arith.constant 3.200000e+01 : f32
    %544 = vector.broadcast %cst_272 : f32 to vector<8x1xf32>
    %545 = arith.divf %543, %544 : vector<8x1xf32>
    %546 = vector.broadcast %545 : vector<8x1xf32> to vector<8x32xf32>
    %547 = arith.subf %541, %546 : vector<8x32xf32>
    %548 = arith.mulf %547, %547 : vector<8x32xf32>
    %cst_273 = arith.constant dense<0.000000e+00> : vector<8xf32>
    %549 = vector.multi_reduction <add>, %548, %cst_273 [1] : vector<8x32xf32> to vector<8xf32>
    %550 = vector.shape_cast %549 : vector<8xf32> to vector<8x1xf32>
    %cst_274 = arith.constant 3.200000e+01 : f32
    %551 = vector.broadcast %cst_274 : f32 to vector<8x1xf32>
    %552 = arith.divf %550, %551 : vector<8x1xf32>
    %553 = vector.broadcast %545 : vector<8x1xf32> to vector<8x32xf32>
    %554 = arith.subf %541, %553 : vector<8x32xf32>
    %cst_275 = arith.constant 9.99999974E-6 : f32
    %555 = vector.broadcast %cst_275 : f32 to vector<8x1xf32>
    %556 = arith.addf %552, %555 : vector<8x1xf32>
    %557 = math.rsqrt %556 : vector<8x1xf32>
    %558 = vector.broadcast %557 : vector<8x1xf32> to vector<8x32xf32>
    %559 = arith.mulf %554, %558 : vector<8x32xf32>
    %560 = vector.broadcast %490 : vector<1x32xf32> to vector<8x32xf32>
    %561 = arith.mulf %559, %560 : vector<8x32xf32>
    %562 = vector.broadcast %492 : vector<1x32xf32> to vector<8x32xf32>
    %563 = arith.addf %561, %562 : vector<8x32xf32>
    %c1_276 = arith.constant 1 : index
    %c0_277 = arith.constant 0 : index
    %c0_278 = arith.constant 0 : index
    %c0_279 = arith.constant 0 : index
    %564 = vector.load %arg38[%c1_276, %c0_277, %c0_278, %c0_279] : memref<2x1x8x32xf32, #tpu.memory_space<vmem>>, vector<1x1x8x32xf32>
    %565 = vector.shape_cast %564 : vector<1x1x8x32xf32> to vector<8x32xf32>
    %566 = vector.shape_cast %536 : vector<8x32xf32> to vector<1x1x8x32xf32>
    tpu.vector_store %arg38[%c1_276, %c0_277, %c0_278, %c0_279], %566 {strides = array<i32>} : memref<2x1x8x32xf32, #tpu.memory_space<vmem>>, vector<1x1x8x32xf32>,
    %c1_280 = arith.constant 1 : index
    %c0_281 = arith.constant 0 : index
    %c0_282 = arith.constant 0 : index
    %567 = vector.load %arg22[%c1_280, %c0_281, %c0_282] : memref<2x32x32xf32, #tpu.memory_space<vmem>>, vector<1x32x32xf32>
    %568 = vector.shape_cast %567 : vector<1x32x32xf32> to vector<32x32xf32>
    %c1_283 = arith.constant 1 : index
    %c0_284 = arith.constant 0 : index
    %c0_285 = arith.constant 0 : index
    %569 = vector.load %arg23[%c1_283, %c0_284, %c0_285] : memref<2x32x64xf32, #tpu.memory_space<vmem>>, vector<1x32x64xf32>
    %570 = vector.shape_cast %569 : vector<1x32x64xf32> to vector<32x64xf32>
    %c1_286 = arith.constant 1 : index
    %c0_287 = arith.constant 0 : index
    %c0_288 = arith.constant 0 : index
    %571 = vector.load %arg24[%c1_286, %c0_287, %c0_288] : memref<2x64x32xf32, #tpu.memory_space<vmem>>, vector<1x64x32xf32>
    %572 = vector.shape_cast %571 : vector<1x64x32xf32> to vector<64x32xf32>
    %c1_289 = arith.constant 1 : index
    %c0_290 = arith.constant 0 : index
    %c0_291 = arith.constant 0 : index
    %573 = vector.load %arg25[%c1_289, %c0_290, %c0_291] : memref<2x1x32xf32, #tpu.memory_space<vmem>>, vector<1x1x32xf32>
    %574 = vector.shape_cast %573 : vector<1x1x32xf32> to vector<1x32xf32>
    %c1_292 = arith.constant 1 : index
    %c0_293 = arith.constant 0 : index
    %c0_294 = arith.constant 0 : index
    %575 = vector.load %arg26[%c1_292, %c0_293, %c0_294] : memref<2x1x32xf32, #tpu.memory_space<vmem>>, vector<1x1x32xf32>
    %576 = vector.shape_cast %575 : vector<1x1x32xf32> to vector<1x32xf32>
    %c1_295 = arith.constant 1 : index
    %c0_296 = arith.constant 0 : index
    %c0_297 = arith.constant 0 : index
    %577 = vector.load %arg27[%c1_295, %c0_296, %c0_297] : memref<2x1x32xf32, #tpu.memory_space<vmem>>, vector<1x1x32xf32>
    %578 = vector.shape_cast %577 : vector<1x1x32xf32> to vector<1x32xf32>
    %cst_298 = arith.constant dense<0.000000e+00> : vector<8x32xf32>
    %579 = tpu.matmul %563, %568, %cst_298 {dimension_numbers = #tpu.dot_dimension_numbers<[1], [0], [0], [1], [0, 0, 1, 1], [], []>} : vector<8x32xf32>, vector<32x32xf32>, vector<8x32xf32> -> vector<8x32xf32>
    %cst_299 = arith.constant dense<0.000000e+00> : vector<8x64xf32>
    %580 = tpu.matmul %253, %570, %cst_299 {dimension_numbers = #tpu.dot_dimension_numbers<[1], [0], [0], [1], [0, 0, 1, 1], [], []>} : vector<8x32xf32>, vector<32x64xf32>, vector<8x64xf32> -> vector<8x64xf32>
    %581 = vector.extract_strided_slice %580 {offsets = [0, 0], sizes = [8, 32], strides = [1, 1]} : vector<8x64xf32> to vector<8x32xf32>
    %582 = vector.extract_strided_slice %580 {offsets = [0, 32], sizes = [8, 32], strides = [1, 1]} : vector<8x64xf32> to vector<8x32xf32>
    %583 = vector.extract_strided_slice %579 {offsets = [0, 0], sizes = [8, 8], strides = [1, 1]} : vector<8x32xf32> to vector<8x8xf32>
    %584 = vector.extract_strided_slice %581 {offsets = [0, 0], sizes = [8, 8], strides = [1, 1]} : vector<8x32xf32> to vector<8x8xf32>
    %cst_300 = arith.constant dense<0.000000e+00> : vector<8x8xf32>
    %585 = tpu.matmul %583, %584, %cst_300 {dimension_numbers = #tpu.dot_dimension_numbers<[1], [1], [0], [0], [0, 0, 1, 0], [], []>} : vector<8x8xf32>, vector<8x8xf32>, vector<8x8xf32> -> vector<8x8xf32>
    %586 = vector.extract_strided_slice %579 {offsets = [0, 8], sizes = [8, 8], strides = [1, 1]} : vector<8x32xf32> to vector<8x8xf32>
    %587 = vector.extract_strided_slice %581 {offsets = [0, 8], sizes = [8, 8], strides = [1, 1]} : vector<8x32xf32> to vector<8x8xf32>
    %cst_301 = arith.constant dense<0.000000e+00> : vector<8x8xf32>
    %588 = tpu.matmul %586, %587, %cst_301 {dimension_numbers = #tpu.dot_dimension_numbers<[1], [1], [0], [0], [0, 0, 1, 0], [], []>} : vector<8x8xf32>, vector<8x8xf32>, vector<8x8xf32> -> vector<8x8xf32>
    %589 = vector.extract_strided_slice %579 {offsets = [0, 16], sizes = [8, 8], strides = [1, 1]} : vector<8x32xf32> to vector<8x8xf32>
    %590 = vector.extract_strided_slice %581 {offsets = [0, 16], sizes = [8, 8], strides = [1, 1]} : vector<8x32xf32> to vector<8x8xf32>
    %cst_302 = arith.constant dense<0.000000e+00> : vector<8x8xf32>
    %591 = tpu.matmul %589, %590, %cst_302 {dimension_numbers = #tpu.dot_dimension_numbers<[1], [1], [0], [0], [0, 0, 1, 0], [], []>} : vector<8x8xf32>, vector<8x8xf32>, vector<8x8xf32> -> vector<8x8xf32>
    %592 = vector.extract_strided_slice %579 {offsets = [0, 24], sizes = [8, 8], strides = [1, 1]} : vector<8x32xf32> to vector<8x8xf32>
    %593 = vector.extract_strided_slice %581 {offsets = [0, 24], sizes = [8, 8], strides = [1, 1]} : vector<8x32xf32> to vector<8x8xf32>
    %cst_303 = arith.constant dense<0.000000e+00> : vector<8x8xf32>
    %594 = tpu.matmul %592, %593, %cst_303 {dimension_numbers = #tpu.dot_dimension_numbers<[1], [1], [0], [0], [0, 0, 1, 0], [], []>} : vector<8x8xf32>, vector<8x8xf32>, vector<8x8xf32> -> vector<8x8xf32>
    %595 = tpu.concatenate %585, %588, %591, %594 in 0 : vector<8x8xf32>, vector<8x8xf32>, vector<8x8xf32>, vector<8x8xf32> -> vector<32x8xf32>
    %cst_304 = arith.constant 0.353553385 : f32
    %596 = vector.broadcast %cst_304 : f32 to vector<32x8xf32>
    %597 = arith.mulf %595, %596 : vector<32x8xf32>
    %cst_305 = arith.constant dense<0xFF800000> : vector<32xf32>
    %598 = vector.multi_reduction <maximumf>, %597, %cst_305 [1] : vector<32x8xf32> to vector<32xf32>
    %599 = vector.shape_cast %598 : vector<32xf32> to vector<32x1xf32>
    %600 = vector.broadcast %599 : vector<32x1xf32> to vector<32x8xf32>
    %601 = arith.subf %597, %600 : vector<32x8xf32>
    %602 = math.exp %601 : vector<32x8xf32>
    %cst_306 = arith.constant dense<0.000000e+00> : vector<32xf32>
    %603 = vector.multi_reduction <add>, %602, %cst_306 [1] : vector<32x8xf32> to vector<32xf32>
    %604 = vector.shape_cast %603 : vector<32xf32> to vector<32x1xf32>
    %605 = tpu.reciprocal %604 {approx = true} : vector<32x1xf32> -> vector<32x1xf32>
    %606 = vector.broadcast %605 : vector<32x1xf32> to vector<32x8xf32>
    %607 = arith.mulf %602, %606 : vector<32x8xf32>
    %608 = vector.extract_strided_slice %607 {offsets = [0, 0], sizes = [8, 8], strides = [1, 1]} : vector<32x8xf32> to vector<8x8xf32>
    %609 = vector.extract_strided_slice %582 {offsets = [0, 0], sizes = [8, 8], strides = [1, 1]} : vector<8x32xf32> to vector<8x8xf32>
    %cst_307 = arith.constant dense<0.000000e+00> : vector<8x8xf32>
    %610 = tpu.matmul %608, %609, %cst_307 {dimension_numbers = #tpu.dot_dimension_numbers<[1], [0], [0], [1], [0, 0, 1, 1], [], []>} : vector<8x8xf32>, vector<8x8xf32>, vector<8x8xf32> -> vector<8x8xf32>
    %611 = vector.extract_strided_slice %607 {offsets = [8, 0], sizes = [8, 8], strides = [1, 1]} : vector<32x8xf32> to vector<8x8xf32>
    %612 = vector.extract_strided_slice %582 {offsets = [0, 8], sizes = [8, 8], strides = [1, 1]} : vector<8x32xf32> to vector<8x8xf32>
    %cst_308 = arith.constant dense<0.000000e+00> : vector<8x8xf32>
    %613 = tpu.matmul %611, %612, %cst_308 {dimension_numbers = #tpu.dot_dimension_numbers<[1], [0], [0], [1], [0, 0, 1, 1], [], []>} : vector<8x8xf32>, vector<8x8xf32>, vector<8x8xf32> -> vector<8x8xf32>
    %614 = vector.extract_strided_slice %607 {offsets = [16, 0], sizes = [8, 8], strides = [1, 1]} : vector<32x8xf32> to vector<8x8xf32>
    %615 = vector.extract_strided_slice %582 {offsets = [0, 16], sizes = [8, 8], strides = [1, 1]} : vector<8x32xf32> to vector<8x8xf32>
    %cst_309 = arith.constant dense<0.000000e+00> : vector<8x8xf32>
    %616 = tpu.matmul %614, %615, %cst_309 {dimension_numbers = #tpu.dot_dimension_numbers<[1], [0], [0], [1], [0, 0, 1, 1], [], []>} : vector<8x8xf32>, vector<8x8xf32>, vector<8x8xf32> -> vector<8x8xf32>
    %617 = vector.extract_strided_slice %607 {offsets = [24, 0], sizes = [8, 8], strides = [1, 1]} : vector<32x8xf32> to vector<8x8xf32>
    %618 = vector.extract_strided_slice %582 {offsets = [0, 24], sizes = [8, 8], strides = [1, 1]} : vector<8x32xf32> to vector<8x8xf32>
    %cst_310 = arith.constant dense<0.000000e+00> : vector<8x8xf32>
    %619 = tpu.matmul %617, %618, %cst_310 {dimension_numbers = #tpu.dot_dimension_numbers<[1], [0], [0], [1], [0, 0, 1, 1], [], []>} : vector<8x8xf32>, vector<8x8xf32>, vector<8x8xf32> -> vector<8x8xf32>
    %620 = tpu.concatenate %610, %613, %616, %619 in 1 : vector<8x8xf32>, vector<8x8xf32>, vector<8x8xf32>, vector<8x8xf32> -> vector<8x32xf32>
    %621 = tpu.concatenate %608, %611, %614, %617 in 1 : vector<8x8xf32>, vector<8x8xf32>, vector<8x8xf32>, vector<8x8xf32> -> vector<8x32xf32>
    %622 = tpu.concatenate %563, %620 in 1 : vector<8x32xf32>, vector<8x32xf32> -> vector<8x64xf32>
    %cst_311 = arith.constant dense<0.000000e+00> : vector<8x32xf32>
    %623 = tpu.matmul %622, %572, %cst_311 {dimension_numbers = #tpu.dot_dimension_numbers<[1], [0], [0], [1], [0, 0, 1, 1], [], []>} : vector<8x64xf32>, vector<64x32xf32>, vector<8x32xf32> -> vector<8x32xf32>
    %624 = vector.broadcast %574 : vector<1x32xf32> to vector<8x32xf32>
    %625 = arith.addf %623, %624 : vector<8x32xf32>
    %626 = arith.addf %625, %563 : vector<8x32xf32>
    %cst_312 = arith.constant dense<0.000000e+00> : vector<8xf32>
    %627 = vector.multi_reduction <add>, %626, %cst_312 [1] : vector<8x32xf32> to vector<8xf32>
    %628 = vector.shape_cast %627 : vector<8xf32> to vector<8x1xf32>
    %cst_313 = arith.constant 3.200000e+01 : f32
    %629 = vector.broadcast %cst_313 : f32 to vector<8x1xf32>
    %630 = arith.divf %628, %629 : vector<8x1xf32>
    %631 = vector.broadcast %630 : vector<8x1xf32> to vector<8x32xf32>
    %632 = arith.subf %626, %631 : vector<8x32xf32>
    %633 = arith.mulf %632, %632 : vector<8x32xf32>
    %cst_314 = arith.constant dense<0.000000e+00> : vector<8xf32>
    %634 = vector.multi_reduction <add>, %633, %cst_314 [1] : vector<8x32xf32> to vector<8xf32>
    %635 = vector.shape_cast %634 : vector<8xf32> to vector<8x1xf32>
    %cst_315 = arith.constant 3.200000e+01 : f32
    %636 = vector.broadcast %cst_315 : f32 to vector<8x1xf32>
    %637 = arith.divf %635, %636 : vector<8x1xf32>
    %638 = vector.broadcast %630 : vector<8x1xf32> to vector<8x32xf32>
    %639 = arith.subf %626, %638 : vector<8x32xf32>
    %cst_316 = arith.constant 9.99999974E-6 : f32
    %640 = vector.broadcast %cst_316 : f32 to vector<8x1xf32>
    %641 = arith.addf %637, %640 : vector<8x1xf32>
    %642 = math.rsqrt %641 : vector<8x1xf32>
    %643 = vector.broadcast %642 : vector<8x1xf32> to vector<8x32xf32>
    %644 = arith.mulf %639, %643 : vector<8x32xf32>
    %645 = vector.broadcast %576 : vector<1x32xf32> to vector<8x32xf32>
    %646 = arith.mulf %644, %645 : vector<8x32xf32>
    %647 = vector.broadcast %578 : vector<1x32xf32> to vector<8x32xf32>
    %648 = arith.addf %646, %647 : vector<8x32xf32>
    %c1_317 = arith.constant 1 : index
    %c0_318 = arith.constant 0 : index
    %c0_319 = arith.constant 0 : index
    %c0_320 = arith.constant 0 : index
    %649 = vector.load %arg39[%c1_317, %c0_318, %c0_319, %c0_320] : memref<2x1x8x32xf32, #tpu.memory_space<vmem>>, vector<1x1x8x32xf32>
    %650 = vector.shape_cast %649 : vector<1x1x8x32xf32> to vector<8x32xf32>
    %651 = vector.shape_cast %621 : vector<8x32xf32> to vector<1x1x8x32xf32>
    tpu.vector_store %arg39[%c1_317, %c0_318, %c0_319, %c0_320], %651 {strides = array<i32>} : memref<2x1x8x32xf32, #tpu.memory_space<vmem>>, vector<1x1x8x32xf32>,
    %c1_321 = arith.constant 1 : index
    %c0_322 = arith.constant 0 : index
    %c0_323 = arith.constant 0 : index
    %652 = vector.load %arg28[%c1_321, %c0_322, %c0_323] : memref<2x32x128xf32, #tpu.memory_space<vmem>>, vector<1x32x128xf32>
    %653 = vector.shape_cast %652 : vector<1x32x128xf32> to vector<32x128xf32>
    %c1_324 = arith.constant 1 : index
    %c0_325 = arith.constant 0 : index
    %c0_326 = arith.constant 0 : index
    %654 = vector.load %arg29[%c1_324, %c0_325, %c0_326] : memref<2x1x128xf32, #tpu.memory_space<vmem>>, vector<1x1x128xf32>
    %655 = vector.shape_cast %654 : vector<1x1x128xf32> to vector<1x128xf32>
    %c1_327 = arith.constant 1 : index
    %c0_328 = arith.constant 0 : index
    %c0_329 = arith.constant 0 : index
    %656 = vector.load %arg30[%c1_327, %c0_328, %c0_329] : memref<2x128x32xf32, #tpu.memory_space<vmem>>, vector<1x128x32xf32>
    %657 = vector.shape_cast %656 : vector<1x128x32xf32> to vector<128x32xf32>
    %c1_330 = arith.constant 1 : index
    %c0_331 = arith.constant 0 : index
    %c0_332 = arith.constant 0 : index
    %658 = vector.load %arg31[%c1_330, %c0_331, %c0_332] : memref<2x1x32xf32, #tpu.memory_space<vmem>>, vector<1x1x32xf32>
    %659 = vector.shape_cast %658 : vector<1x1x32xf32> to vector<1x32xf32>
    %c1_333 = arith.constant 1 : index
    %c0_334 = arith.constant 0 : index
    %c0_335 = arith.constant 0 : index
    %660 = vector.load %arg32[%c1_333, %c0_334, %c0_335] : memref<2x1x32xf32, #tpu.memory_space<vmem>>, vector<1x1x32xf32>
    %661 = vector.shape_cast %660 : vector<1x1x32xf32> to vector<1x32xf32>
    %c1_336 = arith.constant 1 : index
    %c0_337 = arith.constant 0 : index
    %c0_338 = arith.constant 0 : index
    %662 = vector.load %arg33[%c1_336, %c0_337, %c0_338] : memref<2x1x32xf32, #tpu.memory_space<vmem>>, vector<1x1x32xf32>
    %663 = vector.shape_cast %662 : vector<1x1x32xf32> to vector<1x32xf32>
    %cst_339 = arith.constant dense<0.000000e+00> : vector<8x128xf32>
    %664 = tpu.matmul %648, %653, %cst_339 {dimension_numbers = #tpu.dot_dimension_numbers<[1], [0], [0], [1], [0, 0, 1, 1], [], []>} : vector<8x32xf32>, vector<32x128xf32>, vector<8x128xf32> -> vector<8x128xf32>
    %665 = vector.broadcast %655 : vector<1x128xf32> to vector<8x128xf32>
    %666 = arith.addf %664, %665 : vector<8x128xf32>
    %cst_340 = arith.constant 0.000000e+00 : f32
    %667 = vector.broadcast %cst_340 : f32 to vector<8x128xf32>
    %668 = arith.maximumf %666, %667 : vector<8x128xf32>
    %cst_341 = arith.constant dense<0.000000e+00> : vector<8x32xf32>
    %669 = tpu.matmul %668, %657, %cst_341 {dimension_numbers = #tpu.dot_dimension_numbers<[1], [0], [0], [1], [0, 0, 1, 1], [], []>} : vector<8x128xf32>, vector<128x32xf32>, vector<8x32xf32> -> vector<8x32xf32>
    %670 = vector.broadcast %659 : vector<1x32xf32> to vector<8x32xf32>
    %671 = arith.addf %669, %670 : vector<8x32xf32>
    %672 = arith.addf %671, %648 : vector<8x32xf32>
    %cst_342 = arith.constant dense<0.000000e+00> : vector<8xf32>
    %673 = vector.multi_reduction <add>, %672, %cst_342 [1] : vector<8x32xf32> to vector<8xf32>
    %674 = vector.shape_cast %673 : vector<8xf32> to vector<8x1xf32>
    %cst_343 = arith.constant 3.200000e+01 : f32
    %675 = vector.broadcast %cst_343 : f32 to vector<8x1xf32>
    %676 = arith.divf %674, %675 : vector<8x1xf32>
    %677 = vector.broadcast %676 : vector<8x1xf32> to vector<8x32xf32>
    %678 = arith.subf %672, %677 : vector<8x32xf32>
    %679 = arith.mulf %678, %678 : vector<8x32xf32>
    %cst_344 = arith.constant dense<0.000000e+00> : vector<8xf32>
    %680 = vector.multi_reduction <add>, %679, %cst_344 [1] : vector<8x32xf32> to vector<8xf32>
    %681 = vector.shape_cast %680 : vector<8xf32> to vector<8x1xf32>
    %cst_345 = arith.constant 3.200000e+01 : f32
    %682 = vector.broadcast %cst_345 : f32 to vector<8x1xf32>
    %683 = arith.divf %681, %682 : vector<8x1xf32>
    %684 = vector.broadcast %676 : vector<8x1xf32> to vector<8x32xf32>
    %685 = arith.subf %672, %684 : vector<8x32xf32>
    %cst_346 = arith.constant 9.99999974E-6 : f32
    %686 = vector.broadcast %cst_346 : f32 to vector<8x1xf32>
    %687 = arith.addf %683, %686 : vector<8x1xf32>
    %688 = math.rsqrt %687 : vector<8x1xf32>
    %689 = vector.broadcast %688 : vector<8x1xf32> to vector<8x32xf32>
    %690 = arith.mulf %685, %689 : vector<8x32xf32>
    %691 = vector.broadcast %661 : vector<1x32xf32> to vector<8x32xf32>
    %692 = arith.mulf %690, %691 : vector<8x32xf32>
    %693 = vector.broadcast %663 : vector<1x32xf32> to vector<8x32xf32>
    %694 = arith.addf %692, %693 : vector<8x32xf32>
    %c0_347 = arith.constant 0 : index
    %c0_348 = arith.constant 0 : index
    %695 = vector.load %arg34[%c0_347, %c0_348] : memref<32x16xf32, #tpu.memory_space<vmem>>, vector<32x16xf32>
    %cst_349 = arith.constant dense<0.000000e+00> : vector<8x16xf32>
    %696 = tpu.matmul %694, %695, %cst_349 {dimension_numbers = #tpu.dot_dimension_numbers<[1], [0], [0], [1], [0, 0, 1, 1], [], []>} : vector<8x32xf32>, vector<32x16xf32>, vector<8x16xf32> -> vector<8x16xf32>
    %c0_350 = arith.constant 0 : index
    %c0_351 = arith.constant 0 : index
    %697 = vector.load %arg35[%c0_350, %c0_351] : memref<1x16xf32, #tpu.memory_space<vmem>>, vector<1x16xf32>
    %698 = vector.broadcast %697 : vector<1x16xf32> to vector<8x16xf32>
    %699 = arith.addf %696, %698 : vector<8x16xf32>
    %c0_352 = arith.constant 0 : index
    %c0_353 = arith.constant 0 : index
    %c0_354 = arith.constant 0 : index
    %700 = vector.load %arg36[%c0_352, %c0_353, %c0_354] : memref<1x8x16xf32, #tpu.memory_space<vmem>>, vector<1x8x16xf32>
    %701 = vector.shape_cast %700 : vector<1x8x16xf32> to vector<8x16xf32>
    %702 = vector.shape_cast %699 : vector<8x16xf32> to vector<1x8x16xf32>
    tpu.vector_store %arg36[%c0_352, %c0_353, %c0_354], %702 {strides = array<i32>} : memref<1x8x16xf32, #tpu.memory_space<vmem>>, vector<1x8x16xf32>,
    return
  }
  func.func @transform_0(%arg0: i32) -> (i32, i32, i32) {
    %c0_i32 = arith.constant 0 : i32
    %c0_i32_0 = arith.constant 0 : i32
    %c0_i32_1 = arith.constant 0 : i32
    return %arg0, %c0_i32, %c0_i32_0 : i32, i32, i32
  }
  func.func @transform_1(%arg0: i32) -> (i32, i32, i32) {
    %c0_i32 = arith.constant 0 : i32
    %c0_i32_0 = arith.constant 0 : i32
    %c0_i32_1 = arith.constant 0 : i32
    return %arg0, %c0_i32, %c0_i32_0 : i32, i32, i32
  }
  func.func @transform_2(%arg0: i32) -> (i32, i32, i32) {
    %c0_i32 = arith.constant 0 : i32
    %c0_i32_0 = arith.constant 0 : i32
    %c0_i32_1 = arith.constant 0 : i32
    return %arg0, %c0_i32, %c0_i32_0 : i32, i32, i32
  }
  func.func @transform_3(%arg0: i32) -> (i32, i32, i32) {
    %c0_i32 = arith.constant 0 : i32
    %c0_i32_0 = arith.constant 0 : i32
    %c0_i32_1 = arith.constant 0 : i32
    %c0_i32_2 = arith.constant 0 : i32
    return %c0_i32, %c0_i32_0, %c0_i32_1 : i32, i32, i32
  }
  func.func @transform_4(%arg0: i32) -> (i32, i32, i32) {
    %c0_i32 = arith.constant 0 : i32
    %c0_i32_0 = arith.constant 0 : i32
    %c0_i32_1 = arith.constant 0 : i32
    %c0_i32_2 = arith.constant 0 : i32
    return %c0_i32, %c0_i32_0, %c0_i32_1 : i32, i32, i32
  }
  func.func @transform_5(%arg0: i32) -> (i32, i32, i32) {
    %c0_i32 = arith.constant 0 : i32
    %c0_i32_0 = arith.constant 0 : i32
    %c0_i32_1 = arith.constant 0 : i32
    %c0_i32_2 = arith.constant 0 : i32
    return %c0_i32, %c0_i32_0, %c0_i32_1 : i32, i32, i32
  }
  func.func @transform_6(%arg0: i32) -> (i32, i32, i32) {
    %c0_i32 = arith.constant 0 : i32
    %c0_i32_0 = arith.constant 0 : i32
    %c0_i32_1 = arith.constant 0 : i32
    %c0_i32_2 = arith.constant 0 : i32
    return %c0_i32, %c0_i32_0, %c0_i32_1 : i32, i32, i32
  }
  func.func @transform_7(%arg0: i32) -> (i32, i32, i32) {
    %c0_i32 = arith.constant 0 : i32
    %c0_i32_0 = arith.constant 0 : i32
    %c0_i32_1 = arith.constant 0 : i32
    %c0_i32_2 = arith.constant 0 : i32
    return %c0_i32, %c0_i32_0, %c0_i32_1 : i32, i32, i32
  }
  func.func @transform_8(%arg0: i32) -> (i32, i32, i32) {
    %c0_i32 = arith.constant 0 : i32
    %c0_i32_0 = arith.constant 0 : i32
    %c0_i32_1 = arith.constant 0 : i32
    %c0_i32_2 = arith.constant 0 : i32
    return %c0_i32, %c0_i32_0, %c0_i32_1 : i32, i32, i32
  }
  func.func @transform_9(%arg0: i32) -> (i32, i32, i32) {
    %c0_i32 = arith.constant 0 : i32
    %c0_i32_0 = arith.constant 0 : i32
    %c0_i32_1 = arith.constant 0 : i32
    %c0_i32_2 = arith.constant 0 : i32
    return %c0_i32, %c0_i32_0, %c0_i32_1 : i32, i32, i32
  }
  func.func @transform_10(%arg0: i32) -> (i32, i32, i32) {
    %c0_i32 = arith.constant 0 : i32
    %c0_i32_0 = arith.constant 0 : i32
    %c0_i32_1 = arith.constant 0 : i32
    %c0_i32_2 = arith.constant 0 : i32
    return %c0_i32, %c0_i32_0, %c0_i32_1 : i32, i32, i32
  }
  func.func @transform_11(%arg0: i32) -> (i32, i32, i32) {
    %c0_i32 = arith.constant 0 : i32
    %c0_i32_0 = arith.constant 0 : i32
    %c0_i32_1 = arith.constant 0 : i32
    %c0_i32_2 = arith.constant 0 : i32
    return %c0_i32, %c0_i32_0, %c0_i32_1 : i32, i32, i32
  }
  func.func @transform_12(%arg0: i32) -> (i32, i32, i32) {
    %c0_i32 = arith.constant 0 : i32
    %c0_i32_0 = arith.constant 0 : i32
    %c0_i32_1 = arith.constant 0 : i32
    %c0_i32_2 = arith.constant 0 : i32
    return %c0_i32, %c0_i32_0, %c0_i32_1 : i32, i32, i32
  }
  func.func @transform_13(%arg0: i32) -> (i32, i32, i32) {
    %c0_i32 = arith.constant 0 : i32
    %c0_i32_0 = arith.constant 0 : i32
    %c0_i32_1 = arith.constant 0 : i32
    %c0_i32_2 = arith.constant 0 : i32
    return %c0_i32, %c0_i32_0, %c0_i32_1 : i32, i32, i32
  }
  func.func @transform_14(%arg0: i32) -> (i32, i32) {
    %c0_i32 = arith.constant 0 : i32
    %c0_i32_0 = arith.constant 0 : i32
    %c0_i32_1 = arith.constant 0 : i32
    return %c0_i32, %c0_i32_0 : i32, i32
  }
  func.func @transform_15(%arg0: i32) -> (i32, i32) {
    %c0_i32 = arith.constant 0 : i32
    %c0_i32_0 = arith.constant 0 : i32
    %c0_i32_1 = arith.constant 0 : i32
    return %c0_i32, %c0_i32_0 : i32, i32
  }
  func.func @transform_16(%arg0: i32) -> (i32, i32, i32) {
    %c0_i32 = arith.constant 0 : i32
    %c0_i32_0 = arith.constant 0 : i32
    %c0_i32_1 = arith.constant 0 : i32
    %c0_i32_2 = arith.constant 0 : i32
    return %c0_i32, %c0_i32_0, %c0_i32_1 : i32, i32, i32
  }
  func.func @transform_17(%arg0: i32) -> (i32, i32, i32) {
    %c0_i32 = arith.constant 0 : i32
    %c0_i32_0 = arith.constant 0 : i32
    %c0_i32_1 = arith.constant 0 : i32
    %c0_i32_2 = arith.constant 0 : i32
    return %c0_i32, %c0_i32_0, %c0_i32_1 : i32, i32, i32
  }
  func.func @transform_18(%arg0: i32) -> (i32, i32, i32) {
    %c0_i32 = arith.constant 0 : i32
    %c0_i32_0 = arith.constant 0 : i32
    %c0_i32_1 = arith.constant 0 : i32
    %c0_i32_2 = arith.constant 0 : i32
    return %c0_i32, %c0_i32_0, %c0_i32_1 : i32, i32, i32
  }
  func.func @transform_19(%arg0: i32) -> (i32, i32, i32) {
    %c0_i32 = arith.constant 0 : i32
    %c0_i32_0 = arith.constant 0 : i32
    %c0_i32_1 = arith.constant 0 : i32
    %c0_i32_2 = arith.constant 0 : i32
    return %c0_i32, %c0_i32_0, %c0_i32_1 : i32, i32, i32
  }
  func.func @transform_20(%arg0: i32) -> (i32, i32, i32) {
    %c0_i32 = arith.constant 0 : i32
    %c0_i32_0 = arith.constant 0 : i32
    %c0_i32_1 = arith.constant 0 : i32
    %c0_i32_2 = arith.constant 0 : i32
    return %c0_i32, %c0_i32_0, %c0_i32_1 : i32, i32, i32
  }
  func.func @transform_21(%arg0: i32) -> (i32, i32, i32) {
    %c0_i32 = arith.constant 0 : i32
    %c0_i32_0 = arith.constant 0 : i32
    %c0_i32_1 = arith.constant 0 : i32
    %c0_i32_2 = arith.constant 0 : i32
    return %c0_i32, %c0_i32_0, %c0_i32_1 : i32, i32, i32
  }
  func.func @transform_22(%arg0: i32) -> (i32, i32, i32) {
    %c0_i32 = arith.constant 0 : i32
    %c0_i32_0 = arith.constant 0 : i32
    %c0_i32_1 = arith.constant 0 : i32
    %c0_i32_2 = arith.constant 0 : i32
    return %c0_i32, %c0_i32_0, %c0_i32_1 : i32, i32, i32
  }
  func.func @transform_23(%arg0: i32) -> (i32, i32, i32) {
    %c0_i32 = arith.constant 0 : i32
    %c0_i32_0 = arith.constant 0 : i32
    %c0_i32_1 = arith.constant 0 : i32
    %c0_i32_2 = arith.constant 0 : i32
    return %c0_i32, %c0_i32_0, %c0_i32_1 : i32, i32, i32
  }
  func.func @transform_24(%arg0: i32) -> (i32, i32, i32) {
    %c0_i32 = arith.constant 0 : i32
    %c0_i32_0 = arith.constant 0 : i32
    %c0_i32_1 = arith.constant 0 : i32
    %c0_i32_2 = arith.constant 0 : i32
    return %c0_i32, %c0_i32_0, %c0_i32_1 : i32, i32, i32
  }
  func.func @transform_25(%arg0: i32) -> (i32, i32, i32) {
    %c0_i32 = arith.constant 0 : i32
    %c0_i32_0 = arith.constant 0 : i32
    %c0_i32_1 = arith.constant 0 : i32
    %c0_i32_2 = arith.constant 0 : i32
    return %c0_i32, %c0_i32_0, %c0_i32_1 : i32, i32, i32
  }
  func.func @transform_26(%arg0: i32) -> (i32, i32, i32) {
    %c0_i32 = arith.constant 0 : i32
    %c0_i32_0 = arith.constant 0 : i32
    %c0_i32_1 = arith.constant 0 : i32
    %c0_i32_2 = arith.constant 0 : i32
    return %c0_i32, %c0_i32_0, %c0_i32_1 : i32, i32, i32
  }
  func.func @transform_27(%arg0: i32) -> (i32, i32, i32) {
    %c0_i32 = arith.constant 0 : i32
    %c0_i32_0 = arith.constant 0 : i32
    %c0_i32_1 = arith.constant 0 : i32
    %c0_i32_2 = arith.constant 0 : i32
    return %c0_i32, %c0_i32_0, %c0_i32_1 : i32, i32, i32
  }
  func.func @transform_28(%arg0: i32) -> (i32, i32, i32) {
    %c0_i32 = arith.constant 0 : i32
    %c0_i32_0 = arith.constant 0 : i32
    %c0_i32_1 = arith.constant 0 : i32
    %c0_i32_2 = arith.constant 0 : i32
    return %c0_i32, %c0_i32_0, %c0_i32_1 : i32, i32, i32
  }
  func.func @transform_29(%arg0: i32) -> (i32, i32, i32) {
    %c0_i32 = arith.constant 0 : i32
    %c0_i32_0 = arith.constant 0 : i32
    %c0_i32_1 = arith.constant 0 : i32
    %c0_i32_2 = arith.constant 0 : i32
    return %c0_i32, %c0_i32_0, %c0_i32_1 : i32, i32, i32
  }
  func.func @transform_30(%arg0: i32) -> (i32, i32, i32) {
    %c0_i32 = arith.constant 0 : i32
    %c0_i32_0 = arith.constant 0 : i32
    %c0_i32_1 = arith.constant 0 : i32
    %c0_i32_2 = arith.constant 0 : i32
    return %c0_i32, %c0_i32_0, %c0_i32_1 : i32, i32, i32
  }
  func.func @transform_31(%arg0: i32) -> (i32, i32, i32) {
    %c0_i32 = arith.constant 0 : i32
    %c0_i32_0 = arith.constant 0 : i32
    %c0_i32_1 = arith.constant 0 : i32
    %c0_i32_2 = arith.constant 0 : i32
    return %c0_i32, %c0_i32_0, %c0_i32_1 : i32, i32, i32
  }
  func.func @transform_32(%arg0: i32) -> (i32, i32, i32) {
    %c0_i32 = arith.constant 0 : i32
    %c0_i32_0 = arith.constant 0 : i32
    %c0_i32_1 = arith.constant 0 : i32
    %c0_i32_2 = arith.constant 0 : i32
    return %c0_i32, %c0_i32_0, %c0_i32_1 : i32, i32, i32
  }
  func.func @transform_33(%arg0: i32) -> (i32, i32) {
    %c0_i32 = arith.constant 0 : i32
    %c0_i32_0 = arith.constant 0 : i32
    %c0_i32_1 = arith.constant 0 : i32
    return %c0_i32, %c0_i32_0 : i32, i32
  }
  func.func @transform_34(%arg0: i32) -> (i32, i32) {
    %c0_i32 = arith.constant 0 : i32
    %c0_i32_0 = arith.constant 0 : i32
    %c0_i32_1 = arith.constant 0 : i32
    return %c0_i32, %c0_i32_0 : i32, i32
  }
  func.func @transform_35(%arg0: i32) -> (i32, i32, i32) {
    %c0_i32 = arith.constant 0 : i32
    %c0_i32_0 = arith.constant 0 : i32
    %c0_i32_1 = arith.constant 0 : i32
    return %arg0, %c0_i32, %c0_i32_0 : i32, i32, i32
  }
  func.func @transform_36(%arg0: i32) -> (i32, i32, i32, i32) {
    %c0_i32 = arith.constant 0 : i32
    %c0_i32_0 = arith.constant 0 : i32
    %c0_i32_1 = arith.constant 0 : i32
    %c0_i32_2 = arith.constant 0 : i32
    return %c0_i32, %arg0, %c0_i32_0, %c0_i32_1 : i32, i32, i32, i32
  }
  func.func @transform_37(%arg0: i32) -> (i32, i32, i32, i32) {
    %c0_i32 = arith.constant 0 : i32
    %c0_i32_0 = arith.constant 0 : i32
    %c0_i32_1 = arith.constant 0 : i32
    %c0_i32_2 = arith.constant 0 : i32
    return %c0_i32, %arg0, %c0_i32_0, %c0_i32_1 : i32, i32, i32, i32
  }
  func.func @transform_38(%arg0: i32) -> (i32, i32, i32, i32) {
    %c0_i32 = arith.constant 0 : i32
    %c0_i32_0 = arith.constant 0 : i32
    %c0_i32_1 = arith.constant 0 : i32
    %c0_i32_2 = arith.constant 0 : i32
    return %c0_i32, %arg0, %c0_i32_0, %c0_i32_1 : i32, i32, i32, i32
  }
}

</mosaic_0001>

<llo_original>
// kernel: transformer_apply.1
$region0: #{transformer_apply.1}
  #allocation0 [shape = 'u32[]', space=smem, size = 0x4, offset = 0x4, fixed_abs, tag = 'smem constant byte address 0x4 - core index']
  #allocation1 [shape = 'u32[72,128]{1,0:T(1,128)}', space=vmem, size = 0x9000, scoped, tag = 'internal scratch']
  %s0 = inlined_call_operand.smem [shape: u32[39], index: -1, kind: input, shape index: {}]
  %s1 = sld [smem:[%s0]]
  %s2 = scalar_lea.smem %s0, 1
  %s3 = sld [smem:[%s2]]
  %s4 = scalar_lea.smem %s0, 2
  %s5 = sld [smem:[%s4]]
  %s6 = scalar_lea.smem %s0, 3
  %s7 = sld [smem:[%s6]]
  %s8 = scalar_lea.smem %s0, 4
  %s9 = sld [smem:[%s8]]
  %s10 = scalar_lea.smem %s0, 5
  %s11 = sld [smem:[%s10]]
  %s12 = scalar_lea.smem %s0, 6
  %s13 = sld [smem:[%s12]]
  %s14 = scalar_lea.smem %s0, 7
  %s15 = sld [smem:[%s14]]
  %s16 = scalar_lea.smem %s0, 8
  %s17 = sld [smem:[%s16]]
  %s18 = scalar_lea.smem %s0, 9
  %s19 = sld [smem:[%s18]]
  %s20 = scalar_lea.smem %s0, 10
  %s21 = sld [smem:[%s20]]
  %s22 = scalar_lea.smem %s0, 11
  %s23 = sld [smem:[%s22]]
  %s24 = scalar_lea.smem %s0, 12
  %s25 = sld [smem:[%s24]]
  %s26 = scalar_lea.smem %s0, 13
  %s27 = sld [smem:[%s26]]
  %s28 = scalar_lea.smem %s0, 14
  %s29 = sld [smem:[%s28]]
  %s30 = scalar_lea.smem %s0, 15
  %s31 = sld [smem:[%s30]]
  %s32 = scalar_lea.smem %s0, 16
  %s33 = sld [smem:[%s32]]
  %s34 = scalar_lea.smem %s0, 17
  %s35 = sld [smem:[%s34]]
  %s36 = scalar_lea.smem %s0, 18
  %s37 = sld [smem:[%s36]]
  %s38 = scalar_lea.smem %s0, 19
  %s39 = sld [smem:[%s38]]
  %s40 = scalar_lea.smem %s0, 20
  %s41 = sld [smem:[%s40]]
  %s42 = scalar_lea.smem %s0, 21
  %s43 = sld [smem:[%s42]]
  %s44 = scalar_lea.smem %s0, 22
  %s45 = sld [smem:[%s44]]
  %s46 = scalar_lea.smem %s0, 23
  %s47 = sld [smem:[%s46]]
  %s48 = scalar_lea.smem %s0, 24
  %s49 = sld [smem:[%s48]]
  %s50 = scalar_lea.smem %s0, 25
  %s51 = sld [smem:[%s50]]
  %s52 = scalar_lea.smem %s0, 26
  %s53 = sld [smem:[%s52]]
  %s54 = scalar_lea.smem %s0, 27
  %s55 = sld [smem:[%s54]]
  %s56 = scalar_lea.smem %s0, 28
  %s57 = sld [smem:[%s56]]
  %s58 = scalar_lea.smem %s0, 29
  %s59 = sld [smem:[%s58]]
  %s60 = scalar_lea.smem %s0, 30
  %s61 = sld [smem:[%s60]]
  %s62 = scalar_lea.smem %s0, 31
  %s63 = sld [smem:[%s62]]
  %s64 = scalar_lea.smem %s0, 32
  %s65 = sld [smem:[%s64]]
  %s66 = scalar_lea.smem %s0, 33
  %s67 = sld [smem:[%s66]]
  %s68 = scalar_lea.smem %s0, 34
  %s69 = sld [smem:[%s68]]
  %s70 = scalar_lea.smem %s0, 35
  %s71 = sld [smem:[%s70]]
  %s72 = scalar_lea.smem %s0, 36
  %s73 = sld [smem:[%s72]]
  %s74 = scalar_lea.smem %s0, 37
  %s75 = sld [smem:[%s74]]
  %s76 = scalar_lea.smem %s0, 38
  %s77 = sld [smem:[%s76]]
  %78 = xla_tuple %s71, %s73, %s75, %s77
  %s79 = sld [smem:[#allocation0]]
  $region299: #{transformer_apply.1} parent=0
    _
  %s81 = ssub.s32 1, %s79
  %s82 = scalar_select 0, %s81, %s79
  $region1: #{transformer_apply.1} parent=0
    #allocation2 [shape = 'u8[8192]{0}', space=vmem, size = 0x2000, scoped, tag = 'output window, operand 0']
    #allocation3 [shape = 's32[2]{0}', space=sflag, size = 0x8, scoped, tag = 'scoped memory for transformer_apply.1']
    #allocation4 [shape = 'u8[16384]{0}', space=vmem, size = 0x4000, scoped, tag = 'output window, operand 1']
    #allocation5 [shape = 'u8[16384]{0}', space=vmem, size = 0x4000, scoped, tag = 'output window, operand 2']
    #allocation6 [shape = 'u8[16384]{0}', space=vmem, size = 0x4000, scoped, tag = 'output window, operand 3']
    %83 = vsyncpa [#allocation3], 0
    %s84 = scalar_lea.sflag [#allocation3], 1
    %85 = vsyncpa %s84, 0
    loop: start=0, step=1, limit=4
    $region2: #{transformer_apply.1} parent=1 // loop_pre_header
      _
    $region3: #{transformer_apply.1} parent=1 // loop_header
      %s87 = sphi 0, %s91
      %p88 = scmp.ge.s32.totalorder %s87, 4
      %s97 = sphi 0, %s99
      %s100 = sphi 0, %s97
      %s101 = sphi 0, %s100
      %s117 = sphi 0, %s101
      %s123 = sphi 0, %s125
      %s126 = sphi 0, %s123
      %s127 = sphi 0, %s126
      %s143 = sphi 0, %s127
      %s149 = sphi 0, %s151
      %s152 = sphi 0, %s149
      %s153 = sphi 0, %s152
      %s169 = sphi 0, %s153
      %s173 = sphi 0, %s173
      %s175 = sphi 0, %s173
      %s176 = sphi 0, %s175
      %s190 = sphi 0, %s176
      %s194 = sphi 0, %s194
      %s196 = sphi 0, %s194
      %s197 = sphi 0, %s196
      %s211 = sphi 0, %s197
      %s215 = sphi 0, %s215
      %s217 = sphi 0, %s215
      %s218 = sphi 0, %s217
      %s232 = sphi 0, %s218
      %s236 = sphi 0, %s236
      %s238 = sphi 0, %s236
      %s239 = sphi 0, %s238
      %s253 = sphi 0, %s239
      %s257 = sphi 0, %s257
      %s259 = sphi 0, %s257
      %s260 = sphi 0, %s259
      %s274 = sphi 0, %s260
      %s278 = sphi 0, %s278
      %s280 = sphi 0, %s278
      %s281 = sphi 0, %s280
      %s295 = sphi 0, %s281
      %s299 = sphi 0, %s299
      %s301 = sphi 0, %s299
      %s302 = sphi 0, %s301
      %s316 = sphi 0, %s302
      %s320 = sphi 0, %s320
      %s322 = sphi 0, %s320
      %s323 = sphi 0, %s322
      %s337 = sphi 0, %s323
      %s341 = sphi 0, %s341
      %s343 = sphi 0, %s341
      %s344 = sphi 0, %s343
      %s358 = sphi 0, %s344
      %s362 = sphi 0, %s362
      %s364 = sphi 0, %s362
      %s365 = sphi 0, %s364
      %s379 = sphi 0, %s365
      %s383 = sphi 0, %s383
      %s385 = sphi 0, %s383
      %s386 = sphi 0, %s385
      %s400 = sphi 0, %s386
      %s404 = sphi 0, %s404
      %s406 = sphi 0, %s404
      %s407 = sphi 0, %s406
      %s421 = sphi 0, %s407
      %s425 = sphi 0, %s425
      %s427 = sphi 0, %s425
      %s428 = sphi 0, %s427
      %s442 = sphi 0, %s428
      %s446 = sphi 0, %s446
      %s448 = sphi 0, %s446
      %s449 = sphi 0, %s448
      %s463 = sphi 0, %s449
      %s467 = sphi 0, %s467
      %s469 = sphi 0, %s467
      %s470 = sphi 0, %s469
      %s484 = sphi 0, %s470
      %s488 = sphi 0, %s488
      %s490 = sphi 0, %s488
      %s491 = sphi 0, %s490
      %s505 = sphi 0, %s491
      %s509 = sphi 0, %s509
      %s511 = sphi 0, %s509
      %s512 = sphi 0, %s511
      %s526 = sphi 0, %s512
      %s530 = sphi 0, %s530
      %s532 = sphi 0, %s530
      %s533 = sphi 0, %s532
      %s547 = sphi 0, %s533
      %s551 = sphi 0, %s551
      %s553 = sphi 0, %s551
      %s554 = sphi 0, %s553
      %s568 = sphi 0, %s554
      %s572 = sphi 0, %s572
      %s574 = sphi 0, %s572
      %s575 = sphi 0, %s574
      %s589 = sphi 0, %s575
      %s593 = sphi 0, %s593
      %s595 = sphi 0, %s593
      %s596 = sphi 0, %s595
      %s610 = sphi 0, %s596
      %s614 = sphi 0, %s614
      %s616 = sphi 0, %s614
      %s617 = sphi 0, %s616
      %s631 = sphi 0, %s617
      %s635 = sphi 0, %s635
      %s637 = sphi 0, %s635
      %s638 = sphi 0, %s637
      %s652 = sphi 0, %s638
      %s656 = sphi 0, %s656
      %s658 = sphi 0, %s656
      %s659 = sphi 0, %s658
      %s673 = sphi 0, %s659
      %s677 = sphi 0, %s677
      %s679 = sphi 0, %s677
      %s680 = sphi 0, %s679
      %s694 = sphi 0, %s680
      %s698 = sphi 0, %s698
      %s700 = sphi 0, %s698
      %s701 = sphi 0, %s700
      %s715 = sphi 0, %s701
      %s719 = sphi 0, %s719
      %s721 = sphi 0, %s719
      %s722 = sphi 0, %s721
      %s736 = sphi 0, %s722
      %s740 = sphi 0, %s740
      %s742 = sphi 0, %s740
      %s743 = sphi 0, %s742
      %s757 = sphi 0, %s743
      %s761 = sphi 0, %s761
      %s763 = sphi 0, %s761
      %s764 = sphi 0, %s763
      %s778 = sphi 0, %s764
      %s782 = sphi 0, %s782
      %s784 = sphi 0, %s782
      %s785 = sphi 0, %s784
      %s799 = sphi 0, %s785
      %s803 = sphi 0, %s803
      %s805 = sphi 0, %s803
      %s806 = sphi 0, %s805
      %s820 = sphi 0, %s806
      %s824 = sphi 0, %s824
      %s826 = sphi 0, %s824
      %s827 = sphi 0, %s826
      %s841 = sphi 0, %s827
      %s847 = sphi 0, %s849
      %s850 = sphi 0, %s847
      %s851 = sphi 0, %s850
      %s867 = sphi 0, %s851
      %s873 = sphi 0, %s875
      %s876 = sphi 0, %s873
      %s877 = sphi 0, %s876
      %s893 = sphi 0, %s877
      %s899 = sphi 0, %s901
      %s902 = sphi 0, %s899
      %s903 = sphi 0, %s902
      %s919 = sphi 0, %s903
      %s925 = sphi 0, %s927
      %s928 = sphi 0, %s925
      %s929 = sphi 0, %s928
      %s945 = sphi 0, %s929
    $region4: #{transformer_apply.1} parent=1 // loop_header_branch
      %90 = sbr.rel (%p88) target = $region8
    $region5: #{transformer_apply.1} parent=1 // loop_body
      %s92 = ssub.s32 %s87, 1
      %s93 = ssub.s32 %s87, 2
      %s94 = sadd.s32 %s87, 1
      %s95 = ssub.s32 %s87, %s94
      %p96 = scmp.eq.s32.totalorder %s95, 0
      %s98 = sadd.s32 %s97, 1
      %s99 = scalar_select %p96, %s97, %s98
      %p102 = pneg %p96
      %p103 = scmp.eq.s32.totalorder %s87, 1
      %p104 = por %p102, %p103
      %p105 = scmp.ne.s32.totalorder %s97, %s100
      %p106 = scmp.eq.s32.totalorder %s87, 0
      %p107 = por %p105, %p106
      %p108 = scmp.ne.s32.totalorder %s97, %s100
      %p109 = scmp.eq.s32.totalorder %s92, 1
      %p110 = por %p108, %p109
      %p111 = scmp.ne.s32.totalorder %s100, %s101
      %p112 = scmp.eq.s32.totalorder %s92, 0
      %p113 = por %p111, %p112
      %p114 = scmp.ne.s32.totalorder %s100, %s101
      %p115 = scmp.eq.s32.totalorder %s93, 1
      %p116 = por %p114, %p115
      %p118 = scmp.ne.s32.totalorder %s101, %s117
      %p119 = scmp.eq.s32.totalorder %s93, 0
      %p120 = por %p118, %p119
      %s121 = ssub.s32 %s87, %s94
      %p122 = scmp.eq.s32.totalorder %s121, 0
      %s124 = sadd.s32 %s123, 1
      %s125 = scalar_select %p122, %s123, %s124
      %p128 = pneg %p122
      %p129 = scmp.eq.s32.totalorder %s87, 1
      %p130 = por %p128, %p129
      %p131 = scmp.ne.s32.totalorder %s123, %s126
      %p132 = scmp.eq.s32.totalorder %s87, 0
      %p133 = por %p131, %p132
      %p134 = scmp.ne.s32.totalorder %s123, %s126
      %p135 = scmp.eq.s32.totalorder %s92, 1
      %p136 = por %p134, %p135
      %p137 = scmp.ne.s32.totalorder %s126, %s127
      %p138 = scmp.eq.s32.totalorder %s92, 0
      %p139 = por %p137, %p138
      %p140 = scmp.ne.s32.totalorder %s126, %s127
      %p141 = scmp.eq.s32.totalorder %s93, 1
      %p142 = por %p140, %p141
      %p144 = scmp.ne.s32.totalorder %s127, %s143
      %p145 = scmp.eq.s32.totalorder %s93, 0
      %p146 = por %p144, %p145
      %s147 = ssub.s32 %s87, %s94
      %p148 = scmp.eq.s32.totalorder %s147, 0
      %s150 = sadd.s32 %s149, 1
      %s151 = scalar_select %p148, %s149, %s150
      %p154 = pneg %p148
      %p155 = scmp.eq.s32.totalorder %s87, 1
      %p156 = por %p154, %p155
      %p157 = scmp.ne.s32.totalorder %s149, %s152
      %p158 = scmp.eq.s32.totalorder %s87, 0
      %p159 = por %p157, %p158
      %p160 = scmp.ne.s32.totalorder %s149, %s152
      %p161 = scmp.eq.s32.totalorder %s92, 1
      %p162 = por %p160, %p161
      %p163 = scmp.ne.s32.totalorder %s152, %s153
      %p164 = scmp.eq.s32.totalorder %s92, 0
      %p165 = por %p163, %p164
      %p166 = scmp.ne.s32.totalorder %s152, %s153
      %p167 = scmp.eq.s32.totalorder %s93, 1
      %p168 = por %p166, %p167
      %p170 = scmp.ne.s32.totalorder %s153, %s169
      %p171 = scmp.eq.s32.totalorder %s93, 0
      %p172 = por %p170, %p171
      %s174 = sadd.s32 %s173, 1
      %p177 = scmp.eq.s32.totalorder %s87, 1
      %p178 = scmp.ne.s32.totalorder %s173, %s175
      %p179 = scmp.eq.s32.totalorder %s87, 0
      %p180 = por %p178, %p179
      %p181 = scmp.ne.s32.totalorder %s173, %s175
      %p182 = scmp.eq.s32.totalorder %s92, 1
      %p183 = por %p181, %p182
      %p184 = scmp.ne.s32.totalorder %s175, %s176
      %p185 = scmp.eq.s32.totalorder %s92, 0
      %p186 = por %p184, %p185
      %p187 = scmp.ne.s32.totalorder %s175, %s176
      %p188 = scmp.eq.s32.totalorder %s93, 1
      %p189 = por %p187, %p188
      %p191 = scmp.ne.s32.totalorder %s176, %s190
      %p192 = scmp.eq.s32.totalorder %s93, 0
      %p193 = por %p191, %p192
      %s195 = sadd.s32 %s194, 1
      %p198 = scmp.eq.s32.totalorder %s87, 1
      %p199 = scmp.ne.s32.totalorder %s194, %s196
      %p200 = scmp.eq.s32.totalorder %s87, 0
      %p201 = por %p199, %p200
      %p202 = scmp.ne.s32.totalorder %s194, %s196
      %p203 = scmp.eq.s32.totalorder %s92, 1
      %p204 = por %p202, %p203
      %p205 = scmp.ne.s32.totalorder %s196, %s197
      %p206 = scmp.eq.s32.totalorder %s92, 0
      %p207 = por %p205, %p206
      %p208 = scmp.ne.s32.totalorder %s196, %s197
      %p209 = scmp.eq.s32.totalorder %s93, 1
      %p210 = por %p208, %p209
      %p212 = scmp.ne.s32.totalorder %s197, %s211
      %p213 = scmp.eq.s32.totalorder %s93, 0
      %p214 = por %p212, %p213
      %s216 = sadd.s32 %s215, 1
      %p219 = scmp.eq.s32.totalorder %s87, 1
      %p220 = scmp.ne.s32.totalorder %s215, %s217
      %p221 = scmp.eq.s32.totalorder %s87, 0
      %p222 = por %p220, %p221
      %p223 = scmp.ne.s32.totalorder %s215, %s217
      %p224 = scmp.eq.s32.totalorder %s92, 1
      %p225 = por %p223, %p224
      %p226 = scmp.ne.s32.totalorder %s217, %s218
      %p227 = scmp.eq.s32.totalorder %s92, 0
      %p228 = por %p226, %p227
      %p229 = scmp.ne.s32.totalorder %s217, %s218
      %p230 = scmp.eq.s32.totalorder %s93, 1
      %p231 = por %p229, %p230
      %p233 = scmp.ne.s32.totalorder %s218, %s232
      %p234 = scmp.eq.s32.totalorder %s93, 0
      %p235 = por %p233, %p234
      %s237 = sadd.s32 %s236, 1
      %p240 = scmp.eq.s32.totalorder %s87, 1
      %p241 = scmp.ne.s32.totalorder %s236, %s238
      %p242 = scmp.eq.s32.totalorder %s87, 0
      %p243 = por %p241, %p242
      %p244 = scmp.ne.s32.totalorder %s236, %s238
      %p245 = scmp.eq.s32.totalorder %s92, 1
      %p246 = por %p244, %p245
      %p247 = scmp.ne.s32.totalorder %s238, %s239
      %p248 = scmp.eq.s32.totalorder %s92, 0
      %p249 = por %p247, %p248
      %p250 = scmp.ne.s32.totalorder %s238, %s239
      %p251 = scmp.eq.s32.totalorder %s93, 1
      %p252 = por %p250, %p251
      %p254 = scmp.ne.s32.totalorder %s239, %s253
      %p255 = scmp.eq.s32.totalorder %s93, 0
      %p256 = por %p254, %p255
      %s258 = sadd.s32 %s257, 1
      %p261 = scmp.eq.s32.totalorder %s87, 1
      %p262 = scmp.ne.s32.totalorder %s257, %s259
      %p263 = scmp.eq.s32.totalorder %s87, 0
      %p264 = por %p262, %p263
      %p265 = scmp.ne.s32.totalorder %s257, %s259
      %p266 = scmp.eq.s32.totalorder %s92, 1
      %p267 = por %p265, %p266
      %p268 = scmp.ne.s32.totalorder %s259, %s260
      %p269 = scmp.eq.s32.totalorder %s92, 0
      %p270 = por %p268, %p269
      %p271 = scmp.ne.s32.totalorder %s259, %s260
      %p272 = scmp.eq.s32.totalorder %s93, 1
      %p273 = por %p271, %p272
      %p275 = scmp.ne.s32.totalorder %s260, %s274
      %p276 = scmp.eq.s32.totalorder %s93, 0
      %p277 = por %p275, %p276
      %s279 = sadd.s32 %s278, 1
      %p282 = scmp.eq.s32.totalorder %s87, 1
      %p283 = scmp.ne.s32.totalorder %s278, %s280
      %p284 = scmp.eq.s32.totalorder %s87, 0
      %p285 = por %p283, %p284
      %p286 = scmp.ne.s32.totalorder %s278, %s280
      %p287 = scmp.eq.s32.totalorder %s92, 1
      %p288 = por %p286, %p287
      %p289 = scmp.ne.s32.totalorder %s280, %s281
      %p290 = scmp.eq.s32.totalorder %s92, 0
      %p291 = por %p289, %p290
      %p292 = scmp.ne.s32.totalorder %s280, %s281
      %p293 = scmp.eq.s32.totalorder %s93, 1
      %p294 = por %p292, %p293
      %p296 = scmp.ne.s32.totalorder %s281, %s295
      %p297 = scmp.eq.s32.totalorder %s93, 0
      %p298 = por %p296, %p297
      %s300 = sadd.s32 %s299, 1
      %p303 = scmp.eq.s32.totalorder %s87, 1
      %p304 = scmp.ne.s32.totalorder %s299, %s301
      %p305 = scmp.eq.s32.totalorder %s87, 0
      %p306 = por %p304, %p305
      %p307 = scmp.ne.s32.totalorder %s299, %s301
      %p308 = scmp.eq.s32.totalorder %s92, 1
      %p309 = por %p307, %p308
      %p310 = scmp.ne.s32.totalorder %s301, %s302
      %p311 = scmp.eq.s32.totalorder %s92, 0
      %p312 = por %p310, %p311
      %p313 = scmp.ne.s32.totalorder %s301, %s302
      %p314 = scmp.eq.s32.totalorder %s93, 1
      %p315 = por %p313, %p314
      %p317 = scmp.ne.s32.totalorder %s302, %s316
      %p318 = scmp.eq.s32.totalorder %s93, 0
      %p319 = por %p317, %p318
      %s321 = sadd.s32 %s320, 1
      %p324 = scmp.eq.s32.totalorder %s87, 1
      %p325 = scmp.ne.s32.totalorder %s320, %s322
      %p326 = scmp.eq.s32.totalorder %s87, 0
      %p327 = por %p325, %p326
      %p328 = scmp.ne.s32.totalorder %s320, %s322
      %p329 = scmp.eq.s32.totalorder %s92, 1
      %p330 = por %p328, %p329
      %p331 = scmp.ne.s32.totalorder %s322, %s323
      %p332 = scmp.eq.s32.totalorder %s92, 0
      %p333 = por %p331, %p332
      %p334 = scmp.ne.s32.totalorder %s322, %s323
      %p335 = scmp.eq.s32.totalorder %s93, 1
      %p336 = por %p334, %p335
      %p338 = scmp.ne.s32.totalorder %s323, %s337
      %p339 = scmp.eq.s32.totalorder %s93, 0
      %p340 = por %p338, %p339
      %s342 = sadd.s32 %s341, 1
      %p345 = scmp.eq.s32.totalorder %s87, 1
      %p346 = scmp.ne.s32.totalorder %s341, %s343
      %p347 = scmp.eq.s32.totalorder %s87, 0
      %p348 = por %p346, %p347
      %p349 = scmp.ne.s32.totalorder %s341, %s343
      %p350 = scmp.eq.s32.totalorder %s92, 1
      %p351 = por %p349, %p350
      %p352 = scmp.ne.s32.totalorder %s343, %s344
      %p353 = scmp.eq.s32.totalorder %s92, 0
      %p354 = por %p352, %p353
      %p355 = scmp.ne.s32.totalorder %s343, %s344
      %p356 = scmp.eq.s32.totalorder %s93, 1
      %p357 = por %p355, %p356
      %p359 = scmp.ne.s32.totalorder %s344, %s358
      %p360 = scmp.eq.s32.totalorder %s93, 0
      %p361 = por %p359, %p360
      %s363 = sadd.s32 %s362, 1
      %p366 = scmp.eq.s32.totalorder %s87, 1
      %p367 = scmp.ne.s32.totalorder %s362, %s364
      %p368 = scmp.eq.s32.totalorder %s87, 0
      %p369 = por %p367, %p368
      %p370 = scmp.ne.s32.totalorder %s362, %s364
      %p371 = scmp.eq.s32.totalorder %s92, 1
      %p372 = por %p370, %p371
      %p373 = scmp.ne.s32.totalorder %s364, %s365
      %p374 = scmp.eq.s32.totalorder %s92, 0
      %p375 = por %p373, %p374
      %p376 = scmp.ne.s32.totalorder %s364, %s365
      %p377 = scmp.eq.s32.totalorder %s93, 1
      %p378 = por %p376, %p377
      %p380 = scmp.ne.s32.totalorder %s365, %s379
      %p381 = scmp.eq.s32.totalorder %s93, 0
      %p382 = por %p380, %p381
      %s384 = sadd.s32 %s383, 1
      %p387 = scmp.eq.s32.totalorder %s87, 1
      %p388 = scmp.ne.s32.totalorder %s383, %s385
      %p389 = scmp.eq.s32.totalorder %s87, 0
      %p390 = por %p388, %p389
      %p391 = scmp.ne.s32.totalorder %s383, %s385
      %p392 = scmp.eq.s32.totalorder %s92, 1
      %p393 = por %p391, %p392
      %p394 = scmp.ne.s32.totalorder %s385, %s386
      %p395 = scmp.eq.s32.totalorder %s92, 0
      %p396 = por %p394, %p395
      %p397 = scmp.ne.s32.totalorder %s385, %s386
      %p398 = scmp.eq.s32.totalorder %s93, 1
      %p399 = por %p397, %p398
      %p401 = scmp.ne.s32.totalorder %s386, %s400
      %p402 = scmp.eq.s32.totalorder %s93, 0
      %p403 = por %p401, %p402
      %s405 = sadd.s32 %s404, 1
      %p408 = scmp.eq.s32.totalorder %s87, 1
      %p409 = scmp.ne.s32.totalorder %s404, %s406
      %p410 = scmp.eq.s32.totalorder %s87, 0
      %p411 = por %p409, %p410
      %p412 = scmp.ne.s32.totalorder %s404, %s406
      %p413 = scmp.eq.s32.totalorder %s92, 1
      %p414 = por %p412, %p413
      %p415 = scmp.ne.s32.totalorder %s406, %s407
      %p416 = scmp.eq.s32.totalorder %s92, 0
      %p417 = por %p415, %p416
      %p418 = scmp.ne.s32.totalorder %s406, %s407
      %p419 = scmp.eq.s32.totalorder %s93, 1
      %p420 = por %p418, %p419
      %p422 = scmp.ne.s32.totalorder %s407, %s421
      %p423 = scmp.eq.s32.totalorder %s93, 0
      %p424 = por %p422, %p423
      %s426 = sadd.s32 %s425, 1
      %p429 = scmp.eq.s32.totalorder %s87, 1
      %p430 = scmp.ne.s32.totalorder %s425, %s427
      %p431 = scmp.eq.s32.totalorder %s87, 0
      %p432 = por %p430, %p431
      %p433 = scmp.ne.s32.totalorder %s425, %s427
      %p434 = scmp.eq.s32.totalorder %s92, 1
      %p435 = por %p433, %p434
      %p436 = scmp.ne.s32.totalorder %s427, %s428
      %p437 = scmp.eq.s32.totalorder %s92, 0
      %p438 = por %p436, %p437
      %p439 = scmp.ne.s32.totalorder %s427, %s428
      %p440 = scmp.eq.s32.totalorder %s93, 1
      %p441 = por %p439, %p440
      %p443 = scmp.ne.s32.totalorder %s428, %s442
      %p444 = scmp.eq.s32.totalorder %s93, 0
      %p445 = por %p443, %p444
      %s447 = sadd.s32 %s446, 1
      %p450 = scmp.eq.s32.totalorder %s87, 1
      %p451 = scmp.ne.s32.totalorder %s446, %s448
      %p452 = scmp.eq.s32.totalorder %s87, 0
      %p453 = por %p451, %p452
      %p454 = scmp.ne.s32.totalorder %s446, %s448
      %p455 = scmp.eq.s32.totalorder %s92, 1
      %p456 = por %p454, %p455
      %p457 = scmp.ne.s32.totalorder %s448, %s449
      %p458 = scmp.eq.s32.totalorder %s92, 0
      %p459 = por %p457, %p458
      %p460 = scmp.ne.s32.totalorder %s448, %s449
      %p461 = scmp.eq.s32.totalorder %s93, 1
      %p462 = por %p460, %p461
      %p464 = scmp.ne.s32.totalorder %s449, %s463
      %p465 = scmp.eq.s32.totalorder %s93, 0
      %p466 = por %p464, %p465
      %s468 = sadd.s32 %s467, 1
      %p471 = scmp.eq.s32.totalorder %s87, 1
      %p472 = scmp.ne.s32.totalorder %s467, %s469
      %p473 = scmp.eq.s32.totalorder %s87, 0
      %p474 = por %p472, %p473
      %p475 = scmp.ne.s32.totalorder %s467, %s469
      %p476 = scmp.eq.s32.totalorder %s92, 1
      %p477 = por %p475, %p476
      %p478 = scmp.ne.s32.totalorder %s469, %s470
      %p479 = scmp.eq.s32.totalorder %s92, 0
      %p480 = por %p478, %p479
      %p481 = scmp.ne.s32.totalorder %s469, %s470
      %p482 = scmp.eq.s32.totalorder %s93, 1
      %p483 = por %p481, %p482
      %p485 = scmp.ne.s32.totalorder %s470, %s484
      %p486 = scmp.eq.s32.totalorder %s93, 0
      %p487 = por %p485, %p486
      %s489 = sadd.s32 %s488, 1
      %p492 = scmp.eq.s32.totalorder %s87, 1
      %p493 = scmp.ne.s32.totalorder %s488, %s490
      %p494 = scmp.eq.s32.totalorder %s87, 0
      %p495 = por %p493, %p494
      %p496 = scmp.ne.s32.totalorder %s488, %s490
      %p497 = scmp.eq.s32.totalorder %s92, 1
      %p498 = por %p496, %p497
      %p499 = scmp.ne.s32.totalorder %s490, %s491
      %p500 = scmp.eq.s32.totalorder %s92, 0
      %p501 = por %p499, %p500
      %p502 = scmp.ne.s32.totalorder %s490, %s491
      %p503 = scmp.eq.s32.totalorder %s93, 1
      %p504 = por %p502, %p503
      %p506 = scmp.ne.s32.totalorder %s491, %s505
      %p507 = scmp.eq.s32.totalorder %s93, 0
      %p508 = por %p506, %p507
      %s510 = sadd.s32 %s509, 1
      %p513 = scmp.eq.s32.totalorder %s87, 1
      %p514 = scmp.ne.s32.totalorder %s509, %s511
      %p515 = scmp.eq.s32.totalorder %s87, 0
      %p516 = por %p514, %p515
      %p517 = scmp.ne.s32.totalorder %s509, %s511
      %p518 = scmp.eq.s32.totalorder %s92, 1
      %p519 = por %p517, %p518
      %p520 = scmp.ne.s32.totalorder %s511, %s512
      %p521 = scmp.eq.s32.totalorder %s92, 0
      %p522 = por %p520, %p521
      %p523 = scmp.ne.s32.totalorder %s511, %s512
      %p524 = scmp.eq.s32.totalorder %s93, 1
      %p525 = por %p523, %p524
      %p527 = scmp.ne.s32.totalorder %s512, %s526
      %p528 = scmp.eq.s32.totalorder %s93, 0
      %p529 = por %p527, %p528
      %s531 = sadd.s32 %s530, 1
      %p534 = scmp.eq.s32.totalorder %s87, 1
      %p535 = scmp.ne.s32.totalorder %s530, %s532
      %p536 = scmp.eq.s32.totalorder %s87, 0
      %p537 = por %p535, %p536
      %p538 = scmp.ne.s32.totalorder %s530, %s532
      %p539 = scmp.eq.s32.totalorder %s92, 1
      %p540 = por %p538, %p539
      %p541 = scmp.ne.s32.totalorder %s532, %s533
      %p542 = scmp.eq.s32.totalorder %s92, 0
      %p543 = por %p541, %p542
      %p544 = scmp.ne.s32.totalorder %s532, %s533
      %p545 = scmp.eq.s32.totalorder %s93, 1
      %p546 = por %p544, %p545
      %p548 = scmp.ne.s32.totalorder %s533, %s547
      %p549 = scmp.eq.s32.totalorder %s93, 0
      %p550 = por %p548, %p549
      %s552 = sadd.s32 %s551, 1
      %p555 = scmp.eq.s32.totalorder %s87, 1
      %p556 = scmp.ne.s32.totalorder %s551, %s553
      %p557 = scmp.eq.s32.totalorder %s87, 0
      %p558 = por %p556, %p557
      %p559 = scmp.ne.s32.totalorder %s551, %s553
      %p560 = scmp.eq.s32.totalorder %s92, 1
      %p561 = por %p559, %p560
      %p562 = scmp.ne.s32.totalorder %s553, %s554
      %p563 = scmp.eq.s32.totalorder %s92, 0
      %p564 = por %p562, %p563
      %p565 = scmp.ne.s32.totalorder %s553, %s554
      %p566 = scmp.eq.s32.totalorder %s93, 1
      %p567 = por %p565, %p566
      %p569 = scmp.ne.s32.totalorder %s554, %s568
      %p570 = scmp.eq.s32.totalorder %s93, 0
      %p571 = por %p569, %p570
      %s573 = sadd.s32 %s572, 1
      %p576 = scmp.eq.s32.totalorder %s87, 1
      %p577 = scmp.ne.s32.totalorder %s572, %s574
      %p578 = scmp.eq.s32.totalorder %s87, 0
      %p579 = por %p577, %p578
      %p580 = scmp.ne.s32.totalorder %s572, %s574
      %p581 = scmp.eq.s32.totalorder %s92, 1
      %p582 = por %p580, %p581
      %p583 = scmp.ne.s32.totalorder %s574, %s575
      %p584 = scmp.eq.s32.totalorder %s92, 0
      %p585 = por %p583, %p584
      %p586 = scmp.ne.s32.totalorder %s574, %s575
      %p587 = scmp.eq.s32.totalorder %s93, 1
      %p588 = por %p586, %p587
      %p590 = scmp.ne.s32.totalorder %s575, %s589
      %p591 = scmp.eq.s32.totalorder %s93, 0
      %p592 = por %p590, %p591
      %s594 = sadd.s32 %s593, 1
      %p597 = scmp.eq.s32.totalorder %s87, 1
      %p598 = scmp.ne.s32.totalorder %s593, %s595
      %p599 = scmp.eq.s32.totalorder %s87, 0
      %p600 = por %p598, %p599
      %p601 = scmp.ne.s32.totalorder %s593, %s595
      %p602 = scmp.eq.s32.totalorder %s92, 1
      %p603 = por %p601, %p602
      %p604 = scmp.ne.s32.totalorder %s595, %s596
      %p605 = scmp.eq.s32.totalorder %s92, 0
      %p606 = por %p604, %p605
      %p607 = scmp.ne.s32.totalorder %s595, %s596
      %p608 = scmp.eq.s32.totalorder %s93, 1
      %p609 = por %p607, %p608
      %p611 = scmp.ne.s32.totalorder %s596, %s610
      %p612 = scmp.eq.s32.totalorder %s93, 0
      %p613 = por %p611, %p612
      %s615 = sadd.s32 %s614, 1
      %p618 = scmp.eq.s32.totalorder %s87, 1
      %p619 = scmp.ne.s32.totalorder %s614, %s616
      %p620 = scmp.eq.s32.totalorder %s87, 0
      %p621 = por %p619, %p620
      %p622 = scmp.ne.s32.totalorder %s614, %s616
      %p623 = scmp.eq.s32.totalorder %s92, 1
      %p624 = por %p622, %p623
      %p625 = scmp.ne.s32.totalorder %s616, %s617
      %p626 = scmp.eq.s32.totalorder %s92, 0
      %p627 = por %p625, %p626
      %p628 = scmp.ne.s32.totalorder %s616, %s617
      %p629 = scmp.eq.s32.totalorder %s93, 1
      %p630 = por %p628, %p629
      %p632 = scmp.ne.s32.totalorder %s617, %s631
      %p633 = scmp.eq.s32.totalorder %s93, 0
      %p634 = por %p632, %p633
      %s636 = sadd.s32 %s635, 1
      %p639 = scmp.eq.s32.totalorder %s87, 1
      %p640 = scmp.ne.s32.totalorder %s635, %s637
      %p641 = scmp.eq.s32.totalorder %s87, 0
      %p642 = por %p640, %p641
      %p643 = scmp.ne.s32.totalorder %s635, %s637
      %p644 = scmp.eq.s32.totalorder %s92, 1
      %p645 = por %p643, %p644
      %p646 = scmp.ne.s32.totalorder %s637, %s638
      %p647 = scmp.eq.s32.totalorder %s92, 0
      %p648 = por %p646, %p647
      %p649 = scmp.ne.s32.totalorder %s637, %s638
      %p650 = scmp.eq.s32.totalorder %s93, 1
      %p651 = por %p649, %p650
      %p653 = scmp.ne.s32.totalorder %s638, %s652
      %p654 = scmp.eq.s32.totalorder %s93, 0
      %p655 = por %p653, %p654
      %s657 = sadd.s32 %s656, 1
      %p660 = scmp.eq.s32.totalorder %s87, 1
      %p661 = scmp.ne.s32.totalorder %s656, %s658
      %p662 = scmp.eq.s32.totalorder %s87, 0
      %p663 = por %p661, %p662
      %p664 = scmp.ne.s32.totalorder %s656, %s658
      %p665 = scmp.eq.s32.totalorder %s92, 1
      %p666 = por %p664, %p665
      %p667 = scmp.ne.s32.totalorder %s658, %s659
      %p668 = scmp.eq.s32.totalorder %s92, 0
      %p669 = por %p667, %p668
      %p670 = scmp.ne.s32.totalorder %s658, %s659
      %p671 = scmp.eq.s32.totalorder %s93, 1
      %p672 = por %p670, %p671
      %p674 = scmp.ne.s32.totalorder %s659, %s673
      %p675 = scmp.eq.s32.totalorder %s93, 0
      %p676 = por %p674, %p675
      %s678 = sadd.s32 %s677, 1
      %p681 = scmp.eq.s32.totalorder %s87, 1
      %p682 = scmp.ne.s32.totalorder %s677, %s679
      %p683 = scmp.eq.s32.totalorder %s87, 0
      %p684 = por %p682, %p683
      %p685 = scmp.ne.s32.totalorder %s677, %s679
      %p686 = scmp.eq.s32.totalorder %s92, 1
      %p687 = por %p685, %p686
      %p688 = scmp.ne.s32.totalorder %s679, %s680
      %p689 = scmp.eq.s32.totalorder %s92, 0
      %p690 = por %p688, %p689
      %p691 = scmp.ne.s32.totalorder %s679, %s680
      %p692 = scmp.eq.s32.totalorder %s93, 1
      %p693 = por %p691, %p692
      %p695 = scmp.ne.s32.totalorder %s680, %s694
      %p696 = scmp.eq.s32.totalorder %s93, 0
      %p697 = por %p695, %p696
      %s699 = sadd.s32 %s698, 1
      %p702 = scmp.eq.s32.totalorder %s87, 1
      %p703 = scmp.ne.s32.totalorder %s698, %s700
      %p704 = scmp.eq.s32.totalorder %s87, 0
      %p705 = por %p703, %p704
      %p706 = scmp.ne.s32.totalorder %s698, %s700
      %p707 = scmp.eq.s32.totalorder %s92, 1
      %p708 = por %p706, %p707
      %p709 = scmp.ne.s32.totalorder %s700, %s701
      %p710 = scmp.eq.s32.totalorder %s92, 0
      %p711 = por %p709, %p710
      %p712 = scmp.ne.s32.totalorder %s700, %s701
      %p713 = scmp.eq.s32.totalorder %s93, 1
      %p714 = por %p712, %p713
      %p716 = scmp.ne.s32.totalorder %s701, %s715
      %p717 = scmp.eq.s32.totalorder %s93, 0
      %p718 = por %p716, %p717
      %s720 = sadd.s32 %s719, 1
      %p723 = scmp.eq.s32.totalorder %s87, 1
      %p724 = scmp.ne.s32.totalorder %s719, %s721
      %p725 = scmp.eq.s32.totalorder %s87, 0
      %p726 = por %p724, %p725
      %p727 = scmp.ne.s32.totalorder %s719, %s721
      %p728 = scmp.eq.s32.totalorder %s92, 1
      %p729 = por %p727, %p728
      %p730 = scmp.ne.s32.totalorder %s721, %s722
      %p731 = scmp.eq.s32.totalorder %s92, 0
      %p732 = por %p730, %p731
      %p733 = scmp.ne.s32.totalorder %s721, %s722
      %p734 = scmp.eq.s32.totalorder %s93, 1
      %p735 = por %p733, %p734
      %p737 = scmp.ne.s32.totalorder %s722, %s736
      %p738 = scmp.eq.s32.totalorder %s93, 0
      %p739 = por %p737, %p738
      %s741 = sadd.s32 %s740, 1
      %p744 = scmp.eq.s32.totalorder %s87, 1
      %p745 = scmp.ne.s32.totalorder %s740, %s742
      %p746 = scmp.eq.s32.totalorder %s87, 0
      %p747 = por %p745, %p746
      %p748 = scmp.ne.s32.totalorder %s740, %s742
      %p749 = scmp.eq.s32.totalorder %s92, 1
      %p750 = por %p748, %p749
      %p751 = scmp.ne.s32.totalorder %s742, %s743
      %p752 = scmp.eq.s32.totalorder %s92, 0
      %p753 = por %p751, %p752
      %p754 = scmp.ne.s32.totalorder %s742, %s743
      %p755 = scmp.eq.s32.totalorder %s93, 1
      %p756 = por %p754, %p755
      %p758 = scmp.ne.s32.totalorder %s743, %s757
      %p759 = scmp.eq.s32.totalorder %s93, 0
      %p760 = por %p758, %p759
      %s762 = sadd.s32 %s761, 1
      %p765 = scmp.eq.s32.totalorder %s87, 1
      %p766 = scmp.ne.s32.totalorder %s761, %s763
      %p767 = scmp.eq.s32.totalorder %s87, 0
      %p768 = por %p766, %p767
      %p769 = scmp.ne.s32.totalorder %s761, %s763
      %p770 = scmp.eq.s32.totalorder %s92, 1
      %p771 = por %p769, %p770
      %p772 = scmp.ne.s32.totalorder %s763, %s764
      %p773 = scmp.eq.s32.totalorder %s92, 0
      %p774 = por %p772, %p773
      %p775 = scmp.ne.s32.totalorder %s763, %s764
      %p776 = scmp.eq.s32.totalorder %s93, 1
      %p777 = por %p775, %p776
      %p779 = scmp.ne.s32.totalorder %s764, %s778
      %p780 = scmp.eq.s32.totalorder %s93, 0
      %p781 = por %p779, %p780
      %s783 = sadd.s32 %s782, 1
      %p786 = scmp.eq.s32.totalorder %s87, 1
      %p787 = scmp.ne.s32.totalorder %s782, %s784
      %p788 = scmp.eq.s32.totalorder %s87, 0
      %p789 = por %p787, %p788
      %p790 = scmp.ne.s32.totalorder %s782, %s784
      %p791 = scmp.eq.s32.totalorder %s92, 1
      %p792 = por %p790, %p791
      %p793 = scmp.ne.s32.totalorder %s784, %s785
      %p794 = scmp.eq.s32.totalorder %s92, 0
      %p795 = por %p793, %p794
      %p796 = scmp.ne.s32.totalorder %s784, %s785
      %p797 = scmp.eq.s32.totalorder %s93, 1
      %p798 = por %p796, %p797
      %p800 = scmp.ne.s32.totalorder %s785, %s799
      %p801 = scmp.eq.s32.totalorder %s93, 0
      %p802 = por %p800, %p801
      %s804 = sadd.s32 %s803, 1
      %p807 = scmp.eq.s32.totalorder %s87, 1
      %p808 = scmp.ne.s32.totalorder %s803, %s805
      %p809 = scmp.eq.s32.totalorder %s87, 0
      %p810 = por %p808, %p809
      %p811 = scmp.ne.s32.totalorder %s803, %s805
      %p812 = scmp.eq.s32.totalorder %s92, 1
      %p813 = por %p811, %p812
      %p814 = scmp.ne.s32.totalorder %s805, %s806
      %p815 = scmp.eq.s32.totalorder %s92, 0
      %p816 = por %p814, %p815
      %p817 = scmp.ne.s32.totalorder %s805, %s806
      %p818 = scmp.eq.s32.totalorder %s93, 1
      %p819 = por %p817, %p818
      %p821 = scmp.ne.s32.totalorder %s806, %s820
      %p822 = scmp.eq.s32.totalorder %s93, 0
      %p823 = por %p821, %p822
      %s825 = sadd.s32 %s824, 1
      %p828 = scmp.eq.s32.totalorder %s87, 1
      %p829 = scmp.ne.s32.totalorder %s824, %s826
      %p830 = scmp.eq.s32.totalorder %s87, 0
      %p831 = por %p829, %p830
      %p832 = scmp.ne.s32.totalorder %s824, %s826
      %p833 = scmp.eq.s32.totalorder %s92, 1
      %p834 = por %p832, %p833
      %p835 = scmp.ne.s32.totalorder %s826, %s827
      %p836 = scmp.eq.s32.totalorder %s92, 0
      %p837 = por %p835, %p836
      %p838 = scmp.ne.s32.totalorder %s826, %s827
      %p839 = scmp.eq.s32.totalorder %s93, 1
      %p840 = por %p838, %p839
      %p842 = scmp.ne.s32.totalorder %s827, %s841
      %p843 = scmp.eq.s32.totalorder %s93, 0
      %p844 = por %p842, %p843
      %s845 = ssub.s32 %s87, %s94
      %p846 = scmp.eq.s32.totalorder %s845, 0
      %s848 = sadd.s32 %s847, 1
      %s849 = scalar_select %p846, %s847, %s848
      %p852 = pneg %p846
      %p853 = scmp.eq.s32.totalorder %s87, 1
      %p854 = por %p852, %p853
      %p855 = scmp.ne.s32.totalorder %s847, %s850
      %p856 = scmp.eq.s32.totalorder %s87, 0
      %p857 = por %p855, %p856
      %p858 = scmp.ne.s32.totalorder %s847, %s850
      %p859 = scmp.eq.s32.totalorder %s92, 1
      %p860 = por %p858, %p859
      %p861 = scmp.ne.s32.totalorder %s850, %s851
      %p862 = scmp.eq.s32.totalorder %s92, 0
      %p863 = por %p861, %p862
      %p864 = scmp.ne.s32.totalorder %s850, %s851
      %p865 = scmp.eq.s32.totalorder %s93, 1
      %p866 = por %p864, %p865
      %p868 = scmp.ne.s32.totalorder %s851, %s867
      %p869 = scmp.eq.s32.totalorder %s93, 0
      %p870 = por %p868, %p869
      %s871 = ssub.s32 %s87, %s94
      %p872 = scmp.eq.s32.totalorder %s871, 0
      %s874 = sadd.s32 %s873, 1
      %s875 = scalar_select %p872, %s873, %s874
      %p878 = pneg %p872
      %p879 = scmp.eq.s32.totalorder %s87, 1
      %p880 = por %p878, %p879
      %p881 = scmp.ne.s32.totalorder %s873, %s876
      %p882 = scmp.eq.s32.totalorder %s87, 0
      %p883 = por %p881, %p882
      %p884 = scmp.ne.s32.totalorder %s873, %s876
      %p885 = scmp.eq.s32.totalorder %s92, 1
      %p886 = por %p884, %p885
      %p887 = scmp.ne.s32.totalorder %s876, %s877
      %p888 = scmp.eq.s32.totalorder %s92, 0
      %p889 = por %p887, %p888
      %p890 = scmp.ne.s32.totalorder %s876, %s877
      %p891 = scmp.eq.s32.totalorder %s93, 1
      %p892 = por %p890, %p891
      %p894 = scmp.ne.s32.totalorder %s877, %s893
      %p895 = scmp.eq.s32.totalorder %s93, 0
      %p896 = por %p894, %p895
      %s897 = ssub.s32 %s87, %s94
      %p898 = scmp.eq.s32.totalorder %s897, 0
      %s900 = sadd.s32 %s899, 1
      %s901 = scalar_select %p898, %s899, %s900
      %p904 = pneg %p898
      %p905 = scmp.eq.s32.totalorder %s87, 1
      %p906 = por %p904, %p905
      %p907 = scmp.ne.s32.totalorder %s899, %s902
      %p908 = scmp.eq.s32.totalorder %s87, 0
      %p909 = por %p907, %p908
      %p910 = scmp.ne.s32.totalorder %s899, %s902
      %p911 = scmp.eq.s32.totalorder %s92, 1
      %p912 = por %p910, %p911
      %p913 = scmp.ne.s32.totalorder %s902, %s903
      %p914 = scmp.eq.s32.totalorder %s92, 0
      %p915 = por %p913, %p914
      %p916 = scmp.ne.s32.totalorder %s902, %s903
      %p917 = scmp.eq.s32.totalorder %s93, 1
      %p918 = por %p916, %p917
      %p920 = scmp.ne.s32.totalorder %s903, %s919
      %p921 = scmp.eq.s32.totalorder %s93, 0
      %p922 = por %p920, %p921
      %s923 = ssub.s32 %s87, %s94
      %p924 = scmp.eq.s32.totalorder %s923, 0
      %s926 = sadd.s32 %s925, 1
      %s927 = scalar_select %p924, %s925, %s926
      %p930 = pneg %p924
      %p931 = scmp.eq.s32.totalorder %s87, 1
      %p932 = por %p930, %p931
      %p933 = scmp.ne.s32.totalorder %s925, %s928
      %p934 = scmp.eq.s32.totalorder %s87, 0
      %p935 = por %p933, %p934
      %p936 = scmp.ne.s32.totalorder %s925, %s928
      %p937 = scmp.eq.s32.totalorder %s92, 1
      %p938 = por %p936, %p937
      %p939 = scmp.ne.s32.totalorder %s928, %s929
      %p940 = scmp.eq.s32.totalorder %s92, 0
      %p941 = por %p939, %p940
      %p942 = scmp.ne.s32.totalorder %s928, %s929
      %p943 = scmp.eq.s32.totalorder %s93, 1
      %p944 = por %p942, %p943
      %p946 = scmp.ne.s32.totalorder %s929, %s945
      %p947 = scmp.eq.s32.totalorder %s93, 0
      %p948 = por %p946, %p947
      %p949 = scmp.le.s32.totalorder 1, %s87
      %p950 = scmp.lt.s32.totalorder %s87, 3
      %p951 = pnand %p949, %p950
      %p952 = pneg %p951
      // Predicated region
      $region9: #{transformer_apply.1} parent=5 // pred_check
        _
      $region10: #{transformer_apply.1} parent=5 // pred_check_branch
        %954 = sbr.rel (%p951) target = $region12
      $region11: #{transformer_apply.1} parent=5 // pred_region
        %s955 = ssub.s32 %s87, 1
        // Predicated region
        $region13: #{transformer_apply.1} parent=11 // pred_check
          %p956 = pneg %p186
        $region14: #{transformer_apply.1} parent=11 // pred_check_branch
          %958 = sbr.rel (%p956) target = $region16
        $region15: #{transformer_apply.1} parent=11 // pred_region
          _
        $region16: #{transformer_apply.1} parent=11 // pred_fallthru
          _
        // Predicated region
        $region17: #{transformer_apply.1} parent=11 // pred_check
          %p959 = pneg %p207
        $region18: #{transformer_apply.1} parent=11 // pred_check_branch
          %961 = sbr.rel (%p959) target = $region20
        $region19: #{transformer_apply.1} parent=11 // pred_region
          _
        $region20: #{transformer_apply.1} parent=11 // pred_fallthru
          _
        // Predicated region
        $region21: #{transformer_apply.1} parent=11 // pred_check
          %p962 = pneg %p228
        $region22: #{transformer_apply.1} parent=11 // pred_check_branch
          %964 = sbr.rel (%p962) target = $region24
        $region23: #{transformer_apply.1} parent=11 // pred_region
          _
        $region24: #{transformer_apply.1} parent=11 // pred_fallthru
          _
        // Predicated region
        $region25: #{transformer_apply.1} parent=11 // pred_check
          %p965 = pneg %p249
        $region26: #{transformer_apply.1} parent=11 // pred_check_branch
          %967 = sbr.rel (%p965) target = $region28
        $region27: #{transformer_apply.1} parent=11 // pred_region
          _
        $region28: #{transformer_apply.1} parent=11 // pred_fallthru
          _
        // Predicated region
        $region29: #{transformer_apply.1} parent=11 // pred_check
          %p968 = pneg %p270
        $region30: #{transformer_apply.1} parent=11 // pred_check_branch
          %970 = sbr.rel (%p968) target = $region32
        $region31: #{transformer_apply.1} parent=11 // pred_region
          _
        $region32: #{transformer_apply.1} parent=11 // pred_fallthru
          _
        // Predicated region
        $region33: #{transformer_apply.1} parent=11 // pred_check
          %p971 = pneg %p291
        $region34: #{transformer_apply.1} parent=11 // pred_check_branch
          %973 = sbr.rel (%p971) target = $region36
        $region35: #{transformer_apply.1} parent=11 // pred_region
          _
        $region36: #{transformer_apply.1} parent=11 // pred_fallthru
          _
        // Predicated region
        $region37: #{transformer_apply.1} parent=11 // pred_check
          %p974 = pneg %p312
        $region38: #{transformer_apply.1} parent=11 // pred_check_branch
          %976 = sbr.rel (%p974) target = $region40
        $region39: #{transformer_apply.1} parent=11 // pred_region
          _
        $region40: #{transformer_apply.1} parent=11 // pred_fallthru
          _
        // Predicated region
        $region41: #{transformer_apply.1} parent=11 // pred_check
          %p977 = pneg %p333
        $region42: #{transformer_apply.1} parent=11 // pred_check_branch
          %979 = sbr.rel (%p977) target = $region44
        $region43: #{transformer_apply.1} parent=11 // pred_region
          _
        $region44: #{transformer_apply.1} parent=11 // pred_fallthru
          _
        // Predicated region
        $region45: #{transformer_apply.1} parent=11 // pred_check
          %p980 = pneg %p354
        $region46: #{transformer_apply.1} parent=11 // pred_check_branch
          %982 = sbr.rel (%p980) target = $region48
        $region47: #{transformer_apply.1} parent=11 // pred_region
          _
        $region48: #{transformer_apply.1} parent=11 // pred_fallthru
          _
        // Predicated region
        $region49: #{transformer_apply.1} parent=11 // pred_check
          %p983 = pneg %p375
        $region50: #{transformer_apply.1} parent=11 // pred_check_branch
          %985 = sbr.rel (%p983) target = $region52
        $region51: #{transformer_apply.1} parent=11 // pred_region
          _
        $region52: #{transformer_apply.1} parent=11 // pred_fallthru
          _
        // Predicated region
        $region53: #{transformer_apply.1} parent=11 // pred_check
          %p986 = pneg %p396
        $region54: #{transformer_apply.1} parent=11 // pred_check_branch
          %988 = sbr.rel (%p986) target = $region56
        $region55: #{transformer_apply.1} parent=11 // pred_region
          _
        $region56: #{transformer_apply.1} parent=11 // pred_fallthru
          _
        // Predicated region
        $region57: #{transformer_apply.1} parent=11 // pred_check
          %p989 = pneg %p417
        $region58: #{transformer_apply.1} parent=11 // pred_check_branch
          %991 = sbr.rel (%p989) target = $region60
        $region59: #{transformer_apply.1} parent=11 // pred_region
          _
        $region60: #{transformer_apply.1} parent=11 // pred_fallthru
          _
        // Predicated region
        $region61: #{transformer_apply.1} parent=11 // pred_check
          %p992 = pneg %p438
        $region62: #{transformer_apply.1} parent=11 // pred_check_branch
          %994 = sbr.rel (%p992) target = $region64
        $region63: #{transformer_apply.1} parent=11 // pred_region
          _
        $region64: #{transformer_apply.1} parent=11 // pred_fallthru
          _
        // Predicated region
        $region65: #{transformer_apply.1} parent=11 // pred_check
          %p995 = pneg %p459
        $region66: #{transformer_apply.1} parent=11 // pred_check_branch
          %997 = sbr.rel (%p995) target = $region68
        $region67: #{transformer_apply.1} parent=11 // pred_region
          _
        $region68: #{transformer_apply.1} parent=11 // pred_fallthru
          _
        // Predicated region
        $region69: #{transformer_apply.1} parent=11 // pred_check
          %p998 = pneg %p480
        $region70: #{transformer_apply.1} parent=11 // pred_check_branch
          %1000 = sbr.rel (%p998) target = $region72
        $region71: #{transformer_apply.1} parent=11 // pred_region
          _
        $region72: #{transformer_apply.1} parent=11 // pred_fallthru
          _
        // Predicated region
        $region73: #{transformer_apply.1} parent=11 // pred_check
          %p1001 = pneg %p501
        $region74: #{transformer_apply.1} parent=11 // pred_check_branch
          %1003 = sbr.rel (%p1001) target = $region76
        $region75: #{transformer_apply.1} parent=11 // pred_region
          _
        $region76: #{transformer_apply.1} parent=11 // pred_fallthru
          _
        // Predicated region
        $region77: #{transformer_apply.1} parent=11 // pred_check
          %p1004 = pneg %p522
        $region78: #{transformer_apply.1} parent=11 // pred_check_branch
          %1006 = sbr.rel (%p1004) target = $region80
        $region79: #{transformer_apply.1} parent=11 // pred_region
          _
        $region80: #{transformer_apply.1} parent=11 // pred_fallthru
          _
        // Predicated region
        $region81: #{transformer_apply.1} parent=11 // pred_check
          %p1007 = pneg %p543
        $region82: #{transformer_apply.1} parent=11 // pred_check_branch
          %1009 = sbr.rel (%p1007) target = $region84
        $region83: #{transformer_apply.1} parent=11 // pred_region
          _
        $region84: #{transformer_apply.1} parent=11 // pred_fallthru
          _
        // Predicated region
        $region85: #{transformer_apply.1} parent=11 // pred_check
          %p1010 = pneg %p564
        $region86: #{transformer_apply.1} parent=11 // pred_check_branch
          %1012 = sbr.rel (%p1010) target = $region88
        $region87: #{transformer_apply.1} parent=11 // pred_region
          _
        $region88: #{transformer_apply.1} parent=11 // pred_fallthru
          _
        // Predicated region
        $region89: #{transformer_apply.1} parent=11 // pred_check
          %p1013 = pneg %p585
        $region90: #{transformer_apply.1} parent=11 // pred_check_branch
          %1015 = sbr.rel (%p1013) target = $region92
        $region91: #{transformer_apply.1} parent=11 // pred_region
          _
        $region92: #{transformer_apply.1} parent=11 // pred_fallthru
          _
        // Predicated region
        $region93: #{transformer_apply.1} parent=11 // pred_check
          %p1016 = pneg %p606
        $region94: #{transformer_apply.1} parent=11 // pred_check_branch
          %1018 = sbr.rel (%p1016) target = $region96
        $region95: #{transformer_apply.1} parent=11 // pred_region
          _
        $region96: #{transformer_apply.1} parent=11 // pred_fallthru
          _
        // Predicated region
        $region97: #{transformer_apply.1} parent=11 // pred_check
          %p1019 = pneg %p627
        $region98: #{transformer_apply.1} parent=11 // pred_check_branch
          %1021 = sbr.rel (%p1019) target = $region100
        $region99: #{transformer_apply.1} parent=11 // pred_region
          _
        $region100: #{transformer_apply.1} parent=11 // pred_fallthru
          _
        // Predicated region
        $region101: #{transformer_apply.1} parent=11 // pred_check
          %p1022 = pneg %p648
        $region102: #{transformer_apply.1} parent=11 // pred_check_branch
          %1024 = sbr.rel (%p1022) target = $region104
        $region103: #{transformer_apply.1} parent=11 // pred_region
          _
        $region104: #{transformer_apply.1} parent=11 // pred_fallthru
          _
        // Predicated region
        $region105: #{transformer_apply.1} parent=11 // pred_check
          %p1025 = pneg %p669
        $region106: #{transformer_apply.1} parent=11 // pred_check_branch
          %1027 = sbr.rel (%p1025) target = $region108
        $region107: #{transformer_apply.1} parent=11 // pred_region
          _
        $region108: #{transformer_apply.1} parent=11 // pred_fallthru
          _
        // Predicated region
        $region109: #{transformer_apply.1} parent=11 // pred_check
          %p1028 = pneg %p690
        $region110: #{transformer_apply.1} parent=11 // pred_check_branch
          %1030 = sbr.rel (%p1028) target = $region112
        $region111: #{transformer_apply.1} parent=11 // pred_region
          _
        $region112: #{transformer_apply.1} parent=11 // pred_fallthru
          _
        // Predicated region
        $region113: #{transformer_apply.1} parent=11 // pred_check
          %p1031 = pneg %p711
        $region114: #{transformer_apply.1} parent=11 // pred_check_branch
          %1033 = sbr.rel (%p1031) target = $region116
        $region115: #{transformer_apply.1} parent=11 // pred_region
          _
        $region116: #{transformer_apply.1} parent=11 // pred_fallthru
          _
        // Predicated region
        $region117: #{transformer_apply.1} parent=11 // pred_check
          %p1034 = pneg %p732
        $region118: #{transformer_apply.1} parent=11 // pred_check_branch
          %1036 = sbr.rel (%p1034) target = $region120
        $region119: #{transformer_apply.1} parent=11 // pred_region
          _
        $region120: #{transformer_apply.1} parent=11 // pred_fallthru
          _
        // Predicated region
        $region121: #{transformer_apply.1} parent=11 // pred_check
          %p1037 = pneg %p753
        $region122: #{transformer_apply.1} parent=11 // pred_check_branch
          %1039 = sbr.rel (%p1037) target = $region124
        $region123: #{transformer_apply.1} parent=11 // pred_region
          _
        $region124: #{transformer_apply.1} parent=11 // pred_fallthru
          _
        // Predicated region
        $region125: #{transformer_apply.1} parent=11 // pred_check
          %p1040 = pneg %p774
        $region126: #{transformer_apply.1} parent=11 // pred_check_branch
          %1042 = sbr.rel (%p1040) target = $region128
        $region127: #{transformer_apply.1} parent=11 // pred_region
          _
        $region128: #{transformer_apply.1} parent=11 // pred_fallthru
          _
        // Predicated region
        $region129: #{transformer_apply.1} parent=11 // pred_check
          %p1043 = pneg %p795
        $region130: #{transformer_apply.1} parent=11 // pred_check_branch
          %1045 = sbr.rel (%p1043) target = $region132
        $region131: #{transformer_apply.1} parent=11 // pred_region
          _
        $region132: #{transformer_apply.1} parent=11 // pred_fallthru
          _
        // Predicated region
        $region133: #{transformer_apply.1} parent=11 // pred_check
          %p1046 = pneg %p816
        $region134: #{transformer_apply.1} parent=11 // pred_check_branch
          %1048 = sbr.rel (%p1046) target = $region136
        $region135: #{transformer_apply.1} parent=11 // pred_region
          _
        $region136: #{transformer_apply.1} parent=11 // pred_fallthru
          _
        // Predicated region
        $region137: #{transformer_apply.1} parent=11 // pred_check
          %p1049 = pneg %p837
        $region138: #{transformer_apply.1} parent=11 // pred_check_branch
          %1051 = sbr.rel (%p1049) target = $region140
        $region139: #{transformer_apply.1} parent=11 // pred_region
          _
        $region140: #{transformer_apply.1} parent=11 // pred_fallthru
          _
      $region12: #{transformer_apply.1} parent=5 // pred_fallthru
        _
      %p1052 = scmp.lt.s32.totalorder %s87, 2
      // Predicated region
      $region141: #{transformer_apply.1} parent=5 // pred_check
        %p1053 = pneg %p1052
      $region142: #{transformer_apply.1} parent=5 // pred_check_branch
        %1055 = sbr.rel (%p1053) target = $region144
      $region143: #{transformer_apply.1} parent=5 // pred_region
        // Predicated region
        $region145: #{transformer_apply.1} parent=143 // pred_check
          %p1056 = pneg %p107
        $region146: #{transformer_apply.1} parent=143 // pred_check_branch
          %1058 = sbr.rel (%p1056) target = $region148
        $region147: #{transformer_apply.1} parent=143 // pred_region
          %p1059 = scmp.lt.s32.totalorder %s87, 1
          %s1060 = scalar_select %p1059, %s87, 1
          %s1061 = smul.addr %s1060, 8
          %s1062 = scalar_lea.vmem %s1, %s1061
        $region148: #{transformer_apply.1} parent=143 // pred_fallthru
          _
        // Predicated region
        $region149: #{transformer_apply.1} parent=143 // pred_check
          %p1063 = pneg %p133
        $region150: #{transformer_apply.1} parent=143 // pred_check_branch
          %1065 = sbr.rel (%p1063) target = $region152
        $region151: #{transformer_apply.1} parent=143 // pred_region
          %p1066 = scmp.lt.s32.totalorder %s87, 1
          %s1067 = scalar_select %p1066, %s87, 1
          %s1068 = smul.addr %s1067, 8
          %s1069 = scalar_lea.vmem %s3, %s1068
        $region152: #{transformer_apply.1} parent=143 // pred_fallthru
          _
        // Predicated region
        $region153: #{transformer_apply.1} parent=143 // pred_check
          %p1070 = pneg %p159
        $region154: #{transformer_apply.1} parent=143 // pred_check_branch
          %1072 = sbr.rel (%p1070) target = $region156
        $region155: #{transformer_apply.1} parent=143 // pred_region
          %p1073 = scmp.lt.s32.totalorder %s87, 1
          %s1074 = scalar_select %p1073, %s87, 1
          %s1075 = smul.addr %s1074, 8
          %s1076 = scalar_lea.vmem %s5, %s1075
        $region156: #{transformer_apply.1} parent=143 // pred_fallthru
          _
      $region144: #{transformer_apply.1} parent=5 // pred_fallthru
        _
      %p1077 = scmp.le.s32.totalorder 1, %s87
      %p1078 = scmp.lt.s32.totalorder %s87, 3
      %p1079 = pnand %p1077, %p1078
      %p1080 = pneg %p1079
      // Predicated region
      $region157: #{transformer_apply.1} parent=5 // pred_check
        _
      $region158: #{transformer_apply.1} parent=5 // pred_check_branch
        %1082 = sbr.rel (%p1079) target = $region160
      $region159: #{transformer_apply.1} parent=5 // pred_region
        %s1083 = ssub.s32 %s87, 1
        %p1084 = scmp.lt.s32.totalorder %s92, 1
        %s1085 = scalar_select %p1084, %s92, 1
        %s1086 = smul.addr %s1085, 8
        %s1087 = scalar_lea.vmem %s1, %s1086
        %p1088 = pneg %p113
        %p1089 = pneg %p110
        %p1090 = scmp.lt.s32.totalorder %s92, 1
        %s1091 = scalar_select %p1090, %s92, 1
        %s1092 = smul.addr %s1091, 8
        %s1093 = scalar_lea.vmem %s3, %s1092
        %p1094 = pneg %p139
        %p1095 = pneg %p136
        %p1096 = scmp.lt.s32.totalorder %s92, 1
        %s1097 = scalar_select %p1096, %s92, 1
        %s1098 = smul.addr %s1097, 8
        %s1099 = scalar_lea.vmem %s5, %s1098
        %p1100 = pneg %p165
        %p1101 = pneg %p162
        %p1102 = pneg %p186
        %p1103 = pneg %p183
        %p1104 = pneg %p207
        %p1105 = pneg %p204
        %p1106 = pneg %p228
        %p1107 = pneg %p225
        %p1108 = pneg %p249
        %p1109 = pneg %p246
        %p1110 = pneg %p270
        %p1111 = pneg %p267
        %p1112 = pneg %p291
        %p1113 = pneg %p288
        %p1114 = pneg %p312
        %p1115 = pneg %p309
        %p1116 = pneg %p333
        %p1117 = pneg %p330
        %p1118 = pneg %p354
        %p1119 = pneg %p351
        %p1120 = pneg %p375
        %p1121 = pneg %p372
        %p1122 = pneg %p396
        %p1123 = pneg %p393
        %p1124 = pneg %p417
        %p1125 = pneg %p414
        %p1126 = pneg %p438
        %p1127 = pneg %p435
        %p1128 = pneg %p459
        %p1129 = pneg %p456
        %p1130 = pneg %p480
        %p1131 = pneg %p477
        %p1132 = pneg %p501
        %p1133 = pneg %p498
        %p1134 = pneg %p522
        %p1135 = pneg %p519
        %p1136 = pneg %p543
        %p1137 = pneg %p540
        %p1138 = pneg %p564
        %p1139 = pneg %p561
        %p1140 = pneg %p585
        %p1141 = pneg %p582
        %p1142 = pneg %p606
        %p1143 = pneg %p603
        %p1144 = pneg %p627
        %p1145 = pneg %p624
        %p1146 = pneg %p648
        %p1147 = pneg %p645
        %p1148 = pneg %p669
        %p1149 = pneg %p666
        %p1150 = pneg %p690
        %p1151 = pneg %p687
        %p1152 = pneg %p711
        %p1153 = pneg %p708
        %p1154 = pneg %p732
        %p1155 = pneg %p729
        %p1156 = pneg %p753
        %p1157 = pneg %p750
        %p1158 = pneg %p774
        %p1159 = pneg %p771
        %p1160 = pneg %p795
        %p1161 = pneg %p792
        %p1162 = pneg %p816
        %p1163 = pneg %p813
        %p1164 = pneg %p837
        %p1165 = pneg %p834
        %p1166 = pneg %p863
        %p1167 = pneg %p860
        %s1168 = sand.u32 %s850, 1
        %s1169 = scalar_lea.sflag [#allocation3], %s1168
        %s1170 = sand.u32 %s850, 1
        %s1171 = smul.addr %s1170, 8
        %s1172 = scalar_lea.vmem [#allocation2], %s1171
        %p1173 = pneg %p889
        %p1174 = pneg %p886
        %s1175 = sand.u32 %s876, 1
        %s1176 = sand.u32 %s876, 1
        %s1177 = smul.addr %s1176, 16
        %s1178 = scalar_lea.vmem [#allocation4], %s1177
        %p1179 = pneg %p915
        %p1180 = pneg %p912
        %s1181 = sand.u32 %s902, 1
        %s1182 = sand.u32 %s902, 1
        %s1183 = smul.addr %s1182, 16
        %s1184 = scalar_lea.vmem [#allocation5], %s1183
        %p1185 = pneg %p941
        %p1186 = pneg %p938
        %s1187 = sand.u32 %s928, 1
        %s1188 = sand.u32 %s928, 1
        %s1189 = smul.addr %s1188, 16
        %s1190 = scalar_lea.vmem [#allocation6], %s1189
        %p1191 = scmp.lt.s32.totalorder %s92, 1
        %s1192 = scalar_select %p1191, %s92, 1
        %s1193 = smul.addr %s1192, 8
        %s1194 = scalar_lea.vmem %s1, %s1193
        %p1195 = scmp.lt.s32.totalorder %s92, 1
        %s1196 = scalar_select %p1195, %s92, 1
        %s1197 = smul.addr %s1196, 8
        %s1198 = scalar_lea.vmem %s3, %s1197
        %p1199 = scmp.lt.s32.totalorder %s92, 1
        %s1200 = scalar_select %p1199, %s92, 1
        %s1201 = smul.addr %s1200, 8
        %s1202 = scalar_lea.vmem %s5, %s1201
        %v1203 = vld [vmem:[%s1194] sm:$0xff]
        %v1204 = vld [vmem:[%s7] sm:$0xff]
        %v1205 = vld [vmem:[%s7 + $0x8] sm:$0xff]
        %v1206 = vld [vmem:[%s7 + $0x10] sm:$0xff]
        %v1207 = vld [vmem:[%s7 + $0x18] sm:$0xff]
        %v1208 = vld [vmem:[%s9] sm:$0xff]
        %v1209 = vld [vmem:[%s9 + $0x8] sm:$0xff]
        %v1210 = vld [vmem:[%s9 + $0x10] sm:$0xff]
        %v1211 = vld [vmem:[%s9 + $0x18] sm:$0xff]
        %v1212 = vld [vmem:[%s9 + $0x20] sm:$0xff]
        %v1213 = vld [vmem:[%s9 + $0x28] sm:$0xff]
        %v1214 = vld [vmem:[%s9 + $0x30] sm:$0xff]
        %v1215 = vld [vmem:[%s9 + $0x38] sm:$0xff]
        %v1216 = vld [vmem:[%s11] sm:$0x1]
        %v1217 = vld [vmem:[%s13] sm:$0x1]
        %v1218 = vld [vmem:[%s15] sm:$0x1]
        %vm1219 = vcmask 261120
        %v1221 = vsel %vm1219, %v1203, 0
        %1223 = vmatpush.msra.mxu0 0.0
        %1224 = vmatpush.msra.mxu0 0.0
        %1225 = vmatpush.msra.mxu0 0.0
        %1226 = vmatpush.msra.mxu0 0.0
        %1227 = vmatpush.msra.mxu0 0.0
        %1228 = vmatpush.msra.mxu0 0.0
        %1229 = vmatpush.msra.mxu0 0.0
        %1230 = vmatpush.msra.mxu0 0.0
        %1231 = vmatpush.msra.mxu0 0.0
        %1232 = vmatpush.msra.mxu0 0.0
        %1233 = vmatpush.msra.mxu0 0.0
        %1234 = vmatpush.msra.mxu0 0.0
        %1235 = vmatpush.msra.mxu0 %v1207
        %1236 = vmatpush.msra.mxu0 %v1206
        %1237 = vmatpush.msra.mxu0 %v1205
        %1238 = vmatpush.msra.mxu0 %v1204
        %1239 = vmatmul.f32.gmra.mxu0 %v1221
        %v1240 = vpop.f32.mrf.mxu0
        %v1241 = vadd.f32 0.0, %v1240
        %1242 = vdwg.mxu0
        %1244 = vrot.lane.b32.xlu0 %v1241, 96
        %v1245 = vpop.permute.xlu0 %1244
        %vm1246 = vcmask 64512
        %v1247 = vsel %vm1246, %v1241, 0
        %v1249 = vsel %vm1246, %v1245, 0
        %1251 = vmatpush.xpose.msra.mxu0 0.0
        %1252 = vmatpush.xpose.msra.mxu0 0.0
        %1253 = vmatpush.xpose.msra.mxu0 0.0
        %1254 = vmatpush.xpose.msra.mxu0 0.0
        %1255 = vmatpush.xpose.msra.mxu0 0.0
        %1256 = vmatpush.xpose.msra.mxu0 0.0
        %1257 = vmatpush.xpose.msra.mxu0 0.0
        %1258 = vmatpush.xpose.msra.mxu0 0.0
        %1259 = vmatpush.xpose.msra.mxu0 0.0
        %1260 = vmatpush.xpose.msra.mxu0 0.0
        %1261 = vmatpush.xpose.msra.mxu0 0.0
        %1262 = vmatpush.xpose.msra.mxu0 0.0
        %1263 = vmatpush.xpose.msra.mxu0 0.0
        %1264 = vmatpush.xpose.msra.mxu0 0.0
        %1265 = vmatpush.xpose.msra.mxu0 0.0
        %1266 = vmatpush.xpose.msra.mxu0 %v1249
        %1267 = vmatmul.f32.gmra.mxu0 %v1247
        %v1268 = vpop.f32.mrf.mxu0
        %v1269 = vadd.f32 0.0, %v1268
        %1270 = vdwg.mxu0
        %1271 = vrot.lane.b32.xlu0 %v1241, 120
        %v1272 = vpop.permute.xlu0 %1271
        %1273 = vrot.lane.b32.xlu0 %v1241, 88
        %v1274 = vpop.permute.xlu0 %1273
        %v1275 = vsel %vm1246, %v1272, 0
        %v1277 = vsel %vm1246, %v1274, 0
        %1279 = vmatpush.xpose.msra.mxu0 0.0
        %1280 = vmatpush.xpose.msra.mxu0 0.0
        %1281 = vmatpush.xpose.msra.mxu0 0.0
        %1282 = vmatpush.xpose.msra.mxu0 0.0
        %1283 = vmatpush.xpose.msra.mxu0 0.0
        %1284 = vmatpush.xpose.msra.mxu0 0.0
        %1285 = vmatpush.xpose.msra.mxu0 0.0
        %1286 = vmatpush.xpose.msra.mxu0 0.0
        %1287 = vmatpush.xpose.msra.mxu0 0.0
        %1288 = vmatpush.xpose.msra.mxu0 0.0
        %1289 = vmatpush.xpose.msra.mxu0 0.0
        %1290 = vmatpush.xpose.msra.mxu0 0.0
        %1291 = vmatpush.xpose.msra.mxu0 0.0
        %1292 = vmatpush.xpose.msra.mxu0 0.0
        %1293 = vmatpush.xpose.msra.mxu0 0.0
        %1294 = vmatpush.xpose.msra.mxu0 %v1277
        %1295 = vmatmul.f32.gmra.mxu0 %v1275
        %v1296 = vpop.f32.mrf.mxu0
        %v1297 = vadd.f32 0.0, %v1296
        %1298 = vdwg.mxu0
        %1299 = vrot.lane.b32.xlu0 %v1241, 112
        %v1300 = vpop.permute.xlu0 %1299
        %1301 = vrot.lane.b32.xlu0 %v1241, 80
        %v1302 = vpop.permute.xlu0 %1301
        %v1303 = vsel %vm1246, %v1300, 0
        %v1305 = vsel %vm1246, %v1302, 0
        %1307 = vmatpush.xpose.msra.mxu0 0.0
        %1308 = vmatpush.xpose.msra.mxu0 0.0
        %1309 = vmatpush.xpose.msra.mxu0 0.0
        %1310 = vmatpush.xpose.msra.mxu0 0.0
        %1311 = vmatpush.xpose.msra.mxu0 0.0
        %1312 = vmatpush.xpose.msra.mxu0 0.0
        %1313 = vmatpush.xpose.msra.mxu0 0.0
        %1314 = vmatpush.xpose.msra.mxu0 0.0
        %1315 = vmatpush.xpose.msra.mxu0 0.0
        %1316 = vmatpush.xpose.msra.mxu0 0.0
        %1317 = vmatpush.xpose.msra.mxu0 0.0
        %1318 = vmatpush.xpose.msra.mxu0 0.0
        %1319 = vmatpush.xpose.msra.mxu0 0.0
        %1320 = vmatpush.xpose.msra.mxu0 0.0
        %1321 = vmatpush.xpose.msra.mxu0 0.0
        %1322 = vmatpush.xpose.msra.mxu0 %v1305
        %1323 = vmatmul.f32.gmra.mxu0 %v1303
        %v1324 = vpop.f32.mrf.mxu0
        %v1325 = vadd.f32 0.0, %v1324
        %1326 = vdwg.mxu0
        %1327 = vrot.lane.b32.xlu0 %v1241, 104
        %v1328 = vpop.permute.xlu0 %1327
        %1329 = vrot.lane.b32.xlu0 %v1241, 72
        %v1330 = vpop.permute.xlu0 %1329
        %v1331 = vsel %vm1246, %v1328, 0
        %v1333 = vsel %vm1246, %v1330, 0
        %1335 = vmatpush.xpose.msra.mxu0 0.0
        %1336 = vmatpush.xpose.msra.mxu0 0.0
        %1337 = vmatpush.xpose.msra.mxu0 0.0
        %1338 = vmatpush.xpose.msra.mxu0 0.0
        %1339 = vmatpush.xpose.msra.mxu0 0.0
        %1340 = vmatpush.xpose.msra.mxu0 0.0
        %1341 = vmatpush.xpose.msra.mxu0 0.0
        %1342 = vmatpush.xpose.msra.mxu0 0.0
        %1343 = vmatpush.xpose.msra.mxu0 0.0
        %1344 = vmatpush.xpose.msra.mxu0 0.0
        %1345 = vmatpush.xpose.msra.mxu0 0.0
        %1346 = vmatpush.xpose.msra.mxu0 0.0
        %1347 = vmatpush.xpose.msra.mxu0 0.0
        %1348 = vmatpush.xpose.msra.mxu0 0.0
        %1349 = vmatpush.xpose.msra.mxu0 0.0
        %1350 = vmatpush.xpose.msra.mxu0 %v1333
        %1351 = vmatmul.f32.gmra.mxu0 %v1331
        %v1352 = vpop.f32.mrf.mxu0
        %v1353 = vadd.f32 0.0, %v1352
        %1354 = vdwg.mxu0
        %v1355 = vmul.f32 %v1269, 0.35355338
        %v1356 = vmul.f32 %v1297, 0.35355338
        %v1357 = vmul.f32 %v1325, 0.35355338
        %v1358 = vmul.f32 %v1353, 0.35355338
        %v1359 = vsel %vm1246, %v1355, -inf
        %1360 = vmax.xlane.f32.xlu0 %v1359
        %v1361 = vpop.xlane.xlu0 %1360
        %v1362 = vsel %vm1246, %v1356, -inf
        %1363 = vmax.xlane.f32.xlu0 %v1362
        %v1364 = vpop.xlane.xlu0 %1363
        %v1365 = vsel %vm1246, %v1357, -inf
        %1366 = vmax.xlane.f32.xlu0 %v1365
        %v1367 = vpop.xlane.xlu0 %1366
        %v1368 = vsel %vm1246, %v1358, -inf
        %1369 = vmax.xlane.f32.xlu0 %v1368
        %v1370 = vpop.xlane.xlu0 %1369
        %v1371 = vsub.f32 %v1355, %v1361
        %v1372 = vsub.f32 %v1356, %v1364
        %v1373 = vsub.f32 %v1357, %v1367
        %v1374 = vsub.f32 %v1358, %v1370
        %v1375 = vmul.f32 %v1371, 1.442695
        %v1376 = vpow.pop %v1375
        %v1377 = vmul.f32 %v1372, 1.442695
        %v1378 = vpow.pop %v1377
        %v1379 = vmul.f32 %v1373, 1.442695
        %v1380 = vpow.pop %v1379
        %v1381 = vmul.f32 %v1374, 1.442695
        %v1382 = vpow.pop %v1381
        %v1383 = vsel %vm1246, %v1376, 0.0
        %1384 = vadd.xlane.f32.xlu0 %v1383
        %v1385 = vpop.xlane.xlu0 %1384
        %v1386 = vsel %vm1246, %v1378, 0.0
        %1387 = vadd.xlane.f32.xlu0 %v1386
        %v1388 = vpop.xlane.xlu0 %1387
        %v1389 = vsel %vm1246, %v1380, 0.0
        %1390 = vadd.xlane.f32.xlu0 %v1389
        %v1391 = vpop.xlane.xlu0 %1390
        %v1392 = vsel %vm1246, %v1382, 0.0
        %1393 = vadd.xlane.f32.xlu0 %v1392
        %v1394 = vpop.xlane.xlu0 %1393
        %v1395 = vrcp.pop %v1385
        %v1396 = vrcp.pop %v1388
        %v1397 = vrcp.pop %v1391
        %v1398 = vrcp.pop %v1394
        %v1399 = vmul.f32 %v1376, %v1395
        %v1400 = vmul.f32 %v1378, %v1396
        %v1401 = vmul.f32 %v1380, %v1397
        %v1402 = vmul.f32 %v1382, %v1398
        %1403 = vrot.lane.b32.xlu0 %v1241, 64
        %v1404 = vpop.permute.xlu0 %1403
        %v1407 = vsel %vm1246, %v1399, 0
        %1409 = vmatpush.msra.mxu0 0.0
        %1410 = vmatpush.msra.mxu0 0.0
        %1411 = vmatpush.msra.mxu0 0.0
        %1412 = vmatpush.msra.mxu0 0.0
        %1413 = vmatpush.msra.mxu0 0.0
        %1414 = vmatpush.msra.mxu0 0.0
        %1415 = vmatpush.msra.mxu0 0.0
        %1416 = vmatpush.msra.mxu0 0.0
        %1417 = vmatpush.msra.mxu0 0.0
        %1418 = vmatpush.msra.mxu0 0.0
        %1419 = vmatpush.msra.mxu0 0.0
        %1420 = vmatpush.msra.mxu0 0.0
        %1421 = vmatpush.msra.mxu0 0.0
        %1422 = vmatpush.msra.mxu0 0.0
        %1423 = vmatpush.msra.mxu0 0.0
        %1424 = vmatpush.msra.mxu0 %v1404
        %1425 = vmatmul.f32.gmra.mxu0 %v1407
        %v1426 = vpop.f32.mrf.mxu0
        %v1427 = vadd.f32 0.0, %v1426
        %1428 = vdwg.mxu0
        %1429 = vrot.lane.b32.xlu0 %v1241, 56
        %v1430 = vpop.permute.xlu0 %1429
        %v1433 = vsel %vm1246, %v1400, 0
        %1435 = vmatpush.msra.mxu0 0.0
        %1436 = vmatpush.msra.mxu0 0.0
        %1437 = vmatpush.msra.mxu0 0.0
        %1438 = vmatpush.msra.mxu0 0.0
        %1439 = vmatpush.msra.mxu0 0.0
        %1440 = vmatpush.msra.mxu0 0.0
        %1441 = vmatpush.msra.mxu0 0.0
        %1442 = vmatpush.msra.mxu0 0.0
        %1443 = vmatpush.msra.mxu0 0.0
        %1444 = vmatpush.msra.mxu0 0.0
        %1445 = vmatpush.msra.mxu0 0.0
        %1446 = vmatpush.msra.mxu0 0.0
        %1447 = vmatpush.msra.mxu0 0.0
        %1448 = vmatpush.msra.mxu0 0.0
        %1449 = vmatpush.msra.mxu0 0.0
        %1450 = vmatpush.msra.mxu0 %v1430
        %1451 = vmatmul.f32.gmra.mxu0 %v1433
        %v1452 = vpop.f32.mrf.mxu0
        %v1453 = vadd.f32 0.0, %v1452
        %1454 = vdwg.mxu0
        %1455 = vrot.lane.b32.xlu0 %v1241, 48
        %v1456 = vpop.permute.xlu0 %1455
        %v1459 = vsel %vm1246, %v1401, 0
        %1461 = vmatpush.msra.mxu0 0.0
        %1462 = vmatpush.msra.mxu0 0.0
        %1463 = vmatpush.msra.mxu0 0.0
        %1464 = vmatpush.msra.mxu0 0.0
        %1465 = vmatpush.msra.mxu0 0.0
        %1466 = vmatpush.msra.mxu0 0.0
        %1467 = vmatpush.msra.mxu0 0.0
        %1468 = vmatpush.msra.mxu0 0.0
        %1469 = vmatpush.msra.mxu0 0.0
        %1470 = vmatpush.msra.mxu0 0.0
        %1471 = vmatpush.msra.mxu0 0.0
        %1472 = vmatpush.msra.mxu0 0.0
        %1473 = vmatpush.msra.mxu0 0.0
        %1474 = vmatpush.msra.mxu0 0.0
        %1475 = vmatpush.msra.mxu0 0.0
        %1476 = vmatpush.msra.mxu0 %v1456
        %1477 = vmatmul.f32.gmra.mxu0 %v1459
        %v1478 = vpop.f32.mrf.mxu0
        %v1479 = vadd.f32 0.0, %v1478
        %1480 = vdwg.mxu0
        %1481 = vrot.lane.b32.xlu0 %v1241, 40
        %v1482 = vpop.permute.xlu0 %1481
        %v1485 = vsel %vm1246, %v1402, 0
        %1487 = vmatpush.msra.mxu0 0.0
        %1488 = vmatpush.msra.mxu0 0.0
        %1489 = vmatpush.msra.mxu0 0.0
        %1490 = vmatpush.msra.mxu0 0.0
        %1491 = vmatpush.msra.mxu0 0.0
        %1492 = vmatpush.msra.mxu0 0.0
        %1493 = vmatpush.msra.mxu0 0.0
        %1494 = vmatpush.msra.mxu0 0.0
        %1495 = vmatpush.msra.mxu0 0.0
        %1496 = vmatpush.msra.mxu0 0.0
        %1497 = vmatpush.msra.mxu0 0.0
        %1498 = vmatpush.msra.mxu0 0.0
        %1499 = vmatpush.msra.mxu0 0.0
        %1500 = vmatpush.msra.mxu0 0.0
        %1501 = vmatpush.msra.mxu0 0.0
        %1502 = vmatpush.msra.mxu0 %v1482
        %1503 = vmatmul.f32.gmra.mxu0 %v1485
        %v1504 = vpop.f32.mrf.mxu0
        %v1505 = vadd.f32 0.0, %v1504
        %1506 = vdwg.mxu0
        %1508 = vrot.lane.b32.xlu0 %v1453, 8
        %v1509 = vpop.permute.xlu0 %1508
        %1512 = vrot.lane.b32.xlu0 %v1479, 16
        %v1513 = vpop.permute.xlu0 %1512
        %1516 = vrot.lane.b32.xlu0 %v1505, 24
        %v1517 = vpop.permute.xlu0 %1516
        %v1519 = vsel %vm1246, %v1427, %v1509
        %vm1520 = vcmask 130048
        %v1521 = vsel %vm1520, %v1519, %v1513
        %vm1522 = vcmask 195584
        %v1523 = vsel %vm1522, %v1521, %v1517
        %1524 = vrot.lane.b32.xlu0 %v1400, 8
        %v1525 = vpop.permute.xlu0 %1524
        %1527 = vrot.lane.b32.xlu0 %v1401, 16
        %v1528 = vpop.permute.xlu0 %1527
        %1530 = vrot.lane.b32.xlu0 %v1402, 24
        %v1531 = vpop.permute.xlu0 %1530
        %v1533 = vsel %vm1246, %v1399, %v1525
        %v1534 = vsel %vm1520, %v1533, %v1528
        %v1535 = vsel %vm1522, %v1534, %v1531
        %1537 = vrot.lane.b32.xlu0 %v1523, 32
        %v1538 = vpop.permute.xlu0 %1537
        %v1540 = vsel %vm1219, %v1203, %v1538
        %v1542 = vperm.slane %v1216, 0
        %vm1544 = vcmask 523264
        %v1546 = vsel %vm1544, %v1540, 0
        %1548 = vmatpush.msra.mxu0 0.0
        %1549 = vmatpush.msra.mxu0 0.0
        %1550 = vmatpush.msra.mxu0 0.0
        %1551 = vmatpush.msra.mxu0 0.0
        %1552 = vmatpush.msra.mxu0 0.0
        %1553 = vmatpush.msra.mxu0 0.0
        %1554 = vmatpush.msra.mxu0 0.0
        %1555 = vmatpush.msra.mxu0 0.0
        %1556 = vmatpush.msra.mxu0 %v1215
        %1557 = vmatpush.msra.mxu0 %v1214
        %1558 = vmatpush.msra.mxu0 %v1213
        %1559 = vmatpush.msra.mxu0 %v1212
        %1560 = vmatpush.msra.mxu0 %v1211
        %1561 = vmatpush.msra.mxu0 %v1210
        %1562 = vmatpush.msra.mxu0 %v1209
        %1563 = vmatpush.msra.mxu0 %v1208
        %1564 = vmatmul.f32.gmra.mxu0 %v1546
        %v1565 = vpop.f32.mrf.mxu0
        %v1566 = vadd.f32 %v1542, %v1565
        %1567 = vdwg.mxu0
        %v1568 = vadd.f32 %v1566, %v1203
        %v1569 = vsel %vm1219, %v1568, 0.0
        %1570 = vadd.xlane.f32.xlu0 %v1569
        %v1571 = vpop.xlane.xlu0 %1570
        %v1572 = vrcp.pop 32.0
        %v1573 = vmul.f32 32.0, %v1572
        %v1574 = vsub.f32 1.0, %v1573
        %v1575 = vmul.f32 %v1572, %v1574
        %v1576 = vadd.f32 %v1572, %v1575
        %vm1577 = vweird.f32 %v1572
        %v1578 = vsel %vm1577, %v1572, %v1576
        %v1579 = vmul.f32 %v1571, %v1578
        %v1580 = vsub.f32 %v1568, %v1579
        %v1581 = vmul.f32 %v1580, %v1580
        %v1582 = vsel %vm1219, %v1581, 0.0
        %1583 = vadd.xlane.f32.xlu0 %v1582
        %v1584 = vpop.xlane.xlu0 %1583
        %v1585 = vmul.f32 %v1584, %v1578
        %v1586 = vadd.f32 %v1585, 1e-05
        %v1587 = vrsqrt.pop %v1586
        %v1588 = vmul.f32 %v1587, %v1586
        %v1589 = vmul.f32 %v1588, %v1587
        %v1590 = vmul.f32 0.5, %v1589
        %v1591 = vsub.f32 1.5, %v1590
        %v1592 = vmul.f32 %v1587, %v1591
        %vm1593 = vweird.f32 %v1586
        %vm1594 = vweird.f32 %v1587
        %vm1595 = vmor %vm1593, %vm1594
        %v1596 = vsel %vm1595, %v1587, %v1592
        %v1597 = vmul.f32 %v1580, %v1596
        %v1599 = vperm.slane %v1217, 0
        %v1601 = vmul.f32 %v1597, %v1599
        %v1603 = vperm.slane %v1218, 0
        %v1605 = vadd.f32 %v1601, %v1603
        %1606 = vst.msk [vmem:[%s1178] sm:$0xff] %vm1219, %v1535
        %v1607 = vld [vmem:[%s17] sm:$0xff]
        %v1608 = vld [vmem:[%s17 + $0x8] sm:$0xff]
        %v1609 = vld [vmem:[%s17 + $0x10] sm:$0xff]
        %v1610 = vld [vmem:[%s17 + $0x18] sm:$0xff]
        %v1611 = vld [vmem:[%s19] sm:$0x1]
        %v1612 = vld [vmem:[%s21] sm:$0xff]
        %v1613 = vld [vmem:[%s21 + $0x8] sm:$0xff]
        %v1614 = vld [vmem:[%s21 + $0x10] sm:$0xff]
        %v1615 = vld [vmem:[%s21 + $0x18] sm:$0xff]
        %v1616 = vld [vmem:[%s21 + $0x20] sm:$0xff]
        %v1617 = vld [vmem:[%s21 + $0x28] sm:$0xff]
        %v1618 = vld [vmem:[%s21 + $0x30] sm:$0xff]
        %v1619 = vld [vmem:[%s21 + $0x38] sm:$0xff]
        %v1620 = vld [vmem:[%s21 + $0x40] sm:$0xff]
        %v1621 = vld [vmem:[%s21 + $0x48] sm:$0xff]
        %v1622 = vld [vmem:[%s21 + $0x50] sm:$0xff]
        %v1623 = vld [vmem:[%s21 + $0x58] sm:$0xff]
        %v1624 = vld [vmem:[%s21 + $0x60] sm:$0xff]
        %v1625 = vld [vmem:[%s21 + $0x68] sm:$0xff]
        %v1626 = vld [vmem:[%s21 + $0x70] sm:$0xff]
        %v1627 = vld [vmem:[%s21 + $0x78] sm:$0xff]
        %v1628 = vld [vmem:[%s23] sm:$0x1]
        %v1629 = vld [vmem:[%s25] sm:$0x1]
        %v1630 = vld [vmem:[%s27] sm:$0x1]
        %v1632 = vperm.slane %v1611, 0
        %v1635 = vsel %vm1219, %v1605, 0
        %1637 = vmatpush.msra.mxu0 0.0
        %1638 = vmatpush.msra.mxu0 0.0
        %1639 = vmatpush.msra.mxu0 0.0
        %1640 = vmatpush.msra.mxu0 0.0
        %1641 = vmatpush.msra.mxu0 0.0
        %1642 = vmatpush.msra.mxu0 0.0
        %1643 = vmatpush.msra.mxu0 0.0
        %1644 = vmatpush.msra.mxu0 0.0
        %1645 = vmatpush.msra.mxu0 0.0
        %1646 = vmatpush.msra.mxu0 0.0
        %1647 = vmatpush.msra.mxu0 0.0
        %1648 = vmatpush.msra.mxu0 0.0
        %1649 = vmatpush.msra.mxu0 %v1610
        %1650 = vmatpush.msra.mxu0 %v1609
        %1651 = vmatpush.msra.mxu0 %v1608
        %1652 = vmatpush.msra.mxu0 %v1607
        %1653 = vmatmul.f32.gmra.mxu0 %v1635
        %v1654 = vpop.f32.mrf.mxu0
        %v1655 = vadd.f32 %v1632, %v1654
        %1656 = vdwg.mxu0
        %v1657 = vmax.f32 %v1655, 0.0
        %v1659 = vperm.slane %v1628, 0
        %1661 = vmatpush.msra.mxu0 %v1627
        %1662 = vmatpush.msra.mxu0 %v1626
        %1663 = vmatpush.msra.mxu0 %v1625
        %1664 = vmatpush.msra.mxu0 %v1624
        %1665 = vmatpush.msra.mxu0 %v1623
        %1666 = vmatpush.msra.mxu0 %v1622
        %1667 = vmatpush.msra.mxu0 %v1621
        %1668 = vmatpush.msra.mxu0 %v1620
        %1669 = vmatpush.msra.mxu0 %v1619
        %1670 = vmatpush.msra.mxu0 %v1618
        %1671 = vmatpush.msra.mxu0 %v1617
        %1672 = vmatpush.msra.mxu0 %v1616
        %1673 = vmatpush.msra.mxu0 %v1615
        %1674 = vmatpush.msra.mxu0 %v1614
        %1675 = vmatpush.msra.mxu0 %v1613
        %1676 = vmatpush.msra.mxu0 %v1612
        %1677 = vmatmul.f32.gmra.mxu0 %v1657
        %v1678 = vpop.f32.mrf.mxu0
        %v1679 = vadd.f32 %v1659, %v1678
        %1680 = vdwg.mxu0
        %v1681 = vadd.f32 %v1679, %v1605
        %v1682 = vsel %vm1219, %v1681, 0.0
        %1683 = vadd.xlane.f32.xlu0 %v1682
        %v1684 = vpop.xlane.xlu0 %1683
        %v1685 = vmul.f32 %v1684, %v1578
        %v1686 = vsub.f32 %v1681, %v1685
        %v1687 = vmul.f32 %v1686, %v1686
        %v1688 = vsel %vm1219, %v1687, 0.0
        %1689 = vadd.xlane.f32.xlu0 %v1688
        %v1690 = vpop.xlane.xlu0 %1689
        %v1691 = vmul.f32 %v1690, %v1578
        %v1692 = vadd.f32 %v1691, 1e-05
        %v1693 = vrsqrt.pop %v1692
        %v1694 = vmul.f32 %v1693, %v1692
        %v1695 = vmul.f32 %v1694, %v1693
        %v1696 = vmul.f32 0.5, %v1695
        %v1697 = vsub.f32 1.5, %v1696
        %v1698 = vmul.f32 %v1693, %v1697
        %vm1699 = vweird.f32 %v1692
        %vm1700 = vweird.f32 %v1693
        %vm1701 = vmor %vm1699, %vm1700
        %v1702 = vsel %vm1701, %v1693, %v1698
        %v1703 = vmul.f32 %v1686, %v1702
        %v1705 = vperm.slane %v1629, 0
        %v1707 = vmul.f32 %v1703, %v1705
        %v1709 = vperm.slane %v1630, 0
        %v1711 = vadd.f32 %v1707, %v1709
        %s1712 = scalar_lea.vmem %s7, 32
        %v1713 = vld [vmem:[%s1712] sm:$0xff]
        %v1714 = vld [vmem:[%s1712 + $0x8] sm:$0xff]
        %v1715 = vld [vmem:[%s1712 + $0x10] sm:$0xff]
        %v1716 = vld [vmem:[%s1712 + $0x18] sm:$0xff]
        %s1717 = scalar_lea.vmem %s9, 64
        %v1718 = vld [vmem:[%s1717] sm:$0xff]
        %v1719 = vld [vmem:[%s1717 + $0x8] sm:$0xff]
        %v1720 = vld [vmem:[%s1717 + $0x10] sm:$0xff]
        %v1721 = vld [vmem:[%s1717 + $0x18] sm:$0xff]
        %v1722 = vld [vmem:[%s1717 + $0x20] sm:$0xff]
        %v1723 = vld [vmem:[%s1717 + $0x28] sm:$0xff]
        %v1724 = vld [vmem:[%s1717 + $0x30] sm:$0xff]
        %v1725 = vld [vmem:[%s1717 + $0x38] sm:$0xff]
        %s1726 = scalar_lea.vmem %s11, 1
        %v1727 = vld [vmem:[%s1726] sm:$0x1]
        %s1728 = scalar_lea.vmem %s13, 1
        %v1729 = vld [vmem:[%s1728] sm:$0x1]
        %s1730 = scalar_lea.vmem %s15, 1
        %v1731 = vld [vmem:[%s1730] sm:$0x1]
        %v1733 = vsel %vm1219, %v1711, 0
        %1735 = vmatpush.msra.mxu0 0.0
        %1736 = vmatpush.msra.mxu0 0.0
        %1737 = vmatpush.msra.mxu0 0.0
        %1738 = vmatpush.msra.mxu0 0.0
        %1739 = vmatpush.msra.mxu0 0.0
        %1740 = vmatpush.msra.mxu0 0.0
        %1741 = vmatpush.msra.mxu0 0.0
        %1742 = vmatpush.msra.mxu0 0.0
        %1743 = vmatpush.msra.mxu0 0.0
        %1744 = vmatpush.msra.mxu0 0.0
        %1745 = vmatpush.msra.mxu0 0.0
        %1746 = vmatpush.msra.mxu0 0.0
        %1747 = vmatpush.msra.mxu0 %v1716
        %1748 = vmatpush.msra.mxu0 %v1715
        %1749 = vmatpush.msra.mxu0 %v1714
        %1750 = vmatpush.msra.mxu0 %v1713
        %1751 = vmatmul.f32.gmra.mxu0 %v1733
        %v1752 = vpop.f32.mrf.mxu0
        %v1753 = vadd.f32 0.0, %v1752
        %1754 = vdwg.mxu0
        %1756 = vrot.lane.b32.xlu0 %v1753, 96
        %v1757 = vpop.permute.xlu0 %1756
        %v1758 = vsel %vm1246, %v1753, 0
        %v1760 = vsel %vm1246, %v1757, 0
        %1762 = vmatpush.xpose.msra.mxu0 0.0
        %1763 = vmatpush.xpose.msra.mxu0 0.0
        %1764 = vmatpush.xpose.msra.mxu0 0.0
        %1765 = vmatpush.xpose.msra.mxu0 0.0
        %1766 = vmatpush.xpose.msra.mxu0 0.0
        %1767 = vmatpush.xpose.msra.mxu0 0.0
        %1768 = vmatpush.xpose.msra.mxu0 0.0
        %1769 = vmatpush.xpose.msra.mxu0 0.0
        %1770 = vmatpush.xpose.msra.mxu0 0.0
        %1771 = vmatpush.xpose.msra.mxu0 0.0
        %1772 = vmatpush.xpose.msra.mxu0 0.0
        %1773 = vmatpush.xpose.msra.mxu0 0.0
        %1774 = vmatpush.xpose.msra.mxu0 0.0
        %1775 = vmatpush.xpose.msra.mxu0 0.0
        %1776 = vmatpush.xpose.msra.mxu0 0.0
        %1777 = vmatpush.xpose.msra.mxu0 %v1760
        %1778 = vmatmul.f32.gmra.mxu0 %v1758
        %v1779 = vpop.f32.mrf.mxu0
        %v1780 = vadd.f32 0.0, %v1779
        %1781 = vdwg.mxu0
        %1782 = vrot.lane.b32.xlu0 %v1753, 120
        %v1783 = vpop.permute.xlu0 %1782
        %1784 = vrot.lane.b32.xlu0 %v1753, 88
        %v1785 = vpop.permute.xlu0 %1784
        %v1786 = vsel %vm1246, %v1783, 0
        %v1788 = vsel %vm1246, %v1785, 0
        %1790 = vmatpush.xpose.msra.mxu0 0.0
        %1791 = vmatpush.xpose.msra.mxu0 0.0
        %1792 = vmatpush.xpose.msra.mxu0 0.0
        %1793 = vmatpush.xpose.msra.mxu0 0.0
        %1794 = vmatpush.xpose.msra.mxu0 0.0
        %1795 = vmatpush.xpose.msra.mxu0 0.0
        %1796 = vmatpush.xpose.msra.mxu0 0.0
        %1797 = vmatpush.xpose.msra.mxu0 0.0
        %1798 = vmatpush.xpose.msra.mxu0 0.0
        %1799 = vmatpush.xpose.msra.mxu0 0.0
        %1800 = vmatpush.xpose.msra.mxu0 0.0
        %1801 = vmatpush.xpose.msra.mxu0 0.0
        %1802 = vmatpush.xpose.msra.mxu0 0.0
        %1803 = vmatpush.xpose.msra.mxu0 0.0
        %1804 = vmatpush.xpose.msra.mxu0 0.0
        %1805 = vmatpush.xpose.msra.mxu0 %v1788
        %1806 = vmatmul.f32.gmra.mxu0 %v1786
        %v1807 = vpop.f32.mrf.mxu0
        %v1808 = vadd.f32 0.0, %v1807
        %1809 = vdwg.mxu0
        %1810 = vrot.lane.b32.xlu0 %v1753, 112
        %v1811 = vpop.permute.xlu0 %1810
        %1812 = vrot.lane.b32.xlu0 %v1753, 80
        %v1813 = vpop.permute.xlu0 %1812
        %v1814 = vsel %vm1246, %v1811, 0
        %v1816 = vsel %vm1246, %v1813, 0
        %1818 = vmatpush.xpose.msra.mxu0 0.0
        %1819 = vmatpush.xpose.msra.mxu0 0.0
        %1820 = vmatpush.xpose.msra.mxu0 0.0
        %1821 = vmatpush.xpose.msra.mxu0 0.0
        %1822 = vmatpush.xpose.msra.mxu0 0.0
        %1823 = vmatpush.xpose.msra.mxu0 0.0
        %1824 = vmatpush.xpose.msra.mxu0 0.0
        %1825 = vmatpush.xpose.msra.mxu0 0.0
        %1826 = vmatpush.xpose.msra.mxu0 0.0
        %1827 = vmatpush.xpose.msra.mxu0 0.0
        %1828 = vmatpush.xpose.msra.mxu0 0.0
        %1829 = vmatpush.xpose.msra.mxu0 0.0
        %1830 = vmatpush.xpose.msra.mxu0 0.0
        %1831 = vmatpush.xpose.msra.mxu0 0.0
        %1832 = vmatpush.xpose.msra.mxu0 0.0
        %1833 = vmatpush.xpose.msra.mxu0 %v1816
        %1834 = vmatmul.f32.gmra.mxu0 %v1814
        %v1835 = vpop.f32.mrf.mxu0
        %v1836 = vadd.f32 0.0, %v1835
        %1837 = vdwg.mxu0
        %1838 = vrot.lane.b32.xlu0 %v1753, 104
        %v1839 = vpop.permute.xlu0 %1838
        %1840 = vrot.lane.b32.xlu0 %v1753, 72
        %v1841 = vpop.permute.xlu0 %1840
        %v1842 = vsel %vm1246, %v1839, 0
        %v1844 = vsel %vm1246, %v1841, 0
        %1846 = vmatpush.xpose.msra.mxu0 0.0
        %1847 = vmatpush.xpose.msra.mxu0 0.0
        %1848 = vmatpush.xpose.msra.mxu0 0.0
        %1849 = vmatpush.xpose.msra.mxu0 0.0
        %1850 = vmatpush.xpose.msra.mxu0 0.0
        %1851 = vmatpush.xpose.msra.mxu0 0.0
        %1852 = vmatpush.xpose.msra.mxu0 0.0
        %1853 = vmatpush.xpose.msra.mxu0 0.0
        %1854 = vmatpush.xpose.msra.mxu0 0.0
        %1855 = vmatpush.xpose.msra.mxu0 0.0
        %1856 = vmatpush.xpose.msra.mxu0 0.0
        %1857 = vmatpush.xpose.msra.mxu0 0.0
        %1858 = vmatpush.xpose.msra.mxu0 0.0
        %1859 = vmatpush.xpose.msra.mxu0 0.0
        %1860 = vmatpush.xpose.msra.mxu0 0.0
        %1861 = vmatpush.xpose.msra.mxu0 %v1844
        %1862 = vmatmul.f32.gmra.mxu0 %v1842
        %v1863 = vpop.f32.mrf.mxu0
        %v1864 = vadd.f32 0.0, %v1863
        %1865 = vdwg.mxu0
        %v1866 = vmul.f32 %v1780, 0.35355338
        %v1867 = vmul.f32 %v1808, 0.35355338
        %v1868 = vmul.f32 %v1836, 0.35355338
        %v1869 = vmul.f32 %v1864, 0.35355338
        %v1870 = vsel %vm1246, %v1866, -inf
        %1871 = vmax.xlane.f32.xlu0 %v1870
        %v1872 = vpop.xlane.xlu0 %1871
        %v1873 = vsel %vm1246, %v1867, -inf
        %1874 = vmax.xlane.f32.xlu0 %v1873
        %v1875 = vpop.xlane.xlu0 %1874
        %v1876 = vsel %vm1246, %v1868, -inf
        %1877 = vmax.xlane.f32.xlu0 %v1876
        %v1878 = vpop.xlane.xlu0 %1877
        %v1879 = vsel %vm1246, %v1869, -inf
        %1880 = vmax.xlane.f32.xlu0 %v1879
        %v1881 = vpop.xlane.xlu0 %1880
        %v1882 = vsub.f32 %v1866, %v1872
        %v1883 = vsub.f32 %v1867, %v1875
        %v1884 = vsub.f32 %v1868, %v1878
        %v1885 = vsub.f32 %v1869, %v1881
        %v1886 = vmul.f32 %v1882, 1.442695
        %v1887 = vpow.pop %v1886
        %v1888 = vmul.f32 %v1883, 1.442695
        %v1889 = vpow.pop %v1888
        %v1890 = vmul.f32 %v1884, 1.442695
        %v1891 = vpow.pop %v1890
        %v1892 = vmul.f32 %v1885, 1.442695
        %v1893 = vpow.pop %v1892
        %v1894 = vsel %vm1246, %v1887, 0.0
        %1895 = vadd.xlane.f32.xlu0 %v1894
        %v1896 = vpop.xlane.xlu0 %1895
        %v1897 = vsel %vm1246, %v1889, 0.0
        %1898 = vadd.xlane.f32.xlu0 %v1897
        %v1899 = vpop.xlane.xlu0 %1898
        %v1900 = vsel %vm1246, %v1891, 0.0
        %1901 = vadd.xlane.f32.xlu0 %v1900
        %v1902 = vpop.xlane.xlu0 %1901
        %v1903 = vsel %vm1246, %v1893, 0.0
        %1904 = vadd.xlane.f32.xlu0 %v1903
        %v1905 = vpop.xlane.xlu0 %1904
        %v1906 = vrcp.pop %v1896
        %v1907 = vrcp.pop %v1899
        %v1908 = vrcp.pop %v1902
        %v1909 = vrcp.pop %v1905
        %v1910 = vmul.f32 %v1887, %v1906
        %v1911 = vmul.f32 %v1889, %v1907
        %v1912 = vmul.f32 %v1891, %v1908
        %v1913 = vmul.f32 %v1893, %v1909
        %1914 = vrot.lane.b32.xlu0 %v1753, 64
        %v1915 = vpop.permute.xlu0 %1914
        %v1918 = vsel %vm1246, %v1910, 0
        %1920 = vmatpush.msra.mxu0 0.0
        %1921 = vmatpush.msra.mxu0 0.0
        %1922 = vmatpush.msra.mxu0 0.0
        %1923 = vmatpush.msra.mxu0 0.0
        %1924 = vmatpush.msra.mxu0 0.0
        %1925 = vmatpush.msra.mxu0 0.0
        %1926 = vmatpush.msra.mxu0 0.0
        %1927 = vmatpush.msra.mxu0 0.0
        %1928 = vmatpush.msra.mxu0 0.0
        %1929 = vmatpush.msra.mxu0 0.0
        %1930 = vmatpush.msra.mxu0 0.0
        %1931 = vmatpush.msra.mxu0 0.0
        %1932 = vmatpush.msra.mxu0 0.0
        %1933 = vmatpush.msra.mxu0 0.0
        %1934 = vmatpush.msra.mxu0 0.0
        %1935 = vmatpush.msra.mxu0 %v1915
        %1936 = vmatmul.f32.gmra.mxu0 %v1918
        %v1937 = vpop.f32.mrf.mxu0
        %v1938 = vadd.f32 0.0, %v1937
        %1939 = vdwg.mxu0
        %1940 = vrot.lane.b32.xlu0 %v1753, 56
        %v1941 = vpop.permute.xlu0 %1940
        %v1944 = vsel %vm1246, %v1911, 0
        %1946 = vmatpush.msra.mxu0 0.0
        %1947 = vmatpush.msra.mxu0 0.0
        %1948 = vmatpush.msra.mxu0 0.0
        %1949 = vmatpush.msra.mxu0 0.0
        %1950 = vmatpush.msra.mxu0 0.0
        %1951 = vmatpush.msra.mxu0 0.0
        %1952 = vmatpush.msra.mxu0 0.0
        %1953 = vmatpush.msra.mxu0 0.0
        %1954 = vmatpush.msra.mxu0 0.0
        %1955 = vmatpush.msra.mxu0 0.0
        %1956 = vmatpush.msra.mxu0 0.0
        %1957 = vmatpush.msra.mxu0 0.0
        %1958 = vmatpush.msra.mxu0 0.0
        %1959 = vmatpush.msra.mxu0 0.0
        %1960 = vmatpush.msra.mxu0 0.0
        %1961 = vmatpush.msra.mxu0 %v1941
        %1962 = vmatmul.f32.gmra.mxu0 %v1944
        %v1963 = vpop.f32.mrf.mxu0
        %v1964 = vadd.f32 0.0, %v1963
        %1965 = vdwg.mxu0
        %1966 = vrot.lane.b32.xlu0 %v1753, 48
        %v1967 = vpop.permute.xlu0 %1966
        %v1970 = vsel %vm1246, %v1912, 0
        %1972 = vmatpush.msra.mxu0 0.0
        %1973 = vmatpush.msra.mxu0 0.0
        %1974 = vmatpush.msra.mxu0 0.0
        %1975 = vmatpush.msra.mxu0 0.0
        %1976 = vmatpush.msra.mxu0 0.0
        %1977 = vmatpush.msra.mxu0 0.0
        %1978 = vmatpush.msra.mxu0 0.0
        %1979 = vmatpush.msra.mxu0 0.0
        %1980 = vmatpush.msra.mxu0 0.0
        %1981 = vmatpush.msra.mxu0 0.0
        %1982 = vmatpush.msra.mxu0 0.0
        %1983 = vmatpush.msra.mxu0 0.0
        %1984 = vmatpush.msra.mxu0 0.0
        %1985 = vmatpush.msra.mxu0 0.0
        %1986 = vmatpush.msra.mxu0 0.0
        %1987 = vmatpush.msra.mxu0 %v1967
        %1988 = vmatmul.f32.gmra.mxu0 %v1970
        %v1989 = vpop.f32.mrf.mxu0
        %v1990 = vadd.f32 0.0, %v1989
        %1991 = vdwg.mxu0
        %1992 = vrot.lane.b32.xlu0 %v1753, 40
        %v1993 = vpop.permute.xlu0 %1992
        %v1996 = vsel %vm1246, %v1913, 0
        %1998 = vmatpush.msra.mxu0 0.0
        %1999 = vmatpush.msra.mxu0 0.0
        %2000 = vmatpush.msra.mxu0 0.0
        %2001 = vmatpush.msra.mxu0 0.0
        %2002 = vmatpush.msra.mxu0 0.0
        %2003 = vmatpush.msra.mxu0 0.0
        %2004 = vmatpush.msra.mxu0 0.0
        %2005 = vmatpush.msra.mxu0 0.0
        %2006 = vmatpush.msra.mxu0 0.0
        %2007 = vmatpush.msra.mxu0 0.0
        %2008 = vmatpush.msra.mxu0 0.0
        %2009 = vmatpush.msra.mxu0 0.0
        %2010 = vmatpush.msra.mxu0 0.0
        %2011 = vmatpush.msra.mxu0 0.0
        %2012 = vmatpush.msra.mxu0 0.0
        %2013 = vmatpush.msra.mxu0 %v1993
        %2014 = vmatmul.f32.gmra.mxu0 %v1996
        %v2015 = vpop.f32.mrf.mxu0
        %v2016 = vadd.f32 0.0, %v2015
        %2017 = vdwg.mxu0
        %2019 = vrot.lane.b32.xlu0 %v1964, 8
        %v2020 = vpop.permute.xlu0 %2019
        %2023 = vrot.lane.b32.xlu0 %v1990, 16
        %v2024 = vpop.permute.xlu0 %2023
        %2027 = vrot.lane.b32.xlu0 %v2016, 24
        %v2028 = vpop.permute.xlu0 %2027
        %v2030 = vsel %vm1246, %v1938, %v2020
        %v2031 = vsel %vm1520, %v2030, %v2024
        %v2032 = vsel %vm1522, %v2031, %v2028
        %2033 = vrot.lane.b32.xlu0 %v1911, 8
        %v2034 = vpop.permute.xlu0 %2033
        %2036 = vrot.lane.b32.xlu0 %v1912, 16
        %v2037 = vpop.permute.xlu0 %2036
        %2039 = vrot.lane.b32.xlu0 %v1913, 24
        %v2040 = vpop.permute.xlu0 %2039
        %v2042 = vsel %vm1246, %v1910, %v2034
        %v2043 = vsel %vm1520, %v2042, %v2037
        %v2044 = vsel %vm1522, %v2043, %v2040
        %2046 = vrot.lane.b32.xlu0 %v2032, 32
        %v2047 = vpop.permute.xlu0 %2046
        %v2049 = vsel %vm1219, %v1711, %v2047
        %v2051 = vperm.slane %v1727, 0
        %v2054 = vsel %vm1544, %v2049, 0
        %2056 = vmatpush.msra.mxu0 0.0
        %2057 = vmatpush.msra.mxu0 0.0
        %2058 = vmatpush.msra.mxu0 0.0
        %2059 = vmatpush.msra.mxu0 0.0
        %2060 = vmatpush.msra.mxu0 0.0
        %2061 = vmatpush.msra.mxu0 0.0
        %2062 = vmatpush.msra.mxu0 0.0
        %2063 = vmatpush.msra.mxu0 0.0
        %2064 = vmatpush.msra.mxu0 %v1725
        %2065 = vmatpush.msra.mxu0 %v1724
        %2066 = vmatpush.msra.mxu0 %v1723
        %2067 = vmatpush.msra.mxu0 %v1722
        %2068 = vmatpush.msra.mxu0 %v1721
        %2069 = vmatpush.msra.mxu0 %v1720
        %2070 = vmatpush.msra.mxu0 %v1719
        %2071 = vmatpush.msra.mxu0 %v1718
        %2072 = vmatmul.f32.gmra.mxu0 %v2054
        %v2073 = vpop.f32.mrf.mxu0
        %v2074 = vadd.f32 %v2051, %v2073
        %2075 = vdwg.mxu0
        %v2076 = vadd.f32 %v2074, %v1711
        %v2077 = vsel %vm1219, %v2076, 0.0
        %2078 = vadd.xlane.f32.xlu0 %v2077
        %v2079 = vpop.xlane.xlu0 %2078
        %v2080 = vmul.f32 %v2079, %v1578
        %v2081 = vsub.f32 %v2076, %v2080
        %v2082 = vmul.f32 %v2081, %v2081
        %v2083 = vsel %vm1219, %v2082, 0.0
        %2084 = vadd.xlane.f32.xlu0 %v2083
        %v2085 = vpop.xlane.xlu0 %2084
        %v2086 = vmul.f32 %v2085, %v1578
        %v2087 = vadd.f32 %v2086, 1e-05
        %v2088 = vrsqrt.pop %v2087
        %v2089 = vmul.f32 %v2088, %v2087
        %v2090 = vmul.f32 %v2089, %v2088
        %v2091 = vmul.f32 0.5, %v2090
        %v2092 = vsub.f32 1.5, %v2091
        %v2093 = vmul.f32 %v2088, %v2092
        %vm2094 = vweird.f32 %v2087
        %vm2095 = vweird.f32 %v2088
        %vm2096 = vmor %vm2094, %vm2095
        %v2097 = vsel %vm2096, %v2088, %v2093
        %v2098 = vmul.f32 %v2081, %v2097
        %v2100 = vperm.slane %v1729, 0
        %v2102 = vmul.f32 %v2098, %v2100
        %v2104 = vperm.slane %v1731, 0
        %v2106 = vadd.f32 %v2102, %v2104
        %s2107 = scalar_lea.vmem %s1178, 8 [#allocation4]
        %2108 = vst.msk [vmem:[%s2107] sm:$0xff] %vm1219, %v2044
        %s2109 = scalar_lea.vmem %s17, 32
        %v2110 = vld [vmem:[%s2109] sm:$0xff]
        %v2111 = vld [vmem:[%s2109 + $0x8] sm:$0xff]
        %v2112 = vld [vmem:[%s2109 + $0x10] sm:$0xff]
        %v2113 = vld [vmem:[%s2109 + $0x18] sm:$0xff]
        %s2114 = scalar_lea.vmem %s19, 1
        %v2115 = vld [vmem:[%s2114] sm:$0x1]
        %s2116 = scalar_lea.vmem %s21, 128
        %v2117 = vld [vmem:[%s2116] sm:$0xff]
        %v2118 = vld [vmem:[%s2116 + $0x8] sm:$0xff]
        %v2119 = vld [vmem:[%s2116 + $0x10] sm:$0xff]
        %v2120 = vld [vmem:[%s2116 + $0x18] sm:$0xff]
        %v2121 = vld [vmem:[%s2116 + $0x20] sm:$0xff]
        %v2122 = vld [vmem:[%s2116 + $0x28] sm:$0xff]
        %v2123 = vld [vmem:[%s2116 + $0x30] sm:$0xff]
        %v2124 = vld [vmem:[%s2116 + $0x38] sm:$0xff]
        %v2125 = vld [vmem:[%s2116 + $0x40] sm:$0xff]
        %v2126 = vld [vmem:[%s2116 + $0x48] sm:$0xff]
        %v2127 = vld [vmem:[%s2116 + $0x50] sm:$0xff]
        %v2128 = vld [vmem:[%s2116 + $0x58] sm:$0xff]
        %v2129 = vld [vmem:[%s2116 + $0x60] sm:$0xff]
        %v2130 = vld [vmem:[%s2116 + $0x68] sm:$0xff]
        %v2131 = vld [vmem:[%s2116 + $0x70] sm:$0xff]
        %v2132 = vld [vmem:[%s2116 + $0x78] sm:$0xff]
        %s2133 = scalar_lea.vmem %s23, 1
        %v2134 = vld [vmem:[%s2133] sm:$0x1]
        %s2135 = scalar_lea.vmem %s25, 1
        %v2136 = vld [vmem:[%s2135] sm:$0x1]
        %s2137 = scalar_lea.vmem %s27, 1
        %v2138 = vld [vmem:[%s2137] sm:$0x1]
        %v2140 = vperm.slane %v2115, 0
        %v2143 = vsel %vm1219, %v2106, 0
        %2145 = vmatpush.msra.mxu0 0.0
        %2146 = vmatpush.msra.mxu0 0.0
        %2147 = vmatpush.msra.mxu0 0.0
        %2148 = vmatpush.msra.mxu0 0.0
        %2149 = vmatpush.msra.mxu0 0.0
        %2150 = vmatpush.msra.mxu0 0.0
        %2151 = vmatpush.msra.mxu0 0.0
        %2152 = vmatpush.msra.mxu0 0.0
        %2153 = vmatpush.msra.mxu0 0.0
        %2154 = vmatpush.msra.mxu0 0.0
        %2155 = vmatpush.msra.mxu0 0.0
        %2156 = vmatpush.msra.mxu0 0.0
        %2157 = vmatpush.msra.mxu0 %v2113
        %2158 = vmatpush.msra.mxu0 %v2112
        %2159 = vmatpush.msra.mxu0 %v2111
        %2160 = vmatpush.msra.mxu0 %v2110
        %2161 = vmatmul.f32.gmra.mxu0 %v2143
        %v2162 = vpop.f32.mrf.mxu0
        %v2163 = vadd.f32 %v2140, %v2162
        %2164 = vdwg.mxu0
        %v2165 = vmax.f32 %v2163, 0.0
        %v2167 = vperm.slane %v2134, 0
        %2169 = vmatpush.msra.mxu0 %v2132
        %2170 = vmatpush.msra.mxu0 %v2131
        %2171 = vmatpush.msra.mxu0 %v2130
        %2172 = vmatpush.msra.mxu0 %v2129
        %2173 = vmatpush.msra.mxu0 %v2128
        %2174 = vmatpush.msra.mxu0 %v2127
        %2175 = vmatpush.msra.mxu0 %v2126
        %2176 = vmatpush.msra.mxu0 %v2125
        %2177 = vmatpush.msra.mxu0 %v2124
        %2178 = vmatpush.msra.mxu0 %v2123
        %2179 = vmatpush.msra.mxu0 %v2122
        %2180 = vmatpush.msra.mxu0 %v2121
        %2181 = vmatpush.msra.mxu0 %v2120
        %2182 = vmatpush.msra.mxu0 %v2119
        %2183 = vmatpush.msra.mxu0 %v2118
        %2184 = vmatpush.msra.mxu0 %v2117
        %2185 = vmatmul.f32.gmra.mxu0 %v2165
        %v2186 = vpop.f32.mrf.mxu0
        %v2187 = vadd.f32 %v2167, %v2186
        %2188 = vdwg.mxu0
        %v2189 = vadd.f32 %v2187, %v2106
        %v2190 = vsel %vm1219, %v2189, 0.0
        %2191 = vadd.xlane.f32.xlu0 %v2190
        %v2192 = vpop.xlane.xlu0 %2191
        %v2193 = vmul.f32 %v2192, %v1578
        %v2194 = vsub.f32 %v2189, %v2193
        %v2195 = vmul.f32 %v2194, %v2194
        %v2196 = vsel %vm1219, %v2195, 0.0
        %2197 = vadd.xlane.f32.xlu0 %v2196
        %v2198 = vpop.xlane.xlu0 %2197
        %v2199 = vmul.f32 %v2198, %v1578
        %v2200 = vadd.f32 %v2199, 1e-05
        %v2201 = vrsqrt.pop %v2200
        %v2202 = vmul.f32 %v2201, %v2200
        %v2203 = vmul.f32 %v2202, %v2201
        %v2204 = vmul.f32 0.5, %v2203
        %v2205 = vsub.f32 1.5, %v2204
        %v2206 = vmul.f32 %v2201, %v2205
        %vm2207 = vweird.f32 %v2200
        %vm2208 = vweird.f32 %v2201
        %vm2209 = vmor %vm2207, %vm2208
        %v2210 = vsel %vm2209, %v2201, %v2206
        %v2211 = vmul.f32 %v2194, %v2210
        %v2213 = vperm.slane %v2136, 0
        %v2215 = vmul.f32 %v2211, %v2213
        %v2217 = vperm.slane %v2138, 0
        %v2219 = vadd.f32 %v2215, %v2217
        %v2220 = vld [vmem:[%s1198] sm:$0xff]
        %v2221 = vld [vmem:[%s29] sm:$0xff]
        %v2222 = vld [vmem:[%s29 + $0x8] sm:$0xff]
        %v2223 = vld [vmem:[%s29 + $0x10] sm:$0xff]
        %v2224 = vld [vmem:[%s29 + $0x18] sm:$0xff]
        %v2225 = vld [vmem:[%s31] sm:$0x1]
        %v2227 = vperm.slane %v2225, 0
        %v2230 = vsel %vm1219, %v2220, 0
        %2232 = vmatpush.msra.mxu0 0.0
        %2233 = vmatpush.msra.mxu0 0.0
        %2234 = vmatpush.msra.mxu0 0.0
        %2235 = vmatpush.msra.mxu0 0.0
        %2236 = vmatpush.msra.mxu0 0.0
        %2237 = vmatpush.msra.mxu0 0.0
        %2238 = vmatpush.msra.mxu0 0.0
        %2239 = vmatpush.msra.mxu0 0.0
        %2240 = vmatpush.msra.mxu0 0.0
        %2241 = vmatpush.msra.mxu0 0.0
        %2242 = vmatpush.msra.mxu0 0.0
        %2243 = vmatpush.msra.mxu0 0.0
        %2244 = vmatpush.msra.mxu0 %v2224
        %2245 = vmatpush.msra.mxu0 %v2223
        %2246 = vmatpush.msra.mxu0 %v2222
        %2247 = vmatpush.msra.mxu0 %v2221
        %2248 = vmatmul.f32.gmra.mxu0 %v2230
        %v2249 = vpop.f32.mrf.mxu0
        %v2250 = vadd.f32 %v2227, %v2249
        %2251 = vdwg.mxu0
        %v2252 = vld [vmem:[%s1202] sm:$0xff]
        %v2253 = vadd.f32 %v2250, %v2252
        %v2254 = vlaneseq
        %v2255 = vshrl.u32 %v2254, 7
        %v2256 = vlaneseq
        %v2257 = vand.u32 %v2256, 127
        %vm2258 = vcmp.gt.s32.totalorder %v2257, %v2255
        %v2259 = vsel %vm2258, -4.2949673e+09, 0.0
        %v2260 = vld [vmem:[%s33] sm:$0xff]
        %v2261 = vld [vmem:[%s33 + $0x8] sm:$0xff]
        %v2262 = vld [vmem:[%s33 + $0x10] sm:$0xff]
        %v2263 = vld [vmem:[%s33 + $0x18] sm:$0xff]
        %v2264 = vld [vmem:[%s35] sm:$0xff]
        %v2265 = vld [vmem:[%s35 + $0x8] sm:$0xff]
        %v2266 = vld [vmem:[%s35 + $0x10] sm:$0xff]
        %v2267 = vld [vmem:[%s35 + $0x18] sm:$0xff]
        %v2268 = vld [vmem:[%s35 + $0x20] sm:$0xff]
        %v2269 = vld [vmem:[%s35 + $0x28] sm:$0xff]
        %v2270 = vld [vmem:[%s35 + $0x30] sm:$0xff]
        %v2271 = vld [vmem:[%s35 + $0x38] sm:$0xff]
        %v2272 = vld [vmem:[%s37] sm:$0x1]
        %v2273 = vld [vmem:[%s39] sm:$0x1]
        %v2274 = vld [vmem:[%s41] sm:$0x1]
        %v2276 = vsel %vm1219, %v2253, 0
        %2278 = vmatpush.msra.mxu0 0.0
        %2279 = vmatpush.msra.mxu0 0.0
        %2280 = vmatpush.msra.mxu0 0.0
        %2281 = vmatpush.msra.mxu0 0.0
        %2282 = vmatpush.msra.mxu0 0.0
        %2283 = vmatpush.msra.mxu0 0.0
        %2284 = vmatpush.msra.mxu0 0.0
        %2285 = vmatpush.msra.mxu0 0.0
        %2286 = vmatpush.msra.mxu0 0.0
        %2287 = vmatpush.msra.mxu0 0.0
        %2288 = vmatpush.msra.mxu0 0.0
        %2289 = vmatpush.msra.mxu0 0.0
        %2290 = vmatpush.msra.mxu0 %v2263
        %2291 = vmatpush.msra.mxu0 %v2262
        %2292 = vmatpush.msra.mxu0 %v2261
        %2293 = vmatpush.msra.mxu0 %v2260
        %2294 = vmatmul.f32.gmra.mxu0 %v2276
        %v2295 = vpop.f32.mrf.mxu0
        %v2296 = vadd.f32 0.0, %v2295
        %2297 = vdwg.mxu0
        %2299 = vrot.lane.b32.xlu0 %v2296, 96
        %v2300 = vpop.permute.xlu0 %2299
        %v2301 = vsel %vm1246, %v2296, 0
        %v2303 = vsel %vm1246, %v2300, 0
        %2305 = vmatpush.xpose.msra.mxu0 0.0
        %2306 = vmatpush.xpose.msra.mxu0 0.0
        %2307 = vmatpush.xpose.msra.mxu0 0.0
        %2308 = vmatpush.xpose.msra.mxu0 0.0
        %2309 = vmatpush.xpose.msra.mxu0 0.0
        %2310 = vmatpush.xpose.msra.mxu0 0.0
        %2311 = vmatpush.xpose.msra.mxu0 0.0
        %2312 = vmatpush.xpose.msra.mxu0 0.0
        %2313 = vmatpush.xpose.msra.mxu0 0.0
        %2314 = vmatpush.xpose.msra.mxu0 0.0
        %2315 = vmatpush.xpose.msra.mxu0 0.0
        %2316 = vmatpush.xpose.msra.mxu0 0.0
        %2317 = vmatpush.xpose.msra.mxu0 0.0
        %2318 = vmatpush.xpose.msra.mxu0 0.0
        %2319 = vmatpush.xpose.msra.mxu0 0.0
        %2320 = vmatpush.xpose.msra.mxu0 %v2303
        %2321 = vmatmul.f32.gmra.mxu0 %v2301
        %v2322 = vpop.f32.mrf.mxu0
        %v2323 = vadd.f32 0.0, %v2322
        %2324 = vdwg.mxu0
        %2325 = vrot.lane.b32.xlu0 %v2296, 120
        %v2326 = vpop.permute.xlu0 %2325
        %2327 = vrot.lane.b32.xlu0 %v2296, 88
        %v2328 = vpop.permute.xlu0 %2327
        %v2329 = vsel %vm1246, %v2326, 0
        %v2331 = vsel %vm1246, %v2328, 0
        %2333 = vmatpush.xpose.msra.mxu0 0.0
        %2334 = vmatpush.xpose.msra.mxu0 0.0
        %2335 = vmatpush.xpose.msra.mxu0 0.0
        %2336 = vmatpush.xpose.msra.mxu0 0.0
        %2337 = vmatpush.xpose.msra.mxu0 0.0
        %2338 = vmatpush.xpose.msra.mxu0 0.0
        %2339 = vmatpush.xpose.msra.mxu0 0.0
        %2340 = vmatpush.xpose.msra.mxu0 0.0
        %2341 = vmatpush.xpose.msra.mxu0 0.0
        %2342 = vmatpush.xpose.msra.mxu0 0.0
        %2343 = vmatpush.xpose.msra.mxu0 0.0
        %2344 = vmatpush.xpose.msra.mxu0 0.0
        %2345 = vmatpush.xpose.msra.mxu0 0.0
        %2346 = vmatpush.xpose.msra.mxu0 0.0
        %2347 = vmatpush.xpose.msra.mxu0 0.0
        %2348 = vmatpush.xpose.msra.mxu0 %v2331
        %2349 = vmatmul.f32.gmra.mxu0 %v2329
        %v2350 = vpop.f32.mrf.mxu0
        %v2351 = vadd.f32 0.0, %v2350
        %2352 = vdwg.mxu0
        %2353 = vrot.lane.b32.xlu0 %v2296, 112
        %v2354 = vpop.permute.xlu0 %2353
        %2355 = vrot.lane.b32.xlu0 %v2296, 80
        %v2356 = vpop.permute.xlu0 %2355
        %v2357 = vsel %vm1246, %v2354, 0
        %v2359 = vsel %vm1246, %v2356, 0
        %2361 = vmatpush.xpose.msra.mxu0 0.0
        %2362 = vmatpush.xpose.msra.mxu0 0.0
        %2363 = vmatpush.xpose.msra.mxu0 0.0
        %2364 = vmatpush.xpose.msra.mxu0 0.0
        %2365 = vmatpush.xpose.msra.mxu0 0.0
        %2366 = vmatpush.xpose.msra.mxu0 0.0
        %2367 = vmatpush.xpose.msra.mxu0 0.0
        %2368 = vmatpush.xpose.msra.mxu0 0.0
        %2369 = vmatpush.xpose.msra.mxu0 0.0
        %2370 = vmatpush.xpose.msra.mxu0 0.0
        %2371 = vmatpush.xpose.msra.mxu0 0.0
        %2372 = vmatpush.xpose.msra.mxu0 0.0
        %2373 = vmatpush.xpose.msra.mxu0 0.0
        %2374 = vmatpush.xpose.msra.mxu0 0.0
        %2375 = vmatpush.xpose.msra.mxu0 0.0
        %2376 = vmatpush.xpose.msra.mxu0 %v2359
        %2377 = vmatmul.f32.gmra.mxu0 %v2357
        %v2378 = vpop.f32.mrf.mxu0
        %v2379 = vadd.f32 0.0, %v2378
        %2380 = vdwg.mxu0
        %2381 = vrot.lane.b32.xlu0 %v2296, 104
        %v2382 = vpop.permute.xlu0 %2381
        %2383 = vrot.lane.b32.xlu0 %v2296, 72
        %v2384 = vpop.permute.xlu0 %2383
        %v2385 = vsel %vm1246, %v2382, 0
        %v2387 = vsel %vm1246, %v2384, 0
        %2389 = vmatpush.xpose.msra.mxu0 0.0
        %2390 = vmatpush.xpose.msra.mxu0 0.0
        %2391 = vmatpush.xpose.msra.mxu0 0.0
        %2392 = vmatpush.xpose.msra.mxu0 0.0
        %2393 = vmatpush.xpose.msra.mxu0 0.0
        %2394 = vmatpush.xpose.msra.mxu0 0.0
        %2395 = vmatpush.xpose.msra.mxu0 0.0
        %2396 = vmatpush.xpose.msra.mxu0 0.0
        %2397 = vmatpush.xpose.msra.mxu0 0.0
        %2398 = vmatpush.xpose.msra.mxu0 0.0
        %2399 = vmatpush.xpose.msra.mxu0 0.0
        %2400 = vmatpush.xpose.msra.mxu0 0.0
        %2401 = vmatpush.xpose.msra.mxu0 0.0
        %2402 = vmatpush.xpose.msra.mxu0 0.0
        %2403 = vmatpush.xpose.msra.mxu0 0.0
        %2404 = vmatpush.xpose.msra.mxu0 %v2387
        %2405 = vmatmul.f32.gmra.mxu0 %v2385
        %v2406 = vpop.f32.mrf.mxu0
        %v2407 = vadd.f32 0.0, %v2406
        %2408 = vdwg.mxu0
        %v2409 = vmul.f32 %v2323, 0.35355338
        %v2410 = vmul.f32 %v2351, 0.35355338
        %v2411 = vmul.f32 %v2379, 0.35355338
        %v2412 = vmul.f32 %v2407, 0.35355338
        %v2413 = vadd.f32 %v2409, %v2259
        %v2414 = vadd.f32 %v2410, %v2259
        %v2415 = vadd.f32 %v2411, %v2259
        %v2416 = vadd.f32 %v2412, %v2259
        %v2417 = vsel %vm1246, %v2413, -inf
        %2418 = vmax.xlane.f32.xlu0 %v2417
        %v2419 = vpop.xlane.xlu0 %2418
        %v2420 = vsel %vm1246, %v2414, -inf
        %2421 = vmax.xlane.f32.xlu0 %v2420
        %v2422 = vpop.xlane.xlu0 %2421
        %v2423 = vsel %vm1246, %v2415, -inf
        %2424 = vmax.xlane.f32.xlu0 %v2423
        %v2425 = vpop.xlane.xlu0 %2424
        %v2426 = vsel %vm1246, %v2416, -inf
        %2427 = vmax.xlane.f32.xlu0 %v2426
        %v2428 = vpop.xlane.xlu0 %2427
        %v2429 = vsub.f32 %v2413, %v2419
        %v2430 = vsub.f32 %v2414, %v2422
        %v2431 = vsub.f32 %v2415, %v2425
        %v2432 = vsub.f32 %v2416, %v2428
        %v2433 = vmul.f32 %v2429, 1.442695
        %v2434 = vpow.pop %v2433
        %v2435 = vmul.f32 %v2430, 1.442695
        %v2436 = vpow.pop %v2435
        %v2437 = vmul.f32 %v2431, 1.442695
        %v2438 = vpow.pop %v2437
        %v2439 = vmul.f32 %v2432, 1.442695
        %v2440 = vpow.pop %v2439
        %v2441 = vsel %vm1246, %v2434, 0.0
        %2442 = vadd.xlane.f32.xlu0 %v2441
        %v2443 = vpop.xlane.xlu0 %2442
        %v2444 = vsel %vm1246, %v2436, 0.0
        %2445 = vadd.xlane.f32.xlu0 %v2444
        %v2446 = vpop.xlane.xlu0 %2445
        %v2447 = vsel %vm1246, %v2438, 0.0
        %2448 = vadd.xlane.f32.xlu0 %v2447
        %v2449 = vpop.xlane.xlu0 %2448
        %v2450 = vsel %vm1246, %v2440, 0.0
        %2451 = vadd.xlane.f32.xlu0 %v2450
        %v2452 = vpop.xlane.xlu0 %2451
        %v2453 = vrcp.pop %v2443
        %v2454 = vrcp.pop %v2446
        %v2455 = vrcp.pop %v2449
        %v2456 = vrcp.pop %v2452
        %v2457 = vmul.f32 %v2434, %v2453
        %v2458 = vmul.f32 %v2436, %v2454
        %v2459 = vmul.f32 %v2438, %v2455
        %v2460 = vmul.f32 %v2440, %v2456
        %2461 = vrot.lane.b32.xlu0 %v2296, 64
        %v2462 = vpop.permute.xlu0 %2461
        %v2465 = vsel %vm1246, %v2457, 0
        %2467 = vmatpush.msra.mxu0 0.0
        %2468 = vmatpush.msra.mxu0 0.0
        %2469 = vmatpush.msra.mxu0 0.0
        %2470 = vmatpush.msra.mxu0 0.0
        %2471 = vmatpush.msra.mxu0 0.0
        %2472 = vmatpush.msra.mxu0 0.0
        %2473 = vmatpush.msra.mxu0 0.0
        %2474 = vmatpush.msra.mxu0 0.0
        %2475 = vmatpush.msra.mxu0 0.0
        %2476 = vmatpush.msra.mxu0 0.0
        %2477 = vmatpush.msra.mxu0 0.0
        %2478 = vmatpush.msra.mxu0 0.0
        %2479 = vmatpush.msra.mxu0 0.0
        %2480 = vmatpush.msra.mxu0 0.0
        %2481 = vmatpush.msra.mxu0 0.0
        %2482 = vmatpush.msra.mxu0 %v2462
        %2483 = vmatmul.f32.gmra.mxu0 %v2465
        %v2484 = vpop.f32.mrf.mxu0
        %v2485 = vadd.f32 0.0, %v2484
        %2486 = vdwg.mxu0
        %2487 = vrot.lane.b32.xlu0 %v2296, 56
        %v2488 = vpop.permute.xlu0 %2487
        %v2491 = vsel %vm1246, %v2458, 0
        %2493 = vmatpush.msra.mxu0 0.0
        %2494 = vmatpush.msra.mxu0 0.0
        %2495 = vmatpush.msra.mxu0 0.0
        %2496 = vmatpush.msra.mxu0 0.0
        %2497 = vmatpush.msra.mxu0 0.0
        %2498 = vmatpush.msra.mxu0 0.0
        %2499 = vmatpush.msra.mxu0 0.0
        %2500 = vmatpush.msra.mxu0 0.0
        %2501 = vmatpush.msra.mxu0 0.0
        %2502 = vmatpush.msra.mxu0 0.0
        %2503 = vmatpush.msra.mxu0 0.0
        %2504 = vmatpush.msra.mxu0 0.0
        %2505 = vmatpush.msra.mxu0 0.0
        %2506 = vmatpush.msra.mxu0 0.0
        %2507 = vmatpush.msra.mxu0 0.0
        %2508 = vmatpush.msra.mxu0 %v2488
        %2509 = vmatmul.f32.gmra.mxu0 %v2491
        %v2510 = vpop.f32.mrf.mxu0
        %v2511 = vadd.f32 0.0, %v2510
        %2512 = vdwg.mxu0
        %2513 = vrot.lane.b32.xlu0 %v2296, 48
        %v2514 = vpop.permute.xlu0 %2513
        %v2517 = vsel %vm1246, %v2459, 0
        %2519 = vmatpush.msra.mxu0 0.0
        %2520 = vmatpush.msra.mxu0 0.0
        %2521 = vmatpush.msra.mxu0 0.0
        %2522 = vmatpush.msra.mxu0 0.0
        %2523 = vmatpush.msra.mxu0 0.0
        %2524 = vmatpush.msra.mxu0 0.0
        %2525 = vmatpush.msra.mxu0 0.0
        %2526 = vmatpush.msra.mxu0 0.0
        %2527 = vmatpush.msra.mxu0 0.0
        %2528 = vmatpush.msra.mxu0 0.0
        %2529 = vmatpush.msra.mxu0 0.0
        %2530 = vmatpush.msra.mxu0 0.0
        %2531 = vmatpush.msra.mxu0 0.0
        %2532 = vmatpush.msra.mxu0 0.0
        %2533 = vmatpush.msra.mxu0 0.0
        %2534 = vmatpush.msra.mxu0 %v2514
        %2535 = vmatmul.f32.gmra.mxu0 %v2517
        %v2536 = vpop.f32.mrf.mxu0
        %v2537 = vadd.f32 0.0, %v2536
        %2538 = vdwg.mxu0
        %2539 = vrot.lane.b32.xlu0 %v2296, 40
        %v2540 = vpop.permute.xlu0 %2539
        %v2543 = vsel %vm1246, %v2460, 0
        %2545 = vmatpush.msra.mxu0 0.0
        %2546 = vmatpush.msra.mxu0 0.0
        %2547 = vmatpush.msra.mxu0 0.0
        %2548 = vmatpush.msra.mxu0 0.0
        %2549 = vmatpush.msra.mxu0 0.0
        %2550 = vmatpush.msra.mxu0 0.0
        %2551 = vmatpush.msra.mxu0 0.0
        %2552 = vmatpush.msra.mxu0 0.0
        %2553 = vmatpush.msra.mxu0 0.0
        %2554 = vmatpush.msra.mxu0 0.0
        %2555 = vmatpush.msra.mxu0 0.0
        %2556 = vmatpush.msra.mxu0 0.0
        %2557 = vmatpush.msra.mxu0 0.0
        %2558 = vmatpush.msra.mxu0 0.0
        %2559 = vmatpush.msra.mxu0 0.0
        %2560 = vmatpush.msra.mxu0 %v2540
        %2561 = vmatmul.f32.gmra.mxu0 %v2543
        %v2562 = vpop.f32.mrf.mxu0
        %v2563 = vadd.f32 0.0, %v2562
        %2564 = vdwg.mxu0
        %2566 = vrot.lane.b32.xlu0 %v2511, 8
        %v2567 = vpop.permute.xlu0 %2566
        %2570 = vrot.lane.b32.xlu0 %v2537, 16
        %v2571 = vpop.permute.xlu0 %2570
        %2574 = vrot.lane.b32.xlu0 %v2563, 24
        %v2575 = vpop.permute.xlu0 %2574
        %v2577 = vsel %vm1246, %v2485, %v2567
        %v2578 = vsel %vm1520, %v2577, %v2571
        %v2579 = vsel %vm1522, %v2578, %v2575
        %2580 = vrot.lane.b32.xlu0 %v2458, 8
        %v2581 = vpop.permute.xlu0 %2580
        %2583 = vrot.lane.b32.xlu0 %v2459, 16
        %v2584 = vpop.permute.xlu0 %2583
        %2586 = vrot.lane.b32.xlu0 %v2460, 24
        %v2587 = vpop.permute.xlu0 %2586
        %v2589 = vsel %vm1246, %v2457, %v2581
        %v2590 = vsel %vm1520, %v2589, %v2584
        %v2591 = vsel %vm1522, %v2590, %v2587
        %2593 = vrot.lane.b32.xlu0 %v2579, 32
        %v2594 = vpop.permute.xlu0 %2593
        %v2596 = vsel %vm1219, %v2253, %v2594
        %v2598 = vperm.slane %v2272, 0
        %v2601 = vsel %vm1544, %v2596, 0
        %2603 = vmatpush.msra.mxu0 0.0
        %2604 = vmatpush.msra.mxu0 0.0
        %2605 = vmatpush.msra.mxu0 0.0
        %2606 = vmatpush.msra.mxu0 0.0
        %2607 = vmatpush.msra.mxu0 0.0
        %2608 = vmatpush.msra.mxu0 0.0
        %2609 = vmatpush.msra.mxu0 0.0
        %2610 = vmatpush.msra.mxu0 0.0
        %2611 = vmatpush.msra.mxu0 %v2271
        %2612 = vmatpush.msra.mxu0 %v2270
        %2613 = vmatpush.msra.mxu0 %v2269
        %2614 = vmatpush.msra.mxu0 %v2268
        %2615 = vmatpush.msra.mxu0 %v2267
        %2616 = vmatpush.msra.mxu0 %v2266
        %2617 = vmatpush.msra.mxu0 %v2265
        %2618 = vmatpush.msra.mxu0 %v2264
        %2619 = vmatmul.f32.gmra.mxu0 %v2601
        %v2620 = vpop.f32.mrf.mxu0
        %v2621 = vadd.f32 %v2598, %v2620
        %2622 = vdwg.mxu0
        %v2623 = vadd.f32 %v2621, %v2253
        %v2624 = vsel %vm1219, %v2623, 0.0
        %2625 = vadd.xlane.f32.xlu0 %v2624
        %v2626 = vpop.xlane.xlu0 %2625
        %v2627 = vmul.f32 %v2626, %v1578
        %v2628 = vsub.f32 %v2623, %v2627
        %v2629 = vmul.f32 %v2628, %v2628
        %v2630 = vsel %vm1219, %v2629, 0.0
        %2631 = vadd.xlane.f32.xlu0 %v2630
        %v2632 = vpop.xlane.xlu0 %2631
        %v2633 = vmul.f32 %v2632, %v1578
        %v2634 = vadd.f32 %v2633, 1e-05
        %v2635 = vrsqrt.pop %v2634
        %v2636 = vmul.f32 %v2635, %v2634
        %v2637 = vmul.f32 %v2636, %v2635
        %v2638 = vmul.f32 0.5, %v2637
        %v2639 = vsub.f32 1.5, %v2638
        %v2640 = vmul.f32 %v2635, %v2639
        %vm2641 = vweird.f32 %v2634
        %vm2642 = vweird.f32 %v2635
        %vm2643 = vmor %vm2641, %vm2642
        %v2644 = vsel %vm2643, %v2635, %v2640
        %v2645 = vmul.f32 %v2628, %v2644
        %v2647 = vperm.slane %v2273, 0
        %v2649 = vmul.f32 %v2645, %v2647
        %v2651 = vperm.slane %v2274, 0
        %v2653 = vadd.f32 %v2649, %v2651
        %2654 = vst.msk [vmem:[%s1184] sm:$0xff] %vm1219, %v2591
        %v2655 = vld [vmem:[%s43] sm:$0xff]
        %v2656 = vld [vmem:[%s43 + $0x8] sm:$0xff]
        %v2657 = vld [vmem:[%s43 + $0x10] sm:$0xff]
        %v2658 = vld [vmem:[%s43 + $0x18] sm:$0xff]
        %v2659 = vld [vmem:[%s45] sm:$0xff]
        %v2660 = vld [vmem:[%s45 + $0x8] sm:$0xff]
        %v2661 = vld [vmem:[%s45 + $0x10] sm:$0xff]
        %v2662 = vld [vmem:[%s45 + $0x18] sm:$0xff]
        %v2663 = vld [vmem:[%s47] sm:$0xff]
        %v2664 = vld [vmem:[%s47 + $0x8] sm:$0xff]
        %v2665 = vld [vmem:[%s47 + $0x10] sm:$0xff]
        %v2666 = vld [vmem:[%s47 + $0x18] sm:$0xff]
        %v2667 = vld [vmem:[%s47 + $0x20] sm:$0xff]
        %v2668 = vld [vmem:[%s47 + $0x28] sm:$0xff]
        %v2669 = vld [vmem:[%s47 + $0x30] sm:$0xff]
        %v2670 = vld [vmem:[%s47 + $0x38] sm:$0xff]
        %v2671 = vld [vmem:[%s49] sm:$0x1]
        %v2672 = vld [vmem:[%s51] sm:$0x1]
        %v2673 = vld [vmem:[%s53] sm:$0x1]
        %v2675 = vsel %vm1219, %v2653, 0
        %2677 = vmatpush.msra.mxu0 0.0
        %2678 = vmatpush.msra.mxu0 0.0
        %2679 = vmatpush.msra.mxu0 0.0
        %2680 = vmatpush.msra.mxu0 0.0
        %2681 = vmatpush.msra.mxu0 0.0
        %2682 = vmatpush.msra.mxu0 0.0
        %2683 = vmatpush.msra.mxu0 0.0
        %2684 = vmatpush.msra.mxu0 0.0
        %2685 = vmatpush.msra.mxu0 0.0
        %2686 = vmatpush.msra.mxu0 0.0
        %2687 = vmatpush.msra.mxu0 0.0
        %2688 = vmatpush.msra.mxu0 0.0
        %2689 = vmatpush.msra.mxu0 %v2658
        %2690 = vmatpush.msra.mxu0 %v2657
        %2691 = vmatpush.msra.mxu0 %v2656
        %2692 = vmatpush.msra.mxu0 %v2655
        %2693 = vmatmul.f32.gmra.mxu0 %v2675
        %v2694 = vpop.f32.mrf.mxu0
        %v2695 = vadd.f32 0.0, %v2694
        %2696 = vdwg.mxu0
        %v2698 = vsel %vm1219, %v2219, 0
        %2700 = vmatpush.msra.mxu0 0.0
        %2701 = vmatpush.msra.mxu0 0.0
        %2702 = vmatpush.msra.mxu0 0.0
        %2703 = vmatpush.msra.mxu0 0.0
        %2704 = vmatpush.msra.mxu0 0.0
        %2705 = vmatpush.msra.mxu0 0.0
        %2706 = vmatpush.msra.mxu0 0.0
        %2707 = vmatpush.msra.mxu0 0.0
        %2708 = vmatpush.msra.mxu0 0.0
        %2709 = vmatpush.msra.mxu0 0.0
        %2710 = vmatpush.msra.mxu0 0.0
        %2711 = vmatpush.msra.mxu0 0.0
        %2712 = vmatpush.msra.mxu0 %v2662
        %2713 = vmatpush.msra.mxu0 %v2661
        %2714 = vmatpush.msra.mxu0 %v2660
        %2715 = vmatpush.msra.mxu0 %v2659
        %2716 = vmatmul.f32.gmra.mxu0 %v2698
        %v2717 = vpop.f32.mrf.mxu0
        %v2718 = vadd.f32 0.0, %v2717
        %2719 = vdwg.mxu0
        %v2721 = vsel %vm1246, %v2695, 0
        %v2724 = vsel %vm1246, %v2718, 0
        %2726 = vmatpush.xpose.msra.mxu0 0.0
        %2727 = vmatpush.xpose.msra.mxu0 0.0
        %2728 = vmatpush.xpose.msra.mxu0 0.0
        %2729 = vmatpush.xpose.msra.mxu0 0.0
        %2730 = vmatpush.xpose.msra.mxu0 0.0
        %2731 = vmatpush.xpose.msra.mxu0 0.0
        %2732 = vmatpush.xpose.msra.mxu0 0.0
        %2733 = vmatpush.xpose.msra.mxu0 0.0
        %2734 = vmatpush.xpose.msra.mxu0 0.0
        %2735 = vmatpush.xpose.msra.mxu0 0.0
        %2736 = vmatpush.xpose.msra.mxu0 0.0
        %2737 = vmatpush.xpose.msra.mxu0 0.0
        %2738 = vmatpush.xpose.msra.mxu0 0.0
        %2739 = vmatpush.xpose.msra.mxu0 0.0
        %2740 = vmatpush.xpose.msra.mxu0 0.0
        %2741 = vmatpush.xpose.msra.mxu0 %v2724
        %2742 = vmatmul.f32.gmra.mxu0 %v2721
        %v2743 = vpop.f32.mrf.mxu0
        %v2744 = vadd.f32 0.0, %v2743
        %2745 = vdwg.mxu0
        %2746 = vrot.lane.b32.xlu0 %v2695, 120
        %v2747 = vpop.permute.xlu0 %2746
        %2748 = vrot.lane.b32.xlu0 %v2718, 120
        %v2749 = vpop.permute.xlu0 %2748
        %v2750 = vsel %vm1246, %v2747, 0
        %v2752 = vsel %vm1246, %v2749, 0
        %2754 = vmatpush.xpose.msra.mxu0 0.0
        %2755 = vmatpush.xpose.msra.mxu0 0.0
        %2756 = vmatpush.xpose.msra.mxu0 0.0
        %2757 = vmatpush.xpose.msra.mxu0 0.0
        %2758 = vmatpush.xpose.msra.mxu0 0.0
        %2759 = vmatpush.xpose.msra.mxu0 0.0
        %2760 = vmatpush.xpose.msra.mxu0 0.0
        %2761 = vmatpush.xpose.msra.mxu0 0.0
        %2762 = vmatpush.xpose.msra.mxu0 0.0
        %2763 = vmatpush.xpose.msra.mxu0 0.0
        %2764 = vmatpush.xpose.msra.mxu0 0.0
        %2765 = vmatpush.xpose.msra.mxu0 0.0
        %2766 = vmatpush.xpose.msra.mxu0 0.0
        %2767 = vmatpush.xpose.msra.mxu0 0.0
        %2768 = vmatpush.xpose.msra.mxu0 0.0
        %2769 = vmatpush.xpose.msra.mxu0 %v2752
        %2770 = vmatmul.f32.gmra.mxu0 %v2750
        %v2771 = vpop.f32.mrf.mxu0
        %v2772 = vadd.f32 0.0, %v2771
        %2773 = vdwg.mxu0
        %2774 = vrot.lane.b32.xlu0 %v2695, 112
        %v2775 = vpop.permute.xlu0 %2774
        %2776 = vrot.lane.b32.xlu0 %v2718, 112
        %v2777 = vpop.permute.xlu0 %2776
        %v2778 = vsel %vm1246, %v2775, 0
        %v2780 = vsel %vm1246, %v2777, 0
        %2782 = vmatpush.xpose.msra.mxu0 0.0
        %2783 = vmatpush.xpose.msra.mxu0 0.0
        %2784 = vmatpush.xpose.msra.mxu0 0.0
        %2785 = vmatpush.xpose.msra.mxu0 0.0
        %2786 = vmatpush.xpose.msra.mxu0 0.0
        %2787 = vmatpush.xpose.msra.mxu0 0.0
        %2788 = vmatpush.xpose.msra.mxu0 0.0
        %2789 = vmatpush.xpose.msra.mxu0 0.0
        %2790 = vmatpush.xpose.msra.mxu0 0.0
        %2791 = vmatpush.xpose.msra.mxu0 0.0
        %2792 = vmatpush.xpose.msra.mxu0 0.0
        %2793 = vmatpush.xpose.msra.mxu0 0.0
        %2794 = vmatpush.xpose.msra.mxu0 0.0
        %2795 = vmatpush.xpose.msra.mxu0 0.0
        %2796 = vmatpush.xpose.msra.mxu0 0.0
        %2797 = vmatpush.xpose.msra.mxu0 %v2780
        %2798 = vmatmul.f32.gmra.mxu0 %v2778
        %v2799 = vpop.f32.mrf.mxu0
        %v2800 = vadd.f32 0.0, %v2799
        %2801 = vdwg.mxu0
        %2802 = vrot.lane.b32.xlu0 %v2695, 104
        %v2803 = vpop.permute.xlu0 %2802
        %2804 = vrot.lane.b32.xlu0 %v2718, 104
        %v2805 = vpop.permute.xlu0 %2804
        %v2806 = vsel %vm1246, %v2803, 0
        %v2808 = vsel %vm1246, %v2805, 0
        %2810 = vmatpush.xpose.msra.mxu0 0.0
        %2811 = vmatpush.xpose.msra.mxu0 0.0
        %2812 = vmatpush.xpose.msra.mxu0 0.0
        %2813 = vmatpush.xpose.msra.mxu0 0.0
        %2814 = vmatpush.xpose.msra.mxu0 0.0
        %2815 = vmatpush.xpose.msra.mxu0 0.0
        %2816 = vmatpush.xpose.msra.mxu0 0.0
        %2817 = vmatpush.xpose.msra.mxu0 0.0
        %2818 = vmatpush.xpose.msra.mxu0 0.0
        %2819 = vmatpush.xpose.msra.mxu0 0.0
        %2820 = vmatpush.xpose.msra.mxu0 0.0
        %2821 = vmatpush.xpose.msra.mxu0 0.0
        %2822 = vmatpush.xpose.msra.mxu0 0.0
        %2823 = vmatpush.xpose.msra.mxu0 0.0
        %2824 = vmatpush.xpose.msra.mxu0 0.0
        %2825 = vmatpush.xpose.msra.mxu0 %v2808
        %2826 = vmatmul.f32.gmra.mxu0 %v2806
        %v2827 = vpop.f32.mrf.mxu0
        %v2828 = vadd.f32 0.0, %v2827
        %2829 = vdwg.mxu0
        %v2830 = vmul.f32 %v2744, 0.35355338
        %v2831 = vmul.f32 %v2772, 0.35355338
        %v2832 = vmul.f32 %v2800, 0.35355338
        %v2833 = vmul.f32 %v2828, 0.35355338
        %v2834 = vsel %vm1246, %v2830, -inf
        %2835 = vmax.xlane.f32.xlu0 %v2834
        %v2836 = vpop.xlane.xlu0 %2835
        %v2837 = vsel %vm1246, %v2831, -inf
        %2838 = vmax.xlane.f32.xlu0 %v2837
        %v2839 = vpop.xlane.xlu0 %2838
        %v2840 = vsel %vm1246, %v2832, -inf
        %2841 = vmax.xlane.f32.xlu0 %v2840
        %v2842 = vpop.xlane.xlu0 %2841
        %v2843 = vsel %vm1246, %v2833, -inf
        %2844 = vmax.xlane.f32.xlu0 %v2843
        %v2845 = vpop.xlane.xlu0 %2844
        %v2846 = vsub.f32 %v2830, %v2836
        %v2847 = vsub.f32 %v2831, %v2839
        %v2848 = vsub.f32 %v2832, %v2842
        %v2849 = vsub.f32 %v2833, %v2845
        %v2850 = vmul.f32 %v2846, 1.442695
        %v2851 = vpow.pop %v2850
        %v2852 = vmul.f32 %v2847, 1.442695
        %v2853 = vpow.pop %v2852
        %v2854 = vmul.f32 %v2848, 1.442695
        %v2855 = vpow.pop %v2854
        %v2856 = vmul.f32 %v2849, 1.442695
        %v2857 = vpow.pop %v2856
        %v2858 = vsel %vm1246, %v2851, 0.0
        %2859 = vadd.xlane.f32.xlu0 %v2858
        %v2860 = vpop.xlane.xlu0 %2859
        %v2861 = vsel %vm1246, %v2853, 0.0
        %2862 = vadd.xlane.f32.xlu0 %v2861
        %v2863 = vpop.xlane.xlu0 %2862
        %v2864 = vsel %vm1246, %v2855, 0.0
        %2865 = vadd.xlane.f32.xlu0 %v2864
        %v2866 = vpop.xlane.xlu0 %2865
        %v2867 = vsel %vm1246, %v2857, 0.0
        %2868 = vadd.xlane.f32.xlu0 %v2867
        %v2869 = vpop.xlane.xlu0 %2868
        %v2870 = vrcp.pop %v2860
        %v2871 = vrcp.pop %v2863
        %v2872 = vrcp.pop %v2866
        %v2873 = vrcp.pop %v2869
        %v2874 = vmul.f32 %v2851, %v2870
        %v2875 = vmul.f32 %v2853, %v2871
        %v2876 = vmul.f32 %v2855, %v2872
        %v2877 = vmul.f32 %v2857, %v2873
        %2878 = vrot.lane.b32.xlu0 %v2718, 96
        %v2879 = vpop.permute.xlu0 %2878
        %v2882 = vsel %vm1246, %v2874, 0
        %2884 = vmatpush.msra.mxu0 0.0
        %2885 = vmatpush.msra.mxu0 0.0
        %2886 = vmatpush.msra.mxu0 0.0
        %2887 = vmatpush.msra.mxu0 0.0
        %2888 = vmatpush.msra.mxu0 0.0
        %2889 = vmatpush.msra.mxu0 0.0
        %2890 = vmatpush.msra.mxu0 0.0
        %2891 = vmatpush.msra.mxu0 0.0
        %2892 = vmatpush.msra.mxu0 0.0
        %2893 = vmatpush.msra.mxu0 0.0
        %2894 = vmatpush.msra.mxu0 0.0
        %2895 = vmatpush.msra.mxu0 0.0
        %2896 = vmatpush.msra.mxu0 0.0
        %2897 = vmatpush.msra.mxu0 0.0
        %2898 = vmatpush.msra.mxu0 0.0
        %2899 = vmatpush.msra.mxu0 %v2879
        %2900 = vmatmul.f32.gmra.mxu0 %v2882
        %v2901 = vpop.f32.mrf.mxu0
        %v2902 = vadd.f32 0.0, %v2901
        %2903 = vdwg.mxu0
        %2904 = vrot.lane.b32.xlu0 %v2718, 88
        %v2905 = vpop.permute.xlu0 %2904
        %v2908 = vsel %vm1246, %v2875, 0
        %2910 = vmatpush.msra.mxu0 0.0
        %2911 = vmatpush.msra.mxu0 0.0
        %2912 = vmatpush.msra.mxu0 0.0
        %2913 = vmatpush.msra.mxu0 0.0
        %2914 = vmatpush.msra.mxu0 0.0
        %2915 = vmatpush.msra.mxu0 0.0
        %2916 = vmatpush.msra.mxu0 0.0
        %2917 = vmatpush.msra.mxu0 0.0
        %2918 = vmatpush.msra.mxu0 0.0
        %2919 = vmatpush.msra.mxu0 0.0
        %2920 = vmatpush.msra.mxu0 0.0
        %2921 = vmatpush.msra.mxu0 0.0
        %2922 = vmatpush.msra.mxu0 0.0
        %2923 = vmatpush.msra.mxu0 0.0
        %2924 = vmatpush.msra.mxu0 0.0
        %2925 = vmatpush.msra.mxu0 %v2905
        %2926 = vmatmul.f32.gmra.mxu0 %v2908
        %v2927 = vpop.f32.mrf.mxu0
        %v2928 = vadd.f32 0.0, %v2927
        %2929 = vdwg.mxu0
        %2930 = vrot.lane.b32.xlu0 %v2718, 80
        %v2931 = vpop.permute.xlu0 %2930
        %v2934 = vsel %vm1246, %v2876, 0
        %2936 = vmatpush.msra.mxu0 0.0
        %2937 = vmatpush.msra.mxu0 0.0
        %2938 = vmatpush.msra.mxu0 0.0
        %2939 = vmatpush.msra.mxu0 0.0
        %2940 = vmatpush.msra.mxu0 0.0
        %2941 = vmatpush.msra.mxu0 0.0
        %2942 = vmatpush.msra.mxu0 0.0
        %2943 = vmatpush.msra.mxu0 0.0
        %2944 = vmatpush.msra.mxu0 0.0
        %2945 = vmatpush.msra.mxu0 0.0
        %2946 = vmatpush.msra.mxu0 0.0
        %2947 = vmatpush.msra.mxu0 0.0
        %2948 = vmatpush.msra.mxu0 0.0
        %2949 = vmatpush.msra.mxu0 0.0
        %2950 = vmatpush.msra.mxu0 0.0
        %2951 = vmatpush.msra.mxu0 %v2931
        %2952 = vmatmul.f32.gmra.mxu0 %v2934
        %v2953 = vpop.f32.mrf.mxu0
        %v2954 = vadd.f32 0.0, %v2953
        %2955 = vdwg.mxu0
        %2956 = vrot.lane.b32.xlu0 %v2718, 72
        %v2957 = vpop.permute.xlu0 %2956
        %v2960 = vsel %vm1246, %v2877, 0
        %2962 = vmatpush.msra.mxu0 0.0
        %2963 = vmatpush.msra.mxu0 0.0
        %2964 = vmatpush.msra.mxu0 0.0
        %2965 = vmatpush.msra.mxu0 0.0
        %2966 = vmatpush.msra.mxu0 0.0
        %2967 = vmatpush.msra.mxu0 0.0
        %2968 = vmatpush.msra.mxu0 0.0
        %2969 = vmatpush.msra.mxu0 0.0
        %2970 = vmatpush.msra.mxu0 0.0
        %2971 = vmatpush.msra.mxu0 0.0
        %2972 = vmatpush.msra.mxu0 0.0
        %2973 = vmatpush.msra.mxu0 0.0
        %2974 = vmatpush.msra.mxu0 0.0
        %2975 = vmatpush.msra.mxu0 0.0
        %2976 = vmatpush.msra.mxu0 0.0
        %2977 = vmatpush.msra.mxu0 %v2957
        %2978 = vmatmul.f32.gmra.mxu0 %v2960
        %v2979 = vpop.f32.mrf.mxu0
        %v2980 = vadd.f32 0.0, %v2979
        %2981 = vdwg.mxu0
        %2983 = vrot.lane.b32.xlu0 %v2928, 8
        %v2984 = vpop.permute.xlu0 %2983
        %2987 = vrot.lane.b32.xlu0 %v2954, 16
        %v2988 = vpop.permute.xlu0 %2987
        %2991 = vrot.lane.b32.xlu0 %v2980, 24
        %v2992 = vpop.permute.xlu0 %2991
        %v2994 = vsel %vm1246, %v2902, %v2984
        %v2995 = vsel %vm1520, %v2994, %v2988
        %v2996 = vsel %vm1522, %v2995, %v2992
        %2997 = vrot.lane.b32.xlu0 %v2875, 8
        %v2998 = vpop.permute.xlu0 %2997
        %3000 = vrot.lane.b32.xlu0 %v2876, 16
        %v3001 = vpop.permute.xlu0 %3000
        %3003 = vrot.lane.b32.xlu0 %v2877, 24
        %v3004 = vpop.permute.xlu0 %3003
        %v3006 = vsel %vm1246, %v2874, %v2998
        %v3007 = vsel %vm1520, %v3006, %v3001
        %v3008 = vsel %vm1522, %v3007, %v3004
        %3010 = vrot.lane.b32.xlu0 %v2996, 32
        %v3011 = vpop.permute.xlu0 %3010
        %v3013 = vsel %vm1219, %v2653, %v3011
        %v3015 = vperm.slane %v2671, 0
        %v3018 = vsel %vm1544, %v3013, 0
        %3020 = vmatpush.msra.mxu0 0.0
        %3021 = vmatpush.msra.mxu0 0.0
        %3022 = vmatpush.msra.mxu0 0.0
        %3023 = vmatpush.msra.mxu0 0.0
        %3024 = vmatpush.msra.mxu0 0.0
        %3025 = vmatpush.msra.mxu0 0.0
        %3026 = vmatpush.msra.mxu0 0.0
        %3027 = vmatpush.msra.mxu0 0.0
        %3028 = vmatpush.msra.mxu0 %v2670
        %3029 = vmatpush.msra.mxu0 %v2669
        %3030 = vmatpush.msra.mxu0 %v2668
        %3031 = vmatpush.msra.mxu0 %v2667
        %3032 = vmatpush.msra.mxu0 %v2666
        %3033 = vmatpush.msra.mxu0 %v2665
        %3034 = vmatpush.msra.mxu0 %v2664
        %3035 = vmatpush.msra.mxu0 %v2663
        %3036 = vmatmul.f32.gmra.mxu0 %v3018
        %v3037 = vpop.f32.mrf.mxu0
        %v3038 = vadd.f32 %v3015, %v3037
        %3039 = vdwg.mxu0
        %v3040 = vadd.f32 %v3038, %v2653
        %v3041 = vsel %vm1219, %v3040, 0.0
        %3042 = vadd.xlane.f32.xlu0 %v3041
        %v3043 = vpop.xlane.xlu0 %3042
        %v3044 = vmul.f32 %v3043, %v1578
        %v3045 = vsub.f32 %v3040, %v3044
        %v3046 = vmul.f32 %v3045, %v3045
        %v3047 = vsel %vm1219, %v3046, 0.0
        %3048 = vadd.xlane.f32.xlu0 %v3047
        %v3049 = vpop.xlane.xlu0 %3048
        %v3050 = vmul.f32 %v3049, %v1578
        %v3051 = vadd.f32 %v3050, 1e-05
        %v3052 = vrsqrt.pop %v3051
        %v3053 = vmul.f32 %v3052, %v3051
        %v3054 = vmul.f32 %v3053, %v3052
        %v3055 = vmul.f32 0.5, %v3054
        %v3056 = vsub.f32 1.5, %v3055
        %v3057 = vmul.f32 %v3052, %v3056
        %vm3058 = vweird.f32 %v3051
        %vm3059 = vweird.f32 %v3052
        %vm3060 = vmor %vm3058, %vm3059
        %v3061 = vsel %vm3060, %v3052, %v3057
        %v3062 = vmul.f32 %v3045, %v3061
        %v3064 = vperm.slane %v2672, 0
        %v3066 = vmul.f32 %v3062, %v3064
        %v3068 = vperm.slane %v2673, 0
        %v3070 = vadd.f32 %v3066, %v3068
        %3071 = vst.msk [vmem:[%s1190] sm:$0xff] %vm1219, %v3008
        %v3072 = vld [vmem:[%s55] sm:$0xff]
        %v3073 = vld [vmem:[%s55 + $0x8] sm:$0xff]
        %v3074 = vld [vmem:[%s55 + $0x10] sm:$0xff]
        %v3075 = vld [vmem:[%s55 + $0x18] sm:$0xff]
        %v3076 = vld [vmem:[%s57] sm:$0x1]
        %v3077 = vld [vmem:[%s59] sm:$0xff]
        %v3078 = vld [vmem:[%s59 + $0x8] sm:$0xff]
        %v3079 = vld [vmem:[%s59 + $0x10] sm:$0xff]
        %v3080 = vld [vmem:[%s59 + $0x18] sm:$0xff]
        %v3081 = vld [vmem:[%s59 + $0x20] sm:$0xff]
        %v3082 = vld [vmem:[%s59 + $0x28] sm:$0xff]
        %v3083 = vld [vmem:[%s59 + $0x30] sm:$0xff]
        %v3084 = vld [vmem:[%s59 + $0x38] sm:$0xff]
        %v3085 = vld [vmem:[%s59 + $0x40] sm:$0xff]
        %v3086 = vld [vmem:[%s59 + $0x48] sm:$0xff]
        %v3087 = vld [vmem:[%s59 + $0x50] sm:$0xff]
        %v3088 = vld [vmem:[%s59 + $0x58] sm:$0xff]
        %v3089 = vld [vmem:[%s59 + $0x60] sm:$0xff]
        %v3090 = vld [vmem:[%s59 + $0x68] sm:$0xff]
        %v3091 = vld [vmem:[%s59 + $0x70] sm:$0xff]
        %v3092 = vld [vmem:[%s59 + $0x78] sm:$0xff]
        %v3093 = vld [vmem:[%s61] sm:$0x1]
        %v3094 = vld [vmem:[%s63] sm:$0x1]
        %v3095 = vld [vmem:[%s65] sm:$0x1]
        %v3097 = vperm.slane %v3076, 0
        %v3100 = vsel %vm1219, %v3070, 0
        %3102 = vmatpush.msra.mxu0 0.0
        %3103 = vmatpush.msra.mxu0 0.0
        %3104 = vmatpush.msra.mxu0 0.0
        %3105 = vmatpush.msra.mxu0 0.0
        %3106 = vmatpush.msra.mxu0 0.0
        %3107 = vmatpush.msra.mxu0 0.0
        %3108 = vmatpush.msra.mxu0 0.0
        %3109 = vmatpush.msra.mxu0 0.0
        %3110 = vmatpush.msra.mxu0 0.0
        %3111 = vmatpush.msra.mxu0 0.0
        %3112 = vmatpush.msra.mxu0 0.0
        %3113 = vmatpush.msra.mxu0 0.0
        %3114 = vmatpush.msra.mxu0 %v3075
        %3115 = vmatpush.msra.mxu0 %v3074
        %3116 = vmatpush.msra.mxu0 %v3073
        %3117 = vmatpush.msra.mxu0 %v3072
        %3118 = vmatmul.f32.gmra.mxu0 %v3100
        %v3119 = vpop.f32.mrf.mxu0
        %v3120 = vadd.f32 %v3097, %v3119
        %3121 = vdwg.mxu0
        %v3122 = vmax.f32 %v3120, 0.0
        %v3124 = vperm.slane %v3093, 0
        %3126 = vmatpush.msra.mxu0 %v3092
        %3127 = vmatpush.msra.mxu0 %v3091
        %3128 = vmatpush.msra.mxu0 %v3090
        %3129 = vmatpush.msra.mxu0 %v3089
        %3130 = vmatpush.msra.mxu0 %v3088
        %3131 = vmatpush.msra.mxu0 %v3087
        %3132 = vmatpush.msra.mxu0 %v3086
        %3133 = vmatpush.msra.mxu0 %v3085
        %3134 = vmatpush.msra.mxu0 %v3084
        %3135 = vmatpush.msra.mxu0 %v3083
        %3136 = vmatpush.msra.mxu0 %v3082
        %3137 = vmatpush.msra.mxu0 %v3081
        %3138 = vmatpush.msra.mxu0 %v3080
        %3139 = vmatpush.msra.mxu0 %v3079
        %3140 = vmatpush.msra.mxu0 %v3078
        %3141 = vmatpush.msra.mxu0 %v3077
        %3142 = vmatmul.f32.gmra.mxu0 %v3122
        %v3143 = vpop.f32.mrf.mxu0
        %v3144 = vadd.f32 %v3124, %v3143
        %3145 = vdwg.mxu0
        %v3146 = vadd.f32 %v3144, %v3070
        %v3147 = vsel %vm1219, %v3146, 0.0
        %3148 = vadd.xlane.f32.xlu0 %v3147
        %v3149 = vpop.xlane.xlu0 %3148
        %v3150 = vmul.f32 %v3149, %v1578
        %v3151 = vsub.f32 %v3146, %v3150
        %v3152 = vmul.f32 %v3151, %v3151
        %v3153 = vsel %vm1219, %v3152, 0.0
        %3154 = vadd.xlane.f32.xlu0 %v3153
        %v3155 = vpop.xlane.xlu0 %3154
        %v3156 = vmul.f32 %v3155, %v1578
        %v3157 = vadd.f32 %v3156, 1e-05
        %v3158 = vrsqrt.pop %v3157
        %v3159 = vmul.f32 %v3158, %v3157
        %v3160 = vmul.f32 %v3159, %v3158
        %v3161 = vmul.f32 0.5, %v3160
        %v3162 = vsub.f32 1.5, %v3161
        %v3163 = vmul.f32 %v3158, %v3162
        %vm3164 = vweird.f32 %v3157
        %vm3165 = vweird.f32 %v3158
        %vm3166 = vmor %vm3164, %vm3165
        %v3167 = vsel %vm3166, %v3158, %v3163
        %v3168 = vmul.f32 %v3151, %v3167
        %v3170 = vperm.slane %v3094, 0
        %v3172 = vmul.f32 %v3168, %v3170
        %v3174 = vperm.slane %v3095, 0
        %v3176 = vadd.f32 %v3172, %v3174
        %s3177 = scalar_lea.vmem %s33, 32
        %v3178 = vld [vmem:[%s3177] sm:$0xff]
        %v3179 = vld [vmem:[%s3177 + $0x8] sm:$0xff]
        %v3180 = vld [vmem:[%s3177 + $0x10] sm:$0xff]
        %v3181 = vld [vmem:[%s3177 + $0x18] sm:$0xff]
        %s3182 = scalar_lea.vmem %s35, 64
        %v3183 = vld [vmem:[%s3182] sm:$0xff]
        %v3184 = vld [vmem:[%s3182 + $0x8] sm:$0xff]
        %v3185 = vld [vmem:[%s3182 + $0x10] sm:$0xff]
        %v3186 = vld [vmem:[%s3182 + $0x18] sm:$0xff]
        %v3187 = vld [vmem:[%s3182 + $0x20] sm:$0xff]
        %v3188 = vld [vmem:[%s3182 + $0x28] sm:$0xff]
        %v3189 = vld [vmem:[%s3182 + $0x30] sm:$0xff]
        %v3190 = vld [vmem:[%s3182 + $0x38] sm:$0xff]
        %s3191 = scalar_lea.vmem %s37, 1
        %v3192 = vld [vmem:[%s3191] sm:$0x1]
        %s3193 = scalar_lea.vmem %s39, 1
        %v3194 = vld [vmem:[%s3193] sm:$0x1]
        %s3195 = scalar_lea.vmem %s41, 1
        %v3196 = vld [vmem:[%s3195] sm:$0x1]
        %v3198 = vsel %vm1219, %v3176, 0
        %3200 = vmatpush.msra.mxu0 0.0
        %3201 = vmatpush.msra.mxu0 0.0
        %3202 = vmatpush.msra.mxu0 0.0
        %3203 = vmatpush.msra.mxu0 0.0
        %3204 = vmatpush.msra.mxu0 0.0
        %3205 = vmatpush.msra.mxu0 0.0
        %3206 = vmatpush.msra.mxu0 0.0
        %3207 = vmatpush.msra.mxu0 0.0
        %3208 = vmatpush.msra.mxu0 0.0
        %3209 = vmatpush.msra.mxu0 0.0
        %3210 = vmatpush.msra.mxu0 0.0
        %3211 = vmatpush.msra.mxu0 0.0
        %3212 = vmatpush.msra.mxu0 %v3181
        %3213 = vmatpush.msra.mxu0 %v3180
        %3214 = vmatpush.msra.mxu0 %v3179
        %3215 = vmatpush.msra.mxu0 %v3178
        %3216 = vmatmul.f32.gmra.mxu0 %v3198
        %v3217 = vpop.f32.mrf.mxu0
        %v3218 = vadd.f32 0.0, %v3217
        %3219 = vdwg.mxu0
        %3221 = vrot.lane.b32.xlu0 %v3218, 96
        %v3222 = vpop.permute.xlu0 %3221
        %v3223 = vsel %vm1246, %v3218, 0
        %v3225 = vsel %vm1246, %v3222, 0
        %3227 = vmatpush.xpose.msra.mxu0 0.0
        %3228 = vmatpush.xpose.msra.mxu0 0.0
        %3229 = vmatpush.xpose.msra.mxu0 0.0
        %3230 = vmatpush.xpose.msra.mxu0 0.0
        %3231 = vmatpush.xpose.msra.mxu0 0.0
        %3232 = vmatpush.xpose.msra.mxu0 0.0
        %3233 = vmatpush.xpose.msra.mxu0 0.0
        %3234 = vmatpush.xpose.msra.mxu0 0.0
        %3235 = vmatpush.xpose.msra.mxu0 0.0
        %3236 = vmatpush.xpose.msra.mxu0 0.0
        %3237 = vmatpush.xpose.msra.mxu0 0.0
        %3238 = vmatpush.xpose.msra.mxu0 0.0
        %3239 = vmatpush.xpose.msra.mxu0 0.0
        %3240 = vmatpush.xpose.msra.mxu0 0.0
        %3241 = vmatpush.xpose.msra.mxu0 0.0
        %3242 = vmatpush.xpose.msra.mxu0 %v3225
        %3243 = vmatmul.f32.gmra.mxu0 %v3223
        %v3244 = vpop.f32.mrf.mxu0
        %v3245 = vadd.f32 0.0, %v3244
        %3246 = vdwg.mxu0
        %3247 = vrot.lane.b32.xlu0 %v3218, 120
        %v3248 = vpop.permute.xlu0 %3247
        %3249 = vrot.lane.b32.xlu0 %v3218, 88
        %v3250 = vpop.permute.xlu0 %3249
        %v3251 = vsel %vm1246, %v3248, 0
        %v3253 = vsel %vm1246, %v3250, 0
        %3255 = vmatpush.xpose.msra.mxu0 0.0
        %3256 = vmatpush.xpose.msra.mxu0 0.0
        %3257 = vmatpush.xpose.msra.mxu0 0.0
        %3258 = vmatpush.xpose.msra.mxu0 0.0
        %3259 = vmatpush.xpose.msra.mxu0 0.0
        %3260 = vmatpush.xpose.msra.mxu0 0.0
        %3261 = vmatpush.xpose.msra.mxu0 0.0
        %3262 = vmatpush.xpose.msra.mxu0 0.0
        %3263 = vmatpush.xpose.msra.mxu0 0.0
        %3264 = vmatpush.xpose.msra.mxu0 0.0
        %3265 = vmatpush.xpose.msra.mxu0 0.0
        %3266 = vmatpush.xpose.msra.mxu0 0.0
        %3267 = vmatpush.xpose.msra.mxu0 0.0
        %3268 = vmatpush.xpose.msra.mxu0 0.0
        %3269 = vmatpush.xpose.msra.mxu0 0.0
        %3270 = vmatpush.xpose.msra.mxu0 %v3253
        %3271 = vmatmul.f32.gmra.mxu0 %v3251
        %v3272 = vpop.f32.mrf.mxu0
        %v3273 = vadd.f32 0.0, %v3272
        %3274 = vdwg.mxu0
        %3275 = vrot.lane.b32.xlu0 %v3218, 112
        %v3276 = vpop.permute.xlu0 %3275
        %3277 = vrot.lane.b32.xlu0 %v3218, 80
        %v3278 = vpop.permute.xlu0 %3277
        %v3279 = vsel %vm1246, %v3276, 0
        %v3281 = vsel %vm1246, %v3278, 0
        %3283 = vmatpush.xpose.msra.mxu0 0.0
        %3284 = vmatpush.xpose.msra.mxu0 0.0
        %3285 = vmatpush.xpose.msra.mxu0 0.0
        %3286 = vmatpush.xpose.msra.mxu0 0.0
        %3287 = vmatpush.xpose.msra.mxu0 0.0
        %3288 = vmatpush.xpose.msra.mxu0 0.0
        %3289 = vmatpush.xpose.msra.mxu0 0.0
        %3290 = vmatpush.xpose.msra.mxu0 0.0
        %3291 = vmatpush.xpose.msra.mxu0 0.0
        %3292 = vmatpush.xpose.msra.mxu0 0.0
        %3293 = vmatpush.xpose.msra.mxu0 0.0
        %3294 = vmatpush.xpose.msra.mxu0 0.0
        %3295 = vmatpush.xpose.msra.mxu0 0.0
        %3296 = vmatpush.xpose.msra.mxu0 0.0
        %3297 = vmatpush.xpose.msra.mxu0 0.0
        %3298 = vmatpush.xpose.msra.mxu0 %v3281
        %3299 = vmatmul.f32.gmra.mxu0 %v3279
        %v3300 = vpop.f32.mrf.mxu0
        %v3301 = vadd.f32 0.0, %v3300
        %3302 = vdwg.mxu0
        %3303 = vrot.lane.b32.xlu0 %v3218, 104
        %v3304 = vpop.permute.xlu0 %3303
        %3305 = vrot.lane.b32.xlu0 %v3218, 72
        %v3306 = vpop.permute.xlu0 %3305
        %v3307 = vsel %vm1246, %v3304, 0
        %v3309 = vsel %vm1246, %v3306, 0
        %3311 = vmatpush.xpose.msra.mxu0 0.0
        %3312 = vmatpush.xpose.msra.mxu0 0.0
        %3313 = vmatpush.xpose.msra.mxu0 0.0
        %3314 = vmatpush.xpose.msra.mxu0 0.0
        %3315 = vmatpush.xpose.msra.mxu0 0.0
        %3316 = vmatpush.xpose.msra.mxu0 0.0
        %3317 = vmatpush.xpose.msra.mxu0 0.0
        %3318 = vmatpush.xpose.msra.mxu0 0.0
        %3319 = vmatpush.xpose.msra.mxu0 0.0
        %3320 = vmatpush.xpose.msra.mxu0 0.0
        %3321 = vmatpush.xpose.msra.mxu0 0.0
        %3322 = vmatpush.xpose.msra.mxu0 0.0
        %3323 = vmatpush.xpose.msra.mxu0 0.0
        %3324 = vmatpush.xpose.msra.mxu0 0.0
        %3325 = vmatpush.xpose.msra.mxu0 0.0
        %3326 = vmatpush.xpose.msra.mxu0 %v3309
        %3327 = vmatmul.f32.gmra.mxu0 %v3307
        %v3328 = vpop.f32.mrf.mxu0
        %v3329 = vadd.f32 0.0, %v3328
        %3330 = vdwg.mxu0
        %v3331 = vmul.f32 %v3245, 0.35355338
        %v3332 = vmul.f32 %v3273, 0.35355338
        %v3333 = vmul.f32 %v3301, 0.35355338
        %v3334 = vmul.f32 %v3329, 0.35355338
        %v3335 = vadd.f32 %v3331, %v2259
        %v3336 = vadd.f32 %v3332, %v2259
        %v3337 = vadd.f32 %v3333, %v2259
        %v3338 = vadd.f32 %v3334, %v2259
        %v3339 = vsel %vm1246, %v3335, -inf
        %3340 = vmax.xlane.f32.xlu0 %v3339
        %v3341 = vpop.xlane.xlu0 %3340
        %v3342 = vsel %vm1246, %v3336, -inf
        %3343 = vmax.xlane.f32.xlu0 %v3342
        %v3344 = vpop.xlane.xlu0 %3343
        %v3345 = vsel %vm1246, %v3337, -inf
        %3346 = vmax.xlane.f32.xlu0 %v3345
        %v3347 = vpop.xlane.xlu0 %3346
        %v3348 = vsel %vm1246, %v3338, -inf
        %3349 = vmax.xlane.f32.xlu0 %v3348
        %v3350 = vpop.xlane.xlu0 %3349
        %v3351 = vsub.f32 %v3335, %v3341
        %v3352 = vsub.f32 %v3336, %v3344
        %v3353 = vsub.f32 %v3337, %v3347
        %v3354 = vsub.f32 %v3338, %v3350
        %v3355 = vmul.f32 %v3351, 1.442695
        %v3356 = vpow.pop %v3355
        %v3357 = vmul.f32 %v3352, 1.442695
        %v3358 = vpow.pop %v3357
        %v3359 = vmul.f32 %v3353, 1.442695
        %v3360 = vpow.pop %v3359
        %v3361 = vmul.f32 %v3354, 1.442695
        %v3362 = vpow.pop %v3361
        %v3363 = vsel %vm1246, %v3356, 0.0
        %3364 = vadd.xlane.f32.xlu0 %v3363
        %v3365 = vpop.xlane.xlu0 %3364
        %v3366 = vsel %vm1246, %v3358, 0.0
        %3367 = vadd.xlane.f32.xlu0 %v3366
        %v3368 = vpop.xlane.xlu0 %3367
        %v3369 = vsel %vm1246, %v3360, 0.0
        %3370 = vadd.xlane.f32.xlu0 %v3369
        %v3371 = vpop.xlane.xlu0 %3370
        %v3372 = vsel %vm1246, %v3362, 0.0
        %3373 = vadd.xlane.f32.xlu0 %v3372
        %v3374 = vpop.xlane.xlu0 %3373
        %v3375 = vrcp.pop %v3365
        %v3376 = vrcp.pop %v3368
        %v3377 = vrcp.pop %v3371
        %v3378 = vrcp.pop %v3374
        %v3379 = vmul.f32 %v3356, %v3375
        %v3380 = vmul.f32 %v3358, %v3376
        %v3381 = vmul.f32 %v3360, %v3377
        %v3382 = vmul.f32 %v3362, %v3378
        %3383 = vrot.lane.b32.xlu0 %v3218, 64
        %v3384 = vpop.permute.xlu0 %3383
        %v3387 = vsel %vm1246, %v3379, 0
        %3389 = vmatpush.msra.mxu0 0.0
        %3390 = vmatpush.msra.mxu0 0.0
        %3391 = vmatpush.msra.mxu0 0.0
        %3392 = vmatpush.msra.mxu0 0.0
        %3393 = vmatpush.msra.mxu0 0.0
        %3394 = vmatpush.msra.mxu0 0.0
        %3395 = vmatpush.msra.mxu0 0.0
        %3396 = vmatpush.msra.mxu0 0.0
        %3397 = vmatpush.msra.mxu0 0.0
        %3398 = vmatpush.msra.mxu0 0.0
        %3399 = vmatpush.msra.mxu0 0.0
        %3400 = vmatpush.msra.mxu0 0.0
        %3401 = vmatpush.msra.mxu0 0.0
        %3402 = vmatpush.msra.mxu0 0.0
        %3403 = vmatpush.msra.mxu0 0.0
        %3404 = vmatpush.msra.mxu0 %v3384
        %3405 = vmatmul.f32.gmra.mxu0 %v3387
        %v3406 = vpop.f32.mrf.mxu0
        %v3407 = vadd.f32 0.0, %v3406
        %3408 = vdwg.mxu0
        %3409 = vrot.lane.b32.xlu0 %v3218, 56
        %v3410 = vpop.permute.xlu0 %3409
        %v3413 = vsel %vm1246, %v3380, 0
        %3415 = vmatpush.msra.mxu0 0.0
        %3416 = vmatpush.msra.mxu0 0.0
        %3417 = vmatpush.msra.mxu0 0.0
        %3418 = vmatpush.msra.mxu0 0.0
        %3419 = vmatpush.msra.mxu0 0.0
        %3420 = vmatpush.msra.mxu0 0.0
        %3421 = vmatpush.msra.mxu0 0.0
        %3422 = vmatpush.msra.mxu0 0.0
        %3423 = vmatpush.msra.mxu0 0.0
        %3424 = vmatpush.msra.mxu0 0.0
        %3425 = vmatpush.msra.mxu0 0.0
        %3426 = vmatpush.msra.mxu0 0.0
        %3427 = vmatpush.msra.mxu0 0.0
        %3428 = vmatpush.msra.mxu0 0.0
        %3429 = vmatpush.msra.mxu0 0.0
        %3430 = vmatpush.msra.mxu0 %v3410
        %3431 = vmatmul.f32.gmra.mxu0 %v3413
        %v3432 = vpop.f32.mrf.mxu0
        %v3433 = vadd.f32 0.0, %v3432
        %3434 = vdwg.mxu0
        %3435 = vrot.lane.b32.xlu0 %v3218, 48
        %v3436 = vpop.permute.xlu0 %3435
        %v3439 = vsel %vm1246, %v3381, 0
        %3441 = vmatpush.msra.mxu0 0.0
        %3442 = vmatpush.msra.mxu0 0.0
        %3443 = vmatpush.msra.mxu0 0.0
        %3444 = vmatpush.msra.mxu0 0.0
        %3445 = vmatpush.msra.mxu0 0.0
        %3446 = vmatpush.msra.mxu0 0.0
        %3447 = vmatpush.msra.mxu0 0.0
        %3448 = vmatpush.msra.mxu0 0.0
        %3449 = vmatpush.msra.mxu0 0.0
        %3450 = vmatpush.msra.mxu0 0.0
        %3451 = vmatpush.msra.mxu0 0.0
        %3452 = vmatpush.msra.mxu0 0.0
        %3453 = vmatpush.msra.mxu0 0.0
        %3454 = vmatpush.msra.mxu0 0.0
        %3455 = vmatpush.msra.mxu0 0.0
        %3456 = vmatpush.msra.mxu0 %v3436
        %3457 = vmatmul.f32.gmra.mxu0 %v3439
        %v3458 = vpop.f32.mrf.mxu0
        %v3459 = vadd.f32 0.0, %v3458
        %3460 = vdwg.mxu0
        %3461 = vrot.lane.b32.xlu0 %v3218, 40
        %v3462 = vpop.permute.xlu0 %3461
        %v3465 = vsel %vm1246, %v3382, 0
        %3467 = vmatpush.msra.mxu0 0.0
        %3468 = vmatpush.msra.mxu0 0.0
        %3469 = vmatpush.msra.mxu0 0.0
        %3470 = vmatpush.msra.mxu0 0.0
        %3471 = vmatpush.msra.mxu0 0.0
        %3472 = vmatpush.msra.mxu0 0.0
        %3473 = vmatpush.msra.mxu0 0.0
        %3474 = vmatpush.msra.mxu0 0.0
        %3475 = vmatpush.msra.mxu0 0.0
        %3476 = vmatpush.msra.mxu0 0.0
        %3477 = vmatpush.msra.mxu0 0.0
        %3478 = vmatpush.msra.mxu0 0.0
        %3479 = vmatpush.msra.mxu0 0.0
        %3480 = vmatpush.msra.mxu0 0.0
        %3481 = vmatpush.msra.mxu0 0.0
        %3482 = vmatpush.msra.mxu0 %v3462
        %3483 = vmatmul.f32.gmra.mxu0 %v3465
        %v3484 = vpop.f32.mrf.mxu0
        %v3485 = vadd.f32 0.0, %v3484
        %3486 = vdwg.mxu0
        %3488 = vrot.lane.b32.xlu0 %v3433, 8
        %v3489 = vpop.permute.xlu0 %3488
        %3492 = vrot.lane.b32.xlu0 %v3459, 16
        %v3493 = vpop.permute.xlu0 %3492
        %3496 = vrot.lane.b32.xlu0 %v3485, 24
        %v3497 = vpop.permute.xlu0 %3496
        %v3499 = vsel %vm1246, %v3407, %v3489
        %v3500 = vsel %vm1520, %v3499, %v3493
        %v3501 = vsel %vm1522, %v3500, %v3497
        %3502 = vrot.lane.b32.xlu0 %v3380, 8
        %v3503 = vpop.permute.xlu0 %3502
        %3505 = vrot.lane.b32.xlu0 %v3381, 16
        %v3506 = vpop.permute.xlu0 %3505
        %3508 = vrot.lane.b32.xlu0 %v3382, 24
        %v3509 = vpop.permute.xlu0 %3508
        %v3511 = vsel %vm1246, %v3379, %v3503
        %v3512 = vsel %vm1520, %v3511, %v3506
        %v3513 = vsel %vm1522, %v3512, %v3509
        %3515 = vrot.lane.b32.xlu0 %v3501, 32
        %v3516 = vpop.permute.xlu0 %3515
        %v3518 = vsel %vm1219, %v3176, %v3516
        %v3520 = vperm.slane %v3192, 0
        %v3523 = vsel %vm1544, %v3518, 0
        %3525 = vmatpush.msra.mxu0 0.0
        %3526 = vmatpush.msra.mxu0 0.0
        %3527 = vmatpush.msra.mxu0 0.0
        %3528 = vmatpush.msra.mxu0 0.0
        %3529 = vmatpush.msra.mxu0 0.0
        %3530 = vmatpush.msra.mxu0 0.0
        %3531 = vmatpush.msra.mxu0 0.0
        %3532 = vmatpush.msra.mxu0 0.0
        %3533 = vmatpush.msra.mxu0 %v3190
        %3534 = vmatpush.msra.mxu0 %v3189
        %3535 = vmatpush.msra.mxu0 %v3188
        %3536 = vmatpush.msra.mxu0 %v3187
        %3537 = vmatpush.msra.mxu0 %v3186
        %3538 = vmatpush.msra.mxu0 %v3185
        %3539 = vmatpush.msra.mxu0 %v3184
        %3540 = vmatpush.msra.mxu0 %v3183
        %3541 = vmatmul.f32.gmra.mxu0 %v3523
        %v3542 = vpop.f32.mrf.mxu0
        %v3543 = vadd.f32 %v3520, %v3542
        %3544 = vdwg.mxu0
        %v3545 = vadd.f32 %v3543, %v3176
        %v3546 = vsel %vm1219, %v3545, 0.0
        %3547 = vadd.xlane.f32.xlu0 %v3546
        %v3548 = vpop.xlane.xlu0 %3547
        %v3549 = vmul.f32 %v3548, %v1578
        %v3550 = vsub.f32 %v3545, %v3549
        %v3551 = vmul.f32 %v3550, %v3550
        %v3552 = vsel %vm1219, %v3551, 0.0
        %3553 = vadd.xlane.f32.xlu0 %v3552
        %v3554 = vpop.xlane.xlu0 %3553
        %v3555 = vmul.f32 %v3554, %v1578
        %v3556 = vadd.f32 %v3555, 1e-05
        %v3557 = vrsqrt.pop %v3556
        %v3558 = vmul.f32 %v3557, %v3556
        %v3559 = vmul.f32 %v3558, %v3557
        %v3560 = vmul.f32 0.5, %v3559
        %v3561 = vsub.f32 1.5, %v3560
        %v3562 = vmul.f32 %v3557, %v3561
        %vm3563 = vweird.f32 %v3556
        %vm3564 = vweird.f32 %v3557
        %vm3565 = vmor %vm3563, %vm3564
        %v3566 = vsel %vm3565, %v3557, %v3562
        %v3567 = vmul.f32 %v3550, %v3566
        %v3569 = vperm.slane %v3194, 0
        %v3571 = vmul.f32 %v3567, %v3569
        %v3573 = vperm.slane %v3196, 0
        %v3575 = vadd.f32 %v3571, %v3573
        %s3576 = scalar_lea.vmem %s1184, 8 [#allocation5]
        %3577 = vst.msk [vmem:[%s3576] sm:$0xff] %vm1219, %v3513
        %s3578 = scalar_lea.vmem %s43, 32
        %v3579 = vld [vmem:[%s3578] sm:$0xff]
        %v3580 = vld [vmem:[%s3578 + $0x8] sm:$0xff]
        %v3581 = vld [vmem:[%s3578 + $0x10] sm:$0xff]
        %v3582 = vld [vmem:[%s3578 + $0x18] sm:$0xff]
        %s3583 = scalar_lea.vmem %s45, 32
        %v3584 = vld [vmem:[%s3583] sm:$0xff]
        %v3585 = vld [vmem:[%s3583 + $0x8] sm:$0xff]
        %v3586 = vld [vmem:[%s3583 + $0x10] sm:$0xff]
        %v3587 = vld [vmem:[%s3583 + $0x18] sm:$0xff]
        %s3588 = scalar_lea.vmem %s47, 64
        %v3589 = vld [vmem:[%s3588] sm:$0xff]
        %v3590 = vld [vmem:[%s3588 + $0x8] sm:$0xff]
        %v3591 = vld [vmem:[%s3588 + $0x10] sm:$0xff]
        %v3592 = vld [vmem:[%s3588 + $0x18] sm:$0xff]
        %v3593 = vld [vmem:[%s3588 + $0x20] sm:$0xff]
        %v3594 = vld [vmem:[%s3588 + $0x28] sm:$0xff]
        %v3595 = vld [vmem:[%s3588 + $0x30] sm:$0xff]
        %v3596 = vld [vmem:[%s3588 + $0x38] sm:$0xff]
        %s3597 = scalar_lea.vmem %s49, 1
        %v3598 = vld [vmem:[%s3597] sm:$0x1]
        %s3599 = scalar_lea.vmem %s51, 1
        %v3600 = vld [vmem:[%s3599] sm:$0x1]
        %s3601 = scalar_lea.vmem %s53, 1
        %v3602 = vld [vmem:[%s3601] sm:$0x1]
        %v3604 = vsel %vm1219, %v3575, 0
        %3606 = vmatpush.msra.mxu0 0.0
        %3607 = vmatpush.msra.mxu0 0.0
        %3608 = vmatpush.msra.mxu0 0.0
        %3609 = vmatpush.msra.mxu0 0.0
        %3610 = vmatpush.msra.mxu0 0.0
        %3611 = vmatpush.msra.mxu0 0.0
        %3612 = vmatpush.msra.mxu0 0.0
        %3613 = vmatpush.msra.mxu0 0.0
        %3614 = vmatpush.msra.mxu0 0.0
        %3615 = vmatpush.msra.mxu0 0.0
        %3616 = vmatpush.msra.mxu0 0.0
        %3617 = vmatpush.msra.mxu0 0.0
        %3618 = vmatpush.msra.mxu0 %v3582
        %3619 = vmatpush.msra.mxu0 %v3581
        %3620 = vmatpush.msra.mxu0 %v3580
        %3621 = vmatpush.msra.mxu0 %v3579
        %3622 = vmatmul.f32.gmra.mxu0 %v3604
        %v3623 = vpop.f32.mrf.mxu0
        %v3624 = vadd.f32 0.0, %v3623
        %3625 = vdwg.mxu0
        %3626 = vmatpush.msra.mxu0 0.0
        %3627 = vmatpush.msra.mxu0 0.0
        %3628 = vmatpush.msra.mxu0 0.0
        %3629 = vmatpush.msra.mxu0 0.0
        %3630 = vmatpush.msra.mxu0 0.0
        %3631 = vmatpush.msra.mxu0 0.0
        %3632 = vmatpush.msra.mxu0 0.0
        %3633 = vmatpush.msra.mxu0 0.0
        %3634 = vmatpush.msra.mxu0 0.0
        %3635 = vmatpush.msra.mxu0 0.0
        %3636 = vmatpush.msra.mxu0 0.0
        %3637 = vmatpush.msra.mxu0 0.0
        %3638 = vmatpush.msra.mxu0 %v3587
        %3639 = vmatpush.msra.mxu0 %v3586
        %3640 = vmatpush.msra.mxu0 %v3585
        %3641 = vmatpush.msra.mxu0 %v3584
        %3642 = vmatmul.f32.gmra.mxu0 %v2698
        %v3643 = vpop.f32.mrf.mxu0
        %v3644 = vadd.f32 0.0, %v3643
        %3645 = vdwg.mxu0
        %v3647 = vsel %vm1246, %v3624, 0
        %v3650 = vsel %vm1246, %v3644, 0
        %3652 = vmatpush.xpose.msra.mxu0 0.0
        %3653 = vmatpush.xpose.msra.mxu0 0.0
        %3654 = vmatpush.xpose.msra.mxu0 0.0
        %3655 = vmatpush.xpose.msra.mxu0 0.0
        %3656 = vmatpush.xpose.msra.mxu0 0.0
        %3657 = vmatpush.xpose.msra.mxu0 0.0
        %3658 = vmatpush.xpose.msra.mxu0 0.0
        %3659 = vmatpush.xpose.msra.mxu0 0.0
        %3660 = vmatpush.xpose.msra.mxu0 0.0
        %3661 = vmatpush.xpose.msra.mxu0 0.0
        %3662 = vmatpush.xpose.msra.mxu0 0.0
        %3663 = vmatpush.xpose.msra.mxu0 0.0
        %3664 = vmatpush.xpose.msra.mxu0 0.0
        %3665 = vmatpush.xpose.msra.mxu0 0.0
        %3666 = vmatpush.xpose.msra.mxu0 0.0
        %3667 = vmatpush.xpose.msra.mxu0 %v3650
        %3668 = vmatmul.f32.gmra.mxu0 %v3647
        %v3669 = vpop.f32.mrf.mxu0
        %v3670 = vadd.f32 0.0, %v3669
        %3671 = vdwg.mxu0
        %3672 = vrot.lane.b32.xlu0 %v3624, 120
        %v3673 = vpop.permute.xlu0 %3672
        %3674 = vrot.lane.b32.xlu0 %v3644, 120
        %v3675 = vpop.permute.xlu0 %3674
        %v3676 = vsel %vm1246, %v3673, 0
        %v3678 = vsel %vm1246, %v3675, 0
        %3680 = vmatpush.xpose.msra.mxu0 0.0
        %3681 = vmatpush.xpose.msra.mxu0 0.0
        %3682 = vmatpush.xpose.msra.mxu0 0.0
        %3683 = vmatpush.xpose.msra.mxu0 0.0
        %3684 = vmatpush.xpose.msra.mxu0 0.0
        %3685 = vmatpush.xpose.msra.mxu0 0.0
        %3686 = vmatpush.xpose.msra.mxu0 0.0
        %3687 = vmatpush.xpose.msra.mxu0 0.0
        %3688 = vmatpush.xpose.msra.mxu0 0.0
        %3689 = vmatpush.xpose.msra.mxu0 0.0
        %3690 = vmatpush.xpose.msra.mxu0 0.0
        %3691 = vmatpush.xpose.msra.mxu0 0.0
        %3692 = vmatpush.xpose.msra.mxu0 0.0
        %3693 = vmatpush.xpose.msra.mxu0 0.0
        %3694 = vmatpush.xpose.msra.mxu0 0.0
        %3695 = vmatpush.xpose.msra.mxu0 %v3678
        %3696 = vmatmul.f32.gmra.mxu0 %v3676
        %v3697 = vpop.f32.mrf.mxu0
        %v3698 = vadd.f32 0.0, %v3697
        %3699 = vdwg.mxu0
        %3700 = vrot.lane.b32.xlu0 %v3624, 112
        %v3701 = vpop.permute.xlu0 %3700
        %3702 = vrot.lane.b32.xlu0 %v3644, 112
        %v3703 = vpop.permute.xlu0 %3702
        %v3704 = vsel %vm1246, %v3701, 0
        %v3706 = vsel %vm1246, %v3703, 0
        %3708 = vmatpush.xpose.msra.mxu0 0.0
        %3709 = vmatpush.xpose.msra.mxu0 0.0
        %3710 = vmatpush.xpose.msra.mxu0 0.0
        %3711 = vmatpush.xpose.msra.mxu0 0.0
        %3712 = vmatpush.xpose.msra.mxu0 0.0
        %3713 = vmatpush.xpose.msra.mxu0 0.0
        %3714 = vmatpush.xpose.msra.mxu0 0.0
        %3715 = vmatpush.xpose.msra.mxu0 0.0
        %3716 = vmatpush.xpose.msra.mxu0 0.0
        %3717 = vmatpush.xpose.msra.mxu0 0.0
        %3718 = vmatpush.xpose.msra.mxu0 0.0
        %3719 = vmatpush.xpose.msra.mxu0 0.0
        %3720 = vmatpush.xpose.msra.mxu0 0.0
        %3721 = vmatpush.xpose.msra.mxu0 0.0
        %3722 = vmatpush.xpose.msra.mxu0 0.0
        %3723 = vmatpush.xpose.msra.mxu0 %v3706
        %3724 = vmatmul.f32.gmra.mxu0 %v3704
        %v3725 = vpop.f32.mrf.mxu0
        %v3726 = vadd.f32 0.0, %v3725
        %3727 = vdwg.mxu0
        %3728 = vrot.lane.b32.xlu0 %v3624, 104
        %v3729 = vpop.permute.xlu0 %3728
        %3730 = vrot.lane.b32.xlu0 %v3644, 104
        %v3731 = vpop.permute.xlu0 %3730
        %v3732 = vsel %vm1246, %v3729, 0
        %v3734 = vsel %vm1246, %v3731, 0
        %3736 = vmatpush.xpose.msra.mxu0 0.0
        %3737 = vmatpush.xpose.msra.mxu0 0.0
        %3738 = vmatpush.xpose.msra.mxu0 0.0
        %3739 = vmatpush.xpose.msra.mxu0 0.0
        %3740 = vmatpush.xpose.msra.mxu0 0.0
        %3741 = vmatpush.xpose.msra.mxu0 0.0
        %3742 = vmatpush.xpose.msra.mxu0 0.0
        %3743 = vmatpush.xpose.msra.mxu0 0.0
        %3744 = vmatpush.xpose.msra.mxu0 0.0
        %3745 = vmatpush.xpose.msra.mxu0 0.0
        %3746 = vmatpush.xpose.msra.mxu0 0.0
        %3747 = vmatpush.xpose.msra.mxu0 0.0
        %3748 = vmatpush.xpose.msra.mxu0 0.0
        %3749 = vmatpush.xpose.msra.mxu0 0.0
        %3750 = vmatpush.xpose.msra.mxu0 0.0
        %3751 = vmatpush.xpose.msra.mxu0 %v3734
        %3752 = vmatmul.f32.gmra.mxu0 %v3732
        %v3753 = vpop.f32.mrf.mxu0
        %v3754 = vadd.f32 0.0, %v3753
        %3755 = vdwg.mxu0
        %v3756 = vmul.f32 %v3670, 0.35355338
        %v3757 = vmul.f32 %v3698, 0.35355338
        %v3758 = vmul.f32 %v3726, 0.35355338
        %v3759 = vmul.f32 %v3754, 0.35355338
        %v3760 = vsel %vm1246, %v3756, -inf
        %3761 = vmax.xlane.f32.xlu0 %v3760
        %v3762 = vpop.xlane.xlu0 %3761
        %v3763 = vsel %vm1246, %v3757, -inf
        %3764 = vmax.xlane.f32.xlu0 %v3763
        %v3765 = vpop.xlane.xlu0 %3764
        %v3766 = vsel %vm1246, %v3758, -inf
        %3767 = vmax.xlane.f32.xlu0 %v3766
        %v3768 = vpop.xlane.xlu0 %3767
        %v3769 = vsel %vm1246, %v3759, -inf
        %3770 = vmax.xlane.f32.xlu0 %v3769
        %v3771 = vpop.xlane.xlu0 %3770
        %v3772 = vsub.f32 %v3756, %v3762
        %v3773 = vsub.f32 %v3757, %v3765
        %v3774 = vsub.f32 %v3758, %v3768
        %v3775 = vsub.f32 %v3759, %v3771
        %v3776 = vmul.f32 %v3772, 1.442695
        %v3777 = vpow.pop %v3776
        %v3778 = vmul.f32 %v3773, 1.442695
        %v3779 = vpow.pop %v3778
        %v3780 = vmul.f32 %v3774, 1.442695
        %v3781 = vpow.pop %v3780
        %v3782 = vmul.f32 %v3775, 1.442695
        %v3783 = vpow.pop %v3782
        %v3784 = vsel %vm1246, %v3777, 0.0
        %3785 = vadd.xlane.f32.xlu0 %v3784
        %v3786 = vpop.xlane.xlu0 %3785
        %v3787 = vsel %vm1246, %v3779, 0.0
        %3788 = vadd.xlane.f32.xlu0 %v3787
        %v3789 = vpop.xlane.xlu0 %3788
        %v3790 = vsel %vm1246, %v3781, 0.0
        %3791 = vadd.xlane.f32.xlu0 %v3790
        %v3792 = vpop.xlane.xlu0 %3791
        %v3793 = vsel %vm1246, %v3783, 0.0
        %3794 = vadd.xlane.f32.xlu0 %v3793
        %v3795 = vpop.xlane.xlu0 %3794
        %v3796 = vrcp.pop %v3786
        %v3797 = vrcp.pop %v3789
        %v3798 = vrcp.pop %v3792
        %v3799 = vrcp.pop %v3795
        %v3800 = vmul.f32 %v3777, %v3796
        %v3801 = vmul.f32 %v3779, %v3797
        %v3802 = vmul.f32 %v3781, %v3798
        %v3803 = vmul.f32 %v3783, %v3799
        %3804 = vrot.lane.b32.xlu0 %v3644, 96
        %v3805 = vpop.permute.xlu0 %3804
        %v3808 = vsel %vm1246, %v3800, 0
        %3810 = vmatpush.msra.mxu0 0.0
        %3811 = vmatpush.msra.mxu0 0.0
        %3812 = vmatpush.msra.mxu0 0.0
        %3813 = vmatpush.msra.mxu0 0.0
        %3814 = vmatpush.msra.mxu0 0.0
        %3815 = vmatpush.msra.mxu0 0.0
        %3816 = vmatpush.msra.mxu0 0.0
        %3817 = vmatpush.msra.mxu0 0.0
        %3818 = vmatpush.msra.mxu0 0.0
        %3819 = vmatpush.msra.mxu0 0.0
        %3820 = vmatpush.msra.mxu0 0.0
        %3821 = vmatpush.msra.mxu0 0.0
        %3822 = vmatpush.msra.mxu0 0.0
        %3823 = vmatpush.msra.mxu0 0.0
        %3824 = vmatpush.msra.mxu0 0.0
        %3825 = vmatpush.msra.mxu0 %v3805
        %3826 = vmatmul.f32.gmra.mxu0 %v3808
        %v3827 = vpop.f32.mrf.mxu0
        %v3828 = vadd.f32 0.0, %v3827
        %3829 = vdwg.mxu0
        %3830 = vrot.lane.b32.xlu0 %v3644, 88
        %v3831 = vpop.permute.xlu0 %3830
        %v3834 = vsel %vm1246, %v3801, 0
        %3836 = vmatpush.msra.mxu0 0.0
        %3837 = vmatpush.msra.mxu0 0.0
        %3838 = vmatpush.msra.mxu0 0.0
        %3839 = vmatpush.msra.mxu0 0.0
        %3840 = vmatpush.msra.mxu0 0.0
        %3841 = vmatpush.msra.mxu0 0.0
        %3842 = vmatpush.msra.mxu0 0.0
        %3843 = vmatpush.msra.mxu0 0.0
        %3844 = vmatpush.msra.mxu0 0.0
        %3845 = vmatpush.msra.mxu0 0.0
        %3846 = vmatpush.msra.mxu0 0.0
        %3847 = vmatpush.msra.mxu0 0.0
        %3848 = vmatpush.msra.mxu0 0.0
        %3849 = vmatpush.msra.mxu0 0.0
        %3850 = vmatpush.msra.mxu0 0.0
        %3851 = vmatpush.msra.mxu0 %v3831
        %3852 = vmatmul.f32.gmra.mxu0 %v3834
        %v3853 = vpop.f32.mrf.mxu0
        %v3854 = vadd.f32 0.0, %v3853
        %3855 = vdwg.mxu0
        %3856 = vrot.lane.b32.xlu0 %v3644, 80
        %v3857 = vpop.permute.xlu0 %3856
        %v3860 = vsel %vm1246, %v3802, 0
        %3862 = vmatpush.msra.mxu0 0.0
        %3863 = vmatpush.msra.mxu0 0.0
        %3864 = vmatpush.msra.mxu0 0.0
        %3865 = vmatpush.msra.mxu0 0.0
        %3866 = vmatpush.msra.mxu0 0.0
        %3867 = vmatpush.msra.mxu0 0.0
        %3868 = vmatpush.msra.mxu0 0.0
        %3869 = vmatpush.msra.mxu0 0.0
        %3870 = vmatpush.msra.mxu0 0.0
        %3871 = vmatpush.msra.mxu0 0.0
        %3872 = vmatpush.msra.mxu0 0.0
        %3873 = vmatpush.msra.mxu0 0.0
        %3874 = vmatpush.msra.mxu0 0.0
        %3875 = vmatpush.msra.mxu0 0.0
        %3876 = vmatpush.msra.mxu0 0.0
        %3877 = vmatpush.msra.mxu0 %v3857
        %3878 = vmatmul.f32.gmra.mxu0 %v3860
        %v3879 = vpop.f32.mrf.mxu0
        %v3880 = vadd.f32 0.0, %v3879
        %3881 = vdwg.mxu0
        %3882 = vrot.lane.b32.xlu0 %v3644, 72
        %v3883 = vpop.permute.xlu0 %3882
        %v3886 = vsel %vm1246, %v3803, 0
        %3888 = vmatpush.msra.mxu0 0.0
        %3889 = vmatpush.msra.mxu0 0.0
        %3890 = vmatpush.msra.mxu0 0.0
        %3891 = vmatpush.msra.mxu0 0.0
        %3892 = vmatpush.msra.mxu0 0.0
        %3893 = vmatpush.msra.mxu0 0.0
        %3894 = vmatpush.msra.mxu0 0.0
        %3895 = vmatpush.msra.mxu0 0.0
        %3896 = vmatpush.msra.mxu0 0.0
        %3897 = vmatpush.msra.mxu0 0.0
        %3898 = vmatpush.msra.mxu0 0.0
        %3899 = vmatpush.msra.mxu0 0.0
        %3900 = vmatpush.msra.mxu0 0.0
        %3901 = vmatpush.msra.mxu0 0.0
        %3902 = vmatpush.msra.mxu0 0.0
        %3903 = vmatpush.msra.mxu0 %v3883
        %3904 = vmatmul.f32.gmra.mxu0 %v3886
        %v3905 = vpop.f32.mrf.mxu0
        %v3906 = vadd.f32 0.0, %v3905
        %3907 = vdwg.mxu0
        %3909 = vrot.lane.b32.xlu0 %v3854, 8
        %v3910 = vpop.permute.xlu0 %3909
        %3913 = vrot.lane.b32.xlu0 %v3880, 16
        %v3914 = vpop.permute.xlu0 %3913
        %3917 = vrot.lane.b32.xlu0 %v3906, 24
        %v3918 = vpop.permute.xlu0 %3917
        %v3920 = vsel %vm1246, %v3828, %v3910
        %v3921 = vsel %vm1520, %v3920, %v3914
        %v3922 = vsel %vm1522, %v3921, %v3918
        %3923 = vrot.lane.b32.xlu0 %v3801, 8
        %v3924 = vpop.permute.xlu0 %3923
        %3926 = vrot.lane.b32.xlu0 %v3802, 16
        %v3927 = vpop.permute.xlu0 %3926
        %3929 = vrot.lane.b32.xlu0 %v3803, 24
        %v3930 = vpop.permute.xlu0 %3929
        %v3932 = vsel %vm1246, %v3800, %v3924
        %v3933 = vsel %vm1520, %v3932, %v3927
        %v3934 = vsel %vm1522, %v3933, %v3930
        %3936 = vrot.lane.b32.xlu0 %v3922, 32
        %v3937 = vpop.permute.xlu0 %3936
        %v3939 = vsel %vm1219, %v3575, %v3937
        %v3941 = vperm.slane %v3598, 0
        %v3944 = vsel %vm1544, %v3939, 0
        %3946 = vmatpush.msra.mxu0 0.0
        %3947 = vmatpush.msra.mxu0 0.0
        %3948 = vmatpush.msra.mxu0 0.0
        %3949 = vmatpush.msra.mxu0 0.0
        %3950 = vmatpush.msra.mxu0 0.0
        %3951 = vmatpush.msra.mxu0 0.0
        %3952 = vmatpush.msra.mxu0 0.0
        %3953 = vmatpush.msra.mxu0 0.0
        %3954 = vmatpush.msra.mxu0 %v3596
        %3955 = vmatpush.msra.mxu0 %v3595
        %3956 = vmatpush.msra.mxu0 %v3594
        %3957 = vmatpush.msra.mxu0 %v3593
        %3958 = vmatpush.msra.mxu0 %v3592
        %3959 = vmatpush.msra.mxu0 %v3591
        %3960 = vmatpush.msra.mxu0 %v3590
        %3961 = vmatpush.msra.mxu0 %v3589
        %3962 = vmatmul.f32.gmra.mxu0 %v3944
        %v3963 = vpop.f32.mrf.mxu0
        %v3964 = vadd.f32 %v3941, %v3963
        %3965 = vdwg.mxu0
        %v3966 = vadd.f32 %v3964, %v3575
        %v3967 = vsel %vm1219, %v3966, 0.0
        %3968 = vadd.xlane.f32.xlu0 %v3967
        %v3969 = vpop.xlane.xlu0 %3968
        %v3970 = vmul.f32 %v3969, %v1578
        %v3971 = vsub.f32 %v3966, %v3970
        %v3972 = vmul.f32 %v3971, %v3971
        %v3973 = vsel %vm1219, %v3972, 0.0
        %3974 = vadd.xlane.f32.xlu0 %v3973
        %v3975 = vpop.xlane.xlu0 %3974
        %v3976 = vmul.f32 %v3975, %v1578
        %v3977 = vadd.f32 %v3976, 1e-05
        %v3978 = vrsqrt.pop %v3977
        %v3979 = vmul.f32 %v3978, %v3977
        %v3980 = vmul.f32 %v3979, %v3978
        %v3981 = vmul.f32 0.5, %v3980
        %v3982 = vsub.f32 1.5, %v3981
        %v3983 = vmul.f32 %v3978, %v3982
        %vm3984 = vweird.f32 %v3977
        %vm3985 = vweird.f32 %v3978
        %vm3986 = vmor %vm3984, %vm3985
        %v3987 = vsel %vm3986, %v3978, %v3983
        %v3988 = vmul.f32 %v3971, %v3987
        %v3990 = vperm.slane %v3600, 0
        %v3992 = vmul.f32 %v3988, %v3990
        %v3994 = vperm.slane %v3602, 0
        %v3996 = vadd.f32 %v3992, %v3994
        %s3997 = scalar_lea.vmem %s1190, 8 [#allocation6]
        %3998 = vst.msk [vmem:[%s3997] sm:$0xff] %vm1219, %v3934
        %s3999 = scalar_lea.vmem %s55, 32
        %v4000 = vld [vmem:[%s3999] sm:$0xff]
        %v4001 = vld [vmem:[%s3999 + $0x8] sm:$0xff]
        %v4002 = vld [vmem:[%s3999 + $0x10] sm:$0xff]
        %v4003 = vld [vmem:[%s3999 + $0x18] sm:$0xff]
        %s4004 = scalar_lea.vmem %s57, 1
        %v4005 = vld [vmem:[%s4004] sm:$0x1]
        %s4006 = scalar_lea.vmem %s59, 128
        %v4007 = vld [vmem:[%s4006] sm:$0xff]
        %v4008 = vld [vmem:[%s4006 + $0x8] sm:$0xff]
        %v4009 = vld [vmem:[%s4006 + $0x10] sm:$0xff]
        %v4010 = vld [vmem:[%s4006 + $0x18] sm:$0xff]
        %v4011 = vld [vmem:[%s4006 + $0x20] sm:$0xff]
        %v4012 = vld [vmem:[%s4006 + $0x28] sm:$0xff]
        %v4013 = vld [vmem:[%s4006 + $0x30] sm:$0xff]
        %v4014 = vld [vmem:[%s4006 + $0x38] sm:$0xff]
        %v4015 = vld [vmem:[%s4006 + $0x40] sm:$0xff]
        %v4016 = vld [vmem:[%s4006 + $0x48] sm:$0xff]
        %v4017 = vld [vmem:[%s4006 + $0x50] sm:$0xff]
        %v4018 = vld [vmem:[%s4006 + $0x58] sm:$0xff]
        %v4019 = vld [vmem:[%s4006 + $0x60] sm:$0xff]
        %v4020 = vld [vmem:[%s4006 + $0x68] sm:$0xff]
        %v4021 = vld [vmem:[%s4006 + $0x70] sm:$0xff]
        %v4022 = vld [vmem:[%s4006 + $0x78] sm:$0xff]
        %s4023 = scalar_lea.vmem %s61, 1
        %v4024 = vld [vmem:[%s4023] sm:$0x1]
        %s4025 = scalar_lea.vmem %s63, 1
        %v4026 = vld [vmem:[%s4025] sm:$0x1]
        %s4027 = scalar_lea.vmem %s65, 1
        %v4028 = vld [vmem:[%s4027] sm:$0x1]
        %v4030 = vperm.slane %v4005, 0
        %v4033 = vsel %vm1219, %v3996, 0
        %4035 = vmatpush.msra.mxu0 0.0
        %4036 = vmatpush.msra.mxu0 0.0
        %4037 = vmatpush.msra.mxu0 0.0
        %4038 = vmatpush.msra.mxu0 0.0
        %4039 = vmatpush.msra.mxu0 0.0
        %4040 = vmatpush.msra.mxu0 0.0
        %4041 = vmatpush.msra.mxu0 0.0
        %4042 = vmatpush.msra.mxu0 0.0
        %4043 = vmatpush.msra.mxu0 0.0
        %4044 = vmatpush.msra.mxu0 0.0
        %4045 = vmatpush.msra.mxu0 0.0
        %4046 = vmatpush.msra.mxu0 0.0
        %4047 = vmatpush.msra.mxu0 %v4003
        %4048 = vmatpush.msra.mxu0 %v4002
        %4049 = vmatpush.msra.mxu0 %v4001
        %4050 = vmatpush.msra.mxu0 %v4000
        %4051 = vmatmul.f32.gmra.mxu0 %v4033
        %v4052 = vpop.f32.mrf.mxu0
        %v4053 = vadd.f32 %v4030, %v4052
        %4054 = vdwg.mxu0
        %v4055 = vmax.f32 %v4053, 0.0
        %v4057 = vperm.slane %v4024, 0
        %4059 = vmatpush.msra.mxu0 %v4022
        %4060 = vmatpush.msra.mxu0 %v4021
        %4061 = vmatpush.msra.mxu0 %v4020
        %4062 = vmatpush.msra.mxu0 %v4019
        %4063 = vmatpush.msra.mxu0 %v4018
        %4064 = vmatpush.msra.mxu0 %v4017
        %4065 = vmatpush.msra.mxu0 %v4016
        %4066 = vmatpush.msra.mxu0 %v4015
        %4067 = vmatpush.msra.mxu0 %v4014
        %4068 = vmatpush.msra.mxu0 %v4013
        %4069 = vmatpush.msra.mxu0 %v4012
        %4070 = vmatpush.msra.mxu0 %v4011
        %4071 = vmatpush.msra.mxu0 %v4010
        %4072 = vmatpush.msra.mxu0 %v4009
        %4073 = vmatpush.msra.mxu0 %v4008
        %4074 = vmatpush.msra.mxu0 %v4007
        %4075 = vmatmul.f32.gmra.mxu0 %v4055
        %v4076 = vpop.f32.mrf.mxu0
        %v4077 = vadd.f32 %v4057, %v4076
        %4078 = vdwg.mxu0
        %v4079 = vadd.f32 %v4077, %v3996
        %v4080 = vsel %vm1219, %v4079, 0.0
        %4081 = vadd.xlane.f32.xlu0 %v4080
        %v4082 = vpop.xlane.xlu0 %4081
        %v4083 = vmul.f32 %v4082, %v1578
        %v4084 = vsub.f32 %v4079, %v4083
        %v4085 = vmul.f32 %v4084, %v4084
        %v4086 = vsel %vm1219, %v4085, 0.0
        %4087 = vadd.xlane.f32.xlu0 %v4086
        %v4088 = vpop.xlane.xlu0 %4087
        %v4089 = vmul.f32 %v4088, %v1578
        %v4090 = vadd.f32 %v4089, 1e-05
        %v4091 = vrsqrt.pop %v4090
        %v4092 = vmul.f32 %v4091, %v4090
        %v4093 = vmul.f32 %v4092, %v4091
        %v4094 = vmul.f32 0.5, %v4093
        %v4095 = vsub.f32 1.5, %v4094
        %v4096 = vmul.f32 %v4091, %v4095
        %vm4097 = vweird.f32 %v4090
        %vm4098 = vweird.f32 %v4091
        %vm4099 = vmor %vm4097, %vm4098
        %v4100 = vsel %vm4099, %v4091, %v4096
        %v4101 = vmul.f32 %v4084, %v4100
        %v4103 = vperm.slane %v4026, 0
        %v4105 = vmul.f32 %v4101, %v4103
        %v4107 = vperm.slane %v4028, 0
        %v4109 = vadd.f32 %v4105, %v4107
        %v4110 = vld [vmem:[%s67] sm:$0xff]
        %v4111 = vld [vmem:[%s67 + $0x8] sm:$0xff]
        %v4112 = vld [vmem:[%s67 + $0x10] sm:$0xff]
        %v4113 = vld [vmem:[%s67 + $0x18] sm:$0xff]
        %v4114 = vld [vmem:[%s69] sm:$0x1]
        %v4116 = vperm.slane %v4114, 0
        %v4119 = vsel %vm1219, %v4109, 0
        %4121 = vmatpush.msra.mxu0 0.0
        %4122 = vmatpush.msra.mxu0 0.0
        %4123 = vmatpush.msra.mxu0 0.0
        %4124 = vmatpush.msra.mxu0 0.0
        %4125 = vmatpush.msra.mxu0 0.0
        %4126 = vmatpush.msra.mxu0 0.0
        %4127 = vmatpush.msra.mxu0 0.0
        %4128 = vmatpush.msra.mxu0 0.0
        %4129 = vmatpush.msra.mxu0 0.0
        %4130 = vmatpush.msra.mxu0 0.0
        %4131 = vmatpush.msra.mxu0 0.0
        %4132 = vmatpush.msra.mxu0 0.0
        %4133 = vmatpush.msra.mxu0 %v4113
        %4134 = vmatpush.msra.mxu0 %v4112
        %4135 = vmatpush.msra.mxu0 %v4111
        %4136 = vmatpush.msra.mxu0 %v4110
        %4137 = vmatmul.f32.gmra.mxu0 %v4119
        %v4138 = vpop.f32.mrf.mxu0
        %v4139 = vadd.f32 %v4116, %v4138
        %4140 = vdwg.mxu0
        %4141 = vst.msk [vmem:[%s1172] sm:$0xff] %vm1520, %v4139
        %s4142 = sand.u32 %s850, 1
        %s4143 = scalar_lea.sflag [#allocation3], %s4142
        %s4144 = sand.u32 %s850, 1
        %s4145 = smul.addr %s4144, 8
        %s4146 = scalar_lea.vmem [#allocation2], %s4145
        %s4147 = sand.u32 %s876, 1
        %s4148 = sand.u32 %s876, 1
        %s4149 = smul.addr %s4148, 16
        %s4150 = scalar_lea.vmem [#allocation4], %s4149
        %s4151 = sand.u32 %s902, 1
        %s4152 = sand.u32 %s902, 1
        %s4153 = smul.addr %s4152, 16
        %s4154 = scalar_lea.vmem [#allocation5], %s4153
        %s4155 = sand.u32 %s928, 1
        %s4156 = sand.u32 %s928, 1
        %s4157 = smul.addr %s4156, 16
        %s4158 = scalar_lea.vmem [#allocation6], %s4157
        // Predicated region
        $region161: #{transformer_apply.1} parent=159 // pred_check
          %p4159 = pneg %p860
        $region162: #{transformer_apply.1} parent=159 // pred_check_branch
          %4161 = sbr.rel (%p4159) target = $region164
        $region163: #{transformer_apply.1} parent=159 // pred_region
          %4163 = vsyncadd %s4143, 0
          %s4164 = smul.addr %s92, 8
          %s4165 = scalar_lea.hbm %s71, %s4164
          %s4167 = sshll.u32 %s4146, 4
          %s4168 = int_to_ptr.vmem [resolvable:$true] %s4167
          %s4169 = sshll.u32 %s4165, 4
          %s4170 = int_to_ptr.hbm [resolvable:$true] %s4169
          %4172 = dma.vmem_to_hbm [thread:$0]  %s4168, 128, %s4170, %s4143
        $region164: #{transformer_apply.1} parent=159 // pred_fallthru
          _
        // Predicated region
        $region165: #{transformer_apply.1} parent=159 // pred_check
          %p4173 = pneg %p886
        $region166: #{transformer_apply.1} parent=159 // pred_check_branch
          %4175 = sbr.rel (%p4173) target = $region168
        $region167: #{transformer_apply.1} parent=159 // pred_region
          %s4176 = smul.addr %s92, 8
          %s4177 = scalar_lea.vmem %s73, %s4176
          // Predicated region
          $region169: #{transformer_apply.1} parent=167 // pred_check
            _
          $region170: #{transformer_apply.1} parent=167 // pred_check_branch
            %4179 = sbr.rel (0) target = $region172
          $region171: #{transformer_apply.1} parent=167 // pred_region
            // Predicated region
            $region173: #{transformer_apply.1} parent=171 // pred_check
              _
            $region174: #{transformer_apply.1} parent=171 // pred_check_branch
              %4181 = sbr.rel (0) target = $region176
            $region175: #{transformer_apply.1} parent=171 // pred_region
              // Predicated region
              $region188: #{transformer_apply.1} parent=175 // pred_check
                _
              $region189: #{transformer_apply.1} parent=175 // pred_check_branch
                %4199 = sbr.rel (0) target = $region191
              $region190: #{transformer_apply.1} parent=175 // pred_region
                loop: start=0, step=1, limit=1
                $region192: #{transformer_apply.1} parent=190 // loop_pre_header
                  _
                $region193: #{transformer_apply.1} parent=190 // loop_header
                  %s4201 = sphi 0, %s4205
                  %p4202 = scmp.ge.s32.totalorder %s4201, 1
                  %s4206 = sphi %s4150, %s4150
                  %s4207 = sphi %s4177, %s4177
                $region194: #{transformer_apply.1} parent=190 // loop_header_branch
                  %4204 = sbr.rel (%p4202) target = $region198
                $region195: #{transformer_apply.1} parent=190 // loop_body
                  %v4208 = vld [vmem:[%s4206] sm:$0xff]
                  %4209 = vst [vmem:[%s4207] sm:$0xff] %v4208
                  %v4210 = vld [vmem:[%s4206 + $0x8] sm:$0xff]
                  %4211 = vst [vmem:[%s4207 + $0x10] sm:$0xff] %v4210
                $region196: #{transformer_apply.1} parent=190 // loop_footer
                  %s4205 = sadd.s32 1, %s4201
                $region197: #{transformer_apply.1} parent=190 // loop_footer_branch
                  %4200 = sbr.rel target = $region193
                $region198: #{transformer_apply.1} parent=190 // loop_exit
                  _
              $region191: #{transformer_apply.1} parent=175 // pred_fallthru
                _
              // Predicated region
              $region199: #{transformer_apply.1} parent=175 // pred_check
                _
              $region200: #{transformer_apply.1} parent=175 // pred_check_branch
                %4213 = sbr.rel target = $region202
              $region201: #{transformer_apply.1} parent=175 // pred_region
                _
              $region202: #{transformer_apply.1} parent=175 // pred_fallthru
                _
            $region176: #{transformer_apply.1} parent=171 // pred_fallthru
              _
            // Predicated region
            $region177: #{transformer_apply.1} parent=171 // pred_check
              _
            $region178: #{transformer_apply.1} parent=171 // pred_check_branch
              %4183 = sbr.rel target = $region180
            $region179: #{transformer_apply.1} parent=171 // pred_region
              %s4185 = ssub.s32 256, 1
              loop: start=0, step=1, limit=1
              $region181: #{transformer_apply.1} parent=179 // loop_pre_header
                _
              $region182: #{transformer_apply.1} parent=179 // loop_header
                %s4187 = sphi 0, %s4191
                %p4188 = scmp.ge.s32.totalorder %s4187, 1
                %s4192 = sphi %s4150, %s4150
                %s4193 = sphi %s4177, %s4177
              $region183: #{transformer_apply.1} parent=179 // loop_header_branch
                %4190 = sbr.rel (%p4188) target = $region187
              $region184: #{transformer_apply.1} parent=179 // loop_body
                %v4194 = vld [vmem:[%s4192] sm:%s4185]
                %4195 = vst [vmem:[%s4193] sm:%s4185] %v4194
                %v4196 = vld [vmem:[%s4192 + $0x8] sm:%s4185]
                %4197 = vst [vmem:[%s4193 + $0x10] sm:%s4185] %v4196
              $region185: #{transformer_apply.1} parent=179 // loop_footer
                %s4191 = sadd.s32 1, %s4187
              $region186: #{transformer_apply.1} parent=179 // loop_footer_branch
                %4186 = sbr.rel target = $region182
              $region187: #{transformer_apply.1} parent=179 // loop_exit
                _
            $region180: #{transformer_apply.1} parent=171 // pred_fallthru
              _
          $region172: #{transformer_apply.1} parent=167 // pred_fallthru
            _
          %4214 = vnop
        $region168: #{transformer_apply.1} parent=159 // pred_fallthru
          _
        // Predicated region
        $region203: #{transformer_apply.1} parent=159 // pred_check
          %p4215 = pneg %p912
        $region204: #{transformer_apply.1} parent=159 // pred_check_branch
          %4217 = sbr.rel (%p4215) target = $region206
        $region205: #{transformer_apply.1} parent=159 // pred_region
          %s4218 = smul.addr %s92, 8
          %s4219 = scalar_lea.vmem %s75, %s4218
          // Predicated region
          $region207: #{transformer_apply.1} parent=205 // pred_check
            _
          $region208: #{transformer_apply.1} parent=205 // pred_check_branch
            %4221 = sbr.rel (0) target = $region210
          $region209: #{transformer_apply.1} parent=205 // pred_region
            // Predicated region
            $region211: #{transformer_apply.1} parent=209 // pred_check
              _
            $region212: #{transformer_apply.1} parent=209 // pred_check_branch
              %4223 = sbr.rel (0) target = $region214
            $region213: #{transformer_apply.1} parent=209 // pred_region
              // Predicated region
              $region226: #{transformer_apply.1} parent=213 // pred_check
                _
              $region227: #{transformer_apply.1} parent=213 // pred_check_branch
                %4241 = sbr.rel (0) target = $region229
              $region228: #{transformer_apply.1} parent=213 // pred_region
                loop: start=0, step=1, limit=1
                $region230: #{transformer_apply.1} parent=228 // loop_pre_header
                  _
                $region231: #{transformer_apply.1} parent=228 // loop_header
                  %s4243 = sphi 0, %s4247
                  %p4244 = scmp.ge.s32.totalorder %s4243, 1
                  %s4248 = sphi %s4154, %s4154
                  %s4249 = sphi %s4219, %s4219
                $region232: #{transformer_apply.1} parent=228 // loop_header_branch
                  %4246 = sbr.rel (%p4244) target = $region236
                $region233: #{transformer_apply.1} parent=228 // loop_body
                  %v4250 = vld [vmem:[%s4248] sm:$0xff]
                  %4251 = vst [vmem:[%s4249] sm:$0xff] %v4250
                  %v4252 = vld [vmem:[%s4248 + $0x8] sm:$0xff]
                  %4253 = vst [vmem:[%s4249 + $0x10] sm:$0xff] %v4252
                $region234: #{transformer_apply.1} parent=228 // loop_footer
                  %s4247 = sadd.s32 1, %s4243
                $region235: #{transformer_apply.1} parent=228 // loop_footer_branch
                  %4242 = sbr.rel target = $region231
                $region236: #{transformer_apply.1} parent=228 // loop_exit
                  _
              $region229: #{transformer_apply.1} parent=213 // pred_fallthru
                _
              // Predicated region
              $region237: #{transformer_apply.1} parent=213 // pred_check
                _
              $region238: #{transformer_apply.1} parent=213 // pred_check_branch
                %4255 = sbr.rel target = $region240
              $region239: #{transformer_apply.1} parent=213 // pred_region
                _
              $region240: #{transformer_apply.1} parent=213 // pred_fallthru
                _
            $region214: #{transformer_apply.1} parent=209 // pred_fallthru
              _
            // Predicated region
            $region215: #{transformer_apply.1} parent=209 // pred_check
              _
            $region216: #{transformer_apply.1} parent=209 // pred_check_branch
              %4225 = sbr.rel target = $region218
            $region217: #{transformer_apply.1} parent=209 // pred_region
              %s4227 = ssub.s32 256, 1
              loop: start=0, step=1, limit=1
              $region219: #{transformer_apply.1} parent=217 // loop_pre_header
                _
              $region220: #{transformer_apply.1} parent=217 // loop_header
                %s4229 = sphi 0, %s4233
                %p4230 = scmp.ge.s32.totalorder %s4229, 1
                %s4234 = sphi %s4154, %s4154
                %s4235 = sphi %s4219, %s4219
              $region221: #{transformer_apply.1} parent=217 // loop_header_branch
                %4232 = sbr.rel (%p4230) target = $region225
              $region222: #{transformer_apply.1} parent=217 // loop_body
                %v4236 = vld [vmem:[%s4234] sm:%s4227]
                %4237 = vst [vmem:[%s4235] sm:%s4227] %v4236
                %v4238 = vld [vmem:[%s4234 + $0x8] sm:%s4227]
                %4239 = vst [vmem:[%s4235 + $0x10] sm:%s4227] %v4238
              $region223: #{transformer_apply.1} parent=217 // loop_footer
                %s4233 = sadd.s32 1, %s4229
              $region224: #{transformer_apply.1} parent=217 // loop_footer_branch
                %4228 = sbr.rel target = $region220
              $region225: #{transformer_apply.1} parent=217 // loop_exit
                _
            $region218: #{transformer_apply.1} parent=209 // pred_fallthru
              _
          $region210: #{transformer_apply.1} parent=205 // pred_fallthru
            _
          %4256 = vnop
        $region206: #{transformer_apply.1} parent=159 // pred_fallthru
          _
        // Predicated region
        $region241: #{transformer_apply.1} parent=159 // pred_check
          %p4257 = pneg %p938
        $region242: #{transformer_apply.1} parent=159 // pred_check_branch
          %4259 = sbr.rel (%p4257) target = $region244
        $region243: #{transformer_apply.1} parent=159 // pred_region
          %s4260 = smul.addr %s92, 8
          %s4261 = scalar_lea.vmem %s77, %s4260
          // Predicated region
          $region245: #{transformer_apply.1} parent=243 // pred_check
            _
          $region246: #{transformer_apply.1} parent=243 // pred_check_branch
            %4263 = sbr.rel (0) target = $region248
          $region247: #{transformer_apply.1} parent=243 // pred_region
            // Predicated region
            $region249: #{transformer_apply.1} parent=247 // pred_check
              _
            $region250: #{transformer_apply.1} parent=247 // pred_check_branch
              %4265 = sbr.rel (0) target = $region252
            $region251: #{transformer_apply.1} parent=247 // pred_region
              // Predicated region
              $region264: #{transformer_apply.1} parent=251 // pred_check
                _
              $region265: #{transformer_apply.1} parent=251 // pred_check_branch
                %4283 = sbr.rel (0) target = $region267
              $region266: #{transformer_apply.1} parent=251 // pred_region
                loop: start=0, step=1, limit=1
                $region268: #{transformer_apply.1} parent=266 // loop_pre_header
                  _
                $region269: #{transformer_apply.1} parent=266 // loop_header
                  %s4285 = sphi 0, %s4289
                  %p4286 = scmp.ge.s32.totalorder %s4285, 1
                  %s4290 = sphi %s4158, %s4158
                  %s4291 = sphi %s4261, %s4261
                $region270: #{transformer_apply.1} parent=266 // loop_header_branch
                  %4288 = sbr.rel (%p4286) target = $region274
                $region271: #{transformer_apply.1} parent=266 // loop_body
                  %v4292 = vld [vmem:[%s4290] sm:$0xff]
                  %4293 = vst [vmem:[%s4291] sm:$0xff] %v4292
                  %v4294 = vld [vmem:[%s4290 + $0x8] sm:$0xff]
                  %4295 = vst [vmem:[%s4291 + $0x10] sm:$0xff] %v4294
                $region272: #{transformer_apply.1} parent=266 // loop_footer
                  %s4289 = sadd.s32 1, %s4285
                $region273: #{transformer_apply.1} parent=266 // loop_footer_branch
                  %4284 = sbr.rel target = $region269
                $region274: #{transformer_apply.1} parent=266 // loop_exit
                  _
              $region267: #{transformer_apply.1} parent=251 // pred_fallthru
                _
              // Predicated region
              $region275: #{transformer_apply.1} parent=251 // pred_check
                _
              $region276: #{transformer_apply.1} parent=251 // pred_check_branch
                %4297 = sbr.rel target = $region278
              $region277: #{transformer_apply.1} parent=251 // pred_region
                _
              $region278: #{transformer_apply.1} parent=251 // pred_fallthru
                _
            $region252: #{transformer_apply.1} parent=247 // pred_fallthru
              _
            // Predicated region
            $region253: #{transformer_apply.1} parent=247 // pred_check
              _
            $region254: #{transformer_apply.1} parent=247 // pred_check_branch
              %4267 = sbr.rel target = $region256
            $region255: #{transformer_apply.1} parent=247 // pred_region
              %s4269 = ssub.s32 256, 1
              loop: start=0, step=1, limit=1
              $region257: #{transformer_apply.1} parent=255 // loop_pre_header
                _
              $region258: #{transformer_apply.1} parent=255 // loop_header
                %s4271 = sphi 0, %s4275
                %p4272 = scmp.ge.s32.totalorder %s4271, 1
                %s4276 = sphi %s4158, %s4158
                %s4277 = sphi %s4261, %s4261
              $region259: #{transformer_apply.1} parent=255 // loop_header_branch
                %4274 = sbr.rel (%p4272) target = $region263
              $region260: #{transformer_apply.1} parent=255 // loop_body
                %v4278 = vld [vmem:[%s4276] sm:%s4269]
                %4279 = vst [vmem:[%s4277] sm:%s4269] %v4278
                %v4280 = vld [vmem:[%s4276 + $0x8] sm:%s4269]
                %4281 = vst [vmem:[%s4277 + $0x10] sm:%s4269] %v4280
              $region261: #{transformer_apply.1} parent=255 // loop_footer
                %s4275 = sadd.s32 1, %s4271
              $region262: #{transformer_apply.1} parent=255 // loop_footer_branch
                %4270 = sbr.rel target = $region258
              $region263: #{transformer_apply.1} parent=255 // loop_exit
                _
            $region256: #{transformer_apply.1} parent=247 // pred_fallthru
              _
          $region248: #{transformer_apply.1} parent=243 // pred_fallthru
            _
          %4298 = vnop
        $region244: #{transformer_apply.1} parent=159 // pred_fallthru
          _
      $region160: #{transformer_apply.1} parent=5 // pred_fallthru
        _
      %p4299 = scmp.le.s32.totalorder 2, %s87
      // Predicated region
      $region279: #{transformer_apply.1} parent=5 // pred_check
        %p4300 = pneg %p4299
      $region280: #{transformer_apply.1} parent=5 // pred_check_branch
        %4302 = sbr.rel (%p4300) target = $region282
      $region281: #{transformer_apply.1} parent=5 // pred_region
        %s4303 = ssub.s32 %s87, 2
        // Predicated region
        $region283: #{transformer_apply.1} parent=281 // pred_check
          %p4304 = pneg %p866
        $region284: #{transformer_apply.1} parent=281 // pred_check_branch
          %4306 = sbr.rel (%p4304) target = $region286
        $region285: #{transformer_apply.1} parent=281 // pred_region
          %s4307 = sand.u32 %s851, 1
          %s4308 = scalar_lea.sflag [#allocation3], %s4307
          %s4309 = sand.u32 %s851, 1
          %s4310 = smul.addr %s4309, 8
          %s4311 = scalar_lea.vmem [#allocation2], %s4310
          %4313 = dma.done %s4308, 128
        $region286: #{transformer_apply.1} parent=281 // pred_fallthru
          _
        // Predicated region
        $region287: #{transformer_apply.1} parent=281 // pred_check
          %p4314 = pneg %p892
        $region288: #{transformer_apply.1} parent=281 // pred_check_branch
          %4316 = sbr.rel (%p4314) target = $region290
        $region289: #{transformer_apply.1} parent=281 // pred_region
          %s4317 = sand.u32 %s877, 1
          %s4318 = sand.u32 %s877, 1
          %s4319 = smul.addr %s4318, 16
          %s4320 = scalar_lea.vmem [#allocation4], %s4319
        $region290: #{transformer_apply.1} parent=281 // pred_fallthru
          _
        // Predicated region
        $region291: #{transformer_apply.1} parent=281 // pred_check
          %p4321 = pneg %p918
        $region292: #{transformer_apply.1} parent=281 // pred_check_branch
          %4323 = sbr.rel (%p4321) target = $region294
        $region293: #{transformer_apply.1} parent=281 // pred_region
          %s4324 = sand.u32 %s903, 1
          %s4325 = sand.u32 %s903, 1
          %s4326 = smul.addr %s4325, 16
          %s4327 = scalar_lea.vmem [#allocation5], %s4326
        $region294: #{transformer_apply.1} parent=281 // pred_fallthru
          _
        // Predicated region
        $region295: #{transformer_apply.1} parent=281 // pred_check
          %p4328 = pneg %p944
        $region296: #{transformer_apply.1} parent=281 // pred_check_branch
          %4330 = sbr.rel (%p4328) target = $region298
        $region297: #{transformer_apply.1} parent=281 // pred_region
          %s4331 = sand.u32 %s929, 1
          %s4332 = sand.u32 %s929, 1
          %s4333 = smul.addr %s4332, 16
          %s4334 = scalar_lea.vmem [#allocation6], %s4333
        $region298: #{transformer_apply.1} parent=281 // pred_fallthru
          _
      $region282: #{transformer_apply.1} parent=5 // pred_fallthru
        _
    $region6: #{transformer_apply.1} parent=1 // loop_footer
      %s91 = sadd.s32 1, %s87
    $region7: #{transformer_apply.1} parent=1 // loop_footer_branch
      %86 = sbr.rel target = $region3
    $region8: #{transformer_apply.1} parent=1 // loop_exit
      _
    %4335 = vsyncpa [#allocation3], 1
    %s4336 = scalar_lea.sflag [#allocation3], 1
    %4337 = vsyncpa %s4336, 1

</llo_original>
